<compile_context>
chip_gen: v6e
topology: v6e:2x2x1
jax: 0.10.0
libtpu: 0.0.40
codegen_flags: <defaults>
</compile_context>

<pallas_src>
import functools
import math

import jax
import jax.numpy as jnp
import numpy as np
from jax import lax
from jax.experimental import pallas as pl


# ----------------------------- Pallas kernels -----------------------------

def _gru_kernel(gx_ref, wbd_ref, bhn_ref, o_ref):
    """Fused per-feature GRU recurrence (final hidden state only).

    gx_ref : [T, B, 3*F*H] precomputed input-gate contributions; column blocks
                           are [r | z | n], each F*H wide, with b_i* and
                           b_h{r,z} already folded in.
    wbd_ref: [F*H, 3*F*H]  block-diagonal hidden->gates weight (x @ W layout).
    bhn_ref: [1, F*H]      hidden bias of the n gate (stays inside r * (.)).
    o_ref  : [B, F*H]      final hidden state of every feature GRU, flattened.
    """
    T = gx_ref.shape[0]
    FH = o_ref.shape[1]

    def step(t, h):
        gx = gx_ref[t]                                              # [B, 3FH]
        hh = jnp.dot(h, wbd_ref[...], preferred_element_type=jnp.float32)
        r = jax.nn.sigmoid(gx[:, :FH] + hh[:, :FH])
        z = jax.nn.sigmoid(gx[:, FH:2 * FH] + hh[:, FH:2 * FH])
        n = jnp.tanh(gx[:, 2 * FH:] + r * (hh[:, 2 * FH:] + bhn_ref[...]))
        return (1.0 - z) * n + z * h

    h0 = jnp.zeros(o_ref.shape, jnp.float32)
    o_ref[...] = lax.fori_loop(0, T, step, h0, unroll=True)


def _encoder_kernel(posi_ref, wqkv_ref, bqkv_ref,
                    wmq_ref, bmq_ref, wmk_ref, bmk_ref, wmv_ref, bmv_ref,
                    wfin_ref, bfin_ref,
                    w1_ref, b1_ref, w2_ref, b2_ref,
                    wfq_ref, bfq_ref, wkv_ref, bkv_ref,
                    wo_ref, bo_ref,
                    out_ref, wc_ref, *, num_heads):
    """Transformer tail: tanh(q/k/v) -> MHA -> residual -> FFN -> residual ->
    FinalAttentionQKV('mul') -> (BatchNorm folded) output linear -> sigmoid."""
    posi3 = posi_ref[...]                                  # [B, F, H]
    B, F, H = posi3.shape
    posi2 = posi3.reshape(B * F, H)

    def lin(x2, w_ref, b_ref):
        return (jnp.dot(x2, w_ref[...], preferred_element_type=jnp.float32)
                + b_ref[...])

    # to_query / to_key / to_value fused into one (H, 3H) matmul, then tanh.
    qkv = jnp.tanh(lin(posi2, wqkv_ref, bqkv_ref))         # [BF, 3H]
    q_in, k_in, v_in = qkv[:, :H], qkv[:, H:2 * H], qkv[:, 2 * H:]

    # Multi-headed self attention (dropout = identity in eval mode).
    lq = lin(q_in, wmq_ref, bmq_ref).reshape(B, F, H)
    lk = lin(k_in, wmk_ref, bmk_ref).reshape(B, F, H)
    lv = lin(v_in, wmv_ref, bmv_ref).reshape(B, F, H)
    d_k = H // num_heads
    inv_sqrt_dk = 1.0 / math.sqrt(d_k)
    heads = []
    for i in range(num_heads):
        sl = slice(i * d_k, (i + 1) * d_k)
        qh, kh, vh = lq[:, :, sl], lk[:, :, sl], lv[:, :, sl]
        s = jnp.einsum('bfd,bgd->bfg', qh, kh,
                       preferred_element_type=jnp.float32) * inv_sqrt_dk
        s = s - jnp.max(s, axis=-1, keepdims=True)
        p = jnp.exp(s)
        p = p / jnp.sum(p, axis=-1, keepdims=True)
        heads.append(jnp.einsum('bfg,bgd->bfd', p, vh,
                                preferred_element_type=jnp.float32))
    att2 = jnp.concatenate(heads, axis=-1).reshape(B * F, H)
    mha = lin(att2, wfin_ref, bfin_ref)

    ctx = posi2 + mha                                      # residual 1
    ffn = lin(jnp.maximum(lin(ctx, w1_ref, b1_ref), 0.0), w2_ref, b2_ref)
    ctx2 = ctx + ffn                                       # residual 2
    ctx2_3 = ctx2.reshape(B, F, H)

    # FinalAttentionQKV, attention_type='mul' (W_k|W_v fused into one matmul).
    q_f = (jnp.dot(jnp.mean(ctx2_3, axis=1), wfq_ref[...],
                   preferred_element_type=jnp.float32) + bfq_ref[...])   # [B, H]
    kv = lin(ctx2, wkv_ref, bkv_ref)                       # [BF, 2H]
    k_f = kv[:, :H].reshape(B, F, H)
    v_f = kv[:, H:].reshape(B, F, H)
    e = jnp.sum(k_f * q_f[:, None, :], axis=-1, keepdims=True)   # [B, F, 1]
    e = e - jnp.max(e, axis=1, keepdims=True)
    a = jnp.exp(e)
    a = a / jnp.sum(a, axis=1, keepdims=True)
    wc = jnp.sum(a * v_f, axis=1)                          # [B, H] weighted_contexts
    wc_ref[...] = wc

    # BatchNorm1d (eval, running stats) already folded into wo/bo on the host.
    out_ref[...] = jax.nn.sigmoid(
        jnp.dot(wc, wo_ref[...], preferred_element_type=jnp.float32) + bo_ref[...])


# ------------------------- host-side fusion helpers -------------------------

def _block_diag(w):
    # w: [F, H, H] -> block-diagonal [F*H, F*H]
    F, H, _ = w.shape
    eye = jnp.eye(F, dtype=w.dtype)
    return jnp.einsum('fij,fg->figj', w, eye).reshape(F * H, F * H)


def prepare_gru(params):
    F, _, H = params['gru_wi'].shape
    wbd = jnp.concatenate(
        [_block_diag(params['gru_wh'][:, g]) for g in range(3)], axis=1)
    bhn = params['gru_bh'][:, 2].reshape(1, F * H)
    return wbd, bhn


def gru_input_gates(x, params):
    """x: [B, T, F] -> [T, B, 3*F*H]  (input-side gate contributions, biases folded)."""
    B, T, F = x.shape
    H = params['gru_wi'].shape[-1]

    def gate(g, fold_bh):
        b = params['gru_bi'][:, g] + (params['gru_bh'][:, g] if fold_bh else 0.0)
        gx = (x[:, :, :, None] * params['gru_wi'][None, None, :, g, :]
              + b[None, None])                                   # [B, T, F, H]
        return gx.reshape(B, T, F * H)

    gx = jnp.concatenate([gate(0, True), gate(1, True), gate(2, False)], axis=-1)
    return jnp.transpose(gx, (1, 0, 2))                          # [T, B, 3FH]


def prepare_encoder_args(params, eps=1e-5):
    H = params['wq'].shape[0]
    out_dim = params['wo'].shape[1]
    r2 = lambda v: v.reshape(1, -1)

    wqkv = jnp.concatenate([params['wq'], params['wk'], params['wv']], axis=1)
    bqkv = jnp.concatenate([params['bq'], params['bk'], params['bv']]).reshape(1, 3 * H)
    wkv = jnp.concatenate([params['fw_k'], params['fw_v']], axis=1)
    bkv = jnp.concatenate([params['fb_k'], params['fb_v']]).reshape(1, 2 * H)

    # Fold eval-mode BatchNorm1d into the output linear.
    scale = params['bn_g'] / jnp.sqrt(params['bn_var'] + eps)
    shift = params['bn_b'] - params['bn_mean'] * scale
    wo_eff = scale[:, None] * params['wo']
    bo_eff = (shift @ params['wo'] + params['bo']).reshape(1, out_dim)

    return (wqkv, bqkv,
            params['mw_q'], r2(params['mb_q']),
            params['mw_k'], r2(params['mb_k']),
            params['mw_v'], r2(params['mb_v']),
            params['mw_f'], r2(params['mb_f']),
            params['w1'], r2(params['b1']),
            params['w2'], r2(params['b2']),
            params['fw_q'], r2(params['fb_q']),
            wkv, bkv,
            wo_eff, bo_eff)


# ------------------------------ forward pass -------------------------------

def vanilla_transformer_forward(x, params, num_heads, return_aux=False):
    """x: [B, T, F] -> (output [B,out], DeCov_loss [1], weighted_contexts [B,H])."""
    B, T, F = x.shape
    H = params['gru_wi'].shape[-1]
    out_dim = params['wo'].shape[1]
    assert H % num_heads == 0

    # --- per-feature GRU backbone (Pallas kernel 1) ---
    gx = gru_input_gates(x, params)                 # hoisted out of the recurrence
    wbd, bhn = prepare_gru(params)
    h_flat = pl.pallas_call(
        _gru_kernel,
        out_shape=jax.ShapeDtypeStruct((B, F * H), jnp.float32),
    )(gx, wbd, bhn)
    posi = h_flat.reshape(B, F, H)                  # GRU_embeded_input (eval: no dropout)

    # --- transformer tail + final attention + BN + output (Pallas kernel 2) ---
    enc_args = prepare_encoder_args(params)
    kern = functools.partial(_encoder_kernel, num_heads=num_heads)
    out, wc = pl.pallas_call(
        kern,
        out_shape=(jax.ShapeDtypeStruct((B, out_dim), jnp.float32),
                   jax.ShapeDtypeStruct((B, H), jnp.float32)),
    )(posi, *enc_args)

    decov_loss = jnp.zeros((1,), jnp.float32)       # torch returns torch.zeros(1)
    if return_aux:
        return (out, decov_loss, wc), {"posi": posi}
    return out, decov_loss, wc


# ------------------------------- parameters --------------------------------

def init_params(key, F, H, d_ff, out_dim):
    keys = iter(jax.random.split(key, 40))

    def u(shape, scale):
        return jax.random.uniform(next(keys), shape, jnp.float32, -scale, scale)

    sH = 1.0 / math.sqrt(H)
    sF = 1.0 / math.sqrt(d_ff)
    p = {}
    # per-feature GRU(input_size=1, hidden=H), x@W layout, gate order (r, z, n)
    p['gru_wi'] = u((F, 3, H), sH)
    p['gru_wh'] = u((F, 3, H, H), sH)
    p['gru_bi'] = u((F, 3, H), sH)
    p['gru_bh'] = u((F, 3, H), sH)
    for name in ('wq', 'wk', 'wv', 'mw_q', 'mw_k', 'mw_v', 'mw_f',
                 'fw_q', 'fw_k', 'fw_v'):
        p[name] = u((H, H), sH)
    for name in ('bq', 'bk', 'bv', 'mb_q', 'mb_k', 'mb_v', 'mb_f',
                 'fb_q', 'fb_k', 'fb_v'):
        p[name] = u((H,), sH)
    p['w1'] = u((H, d_ff), sH)
    p['b1'] = u((d_ff,), sH)
    p['w2'] = u((d_ff, H), sF)
    p['b2'] = u((H,), sF)
    p['wo'] = u((H, out_dim), sH)
    p['bo'] = u((out_dim,), sH)
    # BatchNorm1d eval-mode parameters / running stats
    p['bn_g'] = 1.0 + u((H,), 0.1)
    p['bn_b'] = u((H,), 0.1)
    p['bn_mean'] = u((H,), 0.5)
    p['bn_var'] = 1.0 + u((H,), 0.1)
    return p


# --------------------------- pure-JAX reference -----------------------------

def ref_forward(x, p, num_heads, eps=1e-5):
    B, T, F = x.shape
    H = p['gru_wi'].shape[-1]

    def gru_final(x_f, wi, wh, bi, bh):
        def step(h, xt):
            r = jax.nn.sigmoid(xt[:, None] * wi[0] + bi[0] + h @ wh[0] + bh[0])
            z = jax.nn.sigmoid(xt[:, None] * wi[1] + bi[1] + h @ wh[1] + bh[1])
            n = jnp.tanh(xt[:, None] * wi[2] + bi[2] + r * (h @ wh[2] + bh[2]))
            return (1.0 - z) * n + z * h, None
        h, _ = lax.scan(step, jnp.zeros((B, H), jnp.float32), x_f.T)
        return h

    posi = jax.vmap(gru_final, in_axes=(2, 0, 0, 0, 0), out_axes=1)(
        x, p['gru_wi'], p['gru_wh'], p['gru_bi'], p['gru_bh'])      # [B, F, H]

    qin = jnp.tanh(posi @ p['wq'] + p['bq'])
    kin = jnp.tanh(posi @ p['wk'] + p['bk'])
    vin = jnp.tanh(posi @ p['wv'] + p['bv'])
    d_k = H // num_heads

    def split(z, w, b):
        return (z @ w + b).reshape(B, F, num_heads, d_k).transpose(0, 2, 1, 3)

    lq, lk, lv = (split(qin, p['mw_q'], p['mb_q']),
                  split(kin, p['mw_k'], p['mb_k']),
                  split(vin, p['mw_v'], p['mb_v']))
    s = jnp.einsum('bhfd,bhgd->bhfg', lq, lk) / math.sqrt(d_k)
    a = jax.nn.softmax(s, axis=-1)
    att = jnp.einsum('bhfg,bhgd->bhfd', a, lv).transpose(0, 2, 1, 3).reshape(B, F, H)
    mha = att @ p['mw_f'] + p['mb_f']
    ctx = posi + mha
    ffn = jnp.maximum(ctx @ p['w1'] + p['b1'], 0.0) @ p['w2'] + p['b2']
    ctx2 = ctx + ffn

    q_f = jnp.mean(ctx2, axis=1) @ p['fw_q'] + p['fb_q']
    k_f = ctx2 @ p['fw_k'] + p['fb_k']
    v_f = ctx2 @ p['fw_v'] + p['fb_v']
    e = jnp.einsum('bfh,bh->bf', k_f, q_f)
    a2 = jax.nn.softmax(e, axis=-1)
    wc = jnp.einsum('bf,bfh->bh', a2, v_f)

    bn = (wc - p['bn_mean']) / jnp.sqrt(p['bn_var'] + eps) * p['bn_g'] + p['bn_b']
    out = jax.nn.sigmoid(bn @ p['wo'] + p['bo'])
    return out, wc, posi


# --------------------------------- main -------------------------------------

if __name__ == "__main__":
    B, T, F = 4, 8, 8          # batch, time steps, input_dim (features)
    H = 32                     # hidden_dim == d_model (required by the module)
    NUM_HEADS = 4
    D_FF = 64
    OUT_DIM = 2

    key = jax.random.PRNGKey(0)
    kx, kp = jax.random.split(key)
    x = jax.random.normal(kx, (B, T, F), jnp.float32)
    params = init_params(kp, F, H, D_FF, OUT_DIM)

    fwd = jax.jit(functools.partial(vanilla_transformer_forward,
                                    num_heads=NUM_HEADS, return_aux=True))
    (out, decov, wc), aux = fwd(x, params)
    out = jax.block_until_ready(out)
    wc = jax.block_until_ready(wc)

    # sanity checks against a pure-JAX reference of the same forward
    ref_out, ref_wc, ref_posi = ref_forward(x, params, NUM_HEADS)
    np.testing.assert_allclose(np.asarray(aux["posi"]), np.asarray(ref_posi),
                               rtol=1e-3, atol=1e-3)
    np.testing.assert_allclose(np.asarray(wc), np.asarray(ref_wc),
                               rtol=1e-3, atol=1e-3)
    np.testing.assert_allclose(np.asarray(out), np.asarray(ref_out),
                               rtol=1e-3, atol=1e-3)

    assert out.shape == (B, OUT_DIM)
    assert wc.shape == (B, H)
    assert decov.shape == (1,)
    print("KERNEL_OK")
</pallas_src>

<mosaic_0001>
module attributes {stable_mosaic.version = 11 : i64} {
  func.func @_gru_kernel(%arg0: memref<8x4x768xf32, #tpu.memory_space<vmem>>, %arg1: memref<256x768xf32, #tpu.memory_space<vmem>>, %arg2: memref<1x256xf32, #tpu.memory_space<vmem>>, %arg3: memref<4x256xf32, #tpu.memory_space<vmem>>) attributes {dimension_semantics = [], scalar_prefetch = 0 : i64, scratch_operands = 0 : i64, tpu.core_type = #tpu.core_type<tc>} {
    %cst = arith.constant 0.000000e+00 : f32
    %0 = vector.broadcast %cst : f32 to vector<4x256xf32>
    %c0_i32 = arith.constant 0 : i32
    %1 = arith.index_cast %c0_i32 : i32 to index
    %c0 = arith.constant 0 : index
    %c0_0 = arith.constant 0 : index
    %2 = vector.load %arg0[%1, %c0, %c0_0] : memref<8x4x768xf32, #tpu.memory_space<vmem>>, vector<1x4x768xf32>
    %3 = vector.shape_cast %2 : vector<1x4x768xf32> to vector<4x768xf32>
    %c0_1 = arith.constant 0 : index
    %c0_2 = arith.constant 0 : index
    %4 = vector.load %arg1[%c0_1, %c0_2] : memref<256x768xf32, #tpu.memory_space<vmem>>, vector<256x768xf32>
    %cst_3 = arith.constant dense<0.000000e+00> : vector<4x768xf32>
    %5 = tpu.matmul %0, %4, %cst_3 {dimension_numbers = #tpu.dot_dimension_numbers<[1], [0], [0], [1], [0, 0, 1, 1], [], []>} : vector<4x256xf32>, vector<256x768xf32>, vector<4x768xf32> -> vector<4x768xf32>
    %6 = vector.extract_strided_slice %3 {offsets = [0, 0], sizes = [4, 256], strides = [1, 1]} : vector<4x768xf32> to vector<4x256xf32>
    %7 = vector.extract_strided_slice %5 {offsets = [0, 0], sizes = [4, 256], strides = [1, 1]} : vector<4x768xf32> to vector<4x256xf32>
    %8 = arith.addf %6, %7 : vector<4x256xf32>
    %9 = arith.negf %8 : vector<4x256xf32>
    %10 = math.exp %9 : vector<4x256xf32>
    %cst_4 = arith.constant 1.000000e+00 : f32
    %11 = vector.broadcast %cst_4 : f32 to vector<4x256xf32>
    %12 = arith.addf %11, %10 : vector<4x256xf32>
    %13 = arith.divf %11, %12 : vector<4x256xf32>
    %14 = vector.extract_strided_slice %3 {offsets = [0, 256], sizes = [4, 256], strides = [1, 1]} : vector<4x768xf32> to vector<4x256xf32>
    %15 = vector.extract_strided_slice %5 {offsets = [0, 256], sizes = [4, 256], strides = [1, 1]} : vector<4x768xf32> to vector<4x256xf32>
    %16 = arith.addf %14, %15 : vector<4x256xf32>
    %17 = arith.negf %16 : vector<4x256xf32>
    %18 = math.exp %17 : vector<4x256xf32>
    %cst_5 = arith.constant 1.000000e+00 : f32
    %19 = vector.broadcast %cst_5 : f32 to vector<4x256xf32>
    %20 = arith.addf %19, %18 : vector<4x256xf32>
    %21 = arith.divf %19, %20 : vector<4x256xf32>
    %22 = vector.extract_strided_slice %3 {offsets = [0, 512], sizes = [4, 256], strides = [1, 1]} : vector<4x768xf32> to vector<4x256xf32>
    %23 = vector.extract_strided_slice %5 {offsets = [0, 512], sizes = [4, 256], strides = [1, 1]} : vector<4x768xf32> to vector<4x256xf32>
    %c0_6 = arith.constant 0 : index
    %c0_7 = arith.constant 0 : index
    %24 = vector.load %arg2[%c0_6, %c0_7] : memref<1x256xf32, #tpu.memory_space<vmem>>, vector<1x256xf32>
    %25 = vector.broadcast %24 : vector<1x256xf32> to vector<4x256xf32>
    %26 = arith.addf %23, %25 : vector<4x256xf32>
    %27 = arith.mulf %13, %26 : vector<4x256xf32>
    %28 = arith.addf %22, %27 : vector<4x256xf32>
    %29 = math.tanh %28 : vector<4x256xf32>
    %cst_8 = arith.constant 1.000000e+00 : f32
    %30 = vector.broadcast %cst_8 : f32 to vector<4x256xf32>
    %31 = arith.subf %30, %21 : vector<4x256xf32>
    %32 = arith.mulf %31, %29 : vector<4x256xf32>
    %33 = arith.mulf %21, %0 : vector<4x256xf32>
    %34 = arith.addf %32, %33 : vector<4x256xf32>
    %c1_i32 = arith.constant 1 : i32
    %35 = arith.index_cast %c1_i32 : i32 to index
    %c0_9 = arith.constant 0 : index
    %c0_10 = arith.constant 0 : index
    %36 = vector.load %arg0[%35, %c0_9, %c0_10] : memref<8x4x768xf32, #tpu.memory_space<vmem>>, vector<1x4x768xf32>
    %37 = vector.shape_cast %36 : vector<1x4x768xf32> to vector<4x768xf32>
    %c0_11 = arith.constant 0 : index
    %c0_12 = arith.constant 0 : index
    %38 = vector.load %arg1[%c0_11, %c0_12] : memref<256x768xf32, #tpu.memory_space<vmem>>, vector<256x768xf32>
    %cst_13 = arith.constant dense<0.000000e+00> : vector<4x768xf32>
    %39 = tpu.matmul %34, %38, %cst_13 {dimension_numbers = #tpu.dot_dimension_numbers<[1], [0], [0], [1], [0, 0, 1, 1], [], []>} : vector<4x256xf32>, vector<256x768xf32>, vector<4x768xf32> -> vector<4x768xf32>
    %40 = vector.extract_strided_slice %37 {offsets = [0, 0], sizes = [4, 256], strides = [1, 1]} : vector<4x768xf32> to vector<4x256xf32>
    %41 = vector.extract_strided_slice %39 {offsets = [0, 0], sizes = [4, 256], strides = [1, 1]} : vector<4x768xf32> to vector<4x256xf32>
    %42 = arith.addf %40, %41 : vector<4x256xf32>
    %43 = arith.negf %42 : vector<4x256xf32>
    %44 = math.exp %43 : vector<4x256xf32>
    %cst_14 = arith.constant 1.000000e+00 : f32
    %45 = vector.broadcast %cst_14 : f32 to vector<4x256xf32>
    %46 = arith.addf %45, %44 : vector<4x256xf32>
    %47 = arith.divf %45, %46 : vector<4x256xf32>
    %48 = vector.extract_strided_slice %37 {offsets = [0, 256], sizes = [4, 256], strides = [1, 1]} : vector<4x768xf32> to vector<4x256xf32>
    %49 = vector.extract_strided_slice %39 {offsets = [0, 256], sizes = [4, 256], strides = [1, 1]} : vector<4x768xf32> to vector<4x256xf32>
    %50 = arith.addf %48, %49 : vector<4x256xf32>
    %51 = arith.negf %50 : vector<4x256xf32>
    %52 = math.exp %51 : vector<4x256xf32>
    %cst_15 = arith.constant 1.000000e+00 : f32
    %53 = vector.broadcast %cst_15 : f32 to vector<4x256xf32>
    %54 = arith.addf %53, %52 : vector<4x256xf32>
    %55 = arith.divf %53, %54 : vector<4x256xf32>
    %56 = vector.extract_strided_slice %37 {offsets = [0, 512], sizes = [4, 256], strides = [1, 1]} : vector<4x768xf32> to vector<4x256xf32>
    %57 = vector.extract_strided_slice %39 {offsets = [0, 512], sizes = [4, 256], strides = [1, 1]} : vector<4x768xf32> to vector<4x256xf32>
    %c0_16 = arith.constant 0 : index
    %c0_17 = arith.constant 0 : index
    %58 = vector.load %arg2[%c0_16, %c0_17] : memref<1x256xf32, #tpu.memory_space<vmem>>, vector<1x256xf32>
    %59 = vector.broadcast %58 : vector<1x256xf32> to vector<4x256xf32>
    %60 = arith.addf %57, %59 : vector<4x256xf32>
    %61 = arith.mulf %47, %60 : vector<4x256xf32>
    %62 = arith.addf %56, %61 : vector<4x256xf32>
    %63 = math.tanh %62 : vector<4x256xf32>
    %cst_18 = arith.constant 1.000000e+00 : f32
    %64 = vector.broadcast %cst_18 : f32 to vector<4x256xf32>
    %65 = arith.subf %64, %55 : vector<4x256xf32>
    %66 = arith.mulf %65, %63 : vector<4x256xf32>
    %67 = arith.mulf %55, %34 : vector<4x256xf32>
    %68 = arith.addf %66, %67 : vector<4x256xf32>
    %c2_i32 = arith.constant 2 : i32
    %69 = arith.index_cast %c2_i32 : i32 to index
    %c0_19 = arith.constant 0 : index
    %c0_20 = arith.constant 0 : index
    %70 = vector.load %arg0[%69, %c0_19, %c0_20] : memref<8x4x768xf32, #tpu.memory_space<vmem>>, vector<1x4x768xf32>
    %71 = vector.shape_cast %70 : vector<1x4x768xf32> to vector<4x768xf32>
    %c0_21 = arith.constant 0 : index
    %c0_22 = arith.constant 0 : index
    %72 = vector.load %arg1[%c0_21, %c0_22] : memref<256x768xf32, #tpu.memory_space<vmem>>, vector<256x768xf32>
    %cst_23 = arith.constant dense<0.000000e+00> : vector<4x768xf32>
    %73 = tpu.matmul %68, %72, %cst_23 {dimension_numbers = #tpu.dot_dimension_numbers<[1], [0], [0], [1], [0, 0, 1, 1], [], []>} : vector<4x256xf32>, vector<256x768xf32>, vector<4x768xf32> -> vector<4x768xf32>
    %74 = vector.extract_strided_slice %71 {offsets = [0, 0], sizes = [4, 256], strides = [1, 1]} : vector<4x768xf32> to vector<4x256xf32>
    %75 = vector.extract_strided_slice %73 {offsets = [0, 0], sizes = [4, 256], strides = [1, 1]} : vector<4x768xf32> to vector<4x256xf32>
    %76 = arith.addf %74, %75 : vector<4x256xf32>
    %77 = arith.negf %76 : vector<4x256xf32>
    %78 = math.exp %77 : vector<4x256xf32>
    %cst_24 = arith.constant 1.000000e+00 : f32
    %79 = vector.broadcast %cst_24 : f32 to vector<4x256xf32>
    %80 = arith.addf %79, %78 : vector<4x256xf32>
    %81 = arith.divf %79, %80 : vector<4x256xf32>
    %82 = vector.extract_strided_slice %71 {offsets = [0, 256], sizes = [4, 256], strides = [1, 1]} : vector<4x768xf32> to vector<4x256xf32>
    %83 = vector.extract_strided_slice %73 {offsets = [0, 256], sizes = [4, 256], strides = [1, 1]} : vector<4x768xf32> to vector<4x256xf32>
    %84 = arith.addf %82, %83 : vector<4x256xf32>
    %85 = arith.negf %84 : vector<4x256xf32>
    %86 = math.exp %85 : vector<4x256xf32>
    %cst_25 = arith.constant 1.000000e+00 : f32
    %87 = vector.broadcast %cst_25 : f32 to vector<4x256xf32>
    %88 = arith.addf %87, %86 : vector<4x256xf32>
    %89 = arith.divf %87, %88 : vector<4x256xf32>
    %90 = vector.extract_strided_slice %71 {offsets = [0, 512], sizes = [4, 256], strides = [1, 1]} : vector<4x768xf32> to vector<4x256xf32>
    %91 = vector.extract_strided_slice %73 {offsets = [0, 512], sizes = [4, 256], strides = [1, 1]} : vector<4x768xf32> to vector<4x256xf32>
    %c0_26 = arith.constant 0 : index
    %c0_27 = arith.constant 0 : index
    %92 = vector.load %arg2[%c0_26, %c0_27] : memref<1x256xf32, #tpu.memory_space<vmem>>, vector<1x256xf32>
    %93 = vector.broadcast %92 : vector<1x256xf32> to vector<4x256xf32>
    %94 = arith.addf %91, %93 : vector<4x256xf32>
    %95 = arith.mulf %81, %94 : vector<4x256xf32>
    %96 = arith.addf %90, %95 : vector<4x256xf32>
    %97 = math.tanh %96 : vector<4x256xf32>
    %cst_28 = arith.constant 1.000000e+00 : f32
    %98 = vector.broadcast %cst_28 : f32 to vector<4x256xf32>
    %99 = arith.subf %98, %89 : vector<4x256xf32>
    %100 = arith.mulf %99, %97 : vector<4x256xf32>
    %101 = arith.mulf %89, %68 : vector<4x256xf32>
    %102 = arith.addf %100, %101 : vector<4x256xf32>
    %c3_i32 = arith.constant 3 : i32
    %103 = arith.index_cast %c3_i32 : i32 to index
    %c0_29 = arith.constant 0 : index
    %c0_30 = arith.constant 0 : index
    %104 = vector.load %arg0[%103, %c0_29, %c0_30] : memref<8x4x768xf32, #tpu.memory_space<vmem>>, vector<1x4x768xf32>
    %105 = vector.shape_cast %104 : vector<1x4x768xf32> to vector<4x768xf32>
    %c0_31 = arith.constant 0 : index
    %c0_32 = arith.constant 0 : index
    %106 = vector.load %arg1[%c0_31, %c0_32] : memref<256x768xf32, #tpu.memory_space<vmem>>, vector<256x768xf32>
    %cst_33 = arith.constant dense<0.000000e+00> : vector<4x768xf32>
    %107 = tpu.matmul %102, %106, %cst_33 {dimension_numbers = #tpu.dot_dimension_numbers<[1], [0], [0], [1], [0, 0, 1, 1], [], []>} : vector<4x256xf32>, vector<256x768xf32>, vector<4x768xf32> -> vector<4x768xf32>
    %108 = vector.extract_strided_slice %105 {offsets = [0, 0], sizes = [4, 256], strides = [1, 1]} : vector<4x768xf32> to vector<4x256xf32>
    %109 = vector.extract_strided_slice %107 {offsets = [0, 0], sizes = [4, 256], strides = [1, 1]} : vector<4x768xf32> to vector<4x256xf32>
    %110 = arith.addf %108, %109 : vector<4x256xf32>
    %111 = arith.negf %110 : vector<4x256xf32>
    %112 = math.exp %111 : vector<4x256xf32>
    %cst_34 = arith.constant 1.000000e+00 : f32
    %113 = vector.broadcast %cst_34 : f32 to vector<4x256xf32>
    %114 = arith.addf %113, %112 : vector<4x256xf32>
    %115 = arith.divf %113, %114 : vector<4x256xf32>
    %116 = vector.extract_strided_slice %105 {offsets = [0, 256], sizes = [4, 256], strides = [1, 1]} : vector<4x768xf32> to vector<4x256xf32>
    %117 = vector.extract_strided_slice %107 {offsets = [0, 256], sizes = [4, 256], strides = [1, 1]} : vector<4x768xf32> to vector<4x256xf32>
    %118 = arith.addf %116, %117 : vector<4x256xf32>
    %119 = arith.negf %118 : vector<4x256xf32>
    %120 = math.exp %119 : vector<4x256xf32>
    %cst_35 = arith.constant 1.000000e+00 : f32
    %121 = vector.broadcast %cst_35 : f32 to vector<4x256xf32>
    %122 = arith.addf %121, %120 : vector<4x256xf32>
    %123 = arith.divf %121, %122 : vector<4x256xf32>
    %124 = vector.extract_strided_slice %105 {offsets = [0, 512], sizes = [4, 256], strides = [1, 1]} : vector<4x768xf32> to vector<4x256xf32>
    %125 = vector.extract_strided_slice %107 {offsets = [0, 512], sizes = [4, 256], strides = [1, 1]} : vector<4x768xf32> to vector<4x256xf32>
    %c0_36 = arith.constant 0 : index
    %c0_37 = arith.constant 0 : index
    %126 = vector.load %arg2[%c0_36, %c0_37] : memref<1x256xf32, #tpu.memory_space<vmem>>, vector<1x256xf32>
    %127 = vector.broadcast %126 : vector<1x256xf32> to vector<4x256xf32>
    %128 = arith.addf %125, %127 : vector<4x256xf32>
    %129 = arith.mulf %115, %128 : vector<4x256xf32>
    %130 = arith.addf %124, %129 : vector<4x256xf32>
    %131 = math.tanh %130 : vector<4x256xf32>
    %cst_38 = arith.constant 1.000000e+00 : f32
    %132 = vector.broadcast %cst_38 : f32 to vector<4x256xf32>
    %133 = arith.subf %132, %123 : vector<4x256xf32>
    %134 = arith.mulf %133, %131 : vector<4x256xf32>
    %135 = arith.mulf %123, %102 : vector<4x256xf32>
    %136 = arith.addf %134, %135 : vector<4x256xf32>
    %c4_i32 = arith.constant 4 : i32
    %137 = arith.index_cast %c4_i32 : i32 to index
    %c0_39 = arith.constant 0 : index
    %c0_40 = arith.constant 0 : index
    %138 = vector.load %arg0[%137, %c0_39, %c0_40] : memref<8x4x768xf32, #tpu.memory_space<vmem>>, vector<1x4x768xf32>
    %139 = vector.shape_cast %138 : vector<1x4x768xf32> to vector<4x768xf32>
    %c0_41 = arith.constant 0 : index
    %c0_42 = arith.constant 0 : index
    %140 = vector.load %arg1[%c0_41, %c0_42] : memref<256x768xf32, #tpu.memory_space<vmem>>, vector<256x768xf32>
    %cst_43 = arith.constant dense<0.000000e+00> : vector<4x768xf32>
    %141 = tpu.matmul %136, %140, %cst_43 {dimension_numbers = #tpu.dot_dimension_numbers<[1], [0], [0], [1], [0, 0, 1, 1], [], []>} : vector<4x256xf32>, vector<256x768xf32>, vector<4x768xf32> -> vector<4x768xf32>
    %142 = vector.extract_strided_slice %139 {offsets = [0, 0], sizes = [4, 256], strides = [1, 1]} : vector<4x768xf32> to vector<4x256xf32>
    %143 = vector.extract_strided_slice %141 {offsets = [0, 0], sizes = [4, 256], strides = [1, 1]} : vector<4x768xf32> to vector<4x256xf32>
    %144 = arith.addf %142, %143 : vector<4x256xf32>
    %145 = arith.negf %144 : vector<4x256xf32>
    %146 = math.exp %145 : vector<4x256xf32>
    %cst_44 = arith.constant 1.000000e+00 : f32
    %147 = vector.broadcast %cst_44 : f32 to vector<4x256xf32>
    %148 = arith.addf %147, %146 : vector<4x256xf32>
    %149 = arith.divf %147, %148 : vector<4x256xf32>
    %150 = vector.extract_strided_slice %139 {offsets = [0, 256], sizes = [4, 256], strides = [1, 1]} : vector<4x768xf32> to vector<4x256xf32>
    %151 = vector.extract_strided_slice %141 {offsets = [0, 256], sizes = [4, 256], strides = [1, 1]} : vector<4x768xf32> to vector<4x256xf32>
    %152 = arith.addf %150, %151 : vector<4x256xf32>
    %153 = arith.negf %152 : vector<4x256xf32>
    %154 = math.exp %153 : vector<4x256xf32>
    %cst_45 = arith.constant 1.000000e+00 : f32
    %155 = vector.broadcast %cst_45 : f32 to vector<4x256xf32>
    %156 = arith.addf %155, %154 : vector<4x256xf32>
    %157 = arith.divf %155, %156 : vector<4x256xf32>
    %158 = vector.extract_strided_slice %139 {offsets = [0, 512], sizes = [4, 256], strides = [1, 1]} : vector<4x768xf32> to vector<4x256xf32>
    %159 = vector.extract_strided_slice %141 {offsets = [0, 512], sizes = [4, 256], strides = [1, 1]} : vector<4x768xf32> to vector<4x256xf32>
    %c0_46 = arith.constant 0 : index
    %c0_47 = arith.constant 0 : index
    %160 = vector.load %arg2[%c0_46, %c0_47] : memref<1x256xf32, #tpu.memory_space<vmem>>, vector<1x256xf32>
    %161 = vector.broadcast %160 : vector<1x256xf32> to vector<4x256xf32>
    %162 = arith.addf %159, %161 : vector<4x256xf32>
    %163 = arith.mulf %149, %162 : vector<4x256xf32>
    %164 = arith.addf %158, %163 : vector<4x256xf32>
    %165 = math.tanh %164 : vector<4x256xf32>
    %cst_48 = arith.constant 1.000000e+00 : f32
    %166 = vector.broadcast %cst_48 : f32 to vector<4x256xf32>
    %167 = arith.subf %166, %157 : vector<4x256xf32>
    %168 = arith.mulf %167, %165 : vector<4x256xf32>
    %169 = arith.mulf %157, %136 : vector<4x256xf32>
    %170 = arith.addf %168, %169 : vector<4x256xf32>
    %c5_i32 = arith.constant 5 : i32
    %171 = arith.index_cast %c5_i32 : i32 to index
    %c0_49 = arith.constant 0 : index
    %c0_50 = arith.constant 0 : index
    %172 = vector.load %arg0[%171, %c0_49, %c0_50] : memref<8x4x768xf32, #tpu.memory_space<vmem>>, vector<1x4x768xf32>
    %173 = vector.shape_cast %172 : vector<1x4x768xf32> to vector<4x768xf32>
    %c0_51 = arith.constant 0 : index
    %c0_52 = arith.constant 0 : index
    %174 = vector.load %arg1[%c0_51, %c0_52] : memref<256x768xf32, #tpu.memory_space<vmem>>, vector<256x768xf32>
    %cst_53 = arith.constant dense<0.000000e+00> : vector<4x768xf32>
    %175 = tpu.matmul %170, %174, %cst_53 {dimension_numbers = #tpu.dot_dimension_numbers<[1], [0], [0], [1], [0, 0, 1, 1], [], []>} : vector<4x256xf32>, vector<256x768xf32>, vector<4x768xf32> -> vector<4x768xf32>
    %176 = vector.extract_strided_slice %173 {offsets = [0, 0], sizes = [4, 256], strides = [1, 1]} : vector<4x768xf32> to vector<4x256xf32>
    %177 = vector.extract_strided_slice %175 {offsets = [0, 0], sizes = [4, 256], strides = [1, 1]} : vector<4x768xf32> to vector<4x256xf32>
    %178 = arith.addf %176, %177 : vector<4x256xf32>
    %179 = arith.negf %178 : vector<4x256xf32>
    %180 = math.exp %179 : vector<4x256xf32>
    %cst_54 = arith.constant 1.000000e+00 : f32
    %181 = vector.broadcast %cst_54 : f32 to vector<4x256xf32>
    %182 = arith.addf %181, %180 : vector<4x256xf32>
    %183 = arith.divf %181, %182 : vector<4x256xf32>
    %184 = vector.extract_strided_slice %173 {offsets = [0, 256], sizes = [4, 256], strides = [1, 1]} : vector<4x768xf32> to vector<4x256xf32>
    %185 = vector.extract_strided_slice %175 {offsets = [0, 256], sizes = [4, 256], strides = [1, 1]} : vector<4x768xf32> to vector<4x256xf32>
    %186 = arith.addf %184, %185 : vector<4x256xf32>
    %187 = arith.negf %186 : vector<4x256xf32>
    %188 = math.exp %187 : vector<4x256xf32>
    %cst_55 = arith.constant 1.000000e+00 : f32
    %189 = vector.broadcast %cst_55 : f32 to vector<4x256xf32>
    %190 = arith.addf %189, %188 : vector<4x256xf32>
    %191 = arith.divf %189, %190 : vector<4x256xf32>
    %192 = vector.extract_strided_slice %173 {offsets = [0, 512], sizes = [4, 256], strides = [1, 1]} : vector<4x768xf32> to vector<4x256xf32>
    %193 = vector.extract_strided_slice %175 {offsets = [0, 512], sizes = [4, 256], strides = [1, 1]} : vector<4x768xf32> to vector<4x256xf32>
    %c0_56 = arith.constant 0 : index
    %c0_57 = arith.constant 0 : index
    %194 = vector.load %arg2[%c0_56, %c0_57] : memref<1x256xf32, #tpu.memory_space<vmem>>, vector<1x256xf32>
    %195 = vector.broadcast %194 : vector<1x256xf32> to vector<4x256xf32>
    %196 = arith.addf %193, %195 : vector<4x256xf32>
    %197 = arith.mulf %183, %196 : vector<4x256xf32>
    %198 = arith.addf %192, %197 : vector<4x256xf32>
    %199 = math.tanh %198 : vector<4x256xf32>
    %cst_58 = arith.constant 1.000000e+00 : f32
    %200 = vector.broadcast %cst_58 : f32 to vector<4x256xf32>
    %201 = arith.subf %200, %191 : vector<4x256xf32>
    %202 = arith.mulf %201, %199 : vector<4x256xf32>
    %203 = arith.mulf %191, %170 : vector<4x256xf32>
    %204 = arith.addf %202, %203 : vector<4x256xf32>
    %c6_i32 = arith.constant 6 : i32
    %205 = arith.index_cast %c6_i32 : i32 to index
    %c0_59 = arith.constant 0 : index
    %c0_60 = arith.constant 0 : index
    %206 = vector.load %arg0[%205, %c0_59, %c0_60] : memref<8x4x768xf32, #tpu.memory_space<vmem>>, vector<1x4x768xf32>
    %207 = vector.shape_cast %206 : vector<1x4x768xf32> to vector<4x768xf32>
    %c0_61 = arith.constant 0 : index
    %c0_62 = arith.constant 0 : index
    %208 = vector.load %arg1[%c0_61, %c0_62] : memref<256x768xf32, #tpu.memory_space<vmem>>, vector<256x768xf32>
    %cst_63 = arith.constant dense<0.000000e+00> : vector<4x768xf32>
    %209 = tpu.matmul %204, %208, %cst_63 {dimension_numbers = #tpu.dot_dimension_numbers<[1], [0], [0], [1], [0, 0, 1, 1], [], []>} : vector<4x256xf32>, vector<256x768xf32>, vector<4x768xf32> -> vector<4x768xf32>
    %210 = vector.extract_strided_slice %207 {offsets = [0, 0], sizes = [4, 256], strides = [1, 1]} : vector<4x768xf32> to vector<4x256xf32>
    %211 = vector.extract_strided_slice %209 {offsets = [0, 0], sizes = [4, 256], strides = [1, 1]} : vector<4x768xf32> to vector<4x256xf32>
    %212 = arith.addf %210, %211 : vector<4x256xf32>
    %213 = arith.negf %212 : vector<4x256xf32>
    %214 = math.exp %213 : vector<4x256xf32>
    %cst_64 = arith.constant 1.000000e+00 : f32
    %215 = vector.broadcast %cst_64 : f32 to vector<4x256xf32>
    %216 = arith.addf %215, %214 : vector<4x256xf32>
    %217 = arith.divf %215, %216 : vector<4x256xf32>
    %218 = vector.extract_strided_slice %207 {offsets = [0, 256], sizes = [4, 256], strides = [1, 1]} : vector<4x768xf32> to vector<4x256xf32>
    %219 = vector.extract_strided_slice %209 {offsets = [0, 256], sizes = [4, 256], strides = [1, 1]} : vector<4x768xf32> to vector<4x256xf32>
    %220 = arith.addf %218, %219 : vector<4x256xf32>
    %221 = arith.negf %220 : vector<4x256xf32>
    %222 = math.exp %221 : vector<4x256xf32>
    %cst_65 = arith.constant 1.000000e+00 : f32
    %223 = vector.broadcast %cst_65 : f32 to vector<4x256xf32>
    %224 = arith.addf %223, %222 : vector<4x256xf32>
    %225 = arith.divf %223, %224 : vector<4x256xf32>
    %226 = vector.extract_strided_slice %207 {offsets = [0, 512], sizes = [4, 256], strides = [1, 1]} : vector<4x768xf32> to vector<4x256xf32>
    %227 = vector.extract_strided_slice %209 {offsets = [0, 512], sizes = [4, 256], strides = [1, 1]} : vector<4x768xf32> to vector<4x256xf32>
    %c0_66 = arith.constant 0 : index
    %c0_67 = arith.constant 0 : index
    %228 = vector.load %arg2[%c0_66, %c0_67] : memref<1x256xf32, #tpu.memory_space<vmem>>, vector<1x256xf32>
    %229 = vector.broadcast %228 : vector<1x256xf32> to vector<4x256xf32>
    %230 = arith.addf %227, %229 : vector<4x256xf32>
    %231 = arith.mulf %217, %230 : vector<4x256xf32>
    %232 = arith.addf %226, %231 : vector<4x256xf32>
    %233 = math.tanh %232 : vector<4x256xf32>
    %cst_68 = arith.constant 1.000000e+00 : f32
    %234 = vector.broadcast %cst_68 : f32 to vector<4x256xf32>
    %235 = arith.subf %234, %225 : vector<4x256xf32>
    %236 = arith.mulf %235, %233 : vector<4x256xf32>
    %237 = arith.mulf %225, %204 : vector<4x256xf32>
    %238 = arith.addf %236, %237 : vector<4x256xf32>
    %c7_i32 = arith.constant 7 : i32
    %239 = arith.index_cast %c7_i32 : i32 to index
    %c0_69 = arith.constant 0 : index
    %c0_70 = arith.constant 0 : index
    %240 = vector.load %arg0[%239, %c0_69, %c0_70] : memref<8x4x768xf32, #tpu.memory_space<vmem>>, vector<1x4x768xf32>
    %241 = vector.shape_cast %240 : vector<1x4x768xf32> to vector<4x768xf32>
    %c0_71 = arith.constant 0 : index
    %c0_72 = arith.constant 0 : index
    %242 = vector.load %arg1[%c0_71, %c0_72] : memref<256x768xf32, #tpu.memory_space<vmem>>, vector<256x768xf32>
    %cst_73 = arith.constant dense<0.000000e+00> : vector<4x768xf32>
    %243 = tpu.matmul %238, %242, %cst_73 {dimension_numbers = #tpu.dot_dimension_numbers<[1], [0], [0], [1], [0, 0, 1, 1], [], []>} : vector<4x256xf32>, vector<256x768xf32>, vector<4x768xf32> -> vector<4x768xf32>
    %244 = vector.extract_strided_slice %241 {offsets = [0, 0], sizes = [4, 256], strides = [1, 1]} : vector<4x768xf32> to vector<4x256xf32>
    %245 = vector.extract_strided_slice %243 {offsets = [0, 0], sizes = [4, 256], strides = [1, 1]} : vector<4x768xf32> to vector<4x256xf32>
    %246 = arith.addf %244, %245 : vector<4x256xf32>
    %247 = arith.negf %246 : vector<4x256xf32>
    %248 = math.exp %247 : vector<4x256xf32>
    %cst_74 = arith.constant 1.000000e+00 : f32
    %249 = vector.broadcast %cst_74 : f32 to vector<4x256xf32>
    %250 = arith.addf %249, %248 : vector<4x256xf32>
    %251 = arith.divf %249, %250 : vector<4x256xf32>
    %252 = vector.extract_strided_slice %241 {offsets = [0, 256], sizes = [4, 256], strides = [1, 1]} : vector<4x768xf32> to vector<4x256xf32>
    %253 = vector.extract_strided_slice %243 {offsets = [0, 256], sizes = [4, 256], strides = [1, 1]} : vector<4x768xf32> to vector<4x256xf32>
    %254 = arith.addf %252, %253 : vector<4x256xf32>
    %255 = arith.negf %254 : vector<4x256xf32>
    %256 = math.exp %255 : vector<4x256xf32>
    %cst_75 = arith.constant 1.000000e+00 : f32
    %257 = vector.broadcast %cst_75 : f32 to vector<4x256xf32>
    %258 = arith.addf %257, %256 : vector<4x256xf32>
    %259 = arith.divf %257, %258 : vector<4x256xf32>
    %260 = vector.extract_strided_slice %241 {offsets = [0, 512], sizes = [4, 256], strides = [1, 1]} : vector<4x768xf32> to vector<4x256xf32>
    %261 = vector.extract_strided_slice %243 {offsets = [0, 512], sizes = [4, 256], strides = [1, 1]} : vector<4x768xf32> to vector<4x256xf32>
    %c0_76 = arith.constant 0 : index
    %c0_77 = arith.constant 0 : index
    %262 = vector.load %arg2[%c0_76, %c0_77] : memref<1x256xf32, #tpu.memory_space<vmem>>, vector<1x256xf32>
    %263 = vector.broadcast %262 : vector<1x256xf32> to vector<4x256xf32>
    %264 = arith.addf %261, %263 : vector<4x256xf32>
    %265 = arith.mulf %251, %264 : vector<4x256xf32>
    %266 = arith.addf %260, %265 : vector<4x256xf32>
    %267 = math.tanh %266 : vector<4x256xf32>
    %cst_78 = arith.constant 1.000000e+00 : f32
    %268 = vector.broadcast %cst_78 : f32 to vector<4x256xf32>
    %269 = arith.subf %268, %259 : vector<4x256xf32>
    %270 = arith.mulf %269, %267 : vector<4x256xf32>
    %271 = arith.mulf %259, %238 : vector<4x256xf32>
    %272 = arith.addf %270, %271 : vector<4x256xf32>
    %c8_i32 = arith.constant 8 : i32
    %c0_79 = arith.constant 0 : index
    %c0_80 = arith.constant 0 : index
    %273 = vector.load %arg3[%c0_79, %c0_80] : memref<4x256xf32, #tpu.memory_space<vmem>>, vector<4x256xf32>
    tpu.vector_store %arg3[%c0_79, %c0_80], %272 {strides = array<i32>} : memref<4x256xf32, #tpu.memory_space<vmem>>, vector<4x256xf32>,
    return
  }
}

module attributes {stable_mosaic.version = 11 : i64} {
  func.func @_encoder_kernel(%arg0: memref<4x8x32xf32, #tpu.memory_space<vmem>>, %arg1: memref<32x96xf32, #tpu.memory_space<vmem>>, %arg2: memref<1x96xf32, #tpu.memory_space<vmem>>, %arg3: memref<32x32xf32, #tpu.memory_space<vmem>>, %arg4: memref<1x32xf32, #tpu.memory_space<vmem>>, %arg5: memref<32x32xf32, #tpu.memory_space<vmem>>, %arg6: memref<1x32xf32, #tpu.memory_space<vmem>>, %arg7: memref<32x32xf32, #tpu.memory_space<vmem>>, %arg8: memref<1x32xf32, #tpu.memory_space<vmem>>, %arg9: memref<32x32xf32, #tpu.memory_space<vmem>>, %arg10: memref<1x32xf32, #tpu.memory_space<vmem>>, %arg11: memref<32x64xf32, #tpu.memory_space<vmem>>, %arg12: memref<1x64xf32, #tpu.memory_space<vmem>>, %arg13: memref<64x32xf32, #tpu.memory_space<vmem>>, %arg14: memref<1x32xf32, #tpu.memory_space<vmem>>, %arg15: memref<32x32xf32, #tpu.memory_space<vmem>>, %arg16: memref<1x32xf32, #tpu.memory_space<vmem>>, %arg17: memref<32x64xf32, #tpu.memory_space<vmem>>, %arg18: memref<1x64xf32, #tpu.memory_space<vmem>>, %arg19: memref<32x2xf32, #tpu.memory_space<vmem>>, %arg20: memref<1x2xf32, #tpu.memory_space<vmem>>, %arg21: memref<4x2xf32, #tpu.memory_space<vmem>>, %arg22: memref<4x32xf32, #tpu.memory_space<vmem>>) attributes {dimension_semantics = [], scalar_prefetch = 0 : i64, scratch_operands = 0 : i64, tpu.core_type = #tpu.core_type<tc>} {
    %c0 = arith.constant 0 : index
    %c0_0 = arith.constant 0 : index
    %c0_1 = arith.constant 0 : index
    %0 = vector.load %arg0[%c0, %c0_0, %c0_1] : memref<4x8x32xf32, #tpu.memory_space<vmem>>, vector<4x8x32xf32>
    %1 = vector.shape_cast %0 : vector<4x8x32xf32> to vector<32x32xf32>
    %c0_2 = arith.constant 0 : index
    %c0_3 = arith.constant 0 : index
    %2 = vector.load %arg1[%c0_2, %c0_3] : memref<32x96xf32, #tpu.memory_space<vmem>>, vector<32x96xf32>
    %cst = arith.constant dense<0.000000e+00> : vector<32x96xf32>
    %3 = tpu.matmul %1, %2, %cst {dimension_numbers = #tpu.dot_dimension_numbers<[1], [0], [0], [1], [0, 0, 1, 1], [], []>} : vector<32x32xf32>, vector<32x96xf32>, vector<32x96xf32> -> vector<32x96xf32>
    %c0_4 = arith.constant 0 : index
    %c0_5 = arith.constant 0 : index
    %4 = vector.load %arg2[%c0_4, %c0_5] : memref<1x96xf32, #tpu.memory_space<vmem>>, vector<1x96xf32>
    %5 = vector.broadcast %4 : vector<1x96xf32> to vector<32x96xf32>
    %6 = arith.addf %3, %5 : vector<32x96xf32>
    %7 = math.tanh %6 : vector<32x96xf32>
    %8 = vector.extract_strided_slice %7 {offsets = [0, 0], sizes = [32, 32], strides = [1, 1]} : vector<32x96xf32> to vector<32x32xf32>
    %9 = vector.extract_strided_slice %7 {offsets = [0, 32], sizes = [32, 32], strides = [1, 1]} : vector<32x96xf32> to vector<32x32xf32>
    %10 = vector.extract_strided_slice %7 {offsets = [0, 64], sizes = [32, 32], strides = [1, 1]} : vector<32x96xf32> to vector<32x32xf32>
    %c0_6 = arith.constant 0 : index
    %c0_7 = arith.constant 0 : index
    %11 = vector.load %arg3[%c0_6, %c0_7] : memref<32x32xf32, #tpu.memory_space<vmem>>, vector<32x32xf32>
    %cst_8 = arith.constant dense<0.000000e+00> : vector<32x32xf32>
    %12 = tpu.matmul %8, %11, %cst_8 {dimension_numbers = #tpu.dot_dimension_numbers<[1], [0], [0], [1], [0, 0, 1, 1], [], []>} : vector<32x32xf32>, vector<32x32xf32>, vector<32x32xf32> -> vector<32x32xf32>
    %c0_9 = arith.constant 0 : index
    %c0_10 = arith.constant 0 : index
    %13 = vector.load %arg4[%c0_9, %c0_10] : memref<1x32xf32, #tpu.memory_space<vmem>>, vector<1x32xf32>
    %14 = vector.broadcast %13 : vector<1x32xf32> to vector<32x32xf32>
    %15 = arith.addf %12, %14 : vector<32x32xf32>
    %16 = vector.shape_cast %15 : vector<32x32xf32> to vector<4x8x32xf32>
    %c0_11 = arith.constant 0 : index
    %c0_12 = arith.constant 0 : index
    %17 = vector.load %arg5[%c0_11, %c0_12] : memref<32x32xf32, #tpu.memory_space<vmem>>, vector<32x32xf32>
    %cst_13 = arith.constant dense<0.000000e+00> : vector<32x32xf32>
    %18 = tpu.matmul %9, %17, %cst_13 {dimension_numbers = #tpu.dot_dimension_numbers<[1], [0], [0], [1], [0, 0, 1, 1], [], []>} : vector<32x32xf32>, vector<32x32xf32>, vector<32x32xf32> -> vector<32x32xf32>
    %c0_14 = arith.constant 0 : index
    %c0_15 = arith.constant 0 : index
    %19 = vector.load %arg6[%c0_14, %c0_15] : memref<1x32xf32, #tpu.memory_space<vmem>>, vector<1x32xf32>
    %20 = vector.broadcast %19 : vector<1x32xf32> to vector<32x32xf32>
    %21 = arith.addf %18, %20 : vector<32x32xf32>
    %22 = vector.shape_cast %21 : vector<32x32xf32> to vector<4x8x32xf32>
    %c0_16 = arith.constant 0 : index
    %c0_17 = arith.constant 0 : index
    %23 = vector.load %arg7[%c0_16, %c0_17] : memref<32x32xf32, #tpu.memory_space<vmem>>, vector<32x32xf32>
    %cst_18 = arith.constant dense<0.000000e+00> : vector<32x32xf32>
    %24 = tpu.matmul %10, %23, %cst_18 {dimension_numbers = #tpu.dot_dimension_numbers<[1], [0], [0], [1], [0, 0, 1, 1], [], []>} : vector<32x32xf32>, vector<32x32xf32>, vector<32x32xf32> -> vector<32x32xf32>
    %c0_19 = arith.constant 0 : index
    %c0_20 = arith.constant 0 : index
    %25 = vector.load %arg8[%c0_19, %c0_20] : memref<1x32xf32, #tpu.memory_space<vmem>>, vector<1x32xf32>
    %26 = vector.broadcast %25 : vector<1x32xf32> to vector<32x32xf32>
    %27 = arith.addf %24, %26 : vector<32x32xf32>
    %28 = vector.shape_cast %27 : vector<32x32xf32> to vector<4x8x32xf32>
    %29 = vector.extract_strided_slice %16 {offsets = [0, 0, 0], sizes = [4, 8, 8], strides = [1, 1, 1]} : vector<4x8x32xf32> to vector<4x8x8xf32>
    %30 = vector.extract_strided_slice %22 {offsets = [0, 0, 0], sizes = [4, 8, 8], strides = [1, 1, 1]} : vector<4x8x32xf32> to vector<4x8x8xf32>
    %31 = vector.extract_strided_slice %28 {offsets = [0, 0, 0], sizes = [4, 8, 8], strides = [1, 1, 1]} : vector<4x8x32xf32> to vector<4x8x8xf32>
    "tpu.trace_start"() <{level = 10 : i32, message = "bfd,bgd->bfg"}> : () -> ()
    %cst_21 = arith.constant dense<0.000000e+00> : vector<4x8x8xf32>
    %32 = tpu.matmul %29, %30, %cst_21 {dimension_numbers = #tpu.dot_dimension_numbers<[2], [2], [1], [1], [0, 0, 0, 1, 1, 1], [0], [0]>} : vector<4x8x8xf32>, vector<4x8x8xf32>, vector<4x8x8xf32> -> vector<4x8x8xf32>
    "tpu.trace_stop"() : () -> ()
    %cst_22 = arith.constant 0.353553385 : f32
    %33 = vector.broadcast %cst_22 : f32 to vector<4x8x8xf32>
    %34 = arith.mulf %32, %33 : vector<4x8x8xf32>
    %cst_23 = arith.constant dense<0xFF800000> : vector<4x8xf32>
    %35 = vector.multi_reduction <maximumf>, %34, %cst_23 [2] : vector<4x8x8xf32> to vector<4x8xf32>
    %36 = vector.shape_cast %35 : vector<4x8xf32> to vector<4x8x1xf32>
    %37 = vector.broadcast %36 : vector<4x8x1xf32> to vector<4x8x8xf32>
    %38 = arith.subf %34, %37 : vector<4x8x8xf32>
    %39 = math.exp %38 : vector<4x8x8xf32>
    %cst_24 = arith.constant dense<0.000000e+00> : vector<4x8xf32>
    %40 = vector.multi_reduction <add>, %39, %cst_24 [2] : vector<4x8x8xf32> to vector<4x8xf32>
    %41 = vector.shape_cast %40 : vector<4x8xf32> to vector<4x8x1xf32>
    %42 = vector.broadcast %41 : vector<4x8x1xf32> to vector<4x8x8xf32>
    %43 = arith.divf %39, %42 : vector<4x8x8xf32>
    "tpu.trace_start"() <{level = 10 : i32, message = "bfg,bgd->bfd"}> : () -> ()
    %cst_25 = arith.constant dense<0.000000e+00> : vector<4x8x8xf32>
    %44 = tpu.matmul %43, %31, %cst_25 {dimension_numbers = #tpu.dot_dimension_numbers<[2], [1], [1], [2], [0, 0, 0, 1, 1, 2], [0], [0]>} : vector<4x8x8xf32>, vector<4x8x8xf32>, vector<4x8x8xf32> -> vector<4x8x8xf32>
    "tpu.trace_stop"() : () -> ()
    %45 = vector.extract_strided_slice %16 {offsets = [0, 0, 8], sizes = [4, 8, 8], strides = [1, 1, 1]} : vector<4x8x32xf32> to vector<4x8x8xf32>
    %46 = vector.extract_strided_slice %22 {offsets = [0, 0, 8], sizes = [4, 8, 8], strides = [1, 1, 1]} : vector<4x8x32xf32> to vector<4x8x8xf32>
    %47 = vector.extract_strided_slice %28 {offsets = [0, 0, 8], sizes = [4, 8, 8], strides = [1, 1, 1]} : vector<4x8x32xf32> to vector<4x8x8xf32>
    "tpu.trace_start"() <{level = 10 : i32, message = "bfd,bgd->bfg"}> : () -> ()
    %cst_26 = arith.constant dense<0.000000e+00> : vector<4x8x8xf32>
    %48 = tpu.matmul %45, %46, %cst_26 {dimension_numbers = #tpu.dot_dimension_numbers<[2], [2], [1], [1], [0, 0, 0, 1, 1, 1], [0], [0]>} : vector<4x8x8xf32>, vector<4x8x8xf32>, vector<4x8x8xf32> -> vector<4x8x8xf32>
    "tpu.trace_stop"() : () -> ()
    %cst_27 = arith.constant 0.353553385 : f32
    %49 = vector.broadcast %cst_27 : f32 to vector<4x8x8xf32>
    %50 = arith.mulf %48, %49 : vector<4x8x8xf32>
    %cst_28 = arith.constant dense<0xFF800000> : vector<4x8xf32>
    %51 = vector.multi_reduction <maximumf>, %50, %cst_28 [2] : vector<4x8x8xf32> to vector<4x8xf32>
    %52 = vector.shape_cast %51 : vector<4x8xf32> to vector<4x8x1xf32>
    %53 = vector.broadcast %52 : vector<4x8x1xf32> to vector<4x8x8xf32>
    %54 = arith.subf %50, %53 : vector<4x8x8xf32>
    %55 = math.exp %54 : vector<4x8x8xf32>
    %cst_29 = arith.constant dense<0.000000e+00> : vector<4x8xf32>
    %56 = vector.multi_reduction <add>, %55, %cst_29 [2] : vector<4x8x8xf32> to vector<4x8xf32>
    %57 = vector.shape_cast %56 : vector<4x8xf32> to vector<4x8x1xf32>
    %58 = vector.broadcast %57 : vector<4x8x1xf32> to vector<4x8x8xf32>
    %59 = arith.divf %55, %58 : vector<4x8x8xf32>
    "tpu.trace_start"() <{level = 10 : i32, message = "bfg,bgd->bfd"}> : () -> ()
    %cst_30 = arith.constant dense<0.000000e+00> : vector<4x8x8xf32>
    %60 = tpu.matmul %59, %47, %cst_30 {dimension_numbers = #tpu.dot_dimension_numbers<[2], [1], [1], [2], [0, 0, 0, 1, 1, 2], [0], [0]>} : vector<4x8x8xf32>, vector<4x8x8xf32>, vector<4x8x8xf32> -> vector<4x8x8xf32>
    "tpu.trace_stop"() : () -> ()
    %61 = vector.extract_strided_slice %16 {offsets = [0, 0, 16], sizes = [4, 8, 8], strides = [1, 1, 1]} : vector<4x8x32xf32> to vector<4x8x8xf32>
    %62 = vector.extract_strided_slice %22 {offsets = [0, 0, 16], sizes = [4, 8, 8], strides = [1, 1, 1]} : vector<4x8x32xf32> to vector<4x8x8xf32>
    %63 = vector.extract_strided_slice %28 {offsets = [0, 0, 16], sizes = [4, 8, 8], strides = [1, 1, 1]} : vector<4x8x32xf32> to vector<4x8x8xf32>
    "tpu.trace_start"() <{level = 10 : i32, message = "bfd,bgd->bfg"}> : () -> ()
    %cst_31 = arith.constant dense<0.000000e+00> : vector<4x8x8xf32>
    %64 = tpu.matmul %61, %62, %cst_31 {dimension_numbers = #tpu.dot_dimension_numbers<[2], [2], [1], [1], [0, 0, 0, 1, 1, 1], [0], [0]>} : vector<4x8x8xf32>, vector<4x8x8xf32>, vector<4x8x8xf32> -> vector<4x8x8xf32>
    "tpu.trace_stop"() : () -> ()
    %cst_32 = arith.constant 0.353553385 : f32
    %65 = vector.broadcast %cst_32 : f32 to vector<4x8x8xf32>
    %66 = arith.mulf %64, %65 : vector<4x8x8xf32>
    %cst_33 = arith.constant dense<0xFF800000> : vector<4x8xf32>
    %67 = vector.multi_reduction <maximumf>, %66, %cst_33 [2] : vector<4x8x8xf32> to vector<4x8xf32>
    %68 = vector.shape_cast %67 : vector<4x8xf32> to vector<4x8x1xf32>
    %69 = vector.broadcast %68 : vector<4x8x1xf32> to vector<4x8x8xf32>
    %70 = arith.subf %66, %69 : vector<4x8x8xf32>
    %71 = math.exp %70 : vector<4x8x8xf32>
    %cst_34 = arith.constant dense<0.000000e+00> : vector<4x8xf32>
    %72 = vector.multi_reduction <add>, %71, %cst_34 [2] : vector<4x8x8xf32> to vector<4x8xf32>
    %73 = vector.shape_cast %72 : vector<4x8xf32> to vector<4x8x1xf32>
    %74 = vector.broadcast %73 : vector<4x8x1xf32> to vector<4x8x8xf32>
    %75 = arith.divf %71, %74 : vector<4x8x8xf32>
    "tpu.trace_start"() <{level = 10 : i32, message = "bfg,bgd->bfd"}> : () -> ()
    %cst_35 = arith.constant dense<0.000000e+00> : vector<4x8x8xf32>
    %76 = tpu.matmul %75, %63, %cst_35 {dimension_numbers = #tpu.dot_dimension_numbers<[2], [1], [1], [2], [0, 0, 0, 1, 1, 2], [0], [0]>} : vector<4x8x8xf32>, vector<4x8x8xf32>, vector<4x8x8xf32> -> vector<4x8x8xf32>
    "tpu.trace_stop"() : () -> ()
    %77 = vector.extract_strided_slice %16 {offsets = [0, 0, 24], sizes = [4, 8, 8], strides = [1, 1, 1]} : vector<4x8x32xf32> to vector<4x8x8xf32>
    %78 = vector.extract_strided_slice %22 {offsets = [0, 0, 24], sizes = [4, 8, 8], strides = [1, 1, 1]} : vector<4x8x32xf32> to vector<4x8x8xf32>
    %79 = vector.extract_strided_slice %28 {offsets = [0, 0, 24], sizes = [4, 8, 8], strides = [1, 1, 1]} : vector<4x8x32xf32> to vector<4x8x8xf32>
    "tpu.trace_start"() <{level = 10 : i32, message = "bfd,bgd->bfg"}> : () -> ()
    %cst_36 = arith.constant dense<0.000000e+00> : vector<4x8x8xf32>
    %80 = tpu.matmul %77, %78, %cst_36 {dimension_numbers = #tpu.dot_dimension_numbers<[2], [2], [1], [1], [0, 0, 0, 1, 1, 1], [0], [0]>} : vector<4x8x8xf32>, vector<4x8x8xf32>, vector<4x8x8xf32> -> vector<4x8x8xf32>
    "tpu.trace_stop"() : () -> ()
    %cst_37 = arith.constant 0.353553385 : f32
    %81 = vector.broadcast %cst_37 : f32 to vector<4x8x8xf32>
    %82 = arith.mulf %80, %81 : vector<4x8x8xf32>
    %cst_38 = arith.constant dense<0xFF800000> : vector<4x8xf32>
    %83 = vector.multi_reduction <maximumf>, %82, %cst_38 [2] : vector<4x8x8xf32> to vector<4x8xf32>
    %84 = vector.shape_cast %83 : vector<4x8xf32> to vector<4x8x1xf32>
    %85 = vector.broadcast %84 : vector<4x8x1xf32> to vector<4x8x8xf32>
    %86 = arith.subf %82, %85 : vector<4x8x8xf32>
    %87 = math.exp %86 : vector<4x8x8xf32>
    %cst_39 = arith.constant dense<0.000000e+00> : vector<4x8xf32>
    %88 = vector.multi_reduction <add>, %87, %cst_39 [2] : vector<4x8x8xf32> to vector<4x8xf32>
    %89 = vector.shape_cast %88 : vector<4x8xf32> to vector<4x8x1xf32>
    %90 = vector.broadcast %89 : vector<4x8x1xf32> to vector<4x8x8xf32>
    %91 = arith.divf %87, %90 : vector<4x8x8xf32>
    "tpu.trace_start"() <{level = 10 : i32, message = "bfg,bgd->bfd"}> : () -> ()
    %cst_40 = arith.constant dense<0.000000e+00> : vector<4x8x8xf32>
    %92 = tpu.matmul %91, %79, %cst_40 {dimension_numbers = #tpu.dot_dimension_numbers<[2], [1], [1], [2], [0, 0, 0, 1, 1, 2], [0], [0]>} : vector<4x8x8xf32>, vector<4x8x8xf32>, vector<4x8x8xf32> -> vector<4x8x8xf32>
    "tpu.trace_stop"() : () -> ()
    %93 = tpu.concatenate %44, %60, %76, %92 in 2 : vector<4x8x8xf32>, vector<4x8x8xf32>, vector<4x8x8xf32>, vector<4x8x8xf32> -> vector<4x8x32xf32>
    %94 = vector.shape_cast %93 : vector<4x8x32xf32> to vector<32x32xf32>
    %c0_41 = arith.constant 0 : index
    %c0_42 = arith.constant 0 : index
    %95 = vector.load %arg9[%c0_41, %c0_42] : memref<32x32xf32, #tpu.memory_space<vmem>>, vector<32x32xf32>
    %cst_43 = arith.constant dense<0.000000e+00> : vector<32x32xf32>
    %96 = tpu.matmul %94, %95, %cst_43 {dimension_numbers = #tpu.dot_dimension_numbers<[1], [0], [0], [1], [0, 0, 1, 1], [], []>} : vector<32x32xf32>, vector<32x32xf32>, vector<32x32xf32> -> vector<32x32xf32>
    %c0_44 = arith.constant 0 : index
    %c0_45 = arith.constant 0 : index
    %97 = vector.load %arg10[%c0_44, %c0_45] : memref<1x32xf32, #tpu.memory_space<vmem>>, vector<1x32xf32>
    %98 = vector.broadcast %97 : vector<1x32xf32> to vector<32x32xf32>
    %99 = arith.addf %96, %98 : vector<32x32xf32>
    %100 = arith.addf %1, %99 : vector<32x32xf32>
    %c0_46 = arith.constant 0 : index
    %c0_47 = arith.constant 0 : index
    %101 = vector.load %arg11[%c0_46, %c0_47] : memref<32x64xf32, #tpu.memory_space<vmem>>, vector<32x64xf32>
    %cst_48 = arith.constant dense<0.000000e+00> : vector<32x64xf32>
    %102 = tpu.matmul %100, %101, %cst_48 {dimension_numbers = #tpu.dot_dimension_numbers<[1], [0], [0], [1], [0, 0, 1, 1], [], []>} : vector<32x32xf32>, vector<32x64xf32>, vector<32x64xf32> -> vector<32x64xf32>
    %c0_49 = arith.constant 0 : index
    %c0_50 = arith.constant 0 : index
    %103 = vector.load %arg12[%c0_49, %c0_50] : memref<1x64xf32, #tpu.memory_space<vmem>>, vector<1x64xf32>
    %104 = vector.broadcast %103 : vector<1x64xf32> to vector<32x64xf32>
    %105 = arith.addf %102, %104 : vector<32x64xf32>
    %cst_51 = arith.constant 0.000000e+00 : f32
    %106 = vector.broadcast %cst_51 : f32 to vector<32x64xf32>
    %107 = arith.maximumf %105, %106 : vector<32x64xf32>
    %c0_52 = arith.constant 0 : index
    %c0_53 = arith.constant 0 : index
    %108 = vector.load %arg13[%c0_52, %c0_53] : memref<64x32xf32, #tpu.memory_space<vmem>>, vector<64x32xf32>
    %cst_54 = arith.constant dense<0.000000e+00> : vector<32x32xf32>
    %109 = tpu.matmul %107, %108, %cst_54 {dimension_numbers = #tpu.dot_dimension_numbers<[1], [0], [0], [1], [0, 0, 1, 1], [], []>} : vector<32x64xf32>, vector<64x32xf32>, vector<32x32xf32> -> vector<32x32xf32>
    %c0_55 = arith.constant 0 : index
    %c0_56 = arith.constant 0 : index
    %110 = vector.load %arg14[%c0_55, %c0_56] : memref<1x32xf32, #tpu.memory_space<vmem>>, vector<1x32xf32>
    %111 = vector.broadcast %110 : vector<1x32xf32> to vector<32x32xf32>
    %112 = arith.addf %109, %111 : vector<32x32xf32>
    %113 = arith.addf %100, %112 : vector<32x32xf32>
    %114 = vector.shape_cast %113 : vector<32x32xf32> to vector<4x8x32xf32>
    %cst_57 = arith.constant dense<0.000000e+00> : vector<4x32xf32>
    %115 = vector.multi_reduction <add>, %114, %cst_57 [1] : vector<4x8x32xf32> to vector<4x32xf32>
    %cst_58 = arith.constant 8.000000e+00 : f32
    %116 = vector.broadcast %cst_58 : f32 to vector<4x32xf32>
    %117 = arith.divf %115, %116 : vector<4x32xf32>
    %c0_59 = arith.constant 0 : index
    %c0_60 = arith.constant 0 : index
    %118 = vector.load %arg15[%c0_59, %c0_60] : memref<32x32xf32, #tpu.memory_space<vmem>>, vector<32x32xf32>
    %cst_61 = arith.constant dense<0.000000e+00> : vector<4x32xf32>
    %119 = tpu.matmul %117, %118, %cst_61 {dimension_numbers = #tpu.dot_dimension_numbers<[1], [0], [0], [1], [0, 0, 1, 1], [], []>} : vector<4x32xf32>, vector<32x32xf32>, vector<4x32xf32> -> vector<4x32xf32>
    %c0_62 = arith.constant 0 : index
    %c0_63 = arith.constant 0 : index
    %120 = vector.load %arg16[%c0_62, %c0_63] : memref<1x32xf32, #tpu.memory_space<vmem>>, vector<1x32xf32>
    %121 = vector.broadcast %120 : vector<1x32xf32> to vector<4x32xf32>
    %122 = arith.addf %119, %121 : vector<4x32xf32>
    %c0_64 = arith.constant 0 : index
    %c0_65 = arith.constant 0 : index
    %123 = vector.load %arg17[%c0_64, %c0_65] : memref<32x64xf32, #tpu.memory_space<vmem>>, vector<32x64xf32>
    %cst_66 = arith.constant dense<0.000000e+00> : vector<32x64xf32>
    %124 = tpu.matmul %113, %123, %cst_66 {dimension_numbers = #tpu.dot_dimension_numbers<[1], [0], [0], [1], [0, 0, 1, 1], [], []>} : vector<32x32xf32>, vector<32x64xf32>, vector<32x64xf32> -> vector<32x64xf32>
    %c0_67 = arith.constant 0 : index
    %c0_68 = arith.constant 0 : index
    %125 = vector.load %arg18[%c0_67, %c0_68] : memref<1x64xf32, #tpu.memory_space<vmem>>, vector<1x64xf32>
    %126 = vector.broadcast %125 : vector<1x64xf32> to vector<32x64xf32>
    %127 = arith.addf %124, %126 : vector<32x64xf32>
    %128 = vector.extract_strided_slice %127 {offsets = [0, 0], sizes = [32, 32], strides = [1, 1]} : vector<32x64xf32> to vector<32x32xf32>
    %129 = vector.shape_cast %128 : vector<32x32xf32> to vector<4x8x32xf32>
    %130 = vector.extract_strided_slice %127 {offsets = [0, 32], sizes = [32, 32], strides = [1, 1]} : vector<32x64xf32> to vector<32x32xf32>
    %131 = vector.shape_cast %130 : vector<32x32xf32> to vector<4x8x32xf32>
    %132 = vector.shape_cast %122 : vector<4x32xf32> to vector<4x1x32xf32>
    %133 = vector.broadcast %132 : vector<4x1x32xf32> to vector<4x8x32xf32>
    %134 = arith.mulf %129, %133 : vector<4x8x32xf32>
    %cst_69 = arith.constant dense<0.000000e+00> : vector<4x8xf32>
    %135 = vector.multi_reduction <add>, %134, %cst_69 [2] : vector<4x8x32xf32> to vector<4x8xf32>
    %136 = vector.shape_cast %135 : vector<4x8xf32> to vector<4x8x1xf32>
    %cst_70 = arith.constant dense<0xFF800000> : vector<4x1xf32>
    %137 = vector.multi_reduction <maximumf>, %136, %cst_70 [1] : vector<4x8x1xf32> to vector<4x1xf32>
    %138 = vector.shape_cast %137 : vector<4x1xf32> to vector<4x1x1xf32>
    %139 = vector.broadcast %138 : vector<4x1x1xf32> to vector<4x8x1xf32>
    %140 = arith.subf %136, %139 : vector<4x8x1xf32>
    %141 = math.exp %140 : vector<4x8x1xf32>
    %cst_71 = arith.constant dense<0.000000e+00> : vector<4x1xf32>
    %142 = vector.multi_reduction <add>, %141, %cst_71 [1] : vector<4x8x1xf32> to vector<4x1xf32>
    %143 = vector.shape_cast %142 : vector<4x1xf32> to vector<4x1x1xf32>
    %144 = vector.broadcast %143 : vector<4x1x1xf32> to vector<4x8x1xf32>
    %145 = arith.divf %141, %144 : vector<4x8x1xf32>
    %146 = vector.broadcast %145 : vector<4x8x1xf32> to vector<4x8x32xf32>
    %147 = arith.mulf %146, %131 : vector<4x8x32xf32>
    %cst_72 = arith.constant dense<0.000000e+00> : vector<4x32xf32>
    %148 = vector.multi_reduction <add>, %147, %cst_72 [1] : vector<4x8x32xf32> to vector<4x32xf32>
    %c0_73 = arith.constant 0 : index
    %c0_74 = arith.constant 0 : index
    %149 = vector.load %arg22[%c0_73, %c0_74] : memref<4x32xf32, #tpu.memory_space<vmem>>, vector<4x32xf32>
    tpu.vector_store %arg22[%c0_73, %c0_74], %148 {strides = array<i32>} : memref<4x32xf32, #tpu.memory_space<vmem>>, vector<4x32xf32>,
    %c0_75 = arith.constant 0 : index
    %c0_76 = arith.constant 0 : index
    %150 = vector.load %arg19[%c0_75, %c0_76] : memref<32x2xf32, #tpu.memory_space<vmem>>, vector<32x2xf32>
    %cst_77 = arith.constant dense<0.000000e+00> : vector<4x2xf32>
    %151 = tpu.matmul %148, %150, %cst_77 {dimension_numbers = #tpu.dot_dimension_numbers<[1], [0], [0], [1], [0, 0, 1, 1], [], []>} : vector<4x32xf32>, vector<32x2xf32>, vector<4x2xf32> -> vector<4x2xf32>
    %c0_78 = arith.constant 0 : index
    %c0_79 = arith.constant 0 : index
    %152 = vector.load %arg20[%c0_78, %c0_79] : memref<1x2xf32, #tpu.memory_space<vmem>>, vector<1x2xf32>
    %153 = vector.broadcast %152 : vector<1x2xf32> to vector<4x2xf32>
    %154 = arith.addf %151, %153 : vector<4x2xf32>
    %155 = arith.negf %154 : vector<4x2xf32>
    %156 = math.exp %155 : vector<4x2xf32>
    %cst_80 = arith.constant 1.000000e+00 : f32
    %157 = vector.broadcast %cst_80 : f32 to vector<4x2xf32>
    %158 = arith.addf %157, %156 : vector<4x2xf32>
    %159 = arith.divf %157, %158 : vector<4x2xf32>
    %c0_81 = arith.constant 0 : index
    %c0_82 = arith.constant 0 : index
    %160 = vector.load %arg21[%c0_81, %c0_82] : memref<4x2xf32, #tpu.memory_space<vmem>>, vector<4x2xf32>
    tpu.vector_store %arg21[%c0_81, %c0_82], %159 {strides = array<i32>} : memref<4x2xf32, #tpu.memory_space<vmem>>, vector<4x2xf32>,
    return
  }
}

</mosaic_0001>

<llo_original>
// kernel: squeeze.23
$region0: #{squeeze.23}
  %s0 = inlined_call_operand.vmem [shape: f32[8,1,32], index: 0, kind: input, shape index: {}]
  %s1 = inlined_call_operand.vmem [shape: f32[1,256], index: 1, kind: output, shape index: {}]
  $region1: #{squeeze.23} parent=0
    #allocation0 [shape = 'u8[8192]{0}', space=vmem, size = 0x2000, scoped, tag = 'scoped mem for output reshape']
    %s2 = smov 3
    %v3 = vld [vmem:[%s0] ss:$4 sm:%s2]
    %vm4 = vcmask 261120
    %5 = vst.msk [vmem:[#allocation0] ss:$8 sm:$0x3] %vm4, %v3
    %s6 = scalar_lea.vmem %s0, 3
    %s7 = smov 3
    %v8 = vld [vmem:[%s6] ss:$4 sm:%s7]
    %9 = vrot.lane.b32.xlu0 %v8, 96
    %v10 = vpop.permute.xlu0 %9
    %vm11 = vcmask 1048320
    %12 = vst.msk [vmem:[#allocation0] ss:$8 sm:$0x3] %vm11, %v10
    %s13 = scalar_lea.vmem %s0, 2
    %s14 = smov 3
    %v15 = vld [vmem:[%s13] ss:$4 sm:%s14]
    %16 = vrot.lane.b32.xlu0 %v15, 64
    %v17 = vpop.permute.xlu0 %16
    %vm18 = vcmask 785920
    %19 = vst.msk [vmem:[#allocation0] ss:$8 sm:$0x3] %vm18, %v17
    %s20 = scalar_lea.vmem %s0, 1
    %s21 = smov 3
    %v22 = vld [vmem:[%s20] ss:$4 sm:%s21]
    %23 = vrot.lane.b32.xlu0 %v22, 32
    %v24 = vpop.permute.xlu0 %23
    %vm25 = vcmask 523520
    %26 = vst.msk [vmem:[#allocation0] ss:$8 sm:$0x3] %vm25, %v24
    %s28 = sshll.u32 1, 1
    %s29 = ssub.s32 %s28, 1
    %v31 = vld [vmem:[#allocation0] sm:%s29]
    %s32 = sshll.u32 1, 1
    %s33 = ssub.s32 %s32, 1
    %34 = vst [vmem:[%s1] sm:%s33] %v31
    %s35 = scalar_lea.vmem [#allocation0], 8
    %v36 = vld [vmem:[%s35] sm:%s29]
    %s37 = sshll.u32 1, 1
    %s38 = ssub.s32 %s37, 1
    %s39 = scalar_lea.vmem %s1, 1
    %40 = vst [vmem:[%s39] sm:%s38] %v36

// kernel: vanilla_transformer_forward.2
$region0: #{vanilla_transformer_forward.2}
  #allocation0 [shape = 'u32[]', space=smem, size = 0x4, offset = 0x4, fixed_abs, tag = 'smem constant byte address 0x4 - core index']
  #allocation1 [shape = 'u32[144,128]{1,0:T(1,128)}', space=vmem, size = 0x12000, scoped, tag = 'internal scratch']
  %s0 = inlined_call_operand.vmem [shape: f32[8,4,768], index: 0, kind: input, shape index: {}]
  %s1 = inlined_call_operand.vmem [shape: f32[256,768], index: 1, kind: input, shape index: {}]
  %s2 = inlined_call_operand.vmem [shape: f32[1,256], index: 2, kind: input, shape index: {}]
  %s3 = inlined_call_operand.vmem [shape: f32[4,256], index: 3, kind: output, shape index: {}]
  %s4 = sld [smem:[#allocation0]]
  $region22: #{vanilla_transformer_forward.2} parent=0
    _
  %s6 = ssub.s32 1, %s4
  %s7 = scalar_select 0, %s6, %s4
  // Predicated region
  $region2: #{vanilla_transformer_forward.2} parent=0 // pred_check
    _
  $region3: #{vanilla_transformer_forward.2} parent=0 // pred_check_branch
    %9 = sbr.rel (0) target = $region5
  $region4: #{vanilla_transformer_forward.2} parent=0 // pred_region
    _
  $region5: #{vanilla_transformer_forward.2} parent=0 // pred_fallthru
    _
  // Predicated region
  $region6: #{vanilla_transformer_forward.2} parent=0 // pred_check
    _
  $region7: #{vanilla_transformer_forward.2} parent=0 // pred_check_branch
    %11 = sbr.rel (0) target = $region9
  $region8: #{vanilla_transformer_forward.2} parent=0 // pred_region
    _
  $region9: #{vanilla_transformer_forward.2} parent=0 // pred_fallthru
    _
  // Predicated region
  $region10: #{vanilla_transformer_forward.2} parent=0 // pred_check
    _
  $region11: #{vanilla_transformer_forward.2} parent=0 // pred_check_branch
    %13 = sbr.rel (0) target = $region13
  $region12: #{vanilla_transformer_forward.2} parent=0 // pred_region
    _
  $region13: #{vanilla_transformer_forward.2} parent=0 // pred_fallthru
    _
  %v14 = vld [vmem:[%s0] sm:$0xff]
  %v15 = vld [vmem:[%s0 + $0x8] sm:$0xff]
  %v16 = vld [vmem:[%s0 + $0x10] sm:$0xff]
  %v17 = vld [vmem:[%s1] sm:$0xff]
  %v18 = vld [vmem:[%s1 + $0x8] sm:$0xff]
  %v19 = vld [vmem:[%s1 + $0x10] sm:$0xff]
  %v20 = vld [vmem:[%s1 + $0x18] sm:$0xff]
  %v21 = vld [vmem:[%s1 + $0x20] sm:$0xff]
  %v22 = vld [vmem:[%s1 + $0x28] sm:$0xff]
  %v23 = vld [vmem:[%s1 + $0x30] sm:$0xff]
  %v24 = vld [vmem:[%s1 + $0x38] sm:$0xff]
  %v25 = vld [vmem:[%s1 + $0x40] sm:$0xff]
  %v26 = vld [vmem:[%s1 + $0x48] sm:$0xff]
  %v27 = vld [vmem:[%s1 + $0x50] sm:$0xff]
  %v28 = vld [vmem:[%s1 + $0x58] sm:$0xff]
  %v29 = vld [vmem:[%s1 + $0x60] sm:$0xff]
  %v30 = vld [vmem:[%s1 + $0x68] sm:$0xff]
  %v31 = vld [vmem:[%s1 + $0x70] sm:$0xff]
  %v32 = vld [vmem:[%s1 + $0x78] sm:$0xff]
  %v33 = vld [vmem:[%s1 + $0x80] sm:$0xff]
  %v34 = vld [vmem:[%s1 + $0x88] sm:$0xff]
  %v35 = vld [vmem:[%s1 + $0x90] sm:$0xff]
  %v36 = vld [vmem:[%s1 + $0x98] sm:$0xff]
  %v37 = vld [vmem:[%s1 + $0xa0] sm:$0xff]
  %v38 = vld [vmem:[%s1 + $0xa8] sm:$0xff]
  %v39 = vld [vmem:[%s1 + $0xb0] sm:$0xff]
  %v40 = vld [vmem:[%s1 + $0xb8] sm:$0xff]
  %v41 = vld [vmem:[%s1 + $0xc0] sm:$0xff]
  %v42 = vld [vmem:[%s1 + $0xc8] sm:$0xff]
  %v43 = vld [vmem:[%s1 + $0xd0] sm:$0xff]
  %v44 = vld [vmem:[%s1 + $0xd8] sm:$0xff]
  %v45 = vld [vmem:[%s1 + $0xe0] sm:$0xff]
  %v46 = vld [vmem:[%s1 + $0xe8] sm:$0xff]
  %v47 = vld [vmem:[%s1 + $0xf0] sm:$0xff]
  %v48 = vld [vmem:[%s1 + $0xf8] sm:$0xff]
  %v49 = vld [vmem:[%s1 + $0x100] sm:$0xff]
  %v50 = vld [vmem:[%s1 + $0x108] sm:$0xff]
  %v51 = vld [vmem:[%s1 + $0x110] sm:$0xff]
  %v52 = vld [vmem:[%s1 + $0x118] sm:$0xff]
  %v53 = vld [vmem:[%s1 + $0x120] sm:$0xff]
  %v54 = vld [vmem:[%s1 + $0x128] sm:$0xff]
  %v55 = vld [vmem:[%s1 + $0x130] sm:$0xff]
  %v56 = vld [vmem:[%s1 + $0x138] sm:$0xff]
  %v57 = vld [vmem:[%s1 + $0x140] sm:$0xff]
  %v58 = vld [vmem:[%s1 + $0x148] sm:$0xff]
  %v59 = vld [vmem:[%s1 + $0x150] sm:$0xff]
  %v60 = vld [vmem:[%s1 + $0x158] sm:$0xff]
  %v61 = vld [vmem:[%s1 + $0x160] sm:$0xff]
  %v62 = vld [vmem:[%s1 + $0x168] sm:$0xff]
  %v63 = vld [vmem:[%s1 + $0x170] sm:$0xff]
  %v64 = vld [vmem:[%s1 + $0x178] sm:$0xff]
  %v65 = vld [vmem:[%s1 + $0x180] sm:$0xff]
  %v66 = vld [vmem:[%s1 + $0x188] sm:$0xff]
  %v67 = vld [vmem:[%s1 + $0x190] sm:$0xff]
  %v68 = vld [vmem:[%s1 + $0x198] sm:$0xff]
  %v69 = vld [vmem:[%s1 + $0x1a0] sm:$0xff]
  %v70 = vld [vmem:[%s1 + $0x1a8] sm:$0xff]
  %v71 = vld [vmem:[%s1 + $0x1b0] sm:$0xff]
  %v72 = vld [vmem:[%s1 + $0x1b8] sm:$0xff]
  %v73 = vld [vmem:[%s1 + $0x1c0] sm:$0xff]
  %v74 = vld [vmem:[%s1 + $0x1c8] sm:$0xff]
  %v75 = vld [vmem:[%s1 + $0x1d0] sm:$0xff]
  %v76 = vld [vmem:[%s1 + $0x1d8] sm:$0xff]
  %v77 = vld [vmem:[%s1 + $0x1e0] sm:$0xff]
  %v78 = vld [vmem:[%s1 + $0x1e8] sm:$0xff]
  %v79 = vld [vmem:[%s1 + $0x1f0] sm:$0xff]
  %v80 = vld [vmem:[%s1 + $0x1f8] sm:$0xff]
  %v81 = vld [vmem:[%s1 + $0x200] sm:$0xff]
  %v82 = vld [vmem:[%s1 + $0x208] sm:$0xff]
  %v83 = vld [vmem:[%s1 + $0x210] sm:$0xff]
  %v84 = vld [vmem:[%s1 + $0x218] sm:$0xff]
  %v85 = vld [vmem:[%s1 + $0x220] sm:$0xff]
  %v86 = vld [vmem:[%s1 + $0x228] sm:$0xff]
  %v87 = vld [vmem:[%s1 + $0x230] sm:$0xff]
  %v88 = vld [vmem:[%s1 + $0x238] sm:$0xff]
  %v89 = vld [vmem:[%s1 + $0x240] sm:$0xff]
  %v90 = vld [vmem:[%s1 + $0x248] sm:$0xff]
  %v91 = vld [vmem:[%s1 + $0x250] sm:$0xff]
  %v92 = vld [vmem:[%s1 + $0x258] sm:$0xff]
  %v93 = vld [vmem:[%s1 + $0x260] sm:$0xff]
  %v94 = vld [vmem:[%s1 + $0x268] sm:$0xff]
  %v95 = vld [vmem:[%s1 + $0x270] sm:$0xff]
  %v96 = vld [vmem:[%s1 + $0x278] sm:$0xff]
  %v97 = vld [vmem:[%s1 + $0x280] sm:$0xff]
  %v98 = vld [vmem:[%s1 + $0x288] sm:$0xff]
  %v99 = vld [vmem:[%s1 + $0x290] sm:$0xff]
  %v100 = vld [vmem:[%s1 + $0x298] sm:$0xff]
  %v101 = vld [vmem:[%s1 + $0x2a0] sm:$0xff]
  %v102 = vld [vmem:[%s1 + $0x2a8] sm:$0xff]
  %v103 = vld [vmem:[%s1 + $0x2b0] sm:$0xff]
  %v104 = vld [vmem:[%s1 + $0x2b8] sm:$0xff]
  %v105 = vld [vmem:[%s1 + $0x2c0] sm:$0xff]
  %v106 = vld [vmem:[%s1 + $0x2c8] sm:$0xff]
  %v107 = vld [vmem:[%s1 + $0x2d0] sm:$0xff]
  %v108 = vld [vmem:[%s1 + $0x2d8] sm:$0xff]
  %v109 = vld [vmem:[%s1 + $0x2e0] sm:$0xff]
  %v110 = vld [vmem:[%s1 + $0x2e8] sm:$0xff]
  %v111 = vld [vmem:[%s1 + $0x2f0] sm:$0xff]
  %v112 = vld [vmem:[%s1 + $0x2f8] sm:$0xff]
  %v113 = vld [vmem:[%s1 + $0x300] sm:$0xff]
  %v114 = vld [vmem:[%s1 + $0x308] sm:$0xff]
  %v115 = vld [vmem:[%s1 + $0x310] sm:$0xff]
  %v116 = vld [vmem:[%s1 + $0x318] sm:$0xff]
  %v117 = vld [vmem:[%s1 + $0x320] sm:$0xff]
  %v118 = vld [vmem:[%s1 + $0x328] sm:$0xff]
  %v119 = vld [vmem:[%s1 + $0x330] sm:$0xff]
  %v120 = vld [vmem:[%s1 + $0x338] sm:$0xff]
  %v121 = vld [vmem:[%s1 + $0x340] sm:$0xff]
  %v122 = vld [vmem:[%s1 + $0x348] sm:$0xff]
  %v123 = vld [vmem:[%s1 + $0x350] sm:$0xff]
  %v124 = vld [vmem:[%s1 + $0x358] sm:$0xff]
  %v125 = vld [vmem:[%s1 + $0x360] sm:$0xff]
  %v126 = vld [vmem:[%s1 + $0x368] sm:$0xff]
  %v127 = vld [vmem:[%s1 + $0x370] sm:$0xff]
  %v128 = vld [vmem:[%s1 + $0x378] sm:$0xff]
  %v129 = vld [vmem:[%s1 + $0x380] sm:$0xff]
  %v130 = vld [vmem:[%s1 + $0x388] sm:$0xff]
  %v131 = vld [vmem:[%s1 + $0x390] sm:$0xff]
  %v132 = vld [vmem:[%s1 + $0x398] sm:$0xff]
  %v133 = vld [vmem:[%s1 + $0x3a0] sm:$0xff]
  %v134 = vld [vmem:[%s1 + $0x3a8] sm:$0xff]
  %v135 = vld [vmem:[%s1 + $0x3b0] sm:$0xff]
  %v136 = vld [vmem:[%s1 + $0x3b8] sm:$0xff]
  %v137 = vld [vmem:[%s1 + $0x3c0] sm:$0xff]
  %v138 = vld [vmem:[%s1 + $0x3c8] sm:$0xff]
  %v139 = vld [vmem:[%s1 + $0x3d0] sm:$0xff]
  %v140 = vld [vmem:[%s1 + $0x3d8] sm:$0xff]
  %v141 = vld [vmem:[%s1 + $0x3e0] sm:$0xff]
  %v142 = vld [vmem:[%s1 + $0x3e8] sm:$0xff]
  %v143 = vld [vmem:[%s1 + $0x3f0] sm:$0xff]
  %v144 = vld [vmem:[%s1 + $0x3f8] sm:$0xff]
  %v145 = vld [vmem:[%s1 + $0x400] sm:$0xff]
  %v146 = vld [vmem:[%s1 + $0x408] sm:$0xff]
  %v147 = vld [vmem:[%s1 + $0x410] sm:$0xff]
  %v148 = vld [vmem:[%s1 + $0x418] sm:$0xff]
  %v149 = vld [vmem:[%s1 + $0x420] sm:$0xff]
  %v150 = vld [vmem:[%s1 + $0x428] sm:$0xff]
  %v151 = vld [vmem:[%s1 + $0x430] sm:$0xff]
  %v152 = vld [vmem:[%s1 + $0x438] sm:$0xff]
  %v153 = vld [vmem:[%s1 + $0x440] sm:$0xff]
  %v154 = vld [vmem:[%s1 + $0x448] sm:$0xff]
  %v155 = vld [vmem:[%s1 + $0x450] sm:$0xff]
  %v156 = vld [vmem:[%s1 + $0x458] sm:$0xff]
  %v157 = vld [vmem:[%s1 + $0x460] sm:$0xff]
  %v158 = vld [vmem:[%s1 + $0x468] sm:$0xff]
  %v159 = vld [vmem:[%s1 + $0x470] sm:$0xff]
  %v160 = vld [vmem:[%s1 + $0x478] sm:$0xff]
  %v161 = vld [vmem:[%s1 + $0x480] sm:$0xff]
  %v162 = vld [vmem:[%s1 + $0x488] sm:$0xff]
  %v163 = vld [vmem:[%s1 + $0x490] sm:$0xff]
  %v164 = vld [vmem:[%s1 + $0x498] sm:$0xff]
  %v165 = vld [vmem:[%s1 + $0x4a0] sm:$0xff]
  %v166 = vld [vmem:[%s1 + $0x4a8] sm:$0xff]
  %v167 = vld [vmem:[%s1 + $0x4b0] sm:$0xff]
  %v168 = vld [vmem:[%s1 + $0x4b8] sm:$0xff]
  %v169 = vld [vmem:[%s1 + $0x4c0] sm:$0xff]
  %v170 = vld [vmem:[%s1 + $0x4c8] sm:$0xff]
  %v171 = vld [vmem:[%s1 + $0x4d0] sm:$0xff]
  %v172 = vld [vmem:[%s1 + $0x4d8] sm:$0xff]
  %v173 = vld [vmem:[%s1 + $0x4e0] sm:$0xff]
  %v174 = vld [vmem:[%s1 + $0x4e8] sm:$0xff]
  %v175 = vld [vmem:[%s1 + $0x4f0] sm:$0xff]
  %v176 = vld [vmem:[%s1 + $0x4f8] sm:$0xff]
  %v177 = vld [vmem:[%s1 + $0x500] sm:$0xff]
  %v178 = vld [vmem:[%s1 + $0x508] sm:$0xff]
  %v179 = vld [vmem:[%s1 + $0x510] sm:$0xff]
  %v180 = vld [vmem:[%s1 + $0x518] sm:$0xff]
  %v181 = vld [vmem:[%s1 + $0x520] sm:$0xff]
  %v182 = vld [vmem:[%s1 + $0x528] sm:$0xff]
  %v183 = vld [vmem:[%s1 + $0x530] sm:$0xff]
  %v184 = vld [vmem:[%s1 + $0x538] sm:$0xff]
  %v185 = vld [vmem:[%s1 + $0x540] sm:$0xff]
  %v186 = vld [vmem:[%s1 + $0x548] sm:$0xff]
  %v187 = vld [vmem:[%s1 + $0x550] sm:$0xff]
  %v188 = vld [vmem:[%s1 + $0x558] sm:$0xff]
  %v189 = vld [vmem:[%s1 + $0x560] sm:$0xff]
  %v190 = vld [vmem:[%s1 + $0x568] sm:$0xff]
  %v191 = vld [vmem:[%s1 + $0x570] sm:$0xff]
  %v192 = vld [vmem:[%s1 + $0x578] sm:$0xff]
  %v193 = vld [vmem:[%s1 + $0x580] sm:$0xff]
  %v194 = vld [vmem:[%s1 + $0x588] sm:$0xff]
  %v195 = vld [vmem:[%s1 + $0x590] sm:$0xff]
  %v196 = vld [vmem:[%s1 + $0x598] sm:$0xff]
  %v197 = vld [vmem:[%s1 + $0x5a0] sm:$0xff]
  %v198 = vld [vmem:[%s1 + $0x5a8] sm:$0xff]
  %v199 = vld [vmem:[%s1 + $0x5b0] sm:$0xff]
  %v200 = vld [vmem:[%s1 + $0x5b8] sm:$0xff]
  %v201 = vld [vmem:[%s1 + $0x5c0] sm:$0xff]
  %v202 = vld [vmem:[%s1 + $0x5c8] sm:$0xff]
  %v203 = vld [vmem:[%s1 + $0x5d0] sm:$0xff]
  %v204 = vld [vmem:[%s1 + $0x5d8] sm:$0xff]
  %v205 = vld [vmem:[%s1 + $0x5e0] sm:$0xff]
  %v206 = vld [vmem:[%s1 + $0x5e8] sm:$0xff]
  %v207 = vld [vmem:[%s1 + $0x5f0] sm:$0xff]
  %v208 = vld [vmem:[%s1 + $0x5f8] sm:$0xff]
  %209 = vmatprep.subr.mxu0 %v108
  %210 = vmatpush1.msra.mxu0 %v107
  %211 = vmatprep.subr.mxu0 %v102
  %212 = vmatpush1.msra.mxu0 %v101
  %213 = vmatprep.subr.mxu0 %v96
  %214 = vmatpush1.msra.mxu0 %v95
  %215 = vmatprep.subr.mxu0 %v90
  %216 = vmatpush1.msra.mxu0 %v89
  %217 = vmatprep.subr.mxu0 %v84
  %218 = vmatpush1.msra.mxu0 %v83
  %219 = vmatprep.subr.mxu0 %v78
  %220 = vmatpush1.msra.mxu0 %v77
  %221 = vmatprep.subr.mxu0 %v72
  %222 = vmatpush1.msra.mxu0 %v71
  %223 = vmatprep.subr.mxu0 %v66
  %224 = vmatpush1.msra.mxu0 %v65
  %225 = vmatprep.subr.mxu0 %v60
  %226 = vmatpush1.msra.mxu0 %v59
  %227 = vmatprep.subr.mxu0 %v54
  %228 = vmatpush1.msra.mxu0 %v53
  %229 = vmatprep.subr.mxu0 %v48
  %230 = vmatpush1.msra.mxu0 %v47
  %231 = vmatprep.subr.mxu0 %v42
  %232 = vmatpush1.msra.mxu0 %v41
  %233 = vmatprep.subr.mxu0 %v36
  %234 = vmatpush1.msra.mxu0 %v35
  %235 = vmatprep.subr.mxu0 %v30
  %236 = vmatpush1.msra.mxu0 %v29
  %237 = vmatprep.subr.mxu0 %v24
  %238 = vmatpush1.msra.mxu0 %v23
  %239 = vmatprep.subr.mxu0 %v18
  %240 = vmatpush1.msra.mxu0 %v17
  %241 = vmatprep.subr.mxu0 %v204
  %242 = vmatpush2.msra.mxu0 %v203
  %243 = vmatprep.subr.mxu0 %v198
  %244 = vmatpush2.msra.mxu0 %v197
  %245 = vmatprep.subr.mxu0 %v192
  %246 = vmatpush2.msra.mxu0 %v191
  %247 = vmatprep.subr.mxu0 %v186
  %248 = vmatpush2.msra.mxu0 %v185
  %249 = vmatprep.subr.mxu0 %v180
  %250 = vmatpush2.msra.mxu0 %v179
  %251 = vmatprep.subr.mxu0 %v174
  %252 = vmatpush2.msra.mxu0 %v173
  %253 = vmatprep.subr.mxu0 %v168
  %254 = vmatpush2.msra.mxu0 %v167
  %255 = vmatprep.subr.mxu0 %v162
  %256 = vmatpush2.msra.mxu0 %v161
  %257 = vmatprep.subr.mxu0 %v156
  %258 = vmatpush2.msra.mxu0 %v155
  %259 = vmatprep.subr.mxu0 %v150
  %260 = vmatpush2.msra.mxu0 %v149
  %261 = vmatprep.subr.mxu0 %v144
  %262 = vmatpush2.msra.mxu0 %v143
  %263 = vmatprep.subr.mxu0 %v138
  %264 = vmatpush2.msra.mxu0 %v137
  %265 = vmatprep.subr.mxu0 %v132
  %266 = vmatpush2.msra.mxu0 %v131
  %267 = vmatprep.subr.mxu0 %v126
  %268 = vmatpush2.msra.mxu0 %v125
  %269 = vmatprep.subr.mxu0 %v120
  %270 = vmatpush2.msra.mxu0 %v119
  %271 = vmatprep.subr.mxu0 %v114
  %272 = vmatpush2.msra.mxu0 %v113
  %273 = vmatprep.mubr.f32.mxu0 0.0
  %274 = vmatmul.mubr.f32.gmra.mxu0 0.0
  %v275 = vpop.f32.mrf.mxu0
  %v276 = vadd.f32 0.0, %v275
  %v277 = vpop.f32.mrf.mxu0
  %v278 = vadd.f32 0.0, %v277
  %279 = vdwg.mxu0
  %280 = vmatprep.subr.mxu0 %v110
  %281 = vmatpush1.msra.mxu0 %v109
  %282 = vmatprep.subr.mxu0 %v104
  %283 = vmatpush1.msra.mxu0 %v103
  %284 = vmatprep.subr.mxu0 %v98
  %285 = vmatpush1.msra.mxu0 %v97
  %286 = vmatprep.subr.mxu0 %v92
  %287 = vmatpush1.msra.mxu0 %v91
  %288 = vmatprep.subr.mxu0 %v86
  %289 = vmatpush1.msra.mxu0 %v85
  %290 = vmatprep.subr.mxu0 %v80
  %291 = vmatpush1.msra.mxu0 %v79
  %292 = vmatprep.subr.mxu0 %v74
  %293 = vmatpush1.msra.mxu0 %v73
  %294 = vmatprep.subr.mxu0 %v68
  %295 = vmatpush1.msra.mxu0 %v67
  %296 = vmatprep.subr.mxu0 %v62
  %297 = vmatpush1.msra.mxu0 %v61
  %298 = vmatprep.subr.mxu0 %v56
  %299 = vmatpush1.msra.mxu0 %v55
  %300 = vmatprep.subr.mxu0 %v50
  %301 = vmatpush1.msra.mxu0 %v49
  %302 = vmatprep.subr.mxu0 %v44
  %303 = vmatpush1.msra.mxu0 %v43
  %304 = vmatprep.subr.mxu0 %v38
  %305 = vmatpush1.msra.mxu0 %v37
  %306 = vmatprep.subr.mxu0 %v32
  %307 = vmatpush1.msra.mxu0 %v31
  %308 = vmatprep.subr.mxu0 %v26
  %309 = vmatpush1.msra.mxu0 %v25
  %310 = vmatprep.subr.mxu0 %v20
  %311 = vmatpush1.msra.mxu0 %v19
  %312 = vmatprep.subr.mxu0 %v206
  %313 = vmatpush2.msra.mxu0 %v205
  %314 = vmatprep.subr.mxu0 %v200
  %315 = vmatpush2.msra.mxu0 %v199
  %316 = vmatprep.subr.mxu0 %v194
  %317 = vmatpush2.msra.mxu0 %v193
  %318 = vmatprep.subr.mxu0 %v188
  %319 = vmatpush2.msra.mxu0 %v187
  %320 = vmatprep.subr.mxu0 %v182
  %321 = vmatpush2.msra.mxu0 %v181
  %322 = vmatprep.subr.mxu0 %v176
  %323 = vmatpush2.msra.mxu0 %v175
  %324 = vmatprep.subr.mxu0 %v170
  %325 = vmatpush2.msra.mxu0 %v169
  %326 = vmatprep.subr.mxu0 %v164
  %327 = vmatpush2.msra.mxu0 %v163
  %328 = vmatprep.subr.mxu0 %v158
  %329 = vmatpush2.msra.mxu0 %v157
  %330 = vmatprep.subr.mxu0 %v152
  %331 = vmatpush2.msra.mxu0 %v151
  %332 = vmatprep.subr.mxu0 %v146
  %333 = vmatpush2.msra.mxu0 %v145
  %334 = vmatprep.subr.mxu0 %v140
  %335 = vmatpush2.msra.mxu0 %v139
  %336 = vmatprep.subr.mxu0 %v134
  %337 = vmatpush2.msra.mxu0 %v133
  %338 = vmatprep.subr.mxu0 %v128
  %339 = vmatpush2.msra.mxu0 %v127
  %340 = vmatprep.subr.mxu0 %v122
  %341 = vmatpush2.msra.mxu0 %v121
  %342 = vmatprep.subr.mxu0 %v116
  %343 = vmatpush2.msra.mxu0 %v115
  %344 = vmatprep.mubr.f32.mxu0 0.0
  %345 = vmatmul.mubr.f32.gmra.mxu0 0.0
  %v346 = vpop.f32.mrf.mxu0
  %v347 = vadd.f32 0.0, %v346
  %v348 = vpop.f32.mrf.mxu0
  %v349 = vadd.f32 0.0, %v348
  %350 = vdwg.mxu0
  %351 = vmatprep.subr.mxu0 %v112
  %352 = vmatpush1.msra.mxu0 %v111
  %353 = vmatprep.subr.mxu0 %v106
  %354 = vmatpush1.msra.mxu0 %v105
  %355 = vmatprep.subr.mxu0 %v100
  %356 = vmatpush1.msra.mxu0 %v99
  %357 = vmatprep.subr.mxu0 %v94
  %358 = vmatpush1.msra.mxu0 %v93
  %359 = vmatprep.subr.mxu0 %v88
  %360 = vmatpush1.msra.mxu0 %v87
  %361 = vmatprep.subr.mxu0 %v82
  %362 = vmatpush1.msra.mxu0 %v81
  %363 = vmatprep.subr.mxu0 %v76
  %364 = vmatpush1.msra.mxu0 %v75
  %365 = vmatprep.subr.mxu0 %v70
  %366 = vmatpush1.msra.mxu0 %v69
  %367 = vmatprep.subr.mxu0 %v64
  %368 = vmatpush1.msra.mxu0 %v63
  %369 = vmatprep.subr.mxu0 %v58
  %370 = vmatpush1.msra.mxu0 %v57
  %371 = vmatprep.subr.mxu0 %v52
  %372 = vmatpush1.msra.mxu0 %v51
  %373 = vmatprep.subr.mxu0 %v46
  %374 = vmatpush1.msra.mxu0 %v45
  %375 = vmatprep.subr.mxu0 %v40
  %376 = vmatpush1.msra.mxu0 %v39
  %377 = vmatprep.subr.mxu0 %v34
  %378 = vmatpush1.msra.mxu0 %v33
  %379 = vmatprep.subr.mxu0 %v28
  %380 = vmatpush1.msra.mxu0 %v27
  %381 = vmatprep.subr.mxu0 %v22
  %382 = vmatpush1.msra.mxu0 %v21
  %383 = vmatprep.subr.mxu0 %v208
  %384 = vmatpush2.msra.mxu0 %v207
  %385 = vmatprep.subr.mxu0 %v202
  %386 = vmatpush2.msra.mxu0 %v201
  %387 = vmatprep.subr.mxu0 %v196
  %388 = vmatpush2.msra.mxu0 %v195
  %389 = vmatprep.subr.mxu0 %v190
  %390 = vmatpush2.msra.mxu0 %v189
  %391 = vmatprep.subr.mxu0 %v184
  %392 = vmatpush2.msra.mxu0 %v183
  %393 = vmatprep.subr.mxu0 %v178
  %394 = vmatpush2.msra.mxu0 %v177
  %395 = vmatprep.subr.mxu0 %v172
  %396 = vmatpush2.msra.mxu0 %v171
  %397 = vmatprep.subr.mxu0 %v166
  %398 = vmatpush2.msra.mxu0 %v165
  %399 = vmatprep.subr.mxu0 %v160
  %400 = vmatpush2.msra.mxu0 %v159
  %401 = vmatprep.subr.mxu0 %v154
  %402 = vmatpush2.msra.mxu0 %v153
  %403 = vmatprep.subr.mxu0 %v148
  %404 = vmatpush2.msra.mxu0 %v147
  %405 = vmatprep.subr.mxu0 %v142
  %406 = vmatpush2.msra.mxu0 %v141
  %407 = vmatprep.subr.mxu0 %v136
  %408 = vmatpush2.msra.mxu0 %v135
  %409 = vmatprep.subr.mxu0 %v130
  %410 = vmatpush2.msra.mxu0 %v129
  %411 = vmatprep.subr.mxu0 %v124
  %412 = vmatpush2.msra.mxu0 %v123
  %413 = vmatprep.subr.mxu0 %v118
  %414 = vmatpush2.msra.mxu0 %v117
  %415 = vmatprep.mubr.f32.mxu0 0.0
  %416 = vmatmul.mubr.f32.gmra.mxu0 0.0
  %v417 = vpop.f32.mrf.mxu0
  %v418 = vadd.f32 0.0, %v417
  %v419 = vpop.f32.mrf.mxu0
  %v420 = vadd.f32 0.0, %v419
  %421 = vdwg.mxu0
  %v424 = vcombine.low %v276, %v278
  %v426 = vadd.f32 %v14, %v424
  %v427 = vxor.u32 %v426, 2147483648
  %v428 = vmul.f32 %v427, 1.442695
  %v429 = vpow.pop %v428
  %v430 = vadd.f32 %v429, 1.0
  %v431 = vrcp.pop %v430
  %v432 = vmul.f32 1.0, %v431
  %v435 = vcombine.low %v347, %v349
  %v437 = vadd.f32 %v15, %v435
  %v438 = vxor.u32 %v437, 2147483648
  %v439 = vmul.f32 %v438, 1.442695
  %v440 = vpow.pop %v439
  %v441 = vadd.f32 %v440, 1.0
  %v442 = vrcp.pop %v441
  %v443 = vmul.f32 1.0, %v442
  %v444 = vld [vmem:[%s2] sm:$0x3]
  %v446 = vlaneseq
  %v447 = vshrl.u32 %v446, 7
  %v448 = vsub.s32 0, %v447
  %v449 = vrot.slane %v444, %v448
  %v450 = vlaneseq
  %v451 = vshrl.u32 %v450, 7
  %v452 = vsub.s32 1, %v451
  %v453 = vrot.slane %v444, %v452
  %v456 = vadd.f32 %v418, %v449
  %v457 = vadd.f32 %v420, %v453
  %v460 = vcombine.low %v456, %v457
  %v462 = vmul.f32 %v432, %v460
  %v463 = vadd.f32 %v16, %v462
  %v464 = vtanh.pop %v463
  %v465 = vsub.f32 1.0, %v443
  %v466 = vmul.f32 %v465, %v464
  %v467 = vmul.f32 %v443, 0.0
  %v468 = vadd.f32 %v466, %v467
  %s469 = scalar_lea.vmem %s0, 24
  %v470 = vld [vmem:[%s469] sm:$0xff]
  %v471 = vld [vmem:[%s469 + $0x8] sm:$0xff]
  %v472 = vld [vmem:[%s469 + $0x10] sm:$0xff]
  %v474 = vcombine.high %v468, %v468
  %476 = vmatprep.subr.mxu0 %v108
  %477 = vmatpush1.msra.mxu0 %v107
  %478 = vmatprep.subr.mxu0 %v102
  %479 = vmatpush1.msra.mxu0 %v101
  %480 = vmatprep.subr.mxu0 %v96
  %481 = vmatpush1.msra.mxu0 %v95
  %482 = vmatprep.subr.mxu0 %v90
  %483 = vmatpush1.msra.mxu0 %v89
  %484 = vmatprep.subr.mxu0 %v84
  %485 = vmatpush1.msra.mxu0 %v83
  %486 = vmatprep.subr.mxu0 %v78
  %487 = vmatpush1.msra.mxu0 %v77
  %488 = vmatprep.subr.mxu0 %v72
  %489 = vmatpush1.msra.mxu0 %v71
  %490 = vmatprep.subr.mxu0 %v66
  %491 = vmatpush1.msra.mxu0 %v65
  %492 = vmatprep.subr.mxu0 %v60
  %493 = vmatpush1.msra.mxu0 %v59
  %494 = vmatprep.subr.mxu0 %v54
  %495 = vmatpush1.msra.mxu0 %v53
  %496 = vmatprep.subr.mxu0 %v48
  %497 = vmatpush1.msra.mxu0 %v47
  %498 = vmatprep.subr.mxu0 %v42
  %499 = vmatpush1.msra.mxu0 %v41
  %500 = vmatprep.subr.mxu0 %v36
  %501 = vmatpush1.msra.mxu0 %v35
  %502 = vmatprep.subr.mxu0 %v30
  %503 = vmatpush1.msra.mxu0 %v29
  %504 = vmatprep.subr.mxu0 %v24
  %505 = vmatpush1.msra.mxu0 %v23
  %506 = vmatprep.subr.mxu0 %v18
  %507 = vmatpush1.msra.mxu0 %v17
  %508 = vmatprep.subr.mxu0 %v204
  %509 = vmatpush2.msra.mxu0 %v203
  %510 = vmatprep.subr.mxu0 %v198
  %511 = vmatpush2.msra.mxu0 %v197
  %512 = vmatprep.subr.mxu0 %v192
  %513 = vmatpush2.msra.mxu0 %v191
  %514 = vmatprep.subr.mxu0 %v186
  %515 = vmatpush2.msra.mxu0 %v185
  %516 = vmatprep.subr.mxu0 %v180
  %517 = vmatpush2.msra.mxu0 %v179
  %518 = vmatprep.subr.mxu0 %v174
  %519 = vmatpush2.msra.mxu0 %v173
  %520 = vmatprep.subr.mxu0 %v168
  %521 = vmatpush2.msra.mxu0 %v167
  %522 = vmatprep.subr.mxu0 %v162
  %523 = vmatpush2.msra.mxu0 %v161
  %524 = vmatprep.subr.mxu0 %v156
  %525 = vmatpush2.msra.mxu0 %v155
  %526 = vmatprep.subr.mxu0 %v150
  %527 = vmatpush2.msra.mxu0 %v149
  %528 = vmatprep.subr.mxu0 %v144
  %529 = vmatpush2.msra.mxu0 %v143
  %530 = vmatprep.subr.mxu0 %v138
  %531 = vmatpush2.msra.mxu0 %v137
  %532 = vmatprep.subr.mxu0 %v132
  %533 = vmatpush2.msra.mxu0 %v131
  %534 = vmatprep.subr.mxu0 %v126
  %535 = vmatpush2.msra.mxu0 %v125
  %536 = vmatprep.subr.mxu0 %v120
  %537 = vmatpush2.msra.mxu0 %v119
  %538 = vmatprep.subr.mxu0 %v114
  %539 = vmatpush2.msra.mxu0 %v113
  %540 = vmatprep.mubr.f32.mxu0 %v474
  %541 = vmatmul.mubr.f32.gmra.mxu0 %v468
  %v542 = vpop.f32.mrf.mxu0
  %v543 = vadd.f32 0.0, %v542
  %v544 = vpop.f32.mrf.mxu0
  %v545 = vadd.f32 0.0, %v544
  %546 = vdwg.mxu0
  %547 = vmatprep.subr.mxu0 %v110
  %548 = vmatpush1.msra.mxu0 %v109
  %549 = vmatprep.subr.mxu0 %v104
  %550 = vmatpush1.msra.mxu0 %v103
  %551 = vmatprep.subr.mxu0 %v98
  %552 = vmatpush1.msra.mxu0 %v97
  %553 = vmatprep.subr.mxu0 %v92
  %554 = vmatpush1.msra.mxu0 %v91
  %555 = vmatprep.subr.mxu0 %v86
  %556 = vmatpush1.msra.mxu0 %v85
  %557 = vmatprep.subr.mxu0 %v80
  %558 = vmatpush1.msra.mxu0 %v79
  %559 = vmatprep.subr.mxu0 %v74
  %560 = vmatpush1.msra.mxu0 %v73
  %561 = vmatprep.subr.mxu0 %v68
  %562 = vmatpush1.msra.mxu0 %v67
  %563 = vmatprep.subr.mxu0 %v62
  %564 = vmatpush1.msra.mxu0 %v61
  %565 = vmatprep.subr.mxu0 %v56
  %566 = vmatpush1.msra.mxu0 %v55
  %567 = vmatprep.subr.mxu0 %v50
  %568 = vmatpush1.msra.mxu0 %v49
  %569 = vmatprep.subr.mxu0 %v44
  %570 = vmatpush1.msra.mxu0 %v43
  %571 = vmatprep.subr.mxu0 %v38
  %572 = vmatpush1.msra.mxu0 %v37
  %573 = vmatprep.subr.mxu0 %v32
  %574 = vmatpush1.msra.mxu0 %v31
  %575 = vmatprep.subr.mxu0 %v26
  %576 = vmatpush1.msra.mxu0 %v25
  %577 = vmatprep.subr.mxu0 %v20
  %578 = vmatpush1.msra.mxu0 %v19
  %579 = vmatprep.subr.mxu0 %v206
  %580 = vmatpush2.msra.mxu0 %v205
  %581 = vmatprep.subr.mxu0 %v200
  %582 = vmatpush2.msra.mxu0 %v199
  %583 = vmatprep.subr.mxu0 %v194
  %584 = vmatpush2.msra.mxu0 %v193
  %585 = vmatprep.subr.mxu0 %v188
  %586 = vmatpush2.msra.mxu0 %v187
  %587 = vmatprep.subr.mxu0 %v182
  %588 = vmatpush2.msra.mxu0 %v181
  %589 = vmatprep.subr.mxu0 %v176
  %590 = vmatpush2.msra.mxu0 %v175
  %591 = vmatprep.subr.mxu0 %v170
  %592 = vmatpush2.msra.mxu0 %v169
  %593 = vmatprep.subr.mxu0 %v164
  %594 = vmatpush2.msra.mxu0 %v163
  %595 = vmatprep.subr.mxu0 %v158
  %596 = vmatpush2.msra.mxu0 %v157
  %597 = vmatprep.subr.mxu0 %v152
  %598 = vmatpush2.msra.mxu0 %v151
  %599 = vmatprep.subr.mxu0 %v146
  %600 = vmatpush2.msra.mxu0 %v145
  %601 = vmatprep.subr.mxu0 %v140
  %602 = vmatpush2.msra.mxu0 %v139
  %603 = vmatprep.subr.mxu0 %v134
  %604 = vmatpush2.msra.mxu0 %v133
  %605 = vmatprep.subr.mxu0 %v128
  %606 = vmatpush2.msra.mxu0 %v127
  %607 = vmatprep.subr.mxu0 %v122
  %608 = vmatpush2.msra.mxu0 %v121
  %609 = vmatprep.subr.mxu0 %v116
  %610 = vmatpush2.msra.mxu0 %v115
  %611 = vmatprep.mubr.f32.mxu0 %v474
  %612 = vmatmul.mubr.f32.gmra.mxu0 %v468
  %v613 = vpop.f32.mrf.mxu0
  %v614 = vadd.f32 0.0, %v613
  %v615 = vpop.f32.mrf.mxu0
  %v616 = vadd.f32 0.0, %v615
  %617 = vdwg.mxu0
  %618 = vmatprep.subr.mxu0 %v112
  %619 = vmatpush1.msra.mxu0 %v111
  %620 = vmatprep.subr.mxu0 %v106
  %621 = vmatpush1.msra.mxu0 %v105
  %622 = vmatprep.subr.mxu0 %v100
  %623 = vmatpush1.msra.mxu0 %v99
  %624 = vmatprep.subr.mxu0 %v94
  %625 = vmatpush1.msra.mxu0 %v93
  %626 = vmatprep.subr.mxu0 %v88
  %627 = vmatpush1.msra.mxu0 %v87
  %628 = vmatprep.subr.mxu0 %v82
  %629 = vmatpush1.msra.mxu0 %v81
  %630 = vmatprep.subr.mxu0 %v76
  %631 = vmatpush1.msra.mxu0 %v75
  %632 = vmatprep.subr.mxu0 %v70
  %633 = vmatpush1.msra.mxu0 %v69
  %634 = vmatprep.subr.mxu0 %v64
  %635 = vmatpush1.msra.mxu0 %v63
  %636 = vmatprep.subr.mxu0 %v58
  %637 = vmatpush1.msra.mxu0 %v57
  %638 = vmatprep.subr.mxu0 %v52
  %639 = vmatpush1.msra.mxu0 %v51
  %640 = vmatprep.subr.mxu0 %v46
  %641 = vmatpush1.msra.mxu0 %v45
  %642 = vmatprep.subr.mxu0 %v40
  %643 = vmatpush1.msra.mxu0 %v39
  %644 = vmatprep.subr.mxu0 %v34
  %645 = vmatpush1.msra.mxu0 %v33
  %646 = vmatprep.subr.mxu0 %v28
  %647 = vmatpush1.msra.mxu0 %v27
  %648 = vmatprep.subr.mxu0 %v22
  %649 = vmatpush1.msra.mxu0 %v21
  %650 = vmatprep.subr.mxu0 %v208
  %651 = vmatpush2.msra.mxu0 %v207
  %652 = vmatprep.subr.mxu0 %v202
  %653 = vmatpush2.msra.mxu0 %v201
  %654 = vmatprep.subr.mxu0 %v196
  %655 = vmatpush2.msra.mxu0 %v195
  %656 = vmatprep.subr.mxu0 %v190
  %657 = vmatpush2.msra.mxu0 %v189
  %658 = vmatprep.subr.mxu0 %v184
  %659 = vmatpush2.msra.mxu0 %v183
  %660 = vmatprep.subr.mxu0 %v178
  %661 = vmatpush2.msra.mxu0 %v177
  %662 = vmatprep.subr.mxu0 %v172
  %663 = vmatpush2.msra.mxu0 %v171
  %664 = vmatprep.subr.mxu0 %v166
  %665 = vmatpush2.msra.mxu0 %v165
  %666 = vmatprep.subr.mxu0 %v160
  %667 = vmatpush2.msra.mxu0 %v159
  %668 = vmatprep.subr.mxu0 %v154
  %669 = vmatpush2.msra.mxu0 %v153
  %670 = vmatprep.subr.mxu0 %v148
  %671 = vmatpush2.msra.mxu0 %v147
  %672 = vmatprep.subr.mxu0 %v142
  %673 = vmatpush2.msra.mxu0 %v141
  %674 = vmatprep.subr.mxu0 %v136
  %675 = vmatpush2.msra.mxu0 %v135
  %676 = vmatprep.subr.mxu0 %v130
  %677 = vmatpush2.msra.mxu0 %v129
  %678 = vmatprep.subr.mxu0 %v124
  %679 = vmatpush2.msra.mxu0 %v123
  %680 = vmatprep.subr.mxu0 %v118
  %681 = vmatpush2.msra.mxu0 %v117
  %682 = vmatprep.mubr.f32.mxu0 %v474
  %683 = vmatmul.mubr.f32.gmra.mxu0 %v468
  %v684 = vpop.f32.mrf.mxu0
  %v685 = vadd.f32 0.0, %v684
  %v686 = vpop.f32.mrf.mxu0
  %v687 = vadd.f32 0.0, %v686
  %688 = vdwg.mxu0
  %v691 = vcombine.low %v543, %v545
  %v693 = vadd.f32 %v470, %v691
  %v694 = vxor.u32 %v693, 2147483648
  %v695 = vmul.f32 %v694, 1.442695
  %v696 = vpow.pop %v695
  %v697 = vadd.f32 %v696, 1.0
  %v698 = vrcp.pop %v697
  %v699 = vmul.f32 1.0, %v698
  %v702 = vcombine.low %v614, %v616
  %v704 = vadd.f32 %v471, %v702
  %v705 = vxor.u32 %v704, 2147483648
  %v706 = vmul.f32 %v705, 1.442695
  %v707 = vpow.pop %v706
  %v708 = vadd.f32 %v707, 1.0
  %v709 = vrcp.pop %v708
  %v710 = vmul.f32 1.0, %v709
  %v711 = vadd.f32 %v685, %v449
  %v712 = vadd.f32 %v687, %v453
  %v715 = vcombine.low %v711, %v712
  %v717 = vmul.f32 %v699, %v715
  %v718 = vadd.f32 %v472, %v717
  %v719 = vtanh.pop %v718
  %v720 = vsub.f32 1.0, %v710
  %v721 = vmul.f32 %v720, %v719
  %v722 = vmul.f32 %v710, %v468
  %v723 = vadd.f32 %v721, %v722
  %s724 = scalar_lea.vmem %s0, 48
  %v725 = vld [vmem:[%s724] sm:$0xff]
  %v726 = vld [vmem:[%s724 + $0x8] sm:$0xff]
  %v727 = vld [vmem:[%s724 + $0x10] sm:$0xff]
  %v729 = vcombine.high %v723, %v723
  %731 = vmatprep.subr.mxu0 %v108
  %732 = vmatpush1.msra.mxu0 %v107
  %733 = vmatprep.subr.mxu0 %v102
  %734 = vmatpush1.msra.mxu0 %v101
  %735 = vmatprep.subr.mxu0 %v96
  %736 = vmatpush1.msra.mxu0 %v95
  %737 = vmatprep.subr.mxu0 %v90
  %738 = vmatpush1.msra.mxu0 %v89
  %739 = vmatprep.subr.mxu0 %v84
  %740 = vmatpush1.msra.mxu0 %v83
  %741 = vmatprep.subr.mxu0 %v78
  %742 = vmatpush1.msra.mxu0 %v77
  %743 = vmatprep.subr.mxu0 %v72
  %744 = vmatpush1.msra.mxu0 %v71
  %745 = vmatprep.subr.mxu0 %v66
  %746 = vmatpush1.msra.mxu0 %v65
  %747 = vmatprep.subr.mxu0 %v60
  %748 = vmatpush1.msra.mxu0 %v59
  %749 = vmatprep.subr.mxu0 %v54
  %750 = vmatpush1.msra.mxu0 %v53
  %751 = vmatprep.subr.mxu0 %v48
  %752 = vmatpush1.msra.mxu0 %v47
  %753 = vmatprep.subr.mxu0 %v42
  %754 = vmatpush1.msra.mxu0 %v41
  %755 = vmatprep.subr.mxu0 %v36
  %756 = vmatpush1.msra.mxu0 %v35
  %757 = vmatprep.subr.mxu0 %v30
  %758 = vmatpush1.msra.mxu0 %v29
  %759 = vmatprep.subr.mxu0 %v24
  %760 = vmatpush1.msra.mxu0 %v23
  %761 = vmatprep.subr.mxu0 %v18
  %762 = vmatpush1.msra.mxu0 %v17
  %763 = vmatprep.subr.mxu0 %v204
  %764 = vmatpush2.msra.mxu0 %v203
  %765 = vmatprep.subr.mxu0 %v198
  %766 = vmatpush2.msra.mxu0 %v197
  %767 = vmatprep.subr.mxu0 %v192
  %768 = vmatpush2.msra.mxu0 %v191
  %769 = vmatprep.subr.mxu0 %v186
  %770 = vmatpush2.msra.mxu0 %v185
  %771 = vmatprep.subr.mxu0 %v180
  %772 = vmatpush2.msra.mxu0 %v179
  %773 = vmatprep.subr.mxu0 %v174
  %774 = vmatpush2.msra.mxu0 %v173
  %775 = vmatprep.subr.mxu0 %v168
  %776 = vmatpush2.msra.mxu0 %v167
  %777 = vmatprep.subr.mxu0 %v162
  %778 = vmatpush2.msra.mxu0 %v161
  %779 = vmatprep.subr.mxu0 %v156
  %780 = vmatpush2.msra.mxu0 %v155
  %781 = vmatprep.subr.mxu0 %v150
  %782 = vmatpush2.msra.mxu0 %v149
  %783 = vmatprep.subr.mxu0 %v144
  %784 = vmatpush2.msra.mxu0 %v143
  %785 = vmatprep.subr.mxu0 %v138
  %786 = vmatpush2.msra.mxu0 %v137
  %787 = vmatprep.subr.mxu0 %v132
  %788 = vmatpush2.msra.mxu0 %v131
  %789 = vmatprep.subr.mxu0 %v126
  %790 = vmatpush2.msra.mxu0 %v125
  %791 = vmatprep.subr.mxu0 %v120
  %792 = vmatpush2.msra.mxu0 %v119
  %793 = vmatprep.subr.mxu0 %v114
  %794 = vmatpush2.msra.mxu0 %v113
  %795 = vmatprep.mubr.f32.mxu0 %v729
  %796 = vmatmul.mubr.f32.gmra.mxu0 %v723
  %v797 = vpop.f32.mrf.mxu0
  %v798 = vadd.f32 0.0, %v797
  %v799 = vpop.f32.mrf.mxu0
  %v800 = vadd.f32 0.0, %v799
  %801 = vdwg.mxu0
  %802 = vmatprep.subr.mxu0 %v110
  %803 = vmatpush1.msra.mxu0 %v109
  %804 = vmatprep.subr.mxu0 %v104
  %805 = vmatpush1.msra.mxu0 %v103
  %806 = vmatprep.subr.mxu0 %v98
  %807 = vmatpush1.msra.mxu0 %v97
  %808 = vmatprep.subr.mxu0 %v92
  %809 = vmatpush1.msra.mxu0 %v91
  %810 = vmatprep.subr.mxu0 %v86
  %811 = vmatpush1.msra.mxu0 %v85
  %812 = vmatprep.subr.mxu0 %v80
  %813 = vmatpush1.msra.mxu0 %v79
  %814 = vmatprep.subr.mxu0 %v74
  %815 = vmatpush1.msra.mxu0 %v73
  %816 = vmatprep.subr.mxu0 %v68
  %817 = vmatpush1.msra.mxu0 %v67
  %818 = vmatprep.subr.mxu0 %v62
  %819 = vmatpush1.msra.mxu0 %v61
  %820 = vmatprep.subr.mxu0 %v56
  %821 = vmatpush1.msra.mxu0 %v55
  %822 = vmatprep.subr.mxu0 %v50
  %823 = vmatpush1.msra.mxu0 %v49
  %824 = vmatprep.subr.mxu0 %v44
  %825 = vmatpush1.msra.mxu0 %v43
  %826 = vmatprep.subr.mxu0 %v38
  %827 = vmatpush1.msra.mxu0 %v37
  %828 = vmatprep.subr.mxu0 %v32
  %829 = vmatpush1.msra.mxu0 %v31
  %830 = vmatprep.subr.mxu0 %v26
  %831 = vmatpush1.msra.mxu0 %v25
  %832 = vmatprep.subr.mxu0 %v20
  %833 = vmatpush1.msra.mxu0 %v19
  %834 = vmatprep.subr.mxu0 %v206
  %835 = vmatpush2.msra.mxu0 %v205
  %836 = vmatprep.subr.mxu0 %v200
  %837 = vmatpush2.msra.mxu0 %v199
  %838 = vmatprep.subr.mxu0 %v194
  %839 = vmatpush2.msra.mxu0 %v193
  %840 = vmatprep.subr.mxu0 %v188
  %841 = vmatpush2.msra.mxu0 %v187
  %842 = vmatprep.subr.mxu0 %v182
  %843 = vmatpush2.msra.mxu0 %v181
  %844 = vmatprep.subr.mxu0 %v176
  %845 = vmatpush2.msra.mxu0 %v175
  %846 = vmatprep.subr.mxu0 %v170
  %847 = vmatpush2.msra.mxu0 %v169
  %848 = vmatprep.subr.mxu0 %v164
  %849 = vmatpush2.msra.mxu0 %v163
  %850 = vmatprep.subr.mxu0 %v158
  %851 = vmatpush2.msra.mxu0 %v157
  %852 = vmatprep.subr.mxu0 %v152
  %853 = vmatpush2.msra.mxu0 %v151
  %854 = vmatprep.subr.mxu0 %v146
  %855 = vmatpush2.msra.mxu0 %v145
  %856 = vmatprep.subr.mxu0 %v140
  %857 = vmatpush2.msra.mxu0 %v139
  %858 = vmatprep.subr.mxu0 %v134
  %859 = vmatpush2.msra.mxu0 %v133
  %860 = vmatprep.subr.mxu0 %v128
  %861 = vmatpush2.msra.mxu0 %v127
  %862 = vmatprep.subr.mxu0 %v122
  %863 = vmatpush2.msra.mxu0 %v121
  %864 = vmatprep.subr.mxu0 %v116
  %865 = vmatpush2.msra.mxu0 %v115
  %866 = vmatprep.mubr.f32.mxu0 %v729
  %867 = vmatmul.mubr.f32.gmra.mxu0 %v723
  %v868 = vpop.f32.mrf.mxu0
  %v869 = vadd.f32 0.0, %v868
  %v870 = vpop.f32.mrf.mxu0
  %v871 = vadd.f32 0.0, %v870
  %872 = vdwg.mxu0
  %873 = vmatprep.subr.mxu0 %v112
  %874 = vmatpush1.msra.mxu0 %v111
  %875 = vmatprep.subr.mxu0 %v106
  %876 = vmatpush1.msra.mxu0 %v105
  %877 = vmatprep.subr.mxu0 %v100
  %878 = vmatpush1.msra.mxu0 %v99
  %879 = vmatprep.subr.mxu0 %v94
  %880 = vmatpush1.msra.mxu0 %v93
  %881 = vmatprep.subr.mxu0 %v88
  %882 = vmatpush1.msra.mxu0 %v87
  %883 = vmatprep.subr.mxu0 %v82
  %884 = vmatpush1.msra.mxu0 %v81
  %885 = vmatprep.subr.mxu0 %v76
  %886 = vmatpush1.msra.mxu0 %v75
  %887 = vmatprep.subr.mxu0 %v70
  %888 = vmatpush1.msra.mxu0 %v69
  %889 = vmatprep.subr.mxu0 %v64
  %890 = vmatpush1.msra.mxu0 %v63
  %891 = vmatprep.subr.mxu0 %v58
  %892 = vmatpush1.msra.mxu0 %v57
  %893 = vmatprep.subr.mxu0 %v52
  %894 = vmatpush1.msra.mxu0 %v51
  %895 = vmatprep.subr.mxu0 %v46
  %896 = vmatpush1.msra.mxu0 %v45
  %897 = vmatprep.subr.mxu0 %v40
  %898 = vmatpush1.msra.mxu0 %v39
  %899 = vmatprep.subr.mxu0 %v34
  %900 = vmatpush1.msra.mxu0 %v33
  %901 = vmatprep.subr.mxu0 %v28
  %902 = vmatpush1.msra.mxu0 %v27
  %903 = vmatprep.subr.mxu0 %v22
  %904 = vmatpush1.msra.mxu0 %v21
  %905 = vmatprep.subr.mxu0 %v208
  %906 = vmatpush2.msra.mxu0 %v207
  %907 = vmatprep.subr.mxu0 %v202
  %908 = vmatpush2.msra.mxu0 %v201
  %909 = vmatprep.subr.mxu0 %v196
  %910 = vmatpush2.msra.mxu0 %v195
  %911 = vmatprep.subr.mxu0 %v190
  %912 = vmatpush2.msra.mxu0 %v189
  %913 = vmatprep.subr.mxu0 %v184
  %914 = vmatpush2.msra.mxu0 %v183
  %915 = vmatprep.subr.mxu0 %v178
  %916 = vmatpush2.msra.mxu0 %v177
  %917 = vmatprep.subr.mxu0 %v172
  %918 = vmatpush2.msra.mxu0 %v171
  %919 = vmatprep.subr.mxu0 %v166
  %920 = vmatpush2.msra.mxu0 %v165
  %921 = vmatprep.subr.mxu0 %v160
  %922 = vmatpush2.msra.mxu0 %v159
  %923 = vmatprep.subr.mxu0 %v154
  %924 = vmatpush2.msra.mxu0 %v153
  %925 = vmatprep.subr.mxu0 %v148
  %926 = vmatpush2.msra.mxu0 %v147
  %927 = vmatprep.subr.mxu0 %v142
  %928 = vmatpush2.msra.mxu0 %v141
  %929 = vmatprep.subr.mxu0 %v136
  %930 = vmatpush2.msra.mxu0 %v135
  %931 = vmatprep.subr.mxu0 %v130
  %932 = vmatpush2.msra.mxu0 %v129
  %933 = vmatprep.subr.mxu0 %v124
  %934 = vmatpush2.msra.mxu0 %v123
  %935 = vmatprep.subr.mxu0 %v118
  %936 = vmatpush2.msra.mxu0 %v117
  %937 = vmatprep.mubr.f32.mxu0 %v729
  %938 = vmatmul.mubr.f32.gmra.mxu0 %v723
  %v939 = vpop.f32.mrf.mxu0
  %v940 = vadd.f32 0.0, %v939
  %v941 = vpop.f32.mrf.mxu0
  %v942 = vadd.f32 0.0, %v941
  %943 = vdwg.mxu0
  %v946 = vcombine.low %v798, %v800
  %v948 = vadd.f32 %v725, %v946
  %v949 = vxor.u32 %v948, 2147483648
  %v950 = vmul.f32 %v949, 1.442695
  %v951 = vpow.pop %v950
  %v952 = vadd.f32 %v951, 1.0
  %v953 = vrcp.pop %v952
  %v954 = vmul.f32 1.0, %v953
  %v957 = vcombine.low %v869, %v871
  %v959 = vadd.f32 %v726, %v957
  %v960 = vxor.u32 %v959, 2147483648
  %v961 = vmul.f32 %v960, 1.442695
  %v962 = vpow.pop %v961
  %v963 = vadd.f32 %v962, 1.0
  %v964 = vrcp.pop %v963
  %v965 = vmul.f32 1.0, %v964
  %v966 = vadd.f32 %v940, %v449
  %v967 = vadd.f32 %v942, %v453
  %v970 = vcombine.low %v966, %v967
  %v972 = vmul.f32 %v954, %v970
  %v973 = vadd.f32 %v727, %v972
  %v974 = vtanh.pop %v973
  %v975 = vsub.f32 1.0, %v965
  %v976 = vmul.f32 %v975, %v974
  %v977 = vmul.f32 %v965, %v723
  %v978 = vadd.f32 %v976, %v977
  %s979 = scalar_lea.vmem %s0, 72
  %v980 = vld [vmem:[%s979] sm:$0xff]
  %v981 = vld [vmem:[%s979 + $0x8] sm:$0xff]
  %v982 = vld [vmem:[%s979 + $0x10] sm:$0xff]
  %v984 = vcombine.high %v978, %v978
  %986 = vmatprep.subr.mxu0 %v108
  %987 = vmatpush1.msra.mxu0 %v107
  %988 = vmatprep.subr.mxu0 %v102
  %989 = vmatpush1.msra.mxu0 %v101
  %990 = vmatprep.subr.mxu0 %v96
  %991 = vmatpush1.msra.mxu0 %v95
  %992 = vmatprep.subr.mxu0 %v90
  %993 = vmatpush1.msra.mxu0 %v89
  %994 = vmatprep.subr.mxu0 %v84
  %995 = vmatpush1.msra.mxu0 %v83
  %996 = vmatprep.subr.mxu0 %v78
  %997 = vmatpush1.msra.mxu0 %v77
  %998 = vmatprep.subr.mxu0 %v72
  %999 = vmatpush1.msra.mxu0 %v71
  %1000 = vmatprep.subr.mxu0 %v66
  %1001 = vmatpush1.msra.mxu0 %v65
  %1002 = vmatprep.subr.mxu0 %v60
  %1003 = vmatpush1.msra.mxu0 %v59
  %1004 = vmatprep.subr.mxu0 %v54
  %1005 = vmatpush1.msra.mxu0 %v53
  %1006 = vmatprep.subr.mxu0 %v48
  %1007 = vmatpush1.msra.mxu0 %v47
  %1008 = vmatprep.subr.mxu0 %v42
  %1009 = vmatpush1.msra.mxu0 %v41
  %1010 = vmatprep.subr.mxu0 %v36
  %1011 = vmatpush1.msra.mxu0 %v35
  %1012 = vmatprep.subr.mxu0 %v30
  %1013 = vmatpush1.msra.mxu0 %v29
  %1014 = vmatprep.subr.mxu0 %v24
  %1015 = vmatpush1.msra.mxu0 %v23
  %1016 = vmatprep.subr.mxu0 %v18
  %1017 = vmatpush1.msra.mxu0 %v17
  %1018 = vmatprep.subr.mxu0 %v204
  %1019 = vmatpush2.msra.mxu0 %v203
  %1020 = vmatprep.subr.mxu0 %v198
  %1021 = vmatpush2.msra.mxu0 %v197
  %1022 = vmatprep.subr.mxu0 %v192
  %1023 = vmatpush2.msra.mxu0 %v191
  %1024 = vmatprep.subr.mxu0 %v186
  %1025 = vmatpush2.msra.mxu0 %v185
  %1026 = vmatprep.subr.mxu0 %v180
  %1027 = vmatpush2.msra.mxu0 %v179
  %1028 = vmatprep.subr.mxu0 %v174
  %1029 = vmatpush2.msra.mxu0 %v173
  %1030 = vmatprep.subr.mxu0 %v168
  %1031 = vmatpush2.msra.mxu0 %v167
  %1032 = vmatprep.subr.mxu0 %v162
  %1033 = vmatpush2.msra.mxu0 %v161
  %1034 = vmatprep.subr.mxu0 %v156
  %1035 = vmatpush2.msra.mxu0 %v155
  %1036 = vmatprep.subr.mxu0 %v150
  %1037 = vmatpush2.msra.mxu0 %v149
  %1038 = vmatprep.subr.mxu0 %v144
  %1039 = vmatpush2.msra.mxu0 %v143
  %1040 = vmatprep.subr.mxu0 %v138
  %1041 = vmatpush2.msra.mxu0 %v137
  %1042 = vmatprep.subr.mxu0 %v132
  %1043 = vmatpush2.msra.mxu0 %v131
  %1044 = vmatprep.subr.mxu0 %v126
  %1045 = vmatpush2.msra.mxu0 %v125
  %1046 = vmatprep.subr.mxu0 %v120
  %1047 = vmatpush2.msra.mxu0 %v119
  %1048 = vmatprep.subr.mxu0 %v114
  %1049 = vmatpush2.msra.mxu0 %v113
  %1050 = vmatprep.mubr.f32.mxu0 %v984
  %1051 = vmatmul.mubr.f32.gmra.mxu0 %v978
  %v1052 = vpop.f32.mrf.mxu0
  %v1053 = vadd.f32 0.0, %v1052
  %v1054 = vpop.f32.mrf.mxu0
  %v1055 = vadd.f32 0.0, %v1054
  %1056 = vdwg.mxu0
  %1057 = vmatprep.subr.mxu0 %v110
  %1058 = vmatpush1.msra.mxu0 %v109
  %1059 = vmatprep.subr.mxu0 %v104
  %1060 = vmatpush1.msra.mxu0 %v103
  %1061 = vmatprep.subr.mxu0 %v98
  %1062 = vmatpush1.msra.mxu0 %v97
  %1063 = vmatprep.subr.mxu0 %v92
  %1064 = vmatpush1.msra.mxu0 %v91
  %1065 = vmatprep.subr.mxu0 %v86
  %1066 = vmatpush1.msra.mxu0 %v85
  %1067 = vmatprep.subr.mxu0 %v80
  %1068 = vmatpush1.msra.mxu0 %v79
  %1069 = vmatprep.subr.mxu0 %v74
  %1070 = vmatpush1.msra.mxu0 %v73
  %1071 = vmatprep.subr.mxu0 %v68
  %1072 = vmatpush1.msra.mxu0 %v67
  %1073 = vmatprep.subr.mxu0 %v62
  %1074 = vmatpush1.msra.mxu0 %v61
  %1075 = vmatprep.subr.mxu0 %v56
  %1076 = vmatpush1.msra.mxu0 %v55
  %1077 = vmatprep.subr.mxu0 %v50
  %1078 = vmatpush1.msra.mxu0 %v49
  %1079 = vmatprep.subr.mxu0 %v44
  %1080 = vmatpush1.msra.mxu0 %v43
  %1081 = vmatprep.subr.mxu0 %v38
  %1082 = vmatpush1.msra.mxu0 %v37
  %1083 = vmatprep.subr.mxu0 %v32
  %1084 = vmatpush1.msra.mxu0 %v31
  %1085 = vmatprep.subr.mxu0 %v26
  %1086 = vmatpush1.msra.mxu0 %v25
  %1087 = vmatprep.subr.mxu0 %v20
  %1088 = vmatpush1.msra.mxu0 %v19
  %1089 = vmatprep.subr.mxu0 %v206
  %1090 = vmatpush2.msra.mxu0 %v205
  %1091 = vmatprep.subr.mxu0 %v200
  %1092 = vmatpush2.msra.mxu0 %v199
  %1093 = vmatprep.subr.mxu0 %v194
  %1094 = vmatpush2.msra.mxu0 %v193
  %1095 = vmatprep.subr.mxu0 %v188
  %1096 = vmatpush2.msra.mxu0 %v187
  %1097 = vmatprep.subr.mxu0 %v182
  %1098 = vmatpush2.msra.mxu0 %v181
  %1099 = vmatprep.subr.mxu0 %v176
  %1100 = vmatpush2.msra.mxu0 %v175
  %1101 = vmatprep.subr.mxu0 %v170
  %1102 = vmatpush2.msra.mxu0 %v169
  %1103 = vmatprep.subr.mxu0 %v164
  %1104 = vmatpush2.msra.mxu0 %v163
  %1105 = vmatprep.subr.mxu0 %v158
  %1106 = vmatpush2.msra.mxu0 %v157
  %1107 = vmatprep.subr.mxu0 %v152
  %1108 = vmatpush2.msra.mxu0 %v151
  %1109 = vmatprep.subr.mxu0 %v146
  %1110 = vmatpush2.msra.mxu0 %v145
  %1111 = vmatprep.subr.mxu0 %v140
  %1112 = vmatpush2.msra.mxu0 %v139
  %1113 = vmatprep.subr.mxu0 %v134
  %1114 = vmatpush2.msra.mxu0 %v133
  %1115 = vmatprep.subr.mxu0 %v128
  %1116 = vmatpush2.msra.mxu0 %v127
  %1117 = vmatprep.subr.mxu0 %v122
  %1118 = vmatpush2.msra.mxu0 %v121
  %1119 = vmatprep.subr.mxu0 %v116
  %1120 = vmatpush2.msra.mxu0 %v115
  %1121 = vmatprep.mubr.f32.mxu0 %v984
  %1122 = vmatmul.mubr.f32.gmra.mxu0 %v978
  %v1123 = vpop.f32.mrf.mxu0
  %v1124 = vadd.f32 0.0, %v1123
  %v1125 = vpop.f32.mrf.mxu0
  %v1126 = vadd.f32 0.0, %v1125
  %1127 = vdwg.mxu0
  %1128 = vmatprep.subr.mxu0 %v112
  %1129 = vmatpush1.msra.mxu0 %v111
  %1130 = vmatprep.subr.mxu0 %v106
  %1131 = vmatpush1.msra.mxu0 %v105
  %1132 = vmatprep.subr.mxu0 %v100
  %1133 = vmatpush1.msra.mxu0 %v99
  %1134 = vmatprep.subr.mxu0 %v94
  %1135 = vmatpush1.msra.mxu0 %v93
  %1136 = vmatprep.subr.mxu0 %v88
  %1137 = vmatpush1.msra.mxu0 %v87
  %1138 = vmatprep.subr.mxu0 %v82
  %1139 = vmatpush1.msra.mxu0 %v81
  %1140 = vmatprep.subr.mxu0 %v76
  %1141 = vmatpush1.msra.mxu0 %v75
  %1142 = vmatprep.subr.mxu0 %v70
  %1143 = vmatpush1.msra.mxu0 %v69
  %1144 = vmatprep.subr.mxu0 %v64
  %1145 = vmatpush1.msra.mxu0 %v63
  %1146 = vmatprep.subr.mxu0 %v58
  %1147 = vmatpush1.msra.mxu0 %v57
  %1148 = vmatprep.subr.mxu0 %v52
  %1149 = vmatpush1.msra.mxu0 %v51
  %1150 = vmatprep.subr.mxu0 %v46
  %1151 = vmatpush1.msra.mxu0 %v45
  %1152 = vmatprep.subr.mxu0 %v40
  %1153 = vmatpush1.msra.mxu0 %v39
  %1154 = vmatprep.subr.mxu0 %v34
  %1155 = vmatpush1.msra.mxu0 %v33
  %1156 = vmatprep.subr.mxu0 %v28
  %1157 = vmatpush1.msra.mxu0 %v27
  %1158 = vmatprep.subr.mxu0 %v22
  %1159 = vmatpush1.msra.mxu0 %v21
  %1160 = vmatprep.subr.mxu0 %v208
  %1161 = vmatpush2.msra.mxu0 %v207
  %1162 = vmatprep.subr.mxu0 %v202
  %1163 = vmatpush2.msra.mxu0 %v201
  %1164 = vmatprep.subr.mxu0 %v196
  %1165 = vmatpush2.msra.mxu0 %v195
  %1166 = vmatprep.subr.mxu0 %v190
  %1167 = vmatpush2.msra.mxu0 %v189
  %1168 = vmatprep.subr.mxu0 %v184
  %1169 = vmatpush2.msra.mxu0 %v183
  %1170 = vmatprep.subr.mxu0 %v178
  %1171 = vmatpush2.msra.mxu0 %v177
  %1172 = vmatprep.subr.mxu0 %v172
  %1173 = vmatpush2.msra.mxu0 %v171
  %1174 = vmatprep.subr.mxu0 %v166
  %1175 = vmatpush2.msra.mxu0 %v165
  %1176 = vmatprep.subr.mxu0 %v160
  %1177 = vmatpush2.msra.mxu0 %v159
  %1178 = vmatprep.subr.mxu0 %v154
  %1179 = vmatpush2.msra.mxu0 %v153
  %1180 = vmatprep.subr.mxu0 %v148
  %1181 = vmatpush2.msra.mxu0 %v147
  %1182 = vmatprep.subr.mxu0 %v142
  %1183 = vmatpush2.msra.mxu0 %v141
  %1184 = vmatprep.subr.mxu0 %v136
  %1185 = vmatpush2.msra.mxu0 %v135
  %1186 = vmatprep.subr.mxu0 %v130
  %1187 = vmatpush2.msra.mxu0 %v129
  %1188 = vmatprep.subr.mxu0 %v124
  %1189 = vmatpush2.msra.mxu0 %v123
  %1190 = vmatprep.subr.mxu0 %v118
  %1191 = vmatpush2.msra.mxu0 %v117
  %1192 = vmatprep.mubr.f32.mxu0 %v984
  %1193 = vmatmul.mubr.f32.gmra.mxu0 %v978
  %v1194 = vpop.f32.mrf.mxu0
  %v1195 = vadd.f32 0.0, %v1194
  %v1196 = vpop.f32.mrf.mxu0
  %v1197 = vadd.f32 0.0, %v1196
  %1198 = vdwg.mxu0
  %v1201 = vcombine.low %v1053, %v1055
  %v1203 = vadd.f32 %v980, %v1201
  %v1204 = vxor.u32 %v1203, 2147483648
  %v1205 = vmul.f32 %v1204, 1.442695
  %v1206 = vpow.pop %v1205
  %v1207 = vadd.f32 %v1206, 1.0
  %v1208 = vrcp.pop %v1207
  %v1209 = vmul.f32 1.0, %v1208
  %v1212 = vcombine.low %v1124, %v1126
  %v1214 = vadd.f32 %v981, %v1212
  %v1215 = vxor.u32 %v1214, 2147483648
  %v1216 = vmul.f32 %v1215, 1.442695
  %v1217 = vpow.pop %v1216
  %v1218 = vadd.f32 %v1217, 1.0
  %v1219 = vrcp.pop %v1218
  %v1220 = vmul.f32 1.0, %v1219
  %v1221 = vadd.f32 %v1195, %v449
  %v1222 = vadd.f32 %v1197, %v453
  %v1225 = vcombine.low %v1221, %v1222
  %v1227 = vmul.f32 %v1209, %v1225
  %v1228 = vadd.f32 %v982, %v1227
  %v1229 = vtanh.pop %v1228
  %v1230 = vsub.f32 1.0, %v1220
  %v1231 = vmul.f32 %v1230, %v1229
  %v1232 = vmul.f32 %v1220, %v978
  %v1233 = vadd.f32 %v1231, %v1232
  %s1234 = scalar_lea.vmem %s0, 96
  %v1235 = vld [vmem:[%s1234] sm:$0xff]
  %v1236 = vld [vmem:[%s1234 + $0x8] sm:$0xff]
  %v1237 = vld [vmem:[%s1234 + $0x10] sm:$0xff]
  %v1239 = vcombine.high %v1233, %v1233
  %1241 = vmatprep.subr.mxu0 %v108
  %1242 = vmatpush1.msra.mxu0 %v107
  %1243 = vmatprep.subr.mxu0 %v102
  %1244 = vmatpush1.msra.mxu0 %v101
  %1245 = vmatprep.subr.mxu0 %v96
  %1246 = vmatpush1.msra.mxu0 %v95
  %1247 = vmatprep.subr.mxu0 %v90
  %1248 = vmatpush1.msra.mxu0 %v89
  %1249 = vmatprep.subr.mxu0 %v84
  %1250 = vmatpush1.msra.mxu0 %v83
  %1251 = vmatprep.subr.mxu0 %v78
  %1252 = vmatpush1.msra.mxu0 %v77
  %1253 = vmatprep.subr.mxu0 %v72
  %1254 = vmatpush1.msra.mxu0 %v71
  %1255 = vmatprep.subr.mxu0 %v66
  %1256 = vmatpush1.msra.mxu0 %v65
  %1257 = vmatprep.subr.mxu0 %v60
  %1258 = vmatpush1.msra.mxu0 %v59
  %1259 = vmatprep.subr.mxu0 %v54
  %1260 = vmatpush1.msra.mxu0 %v53
  %1261 = vmatprep.subr.mxu0 %v48
  %1262 = vmatpush1.msra.mxu0 %v47
  %1263 = vmatprep.subr.mxu0 %v42
  %1264 = vmatpush1.msra.mxu0 %v41
  %1265 = vmatprep.subr.mxu0 %v36
  %1266 = vmatpush1.msra.mxu0 %v35
  %1267 = vmatprep.subr.mxu0 %v30
  %1268 = vmatpush1.msra.mxu0 %v29
  %1269 = vmatprep.subr.mxu0 %v24
  %1270 = vmatpush1.msra.mxu0 %v23
  %1271 = vmatprep.subr.mxu0 %v18
  %1272 = vmatpush1.msra.mxu0 %v17
  %1273 = vmatprep.subr.mxu0 %v204
  %1274 = vmatpush2.msra.mxu0 %v203
  %1275 = vmatprep.subr.mxu0 %v198
  %1276 = vmatpush2.msra.mxu0 %v197
  %1277 = vmatprep.subr.mxu0 %v192
  %1278 = vmatpush2.msra.mxu0 %v191
  %1279 = vmatprep.subr.mxu0 %v186
  %1280 = vmatpush2.msra.mxu0 %v185
  %1281 = vmatprep.subr.mxu0 %v180
  %1282 = vmatpush2.msra.mxu0 %v179
  %1283 = vmatprep.subr.mxu0 %v174
  %1284 = vmatpush2.msra.mxu0 %v173
  %1285 = vmatprep.subr.mxu0 %v168
  %1286 = vmatpush2.msra.mxu0 %v167
  %1287 = vmatprep.subr.mxu0 %v162
  %1288 = vmatpush2.msra.mxu0 %v161
  %1289 = vmatprep.subr.mxu0 %v156
  %1290 = vmatpush2.msra.mxu0 %v155
  %1291 = vmatprep.subr.mxu0 %v150
  %1292 = vmatpush2.msra.mxu0 %v149
  %1293 = vmatprep.subr.mxu0 %v144
  %1294 = vmatpush2.msra.mxu0 %v143
  %1295 = vmatprep.subr.mxu0 %v138
  %1296 = vmatpush2.msra.mxu0 %v137
  %1297 = vmatprep.subr.mxu0 %v132
  %1298 = vmatpush2.msra.mxu0 %v131
  %1299 = vmatprep.subr.mxu0 %v126
  %1300 = vmatpush2.msra.mxu0 %v125
  %1301 = vmatprep.subr.mxu0 %v120
  %1302 = vmatpush2.msra.mxu0 %v119
  %1303 = vmatprep.subr.mxu0 %v114
  %1304 = vmatpush2.msra.mxu0 %v113
  %1305 = vmatprep.mubr.f32.mxu0 %v1239
  %1306 = vmatmul.mubr.f32.gmra.mxu0 %v1233
  %v1307 = vpop.f32.mrf.mxu0
  %v1308 = vadd.f32 0.0, %v1307
  %v1309 = vpop.f32.mrf.mxu0
  %v1310 = vadd.f32 0.0, %v1309
  %1311 = vdwg.mxu0
  %1312 = vmatprep.subr.mxu0 %v110
  %1313 = vmatpush1.msra.mxu0 %v109
  %1314 = vmatprep.subr.mxu0 %v104
  %1315 = vmatpush1.msra.mxu0 %v103
  %1316 = vmatprep.subr.mxu0 %v98
  %1317 = vmatpush1.msra.mxu0 %v97
  %1318 = vmatprep.subr.mxu0 %v92
  %1319 = vmatpush1.msra.mxu0 %v91
  %1320 = vmatprep.subr.mxu0 %v86
  %1321 = vmatpush1.msra.mxu0 %v85
  %1322 = vmatprep.subr.mxu0 %v80
  %1323 = vmatpush1.msra.mxu0 %v79
  %1324 = vmatprep.subr.mxu0 %v74
  %1325 = vmatpush1.msra.mxu0 %v73
  %1326 = vmatprep.subr.mxu0 %v68
  %1327 = vmatpush1.msra.mxu0 %v67
  %1328 = vmatprep.subr.mxu0 %v62
  %1329 = vmatpush1.msra.mxu0 %v61
  %1330 = vmatprep.subr.mxu0 %v56
  %1331 = vmatpush1.msra.mxu0 %v55
  %1332 = vmatprep.subr.mxu0 %v50
  %1333 = vmatpush1.msra.mxu0 %v49
  %1334 = vmatprep.subr.mxu0 %v44
  %1335 = vmatpush1.msra.mxu0 %v43
  %1336 = vmatprep.subr.mxu0 %v38
  %1337 = vmatpush1.msra.mxu0 %v37
  %1338 = vmatprep.subr.mxu0 %v32
  %1339 = vmatpush1.msra.mxu0 %v31
  %1340 = vmatprep.subr.mxu0 %v26
  %1341 = vmatpush1.msra.mxu0 %v25
  %1342 = vmatprep.subr.mxu0 %v20
  %1343 = vmatpush1.msra.mxu0 %v19
  %1344 = vmatprep.subr.mxu0 %v206
  %1345 = vmatpush2.msra.mxu0 %v205
  %1346 = vmatprep.subr.mxu0 %v200
  %1347 = vmatpush2.msra.mxu0 %v199
  %1348 = vmatprep.subr.mxu0 %v194
  %1349 = vmatpush2.msra.mxu0 %v193
  %1350 = vmatprep.subr.mxu0 %v188
  %1351 = vmatpush2.msra.mxu0 %v187
  %1352 = vmatprep.subr.mxu0 %v182
  %1353 = vmatpush2.msra.mxu0 %v181
  %1354 = vmatprep.subr.mxu0 %v176
  %1355 = vmatpush2.msra.mxu0 %v175
  %1356 = vmatprep.subr.mxu0 %v170
  %1357 = vmatpush2.msra.mxu0 %v169
  %1358 = vmatprep.subr.mxu0 %v164
  %1359 = vmatpush2.msra.mxu0 %v163
  %1360 = vmatprep.subr.mxu0 %v158
  %1361 = vmatpush2.msra.mxu0 %v157
  %1362 = vmatprep.subr.mxu0 %v152
  %1363 = vmatpush2.msra.mxu0 %v151
  %1364 = vmatprep.subr.mxu0 %v146
  %1365 = vmatpush2.msra.mxu0 %v145
  %1366 = vmatprep.subr.mxu0 %v140
  %1367 = vmatpush2.msra.mxu0 %v139
  %1368 = vmatprep.subr.mxu0 %v134
  %1369 = vmatpush2.msra.mxu0 %v133
  %1370 = vmatprep.subr.mxu0 %v128
  %1371 = vmatpush2.msra.mxu0 %v127
  %1372 = vmatprep.subr.mxu0 %v122
  %1373 = vmatpush2.msra.mxu0 %v121
  %1374 = vmatprep.subr.mxu0 %v116
  %1375 = vmatpush2.msra.mxu0 %v115
  %1376 = vmatprep.mubr.f32.mxu0 %v1239
  %1377 = vmatmul.mubr.f32.gmra.mxu0 %v1233
  %v1378 = vpop.f32.mrf.mxu0
  %v1379 = vadd.f32 0.0, %v1378
  %v1380 = vpop.f32.mrf.mxu0
  %v1381 = vadd.f32 0.0, %v1380
  %1382 = vdwg.mxu0
  %1383 = vmatprep.subr.mxu0 %v112
  %1384 = vmatpush1.msra.mxu0 %v111
  %1385 = vmatprep.subr.mxu0 %v106
  %1386 = vmatpush1.msra.mxu0 %v105
  %1387 = vmatprep.subr.mxu0 %v100
  %1388 = vmatpush1.msra.mxu0 %v99
  %1389 = vmatprep.subr.mxu0 %v94
  %1390 = vmatpush1.msra.mxu0 %v93
  %1391 = vmatprep.subr.mxu0 %v88
  %1392 = vmatpush1.msra.mxu0 %v87
  %1393 = vmatprep.subr.mxu0 %v82
  %1394 = vmatpush1.msra.mxu0 %v81
  %1395 = vmatprep.subr.mxu0 %v76
  %1396 = vmatpush1.msra.mxu0 %v75
  %1397 = vmatprep.subr.mxu0 %v70
  %1398 = vmatpush1.msra.mxu0 %v69
  %1399 = vmatprep.subr.mxu0 %v64
  %1400 = vmatpush1.msra.mxu0 %v63
  %1401 = vmatprep.subr.mxu0 %v58
  %1402 = vmatpush1.msra.mxu0 %v57
  %1403 = vmatprep.subr.mxu0 %v52
  %1404 = vmatpush1.msra.mxu0 %v51
  %1405 = vmatprep.subr.mxu0 %v46
  %1406 = vmatpush1.msra.mxu0 %v45
  %1407 = vmatprep.subr.mxu0 %v40
  %1408 = vmatpush1.msra.mxu0 %v39
  %1409 = vmatprep.subr.mxu0 %v34
  %1410 = vmatpush1.msra.mxu0 %v33
  %1411 = vmatprep.subr.mxu0 %v28
  %1412 = vmatpush1.msra.mxu0 %v27
  %1413 = vmatprep.subr.mxu0 %v22
  %1414 = vmatpush1.msra.mxu0 %v21
  %1415 = vmatprep.subr.mxu0 %v208
  %1416 = vmatpush2.msra.mxu0 %v207
  %1417 = vmatprep.subr.mxu0 %v202
  %1418 = vmatpush2.msra.mxu0 %v201
  %1419 = vmatprep.subr.mxu0 %v196
  %1420 = vmatpush2.msra.mxu0 %v195
  %1421 = vmatprep.subr.mxu0 %v190
  %1422 = vmatpush2.msra.mxu0 %v189
  %1423 = vmatprep.subr.mxu0 %v184
  %1424 = vmatpush2.msra.mxu0 %v183
  %1425 = vmatprep.subr.mxu0 %v178
  %1426 = vmatpush2.msra.mxu0 %v177
  %1427 = vmatprep.subr.mxu0 %v172
  %1428 = vmatpush2.msra.mxu0 %v171
  %1429 = vmatprep.subr.mxu0 %v166
  %1430 = vmatpush2.msra.mxu0 %v165
  %1431 = vmatprep.subr.mxu0 %v160
  %1432 = vmatpush2.msra.mxu0 %v159
  %1433 = vmatprep.subr.mxu0 %v154
  %1434 = vmatpush2.msra.mxu0 %v153
  %1435 = vmatprep.subr.mxu0 %v148
  %1436 = vmatpush2.msra.mxu0 %v147
  %1437 = vmatprep.subr.mxu0 %v142
  %1438 = vmatpush2.msra.mxu0 %v141
  %1439 = vmatprep.subr.mxu0 %v136
  %1440 = vmatpush2.msra.mxu0 %v135
  %1441 = vmatprep.subr.mxu0 %v130
  %1442 = vmatpush2.msra.mxu0 %v129
  %1443 = vmatprep.subr.mxu0 %v124
  %1444 = vmatpush2.msra.mxu0 %v123
  %1445 = vmatprep.subr.mxu0 %v118
  %1446 = vmatpush2.msra.mxu0 %v117
  %1447 = vmatprep.mubr.f32.mxu0 %v1239
  %1448 = vmatmul.mubr.f32.gmra.mxu0 %v1233
  %v1449 = vpop.f32.mrf.mxu0
  %v1450 = vadd.f32 0.0, %v1449
  %v1451 = vpop.f32.mrf.mxu0
  %v1452 = vadd.f32 0.0, %v1451
  %1453 = vdwg.mxu0
  %v1456 = vcombine.low %v1308, %v1310
  %v1458 = vadd.f32 %v1235, %v1456
  %v1459 = vxor.u32 %v1458, 2147483648
  %v1460 = vmul.f32 %v1459, 1.442695
  %v1461 = vpow.pop %v1460
  %v1462 = vadd.f32 %v1461, 1.0
  %v1463 = vrcp.pop %v1462
  %v1464 = vmul.f32 1.0, %v1463
  %v1467 = vcombine.low %v1379, %v1381
  %v1469 = vadd.f32 %v1236, %v1467
  %v1470 = vxor.u32 %v1469, 2147483648
  %v1471 = vmul.f32 %v1470, 1.442695
  %v1472 = vpow.pop %v1471
  %v1473 = vadd.f32 %v1472, 1.0
  %v1474 = vrcp.pop %v1473
  %v1475 = vmul.f32 1.0, %v1474
  %v1476 = vadd.f32 %v1450, %v449
  %v1477 = vadd.f32 %v1452, %v453
  %v1480 = vcombine.low %v1476, %v1477
  %v1482 = vmul.f32 %v1464, %v1480
  %v1483 = vadd.f32 %v1237, %v1482
  %v1484 = vtanh.pop %v1483
  %v1485 = vsub.f32 1.0, %v1475
  %v1486 = vmul.f32 %v1485, %v1484
  %v1487 = vmul.f32 %v1475, %v1233
  %v1488 = vadd.f32 %v1486, %v1487
  %s1489 = scalar_lea.vmem %s0, 120
  %v1490 = vld [vmem:[%s1489] sm:$0xff]
  %v1491 = vld [vmem:[%s1489 + $0x8] sm:$0xff]
  %v1492 = vld [vmem:[%s1489 + $0x10] sm:$0xff]
  %v1494 = vcombine.high %v1488, %v1488
  %1496 = vmatprep.subr.mxu0 %v108
  %1497 = vmatpush1.msra.mxu0 %v107
  %1498 = vmatprep.subr.mxu0 %v102
  %1499 = vmatpush1.msra.mxu0 %v101
  %1500 = vmatprep.subr.mxu0 %v96
  %1501 = vmatpush1.msra.mxu0 %v95
  %1502 = vmatprep.subr.mxu0 %v90
  %1503 = vmatpush1.msra.mxu0 %v89
  %1504 = vmatprep.subr.mxu0 %v84
  %1505 = vmatpush1.msra.mxu0 %v83
  %1506 = vmatprep.subr.mxu0 %v78
  %1507 = vmatpush1.msra.mxu0 %v77
  %1508 = vmatprep.subr.mxu0 %v72
  %1509 = vmatpush1.msra.mxu0 %v71
  %1510 = vmatprep.subr.mxu0 %v66
  %1511 = vmatpush1.msra.mxu0 %v65
  %1512 = vmatprep.subr.mxu0 %v60
  %1513 = vmatpush1.msra.mxu0 %v59
  %1514 = vmatprep.subr.mxu0 %v54
  %1515 = vmatpush1.msra.mxu0 %v53
  %1516 = vmatprep.subr.mxu0 %v48
  %1517 = vmatpush1.msra.mxu0 %v47
  %1518 = vmatprep.subr.mxu0 %v42
  %1519 = vmatpush1.msra.mxu0 %v41
  %1520 = vmatprep.subr.mxu0 %v36
  %1521 = vmatpush1.msra.mxu0 %v35
  %1522 = vmatprep.subr.mxu0 %v30
  %1523 = vmatpush1.msra.mxu0 %v29
  %1524 = vmatprep.subr.mxu0 %v24
  %1525 = vmatpush1.msra.mxu0 %v23
  %1526 = vmatprep.subr.mxu0 %v18
  %1527 = vmatpush1.msra.mxu0 %v17
  %1528 = vmatprep.subr.mxu0 %v204
  %1529 = vmatpush2.msra.mxu0 %v203
  %1530 = vmatprep.subr.mxu0 %v198
  %1531 = vmatpush2.msra.mxu0 %v197
  %1532 = vmatprep.subr.mxu0 %v192
  %1533 = vmatpush2.msra.mxu0 %v191
  %1534 = vmatprep.subr.mxu0 %v186
  %1535 = vmatpush2.msra.mxu0 %v185
  %1536 = vmatprep.subr.mxu0 %v180
  %1537 = vmatpush2.msra.mxu0 %v179
  %1538 = vmatprep.subr.mxu0 %v174
  %1539 = vmatpush2.msra.mxu0 %v173
  %1540 = vmatprep.subr.mxu0 %v168
  %1541 = vmatpush2.msra.mxu0 %v167
  %1542 = vmatprep.subr.mxu0 %v162
  %1543 = vmatpush2.msra.mxu0 %v161
  %1544 = vmatprep.subr.mxu0 %v156
  %1545 = vmatpush2.msra.mxu0 %v155
  %1546 = vmatprep.subr.mxu0 %v150
  %1547 = vmatpush2.msra.mxu0 %v149
  %1548 = vmatprep.subr.mxu0 %v144
  %1549 = vmatpush2.msra.mxu0 %v143
  %1550 = vmatprep.subr.mxu0 %v138
  %1551 = vmatpush2.msra.mxu0 %v137
  %1552 = vmatprep.subr.mxu0 %v132
  %1553 = vmatpush2.msra.mxu0 %v131
  %1554 = vmatprep.subr.mxu0 %v126
  %1555 = vmatpush2.msra.mxu0 %v125
  %1556 = vmatprep.subr.mxu0 %v120
  %1557 = vmatpush2.msra.mxu0 %v119
  %1558 = vmatprep.subr.mxu0 %v114
  %1559 = vmatpush2.msra.mxu0 %v113
  %1560 = vmatprep.mubr.f32.mxu0 %v1494
  %1561 = vmatmul.mubr.f32.gmra.mxu0 %v1488
  %v1562 = vpop.f32.mrf.mxu0
  %v1563 = vadd.f32 0.0, %v1562
  %v1564 = vpop.f32.mrf.mxu0
  %v1565 = vadd.f32 0.0, %v1564
  %1566 = vdwg.mxu0
  %1567 = vmatprep.subr.mxu0 %v110
  %1568 = vmatpush1.msra.mxu0 %v109
  %1569 = vmatprep.subr.mxu0 %v104
  %1570 = vmatpush1.msra.mxu0 %v103
  %1571 = vmatprep.subr.mxu0 %v98
  %1572 = vmatpush1.msra.mxu0 %v97
  %1573 = vmatprep.subr.mxu0 %v92
  %1574 = vmatpush1.msra.mxu0 %v91
  %1575 = vmatprep.subr.mxu0 %v86
  %1576 = vmatpush1.msra.mxu0 %v85
  %1577 = vmatprep.subr.mxu0 %v80
  %1578 = vmatpush1.msra.mxu0 %v79
  %1579 = vmatprep.subr.mxu0 %v74
  %1580 = vmatpush1.msra.mxu0 %v73
  %1581 = vmatprep.subr.mxu0 %v68
  %1582 = vmatpush1.msra.mxu0 %v67
  %1583 = vmatprep.subr.mxu0 %v62
  %1584 = vmatpush1.msra.mxu0 %v61
  %1585 = vmatprep.subr.mxu0 %v56
  %1586 = vmatpush1.msra.mxu0 %v55
  %1587 = vmatprep.subr.mxu0 %v50
  %1588 = vmatpush1.msra.mxu0 %v49
  %1589 = vmatprep.subr.mxu0 %v44
  %1590 = vmatpush1.msra.mxu0 %v43
  %1591 = vmatprep.subr.mxu0 %v38
  %1592 = vmatpush1.msra.mxu0 %v37
  %1593 = vmatprep.subr.mxu0 %v32
  %1594 = vmatpush1.msra.mxu0 %v31
  %1595 = vmatprep.subr.mxu0 %v26
  %1596 = vmatpush1.msra.mxu0 %v25
  %1597 = vmatprep.subr.mxu0 %v20
  %1598 = vmatpush1.msra.mxu0 %v19
  %1599 = vmatprep.subr.mxu0 %v206
  %1600 = vmatpush2.msra.mxu0 %v205
  %1601 = vmatprep.subr.mxu0 %v200
  %1602 = vmatpush2.msra.mxu0 %v199
  %1603 = vmatprep.subr.mxu0 %v194
  %1604 = vmatpush2.msra.mxu0 %v193
  %1605 = vmatprep.subr.mxu0 %v188
  %1606 = vmatpush2.msra.mxu0 %v187
  %1607 = vmatprep.subr.mxu0 %v182
  %1608 = vmatpush2.msra.mxu0 %v181
  %1609 = vmatprep.subr.mxu0 %v176
  %1610 = vmatpush2.msra.mxu0 %v175
  %1611 = vmatprep.subr.mxu0 %v170
  %1612 = vmatpush2.msra.mxu0 %v169
  %1613 = vmatprep.subr.mxu0 %v164
  %1614 = vmatpush2.msra.mxu0 %v163
  %1615 = vmatprep.subr.mxu0 %v158
  %1616 = vmatpush2.msra.mxu0 %v157
  %1617 = vmatprep.subr.mxu0 %v152
  %1618 = vmatpush2.msra.mxu0 %v151
  %1619 = vmatprep.subr.mxu0 %v146
  %1620 = vmatpush2.msra.mxu0 %v145
  %1621 = vmatprep.subr.mxu0 %v140
  %1622 = vmatpush2.msra.mxu0 %v139
  %1623 = vmatprep.subr.mxu0 %v134
  %1624 = vmatpush2.msra.mxu0 %v133
  %1625 = vmatprep.subr.mxu0 %v128
  %1626 = vmatpush2.msra.mxu0 %v127
  %1627 = vmatprep.subr.mxu0 %v122
  %1628 = vmatpush2.msra.mxu0 %v121
  %1629 = vmatprep.subr.mxu0 %v116
  %1630 = vmatpush2.msra.mxu0 %v115
  %1631 = vmatprep.mubr.f32.mxu0 %v1494
  %1632 = vmatmul.mubr.f32.gmra.mxu0 %v1488
  %v1633 = vpop.f32.mrf.mxu0
  %v1634 = vadd.f32 0.0, %v1633
  %v1635 = vpop.f32.mrf.mxu0
  %v1636 = vadd.f32 0.0, %v1635
  %1637 = vdwg.mxu0
  %1638 = vmatprep.subr.mxu0 %v112
  %1639 = vmatpush1.msra.mxu0 %v111
  %1640 = vmatprep.subr.mxu0 %v106
  %1641 = vmatpush1.msra.mxu0 %v105
  %1642 = vmatprep.subr.mxu0 %v100
  %1643 = vmatpush1.msra.mxu0 %v99
  %1644 = vmatprep.subr.mxu0 %v94
  %1645 = vmatpush1.msra.mxu0 %v93
  %1646 = vmatprep.subr.mxu0 %v88
  %1647 = vmatpush1.msra.mxu0 %v87
  %1648 = vmatprep.subr.mxu0 %v82
  %1649 = vmatpush1.msra.mxu0 %v81
  %1650 = vmatprep.subr.mxu0 %v76
  %1651 = vmatpush1.msra.mxu0 %v75
  %1652 = vmatprep.subr.mxu0 %v70
  %1653 = vmatpush1.msra.mxu0 %v69
  %1654 = vmatprep.subr.mxu0 %v64
  %1655 = vmatpush1.msra.mxu0 %v63
  %1656 = vmatprep.subr.mxu0 %v58
  %1657 = vmatpush1.msra.mxu0 %v57
  %1658 = vmatprep.subr.mxu0 %v52
  %1659 = vmatpush1.msra.mxu0 %v51
  %1660 = vmatprep.subr.mxu0 %v46
  %1661 = vmatpush1.msra.mxu0 %v45
  %1662 = vmatprep.subr.mxu0 %v40
  %1663 = vmatpush1.msra.mxu0 %v39
  %1664 = vmatprep.subr.mxu0 %v34
  %1665 = vmatpush1.msra.mxu0 %v33
  %1666 = vmatprep.subr.mxu0 %v28
  %1667 = vmatpush1.msra.mxu0 %v27
  %1668 = vmatprep.subr.mxu0 %v22
  %1669 = vmatpush1.msra.mxu0 %v21
  %1670 = vmatprep.subr.mxu0 %v208
  %1671 = vmatpush2.msra.mxu0 %v207
  %1672 = vmatprep.subr.mxu0 %v202
  %1673 = vmatpush2.msra.mxu0 %v201
  %1674 = vmatprep.subr.mxu0 %v196
  %1675 = vmatpush2.msra.mxu0 %v195
  %1676 = vmatprep.subr.mxu0 %v190
  %1677 = vmatpush2.msra.mxu0 %v189
  %1678 = vmatprep.subr.mxu0 %v184
  %1679 = vmatpush2.msra.mxu0 %v183
  %1680 = vmatprep.subr.mxu0 %v178
  %1681 = vmatpush2.msra.mxu0 %v177
  %1682 = vmatprep.subr.mxu0 %v172
  %1683 = vmatpush2.msra.mxu0 %v171
  %1684 = vmatprep.subr.mxu0 %v166
  %1685 = vmatpush2.msra.mxu0 %v165
  %1686 = vmatprep.subr.mxu0 %v160
  %1687 = vmatpush2.msra.mxu0 %v159
  %1688 = vmatprep.subr.mxu0 %v154
  %1689 = vmatpush2.msra.mxu0 %v153
  %1690 = vmatprep.subr.mxu0 %v148
  %1691 = vmatpush2.msra.mxu0 %v147
  %1692 = vmatprep.subr.mxu0 %v142
  %1693 = vmatpush2.msra.mxu0 %v141
  %1694 = vmatprep.subr.mxu0 %v136
  %1695 = vmatpush2.msra.mxu0 %v135
  %1696 = vmatprep.subr.mxu0 %v130
  %1697 = vmatpush2.msra.mxu0 %v129
  %1698 = vmatprep.subr.mxu0 %v124
  %1699 = vmatpush2.msra.mxu0 %v123
  %1700 = vmatprep.subr.mxu0 %v118
  %1701 = vmatpush2.msra.mxu0 %v117
  %1702 = vmatprep.mubr.f32.mxu0 %v1494
  %1703 = vmatmul.mubr.f32.gmra.mxu0 %v1488
  %v1704 = vpop.f32.mrf.mxu0
  %v1705 = vadd.f32 0.0, %v1704
  %v1706 = vpop.f32.mrf.mxu0
  %v1707 = vadd.f32 0.0, %v1706
  %1708 = vdwg.mxu0
  %v1711 = vcombine.low %v1563, %v1565
  %v1713 = vadd.f32 %v1490, %v1711
  %v1714 = vxor.u32 %v1713, 2147483648
  %v1715 = vmul.f32 %v1714, 1.442695
  %v1716 = vpow.pop %v1715
  %v1717 = vadd.f32 %v1716, 1.0
  %v1718 = vrcp.pop %v1717
  %v1719 = vmul.f32 1.0, %v1718
  %v1722 = vcombine.low %v1634, %v1636
  %v1724 = vadd.f32 %v1491, %v1722
  %v1725 = vxor.u32 %v1724, 2147483648
  %v1726 = vmul.f32 %v1725, 1.442695
  %v1727 = vpow.pop %v1726
  %v1728 = vadd.f32 %v1727, 1.0
  %v1729 = vrcp.pop %v1728
  %v1730 = vmul.f32 1.0, %v1729
  %v1731 = vadd.f32 %v1705, %v449
  %v1732 = vadd.f32 %v1707, %v453
  %v1735 = vcombine.low %v1731, %v1732
  %v1737 = vmul.f32 %v1719, %v1735
  %v1738 = vadd.f32 %v1492, %v1737
  %v1739 = vtanh.pop %v1738
  %v1740 = vsub.f32 1.0, %v1730
  %v1741 = vmul.f32 %v1740, %v1739
  %v1742 = vmul.f32 %v1730, %v1488
  %v1743 = vadd.f32 %v1741, %v1742
  %s1744 = scalar_lea.vmem %s0, 144
  %v1745 = vld [vmem:[%s1744] sm:$0xff]
  %v1746 = vld [vmem:[%s1744 + $0x8] sm:$0xff]
  %v1747 = vld [vmem:[%s1744 + $0x10] sm:$0xff]
  %v1749 = vcombine.high %v1743, %v1743
  %1751 = vmatprep.subr.mxu0 %v108
  %1752 = vmatpush1.msra.mxu0 %v107
  %1753 = vmatprep.subr.mxu0 %v102
  %1754 = vmatpush1.msra.mxu0 %v101
  %1755 = vmatprep.subr.mxu0 %v96
  %1756 = vmatpush1.msra.mxu0 %v95
  %1757 = vmatprep.subr.mxu0 %v90
  %1758 = vmatpush1.msra.mxu0 %v89
  %1759 = vmatprep.subr.mxu0 %v84
  %1760 = vmatpush1.msra.mxu0 %v83
  %1761 = vmatprep.subr.mxu0 %v78
  %1762 = vmatpush1.msra.mxu0 %v77
  %1763 = vmatprep.subr.mxu0 %v72
  %1764 = vmatpush1.msra.mxu0 %v71
  %1765 = vmatprep.subr.mxu0 %v66
  %1766 = vmatpush1.msra.mxu0 %v65
  %1767 = vmatprep.subr.mxu0 %v60
  %1768 = vmatpush1.msra.mxu0 %v59
  %1769 = vmatprep.subr.mxu0 %v54
  %1770 = vmatpush1.msra.mxu0 %v53
  %1771 = vmatprep.subr.mxu0 %v48
  %1772 = vmatpush1.msra.mxu0 %v47
  %1773 = vmatprep.subr.mxu0 %v42
  %1774 = vmatpush1.msra.mxu0 %v41
  %1775 = vmatprep.subr.mxu0 %v36
  %1776 = vmatpush1.msra.mxu0 %v35
  %1777 = vmatprep.subr.mxu0 %v30
  %1778 = vmatpush1.msra.mxu0 %v29
  %1779 = vmatprep.subr.mxu0 %v24
  %1780 = vmatpush1.msra.mxu0 %v23
  %1781 = vmatprep.subr.mxu0 %v18
  %1782 = vmatpush1.msra.mxu0 %v17
  %1783 = vmatprep.subr.mxu0 %v204
  %1784 = vmatpush2.msra.mxu0 %v203
  %1785 = vmatprep.subr.mxu0 %v198
  %1786 = vmatpush2.msra.mxu0 %v197
  %1787 = vmatprep.subr.mxu0 %v192
  %1788 = vmatpush2.msra.mxu0 %v191
  %1789 = vmatprep.subr.mxu0 %v186
  %1790 = vmatpush2.msra.mxu0 %v185
  %1791 = vmatprep.subr.mxu0 %v180
  %1792 = vmatpush2.msra.mxu0 %v179
  %1793 = vmatprep.subr.mxu0 %v174
  %1794 = vmatpush2.msra.mxu0 %v173
  %1795 = vmatprep.subr.mxu0 %v168
  %1796 = vmatpush2.msra.mxu0 %v167
  %1797 = vmatprep.subr.mxu0 %v162
  %1798 = vmatpush2.msra.mxu0 %v161
  %1799 = vmatprep.subr.mxu0 %v156
  %1800 = vmatpush2.msra.mxu0 %v155
  %1801 = vmatprep.subr.mxu0 %v150
  %1802 = vmatpush2.msra.mxu0 %v149
  %1803 = vmatprep.subr.mxu0 %v144
  %1804 = vmatpush2.msra.mxu0 %v143
  %1805 = vmatprep.subr.mxu0 %v138
  %1806 = vmatpush2.msra.mxu0 %v137
  %1807 = vmatprep.subr.mxu0 %v132
  %1808 = vmatpush2.msra.mxu0 %v131
  %1809 = vmatprep.subr.mxu0 %v126
  %1810 = vmatpush2.msra.mxu0 %v125
  %1811 = vmatprep.subr.mxu0 %v120
  %1812 = vmatpush2.msra.mxu0 %v119
  %1813 = vmatprep.subr.mxu0 %v114
  %1814 = vmatpush2.msra.mxu0 %v113
  %1815 = vmatprep.mubr.f32.mxu0 %v1749
  %1816 = vmatmul.mubr.f32.gmra.mxu0 %v1743
  %v1817 = vpop.f32.mrf.mxu0
  %v1818 = vadd.f32 0.0, %v1817
  %v1819 = vpop.f32.mrf.mxu0
  %v1820 = vadd.f32 0.0, %v1819
  %1821 = vdwg.mxu0
  %1822 = vmatprep.subr.mxu0 %v110
  %1823 = vmatpush1.msra.mxu0 %v109
  %1824 = vmatprep.subr.mxu0 %v104
  %1825 = vmatpush1.msra.mxu0 %v103
  %1826 = vmatprep.subr.mxu0 %v98
  %1827 = vmatpush1.msra.mxu0 %v97
  %1828 = vmatprep.subr.mxu0 %v92
  %1829 = vmatpush1.msra.mxu0 %v91
  %1830 = vmatprep.subr.mxu0 %v86
  %1831 = vmatpush1.msra.mxu0 %v85
  %1832 = vmatprep.subr.mxu0 %v80
  %1833 = vmatpush1.msra.mxu0 %v79
  %1834 = vmatprep.subr.mxu0 %v74
  %1835 = vmatpush1.msra.mxu0 %v73
  %1836 = vmatprep.subr.mxu0 %v68
  %1837 = vmatpush1.msra.mxu0 %v67
  %1838 = vmatprep.subr.mxu0 %v62
  %1839 = vmatpush1.msra.mxu0 %v61
  %1840 = vmatprep.subr.mxu0 %v56
  %1841 = vmatpush1.msra.mxu0 %v55
  %1842 = vmatprep.subr.mxu0 %v50
  %1843 = vmatpush1.msra.mxu0 %v49
  %1844 = vmatprep.subr.mxu0 %v44
  %1845 = vmatpush1.msra.mxu0 %v43
  %1846 = vmatprep.subr.mxu0 %v38
  %1847 = vmatpush1.msra.mxu0 %v37
  %1848 = vmatprep.subr.mxu0 %v32
  %1849 = vmatpush1.msra.mxu0 %v31
  %1850 = vmatprep.subr.mxu0 %v26
  %1851 = vmatpush1.msra.mxu0 %v25
  %1852 = vmatprep.subr.mxu0 %v20
  %1853 = vmatpush1.msra.mxu0 %v19
  %1854 = vmatprep.subr.mxu0 %v206
  %1855 = vmatpush2.msra.mxu0 %v205
  %1856 = vmatprep.subr.mxu0 %v200
  %1857 = vmatpush2.msra.mxu0 %v199
  %1858 = vmatprep.subr.mxu0 %v194
  %1859 = vmatpush2.msra.mxu0 %v193
  %1860 = vmatprep.subr.mxu0 %v188
  %1861 = vmatpush2.msra.mxu0 %v187
  %1862 = vmatprep.subr.mxu0 %v182
  %1863 = vmatpush2.msra.mxu0 %v181
  %1864 = vmatprep.subr.mxu0 %v176
  %1865 = vmatpush2.msra.mxu0 %v175
  %1866 = vmatprep.subr.mxu0 %v170
  %1867 = vmatpush2.msra.mxu0 %v169
  %1868 = vmatprep.subr.mxu0 %v164
  %1869 = vmatpush2.msra.mxu0 %v163
  %1870 = vmatprep.subr.mxu0 %v158
  %1871 = vmatpush2.msra.mxu0 %v157
  %1872 = vmatprep.subr.mxu0 %v152
  %1873 = vmatpush2.msra.mxu0 %v151
  %1874 = vmatprep.subr.mxu0 %v146
  %1875 = vmatpush2.msra.mxu0 %v145
  %1876 = vmatprep.subr.mxu0 %v140
  %1877 = vmatpush2.msra.mxu0 %v139
  %1878 = vmatprep.subr.mxu0 %v134
  %1879 = vmatpush2.msra.mxu0 %v133
  %1880 = vmatprep.subr.mxu0 %v128
  %1881 = vmatpush2.msra.mxu0 %v127
  %1882 = vmatprep.subr.mxu0 %v122
  %1883 = vmatpush2.msra.mxu0 %v121
  %1884 = vmatprep.subr.mxu0 %v116
  %1885 = vmatpush2.msra.mxu0 %v115
  %1886 = vmatprep.mubr.f32.mxu0 %v1749
  %1887 = vmatmul.mubr.f32.gmra.mxu0 %v1743
  %v1888 = vpop.f32.mrf.mxu0
  %v1889 = vadd.f32 0.0, %v1888
  %v1890 = vpop.f32.mrf.mxu0
  %v1891 = vadd.f32 0.0, %v1890
  %1892 = vdwg.mxu0
  %1893 = vmatprep.subr.mxu0 %v112
  %1894 = vmatpush1.msra.mxu0 %v111
  %1895 = vmatprep.subr.mxu0 %v106
  %1896 = vmatpush1.msra.mxu0 %v105
  %1897 = vmatprep.subr.mxu0 %v100
  %1898 = vmatpush1.msra.mxu0 %v99
  %1899 = vmatprep.subr.mxu0 %v94
  %1900 = vmatpush1.msra.mxu0 %v93
  %1901 = vmatprep.subr.mxu0 %v88
  %1902 = vmatpush1.msra.mxu0 %v87
  %1903 = vmatprep.subr.mxu0 %v82
  %1904 = vmatpush1.msra.mxu0 %v81
  %1905 = vmatprep.subr.mxu0 %v76
  %1906 = vmatpush1.msra.mxu0 %v75
  %1907 = vmatprep.subr.mxu0 %v70
  %1908 = vmatpush1.msra.mxu0 %v69
  %1909 = vmatprep.subr.mxu0 %v64
  %1910 = vmatpush1.msra.mxu0 %v63
  %1911 = vmatprep.subr.mxu0 %v58
  %1912 = vmatpush1.msra.mxu0 %v57
  %1913 = vmatprep.subr.mxu0 %v52
  %1914 = vmatpush1.msra.mxu0 %v51
  %1915 = vmatprep.subr.mxu0 %v46
  %1916 = vmatpush1.msra.mxu0 %v45
  %1917 = vmatprep.subr.mxu0 %v40
  %1918 = vmatpush1.msra.mxu0 %v39
  %1919 = vmatprep.subr.mxu0 %v34
  %1920 = vmatpush1.msra.mxu0 %v33
  %1921 = vmatprep.subr.mxu0 %v28
  %1922 = vmatpush1.msra.mxu0 %v27
  %1923 = vmatprep.subr.mxu0 %v22
  %1924 = vmatpush1.msra.mxu0 %v21
  %1925 = vmatprep.subr.mxu0 %v208
  %1926 = vmatpush2.msra.mxu0 %v207
  %1927 = vmatprep.subr.mxu0 %v202
  %1928 = vmatpush2.msra.mxu0 %v201
  %1929 = vmatprep.subr.mxu0 %v196
  %1930 = vmatpush2.msra.mxu0 %v195
  %1931 = vmatprep.subr.mxu0 %v190
  %1932 = vmatpush2.msra.mxu0 %v189
  %1933 = vmatprep.subr.mxu0 %v184
  %1934 = vmatpush2.msra.mxu0 %v183
  %1935 = vmatprep.subr.mxu0 %v178
  %1936 = vmatpush2.msra.mxu0 %v177
  %1937 = vmatprep.subr.mxu0 %v172
  %1938 = vmatpush2.msra.mxu0 %v171
  %1939 = vmatprep.subr.mxu0 %v166
  %1940 = vmatpush2.msra.mxu0 %v165
  %1941 = vmatprep.subr.mxu0 %v160
  %1942 = vmatpush2.msra.mxu0 %v159
  %1943 = vmatprep.subr.mxu0 %v154
  %1944 = vmatpush2.msra.mxu0 %v153
  %1945 = vmatprep.subr.mxu0 %v148
  %1946 = vmatpush2.msra.mxu0 %v147
  %1947 = vmatprep.subr.mxu0 %v142
  %1948 = vmatpush2.msra.mxu0 %v141
  %1949 = vmatprep.subr.mxu0 %v136
  %1950 = vmatpush2.msra.mxu0 %v135
  %1951 = vmatprep.subr.mxu0 %v130
  %1952 = vmatpush2.msra.mxu0 %v129
  %1953 = vmatprep.subr.mxu0 %v124
  %1954 = vmatpush2.msra.mxu0 %v123
  %1955 = vmatprep.subr.mxu0 %v118
  %1956 = vmatpush2.msra.mxu0 %v117
  %1957 = vmatprep.mubr.f32.mxu0 %v1749
  %1958 = vmatmul.mubr.f32.gmra.mxu0 %v1743
  %v1959 = vpop.f32.mrf.mxu0
  %v1960 = vadd.f32 0.0, %v1959
  %v1961 = vpop.f32.mrf.mxu0
  %v1962 = vadd.f32 0.0, %v1961
  %1963 = vdwg.mxu0
  %v1966 = vcombine.low %v1818, %v1820
  %v1968 = vadd.f32 %v1745, %v1966
  %v1969 = vxor.u32 %v1968, 2147483648
  %v1970 = vmul.f32 %v1969, 1.442695
  %v1971 = vpow.pop %v1970
  %v1972 = vadd.f32 %v1971, 1.0
  %v1973 = vrcp.pop %v1972
  %v1974 = vmul.f32 1.0, %v1973
  %v1977 = vcombine.low %v1889, %v1891
  %v1979 = vadd.f32 %v1746, %v1977
  %v1980 = vxor.u32 %v1979, 2147483648
  %v1981 = vmul.f32 %v1980, 1.442695
  %v1982 = vpow.pop %v1981
  %v1983 = vadd.f32 %v1982, 1.0
  %v1984 = vrcp.pop %v1983
  %v1985 = vmul.f32 1.0, %v1984
  %v1986 = vadd.f32 %v1960, %v449
  %v1987 = vadd.f32 %v1962, %v453
  %v1990 = vcombine.low %v1986, %v1987
  %v1992 = vmul.f32 %v1974, %v1990
  %v1993 = vadd.f32 %v1747, %v1992
  %v1994 = vtanh.pop %v1993
  %v1995 = vsub.f32 1.0, %v1985
  %v1996 = vmul.f32 %v1995, %v1994
  %v1997 = vmul.f32 %v1985, %v1743
  %v1998 = vadd.f32 %v1996, %v1997
  %s1999 = scalar_lea.vmem %s0, 168
  %v2000 = vld [vmem:[%s1999] sm:$0xff]
  %v2001 = vld [vmem:[%s1999 + $0x8] sm:$0xff]
  %v2002 = vld [vmem:[%s1999 + $0x10] sm:$0xff]
  %v2004 = vcombine.high %v1998, %v1998
  %2006 = vmatprep.subr.mxu0 %v108
  %2007 = vmatpush1.msra.mxu0 %v107
  %2008 = vmatprep.subr.mxu0 %v102
  %2009 = vmatpush1.msra.mxu0 %v101
  %2010 = vmatprep.subr.mxu0 %v96
  %2011 = vmatpush1.msra.mxu0 %v95
  %2012 = vmatprep.subr.mxu0 %v90
  %2013 = vmatpush1.msra.mxu0 %v89
  %2014 = vmatprep.subr.mxu0 %v84
  %2015 = vmatpush1.msra.mxu0 %v83
  %2016 = vmatprep.subr.mxu0 %v78
  %2017 = vmatpush1.msra.mxu0 %v77
  %2018 = vmatprep.subr.mxu0 %v72
  %2019 = vmatpush1.msra.mxu0 %v71
  %2020 = vmatprep.subr.mxu0 %v66
  %2021 = vmatpush1.msra.mxu0 %v65
  %2022 = vmatprep.subr.mxu0 %v60
  %2023 = vmatpush1.msra.mxu0 %v59
  %2024 = vmatprep.subr.mxu0 %v54
  %2025 = vmatpush1.msra.mxu0 %v53
  %2026 = vmatprep.subr.mxu0 %v48
  %2027 = vmatpush1.msra.mxu0 %v47
  %2028 = vmatprep.subr.mxu0 %v42
  %2029 = vmatpush1.msra.mxu0 %v41
  %2030 = vmatprep.subr.mxu0 %v36
  %2031 = vmatpush1.msra.mxu0 %v35
  %2032 = vmatprep.subr.mxu0 %v30
  %2033 = vmatpush1.msra.mxu0 %v29
  %2034 = vmatprep.subr.mxu0 %v24
  %2035 = vmatpush1.msra.mxu0 %v23
  %2036 = vmatprep.subr.mxu0 %v18
  %2037 = vmatpush1.msra.mxu0 %v17
  %2038 = vmatprep.subr.mxu0 %v204
  %2039 = vmatpush2.msra.mxu0 %v203
  %2040 = vmatprep.subr.mxu0 %v198
  %2041 = vmatpush2.msra.mxu0 %v197
  %2042 = vmatprep.subr.mxu0 %v192
  %2043 = vmatpush2.msra.mxu0 %v191
  %2044 = vmatprep.subr.mxu0 %v186
  %2045 = vmatpush2.msra.mxu0 %v185
  %2046 = vmatprep.subr.mxu0 %v180
  %2047 = vmatpush2.msra.mxu0 %v179
  %2048 = vmatprep.subr.mxu0 %v174
  %2049 = vmatpush2.msra.mxu0 %v173
  %2050 = vmatprep.subr.mxu0 %v168
  %2051 = vmatpush2.msra.mxu0 %v167
  %2052 = vmatprep.subr.mxu0 %v162
  %2053 = vmatpush2.msra.mxu0 %v161
  %2054 = vmatprep.subr.mxu0 %v156
  %2055 = vmatpush2.msra.mxu0 %v155
  %2056 = vmatprep.subr.mxu0 %v150
  %2057 = vmatpush2.msra.mxu0 %v149
  %2058 = vmatprep.subr.mxu0 %v144
  %2059 = vmatpush2.msra.mxu0 %v143
  %2060 = vmatprep.subr.mxu0 %v138
  %2061 = vmatpush2.msra.mxu0 %v137
  %2062 = vmatprep.subr.mxu0 %v132
  %2063 = vmatpush2.msra.mxu0 %v131
  %2064 = vmatprep.subr.mxu0 %v126
  %2065 = vmatpush2.msra.mxu0 %v125
  %2066 = vmatprep.subr.mxu0 %v120
  %2067 = vmatpush2.msra.mxu0 %v119
  %2068 = vmatprep.subr.mxu0 %v114
  %2069 = vmatpush2.msra.mxu0 %v113
  %2070 = vmatprep.mubr.f32.mxu0 %v2004
  %2071 = vmatmul.mubr.f32.gmra.mxu0 %v1998
  %v2072 = vpop.f32.mrf.mxu0
  %v2073 = vadd.f32 0.0, %v2072
  %v2074 = vpop.f32.mrf.mxu0
  %v2075 = vadd.f32 0.0, %v2074
  %2076 = vdwg.mxu0
  %2077 = vmatprep.subr.mxu0 %v110
  %2078 = vmatpush1.msra.mxu0 %v109
  %2079 = vmatprep.subr.mxu0 %v104
  %2080 = vmatpush1.msra.mxu0 %v103
  %2081 = vmatprep.subr.mxu0 %v98
  %2082 = vmatpush1.msra.mxu0 %v97
  %2083 = vmatprep.subr.mxu0 %v92
  %2084 = vmatpush1.msra.mxu0 %v91
  %2085 = vmatprep.subr.mxu0 %v86
  %2086 = vmatpush1.msra.mxu0 %v85
  %2087 = vmatprep.subr.mxu0 %v80
  %2088 = vmatpush1.msra.mxu0 %v79
  %2089 = vmatprep.subr.mxu0 %v74
  %2090 = vmatpush1.msra.mxu0 %v73
  %2091 = vmatprep.subr.mxu0 %v68
  %2092 = vmatpush1.msra.mxu0 %v67
  %2093 = vmatprep.subr.mxu0 %v62
  %2094 = vmatpush1.msra.mxu0 %v61
  %2095 = vmatprep.subr.mxu0 %v56
  %2096 = vmatpush1.msra.mxu0 %v55
  %2097 = vmatprep.subr.mxu0 %v50
  %2098 = vmatpush1.msra.mxu0 %v49
  %2099 = vmatprep.subr.mxu0 %v44
  %2100 = vmatpush1.msra.mxu0 %v43
  %2101 = vmatprep.subr.mxu0 %v38
  %2102 = vmatpush1.msra.mxu0 %v37
  %2103 = vmatprep.subr.mxu0 %v32
  %2104 = vmatpush1.msra.mxu0 %v31
  %2105 = vmatprep.subr.mxu0 %v26
  %2106 = vmatpush1.msra.mxu0 %v25
  %2107 = vmatprep.subr.mxu0 %v20
  %2108 = vmatpush1.msra.mxu0 %v19
  %2109 = vmatprep.subr.mxu0 %v206
  %2110 = vmatpush2.msra.mxu0 %v205
  %2111 = vmatprep.subr.mxu0 %v200
  %2112 = vmatpush2.msra.mxu0 %v199
  %2113 = vmatprep.subr.mxu0 %v194
  %2114 = vmatpush2.msra.mxu0 %v193
  %2115 = vmatprep.subr.mxu0 %v188
  %2116 = vmatpush2.msra.mxu0 %v187
  %2117 = vmatprep.subr.mxu0 %v182
  %2118 = vmatpush2.msra.mxu0 %v181
  %2119 = vmatprep.subr.mxu0 %v176
  %2120 = vmatpush2.msra.mxu0 %v175
  %2121 = vmatprep.subr.mxu0 %v170
  %2122 = vmatpush2.msra.mxu0 %v169
  %2123 = vmatprep.subr.mxu0 %v164
  %2124 = vmatpush2.msra.mxu0 %v163
  %2125 = vmatprep.subr.mxu0 %v158
  %2126 = vmatpush2.msra.mxu0 %v157
  %2127 = vmatprep.subr.mxu0 %v152
  %2128 = vmatpush2.msra.mxu0 %v151
  %2129 = vmatprep.subr.mxu0 %v146
  %2130 = vmatpush2.msra.mxu0 %v145
  %2131 = vmatprep.subr.mxu0 %v140
  %2132 = vmatpush2.msra.mxu0 %v139
  %2133 = vmatprep.subr.mxu0 %v134
  %2134 = vmatpush2.msra.mxu0 %v133
  %2135 = vmatprep.subr.mxu0 %v128
  %2136 = vmatpush2.msra.mxu0 %v127
  %2137 = vmatprep.subr.mxu0 %v122
  %2138 = vmatpush2.msra.mxu0 %v121
  %2139 = vmatprep.subr.mxu0 %v116
  %2140 = vmatpush2.msra.mxu0 %v115
  %2141 = vmatprep.mubr.f32.mxu0 %v2004
  %2142 = vmatmul.mubr.f32.gmra.mxu0 %v1998
  %v2143 = vpop.f32.mrf.mxu0
  %v2144 = vadd.f32 0.0, %v2143
  %v2145 = vpop.f32.mrf.mxu0
  %v2146 = vadd.f32 0.0, %v2145
  %2147 = vdwg.mxu0
  %2148 = vmatprep.subr.mxu0 %v112
  %2149 = vmatpush1.msra.mxu0 %v111
  %2150 = vmatprep.subr.mxu0 %v106
  %2151 = vmatpush1.msra.mxu0 %v105
  %2152 = vmatprep.subr.mxu0 %v100
  %2153 = vmatpush1.msra.mxu0 %v99
  %2154 = vmatprep.subr.mxu0 %v94
  %2155 = vmatpush1.msra.mxu0 %v93
  %2156 = vmatprep.subr.mxu0 %v88
  %2157 = vmatpush1.msra.mxu0 %v87
  %2158 = vmatprep.subr.mxu0 %v82
  %2159 = vmatpush1.msra.mxu0 %v81
  %2160 = vmatprep.subr.mxu0 %v76
  %2161 = vmatpush1.msra.mxu0 %v75
  %2162 = vmatprep.subr.mxu0 %v70
  %2163 = vmatpush1.msra.mxu0 %v69
  %2164 = vmatprep.subr.mxu0 %v64
  %2165 = vmatpush1.msra.mxu0 %v63
  %2166 = vmatprep.subr.mxu0 %v58
  %2167 = vmatpush1.msra.mxu0 %v57
  %2168 = vmatprep.subr.mxu0 %v52
  %2169 = vmatpush1.msra.mxu0 %v51
  %2170 = vmatprep.subr.mxu0 %v46
  %2171 = vmatpush1.msra.mxu0 %v45
  %2172 = vmatprep.subr.mxu0 %v40
  %2173 = vmatpush1.msra.mxu0 %v39
  %2174 = vmatprep.subr.mxu0 %v34
  %2175 = vmatpush1.msra.mxu0 %v33
  %2176 = vmatprep.subr.mxu0 %v28
  %2177 = vmatpush1.msra.mxu0 %v27
  %2178 = vmatprep.subr.mxu0 %v22
  %2179 = vmatpush1.msra.mxu0 %v21
  %2180 = vmatprep.subr.mxu0 %v208
  %2181 = vmatpush2.msra.mxu0 %v207
  %2182 = vmatprep.subr.mxu0 %v202
  %2183 = vmatpush2.msra.mxu0 %v201
  %2184 = vmatprep.subr.mxu0 %v196
  %2185 = vmatpush2.msra.mxu0 %v195
  %2186 = vmatprep.subr.mxu0 %v190
  %2187 = vmatpush2.msra.mxu0 %v189
  %2188 = vmatprep.subr.mxu0 %v184
  %2189 = vmatpush2.msra.mxu0 %v183
  %2190 = vmatprep.subr.mxu0 %v178
  %2191 = vmatpush2.msra.mxu0 %v177
  %2192 = vmatprep.subr.mxu0 %v172
  %2193 = vmatpush2.msra.mxu0 %v171
  %2194 = vmatprep.subr.mxu0 %v166
  %2195 = vmatpush2.msra.mxu0 %v165
  %2196 = vmatprep.subr.mxu0 %v160
  %2197 = vmatpush2.msra.mxu0 %v159
  %2198 = vmatprep.subr.mxu0 %v154
  %2199 = vmatpush2.msra.mxu0 %v153
  %2200 = vmatprep.subr.mxu0 %v148
  %2201 = vmatpush2.msra.mxu0 %v147
  %2202 = vmatprep.subr.mxu0 %v142
  %2203 = vmatpush2.msra.mxu0 %v141
  %2204 = vmatprep.subr.mxu0 %v136
  %2205 = vmatpush2.msra.mxu0 %v135
  %2206 = vmatprep.subr.mxu0 %v130
  %2207 = vmatpush2.msra.mxu0 %v129
  %2208 = vmatprep.subr.mxu0 %v124
  %2209 = vmatpush2.msra.mxu0 %v123
  %2210 = vmatprep.subr.mxu0 %v118
  %2211 = vmatpush2.msra.mxu0 %v117
  %2212 = vmatprep.mubr.f32.mxu0 %v2004
  %2213 = vmatmul.mubr.f32.gmra.mxu0 %v1998
  %v2214 = vpop.f32.mrf.mxu0
  %v2215 = vadd.f32 0.0, %v2214
  %v2216 = vpop.f32.mrf.mxu0
  %v2217 = vadd.f32 0.0, %v2216
  %2218 = vdwg.mxu0
  %v2221 = vcombine.low %v2073, %v2075
  %v2223 = vadd.f32 %v2000, %v2221
  %v2224 = vxor.u32 %v2223, 2147483648
  %v2225 = vmul.f32 %v2224, 1.442695
  %v2226 = vpow.pop %v2225
  %v2227 = vadd.f32 %v2226, 1.0
  %v2228 = vrcp.pop %v2227
  %v2229 = vmul.f32 1.0, %v2228
  %v2232 = vcombine.low %v2144, %v2146
  %v2234 = vadd.f32 %v2001, %v2232
  %v2235 = vxor.u32 %v2234, 2147483648
  %v2236 = vmul.f32 %v2235, 1.442695
  %v2237 = vpow.pop %v2236
  %v2238 = vadd.f32 %v2237, 1.0
  %v2239 = vrcp.pop %v2238
  %v2240 = vmul.f32 1.0, %v2239
  %v2241 = vadd.f32 %v2215, %v449
  %v2242 = vadd.f32 %v2217, %v453
  %v2245 = vcombine.low %v2241, %v2242
  %v2247 = vmul.f32 %v2229, %v2245
  %v2248 = vadd.f32 %v2002, %v2247
  %v2249 = vtanh.pop %v2248
  %v2250 = vsub.f32 1.0, %v2240
  %v2251 = vmul.f32 %v2250, %v2249
  %v2252 = vmul.f32 %v2240, %v1998
  %v2253 = vadd.f32 %v2251, %v2252
  %2254 = vst [vmem:[%s3] sm:$0xff] %v2253
  // Predicated region
  $region14: #{vanilla_transformer_forward.2} parent=0 // pred_check
    _
  $region15: #{vanilla_transformer_forward.2} parent=0 // pred_check_branch
    %2256 = sbr.rel (0) target = $region17
  $region16: #{vanilla_transformer_forward.2} parent=0 // pred_region
    _
  $region17: #{vanilla_transformer_forward.2} parent=0 // pred_fallthru
    _
  // Predicated region
  $region18: #{vanilla_transformer_forward.2} parent=0 // pred_check
    _
  $region19: #{vanilla_transformer_forward.2} parent=0 // pred_check_branch
    %2258 = sbr.rel (0) target = $region21
  $region20: #{vanilla_transformer_forward.2} parent=0 // pred_region
    _
  $region21: #{vanilla_transformer_forward.2} parent=0 // pred_fallthru
    _

// kernel: vanilla_transformer_forward.3
$region0: #{vanilla_transformer_forward.3}
  #allocation0 [shape = 'u32[]', space=smem, size = 0x4, offset = 0x4, fixed_abs, tag = 'smem constant byte address 0x4 - core index']
  #allocation1 [shape = 'u32[144,128]{1,0:T(1,128)}', space=vmem, size = 0x12000, scoped, tag = 'internal scratch']
  %s0 = inlined_call_operand.vmem [shape: f32[4,8,32], index: 0, kind: input, shape index: {}]
  %s1 = inlined_call_operand.vmem [shape: f32[32,96], index: 1, kind: input, shape index: {}]
  %s2 = inlined_call_operand.vmem [shape: f32[1,96], index: 2, kind: input, shape index: {}]
  %s3 = inlined_call_operand.vmem [shape: f32[32,32], index: 3, kind: input, shape index: {}]
  %s4 = inlined_call_operand.vmem [shape: f32[1,32], index: 4, kind: input, shape index: {}]
  %s5 = inlined_call_operand.vmem [shape: f32[32,32], index: 5, kind: input, shape index: {}]
  %s6 = inlined_call_operand.vmem [shape: f32[1,32], index: 6, kind: input, shape index: {}]
  %s7 = inlined_call_operand.vmem [shape: f32[32,32], index: 7, kind: input, shape index: {}]
  %s8 = inlined_call_operand.vmem [shape: f32[1,32], index: 8, kind: input, shape index: {}]
  %s9 = inlined_call_operand.vmem [shape: f32[32,32], index: 9, kind: input, shape index: {}]
  %s10 = inlined_call_operand.vmem [shape: f32[1,32], index: 10, kind: input, shape index: {}]
  %s11 = inlined_call_operand.vmem [shape: f32[32,64], index: 11, kind: input, shape index: {}]
  %s12 = inlined_call_operand.vmem [shape: f32[1,64], index: 12, kind: input, shape index: {}]
  %s13 = inlined_call_operand.vmem [shape: f32[64,32], index: 13, kind: input, shape index: {}]
  %s14 = inlined_call_operand.vmem [shape: f32[1,32], index: 14, kind: input, shape index: {}]
  %s15 = inlined_call_operand.vmem [shape: f32[32,32], index: 15, kind: input, shape index: {}]
  %s16 = inlined_call_operand.vmem [shape: f32[1,32], index: 16, kind: input, shape index: {}]
  %s17 = inlined_call_operand.vmem [shape: f32[32,64], index: 17, kind: input, shape index: {}]
  %s18 = inlined_call_operand.vmem [shape: f32[1,64], index: 18, kind: input, shape index: {}]
  %s19 = inlined_call_operand.vmem [shape: f32[32,2], index: 19, kind: input, shape index: {}]
  %s20 = inlined_call_operand.vmem [shape: f32[1,2], index: 20, kind: input, shape index: {}]
  %s21 = inlined_call_operand.vmem [shape: f32[4,2], index: 21, kind: output, shape index: {0}]
  %s22 = inlined_call_operand.hbm [shape: f32[4,32], index: 22, kind: output, shape index: {1}]
  %23 = xla_tuple %s21, %s22
  %s24 = sld [smem:[#allocation0]]
  $region102: #{vanilla_transformer_forward.3} parent=0
    _
  %s26 = ssub.s32 1, %s24
  %s27 = scalar_select 0, %s26, %s24
  $region1: #{vanilla_transformer_forward.3} parent=0
    #allocation2 [shape = 'u8[2048]{0}', space=vmem, size = 0x800, scoped, tag = 'output window, operand 1, single buffered']
    #allocation3 [shape = 's32[1]{0}', space=sflag, size = 0x4, scoped, tag = 'scoped memory for vanilla_transformer_forward.3']
    %28 = vsyncpa [#allocation3], 0
    // Predicated region
    $region2: #{vanilla_transformer_forward.3} parent=1 // pred_check
      _
    $region3: #{vanilla_transformer_forward.3} parent=1 // pred_check_branch
      %30 = sbr.rel (0) target = $region5
    $region4: #{vanilla_transformer_forward.3} parent=1 // pred_region
      _
    $region5: #{vanilla_transformer_forward.3} parent=1 // pred_fallthru
      _
    // Predicated region
    $region6: #{vanilla_transformer_forward.3} parent=1 // pred_check
      _
    $region7: #{vanilla_transformer_forward.3} parent=1 // pred_check_branch
      %32 = sbr.rel (0) target = $region9
    $region8: #{vanilla_transformer_forward.3} parent=1 // pred_region
      _
    $region9: #{vanilla_transformer_forward.3} parent=1 // pred_fallthru
      _
    // Predicated region
    $region10: #{vanilla_transformer_forward.3} parent=1 // pred_check
      _
    $region11: #{vanilla_transformer_forward.3} parent=1 // pred_check_branch
      %34 = sbr.rel (0) target = $region13
    $region12: #{vanilla_transformer_forward.3} parent=1 // pred_region
      _
    $region13: #{vanilla_transformer_forward.3} parent=1 // pred_fallthru
      _
    // Predicated region
    $region14: #{vanilla_transformer_forward.3} parent=1 // pred_check
      _
    $region15: #{vanilla_transformer_forward.3} parent=1 // pred_check_branch
      %36 = sbr.rel (0) target = $region17
    $region16: #{vanilla_transformer_forward.3} parent=1 // pred_region
      _
    $region17: #{vanilla_transformer_forward.3} parent=1 // pred_fallthru
      _
    // Predicated region
    $region18: #{vanilla_transformer_forward.3} parent=1 // pred_check
      _
    $region19: #{vanilla_transformer_forward.3} parent=1 // pred_check_branch
      %38 = sbr.rel (0) target = $region21
    $region20: #{vanilla_transformer_forward.3} parent=1 // pred_region
      _
    $region21: #{vanilla_transformer_forward.3} parent=1 // pred_fallthru
      _
    // Predicated region
    $region22: #{vanilla_transformer_forward.3} parent=1 // pred_check
      _
    $region23: #{vanilla_transformer_forward.3} parent=1 // pred_check_branch
      %40 = sbr.rel (0) target = $region25
    $region24: #{vanilla_transformer_forward.3} parent=1 // pred_region
      _
    $region25: #{vanilla_transformer_forward.3} parent=1 // pred_fallthru
      _
    // Predicated region
    $region26: #{vanilla_transformer_forward.3} parent=1 // pred_check
      _
    $region27: #{vanilla_transformer_forward.3} parent=1 // pred_check_branch
      %42 = sbr.rel (0) target = $region29
    $region28: #{vanilla_transformer_forward.3} parent=1 // pred_region
      _
    $region29: #{vanilla_transformer_forward.3} parent=1 // pred_fallthru
      _
    // Predicated region
    $region30: #{vanilla_transformer_forward.3} parent=1 // pred_check
      _
    $region31: #{vanilla_transformer_forward.3} parent=1 // pred_check_branch
      %44 = sbr.rel (0) target = $region33
    $region32: #{vanilla_transformer_forward.3} parent=1 // pred_region
      _
    $region33: #{vanilla_transformer_forward.3} parent=1 // pred_fallthru
      _
    // Predicated region
    $region34: #{vanilla_transformer_forward.3} parent=1 // pred_check
      _
    $region35: #{vanilla_transformer_forward.3} parent=1 // pred_check_branch
      %46 = sbr.rel (0) target = $region37
    $region36: #{vanilla_transformer_forward.3} parent=1 // pred_region
      _
    $region37: #{vanilla_transformer_forward.3} parent=1 // pred_fallthru
      _
    // Predicated region
    $region38: #{vanilla_transformer_forward.3} parent=1 // pred_check
      _
    $region39: #{vanilla_transformer_forward.3} parent=1 // pred_check_branch
      %48 = sbr.rel (0) target = $region41
    $region40: #{vanilla_transformer_forward.3} parent=1 // pred_region
      _
    $region41: #{vanilla_transformer_forward.3} parent=1 // pred_fallthru
      _
    // Predicated region
    $region42: #{vanilla_transformer_forward.3} parent=1 // pred_check
      _
    $region43: #{vanilla_transformer_forward.3} parent=1 // pred_check_branch
      %50 = sbr.rel (0) target = $region45
    $region44: #{vanilla_transformer_forward.3} parent=1 // pred_region
      _
    $region45: #{vanilla_transformer_forward.3} parent=1 // pred_fallthru
      _
    // Predicated region
    $region46: #{vanilla_transformer_forward.3} parent=1 // pred_check
      _
    $region47: #{vanilla_transformer_forward.3} parent=1 // pred_check_branch
      %52 = sbr.rel (0) target = $region49
    $region48: #{vanilla_transformer_forward.3} parent=1 // pred_region
      _
    $region49: #{vanilla_transformer_forward.3} parent=1 // pred_fallthru
      _
    // Predicated region
    $region50: #{vanilla_transformer_forward.3} parent=1 // pred_check
      _
    $region51: #{vanilla_transformer_forward.3} parent=1 // pred_check_branch
      %54 = sbr.rel (0) target = $region53
    $region52: #{vanilla_transformer_forward.3} parent=1 // pred_region
      _
    $region53: #{vanilla_transformer_forward.3} parent=1 // pred_fallthru
      _
    // Predicated region
    $region54: #{vanilla_transformer_forward.3} parent=1 // pred_check
      _
    $region55: #{vanilla_transformer_forward.3} parent=1 // pred_check_branch
      %56 = sbr.rel (0) target = $region57
    $region56: #{vanilla_transformer_forward.3} parent=1 // pred_region
      _
    $region57: #{vanilla_transformer_forward.3} parent=1 // pred_fallthru
      _
    // Predicated region
    $region58: #{vanilla_transformer_forward.3} parent=1 // pred_check
      _
    $region59: #{vanilla_transformer_forward.3} parent=1 // pred_check_branch
      %58 = sbr.rel (0) target = $region61
    $region60: #{vanilla_transformer_forward.3} parent=1 // pred_region
      _
    $region61: #{vanilla_transformer_forward.3} parent=1 // pred_fallthru
      _
    // Predicated region
    $region62: #{vanilla_transformer_forward.3} parent=1 // pred_check
      _
    $region63: #{vanilla_transformer_forward.3} parent=1 // pred_check_branch
      %60 = sbr.rel (0) target = $region65
    $region64: #{vanilla_transformer_forward.3} parent=1 // pred_region
      _
    $region65: #{vanilla_transformer_forward.3} parent=1 // pred_fallthru
      _
    // Predicated region
    $region66: #{vanilla_transformer_forward.3} parent=1 // pred_check
      _
    $region67: #{vanilla_transformer_forward.3} parent=1 // pred_check_branch
      %62 = sbr.rel (0) target = $region69
    $region68: #{vanilla_transformer_forward.3} parent=1 // pred_region
      _
    $region69: #{vanilla_transformer_forward.3} parent=1 // pred_fallthru
      _
    // Predicated region
    $region70: #{vanilla_transformer_forward.3} parent=1 // pred_check
      _
    $region71: #{vanilla_transformer_forward.3} parent=1 // pred_check_branch
      %64 = sbr.rel (0) target = $region73
    $region72: #{vanilla_transformer_forward.3} parent=1 // pred_region
      _
    $region73: #{vanilla_transformer_forward.3} parent=1 // pred_fallthru
      _
    // Predicated region
    $region74: #{vanilla_transformer_forward.3} parent=1 // pred_check
      _
    $region75: #{vanilla_transformer_forward.3} parent=1 // pred_check_branch
      %66 = sbr.rel (0) target = $region77
    $region76: #{vanilla_transformer_forward.3} parent=1 // pred_region
      _
    $region77: #{vanilla_transformer_forward.3} parent=1 // pred_fallthru
      _
    // Predicated region
    $region78: #{vanilla_transformer_forward.3} parent=1 // pred_check
      _
    $region79: #{vanilla_transformer_forward.3} parent=1 // pred_check_branch
      %68 = sbr.rel (0) target = $region81
    $region80: #{vanilla_transformer_forward.3} parent=1 // pred_region
      _
    $region81: #{vanilla_transformer_forward.3} parent=1 // pred_fallthru
      _
    // Predicated region
    $region82: #{vanilla_transformer_forward.3} parent=1 // pred_check
      _
    $region83: #{vanilla_transformer_forward.3} parent=1 // pred_check_branch
      %70 = sbr.rel (0) target = $region85
    $region84: #{vanilla_transformer_forward.3} parent=1 // pred_region
      _
    $region85: #{vanilla_transformer_forward.3} parent=1 // pred_fallthru
      _
    %v71 = vld [vmem:[%s0] sm:$0xff]
    %v72 = vld [vmem:[%s0 + $0x8] sm:$0xff]
    %v73 = vld [vmem:[%s0 + $0x10] sm:$0xff]
    %v74 = vld [vmem:[%s0 + $0x18] sm:$0xff]
    %v75 = vld [vmem:[%s1] sm:$0xff]
    %v76 = vld [vmem:[%s1 + $0x8] sm:$0xff]
    %v77 = vld [vmem:[%s1 + $0x10] sm:$0xff]
    %v78 = vld [vmem:[%s1 + $0x18] sm:$0xff]
    %v79 = vld [vmem:[%s2] sm:$0x1]
    %v81 = vlaneseq
    %v82 = vshrl.u32 %v81, 7
    %v83 = vsub.s32 0, %v82
    %v84 = vrot.slane %v79, %v83
    %vm86 = vcmask 261120
    %v88 = vsel %vm86, %v71, 0
    %v91 = vsel %vm86, %v72, 0
    %v94 = vsel %vm86, %v73, 0
    %v97 = vsel %vm86, %v74, 0
    %99 = vmatprep.subr.mxu0 0.0
    %100 = vmatpush1.msra.mxu0 0.0
    %101 = vmatprep.subr.mxu0 0.0
    %102 = vmatpush1.msra.mxu0 0.0
    %103 = vmatprep.subr.mxu0 0.0
    %104 = vmatpush1.msra.mxu0 0.0
    %105 = vmatprep.subr.mxu0 0.0
    %106 = vmatpush1.msra.mxu0 0.0
    %107 = vmatprep.subr.mxu0 0.0
    %108 = vmatpush1.msra.mxu0 0.0
    %109 = vmatprep.subr.mxu0 0.0
    %110 = vmatpush1.msra.mxu0 0.0
    %111 = vmatprep.subr.mxu0 0.0
    %112 = vmatpush1.msra.mxu0 0.0
    %113 = vmatprep.subr.mxu0 0.0
    %114 = vmatpush1.msra.mxu0 0.0
    %115 = vmatprep.subr.mxu0 0.0
    %116 = vmatpush1.msra.mxu0 0.0
    %117 = vmatprep.subr.mxu0 0.0
    %118 = vmatpush1.msra.mxu0 0.0
    %119 = vmatprep.subr.mxu0 0.0
    %120 = vmatpush1.msra.mxu0 0.0
    %121 = vmatprep.subr.mxu0 0.0
    %122 = vmatpush1.msra.mxu0 0.0
    %123 = vmatprep.subr.mxu0 0.0
    %124 = vmatpush1.msra.mxu0 %v78
    %125 = vmatprep.subr.mxu0 0.0
    %126 = vmatpush1.msra.mxu0 %v77
    %127 = vmatprep.subr.mxu0 0.0
    %128 = vmatpush1.msra.mxu0 %v76
    %129 = vmatprep.subr.mxu0 0.0
    %130 = vmatpush1.msra.mxu0 %v75
    %131 = vmatprep.subr.mxu0 0.0
    %132 = vmatpush2.msra.mxu0 0.0
    %133 = vmatprep.subr.mxu0 0.0
    %134 = vmatpush2.msra.mxu0 0.0
    %135 = vmatprep.subr.mxu0 0.0
    %136 = vmatpush2.msra.mxu0 0.0
    %137 = vmatprep.subr.mxu0 0.0
    %138 = vmatpush2.msra.mxu0 0.0
    %139 = vmatprep.subr.mxu0 0.0
    %140 = vmatpush2.msra.mxu0 0.0
    %141 = vmatprep.subr.mxu0 0.0
    %142 = vmatpush2.msra.mxu0 0.0
    %143 = vmatprep.subr.mxu0 0.0
    %144 = vmatpush2.msra.mxu0 0.0
    %145 = vmatprep.subr.mxu0 0.0
    %146 = vmatpush2.msra.mxu0 0.0
    %147 = vmatprep.subr.mxu0 0.0
    %148 = vmatpush2.msra.mxu0 0.0
    %149 = vmatprep.subr.mxu0 0.0
    %150 = vmatpush2.msra.mxu0 0.0
    %151 = vmatprep.subr.mxu0 0.0
    %152 = vmatpush2.msra.mxu0 0.0
    %153 = vmatprep.subr.mxu0 0.0
    %154 = vmatpush2.msra.mxu0 0.0
    %155 = vmatprep.subr.mxu0 0.0
    %156 = vmatpush2.msra.mxu0 0.0
    %157 = vmatprep.subr.mxu0 0.0
    %158 = vmatpush2.msra.mxu0 0.0
    %159 = vmatprep.subr.mxu0 0.0
    %160 = vmatpush2.msra.mxu0 0.0
    %161 = vmatprep.subr.mxu0 0.0
    %162 = vmatpush2.msra.mxu0 0.0
    %163 = vmatprep.mubr.f32.mxu0 0.0
    %164 = vmatmul.mubr.f32.gmra.mxu0 %v88
    %v165 = vpop.f32.mrf.mxu0
    %v166 = vadd.f32 %v84, %v165
    %v167 = vpop.f32.mrf.mxu0
    %168 = vmatprep.mubr.f32.mxu0 0.0
    %169 = vmatmul.mubr.f32.gmra.mxu0 %v91
    %v170 = vpop.f32.mrf.mxu0
    %v171 = vadd.f32 %v84, %v170
    %v172 = vpop.f32.mrf.mxu0
    %173 = vmatprep.mubr.f32.mxu0 0.0
    %174 = vmatmul.mubr.f32.gmra.mxu0 %v94
    %v175 = vpop.f32.mrf.mxu0
    %v176 = vadd.f32 %v84, %v175
    %v177 = vpop.f32.mrf.mxu0
    %178 = vmatprep.mubr.f32.mxu0 0.0
    %179 = vmatmul.mubr.f32.gmra.mxu0 %v97
    %v180 = vpop.f32.mrf.mxu0
    %v181 = vadd.f32 %v84, %v180
    %v182 = vpop.f32.mrf.mxu0
    %183 = vdwg.mxu0
    %v184 = vtanh.pop %v166
    %v185 = vtanh.pop %v171
    %v186 = vtanh.pop %v176
    %v187 = vtanh.pop %v181
    %v188 = vld [vmem:[%s3] sm:$0xff]
    %v189 = vld [vmem:[%s3 + $0x8] sm:$0xff]
    %v190 = vld [vmem:[%s3 + $0x10] sm:$0xff]
    %v191 = vld [vmem:[%s3 + $0x18] sm:$0xff]
    %v192 = vld [vmem:[%s4] sm:$0x1]
    %v194 = vlaneseq
    %v195 = vshrl.u32 %v194, 7
    %v196 = vsub.s32 0, %v195
    %v197 = vrot.slane %v192, %v196
    %v200 = vsel %vm86, %v184, 0
    %v203 = vsel %vm86, %v185, 0
    %v206 = vsel %vm86, %v186, 0
    %v209 = vsel %vm86, %v187, 0
    %211 = vmatprep.subr.mxu0 0.0
    %212 = vmatpush1.msra.mxu0 0.0
    %213 = vmatprep.subr.mxu0 0.0
    %214 = vmatpush1.msra.mxu0 0.0
    %215 = vmatprep.subr.mxu0 0.0
    %216 = vmatpush1.msra.mxu0 0.0
    %217 = vmatprep.subr.mxu0 0.0
    %218 = vmatpush1.msra.mxu0 0.0
    %219 = vmatprep.subr.mxu0 0.0
    %220 = vmatpush1.msra.mxu0 0.0
    %221 = vmatprep.subr.mxu0 0.0
    %222 = vmatpush1.msra.mxu0 0.0
    %223 = vmatprep.subr.mxu0 0.0
    %224 = vmatpush1.msra.mxu0 0.0
    %225 = vmatprep.subr.mxu0 0.0
    %226 = vmatpush1.msra.mxu0 0.0
    %227 = vmatprep.subr.mxu0 0.0
    %228 = vmatpush1.msra.mxu0 0.0
    %229 = vmatprep.subr.mxu0 0.0
    %230 = vmatpush1.msra.mxu0 0.0
    %231 = vmatprep.subr.mxu0 0.0
    %232 = vmatpush1.msra.mxu0 0.0
    %233 = vmatprep.subr.mxu0 0.0
    %234 = vmatpush1.msra.mxu0 0.0
    %235 = vmatprep.subr.mxu0 0.0
    %236 = vmatpush1.msra.mxu0 %v191
    %237 = vmatprep.subr.mxu0 0.0
    %238 = vmatpush1.msra.mxu0 %v190
    %239 = vmatprep.subr.mxu0 0.0
    %240 = vmatpush1.msra.mxu0 %v189
    %241 = vmatprep.subr.mxu0 0.0
    %242 = vmatpush1.msra.mxu0 %v188
    %243 = vmatprep.subr.mxu0 0.0
    %244 = vmatpush2.msra.mxu0 0.0
    %245 = vmatprep.subr.mxu0 0.0
    %246 = vmatpush2.msra.mxu0 0.0
    %247 = vmatprep.subr.mxu0 0.0
    %248 = vmatpush2.msra.mxu0 0.0
    %249 = vmatprep.subr.mxu0 0.0
    %250 = vmatpush2.msra.mxu0 0.0
    %251 = vmatprep.subr.mxu0 0.0
    %252 = vmatpush2.msra.mxu0 0.0
    %253 = vmatprep.subr.mxu0 0.0
    %254 = vmatpush2.msra.mxu0 0.0
    %255 = vmatprep.subr.mxu0 0.0
    %256 = vmatpush2.msra.mxu0 0.0
    %257 = vmatprep.subr.mxu0 0.0
    %258 = vmatpush2.msra.mxu0 0.0
    %259 = vmatprep.subr.mxu0 0.0
    %260 = vmatpush2.msra.mxu0 0.0
    %261 = vmatprep.subr.mxu0 0.0
    %262 = vmatpush2.msra.mxu0 0.0
    %263 = vmatprep.subr.mxu0 0.0
    %264 = vmatpush2.msra.mxu0 0.0
    %265 = vmatprep.subr.mxu0 0.0
    %266 = vmatpush2.msra.mxu0 0.0
    %267 = vmatprep.subr.mxu0 0.0
    %268 = vmatpush2.msra.mxu0 0.0
    %269 = vmatprep.subr.mxu0 0.0
    %270 = vmatpush2.msra.mxu0 0.0
    %271 = vmatprep.subr.mxu0 0.0
    %272 = vmatpush2.msra.mxu0 0.0
    %273 = vmatprep.subr.mxu0 0.0
    %274 = vmatpush2.msra.mxu0 0.0
    %275 = vmatprep.mubr.f32.mxu0 0.0
    %276 = vmatmul.mubr.f32.gmra.mxu0 %v200
    %v277 = vpop.f32.mrf.mxu0
    %v278 = vadd.f32 %v197, %v277
    %v279 = vpop.f32.mrf.mxu0
    %280 = vmatprep.mubr.f32.mxu0 0.0
    %281 = vmatmul.mubr.f32.gmra.mxu0 %v203
    %v282 = vpop.f32.mrf.mxu0
    %v283 = vadd.f32 %v197, %v282
    %v284 = vpop.f32.mrf.mxu0
    %285 = vmatprep.mubr.f32.mxu0 0.0
    %286 = vmatmul.mubr.f32.gmra.mxu0 %v206
    %v287 = vpop.f32.mrf.mxu0
    %v288 = vadd.f32 %v197, %v287
    %v289 = vpop.f32.mrf.mxu0
    %290 = vmatprep.mubr.f32.mxu0 0.0
    %291 = vmatmul.mubr.f32.gmra.mxu0 %v209
    %v292 = vpop.f32.mrf.mxu0
    %v293 = vadd.f32 %v197, %v292
    %v294 = vpop.f32.mrf.mxu0
    %295 = vdwg.mxu0
    %v296 = vld [vmem:[%s5] sm:$0xff]
    %v297 = vld [vmem:[%s5 + $0x8] sm:$0xff]
    %v298 = vld [vmem:[%s5 + $0x10] sm:$0xff]
    %v299 = vld [vmem:[%s5 + $0x18] sm:$0xff]
    %v300 = vld [vmem:[%s6] sm:$0x1]
    %v302 = vlaneseq
    %v303 = vshrl.u32 %v302, 7
    %v304 = vsub.s32 0, %v303
    %v305 = vrot.slane %v300, %v304
    %307 = vrot.lane.b32.xlu0 %v184, 96
    %v308 = vpop.permute.xlu0 %307
    %309 = vrot.lane.b32.xlu0 %v185, 96
    %v310 = vpop.permute.xlu0 %309
    %311 = vrot.lane.b32.xlu0 %v186, 96
    %v312 = vpop.permute.xlu0 %311
    %313 = vrot.lane.b32.xlu0 %v187, 96
    %v314 = vpop.permute.xlu0 %313
    %v315 = vsel %vm86, %v308, 0
    %v317 = vsel %vm86, %v310, 0
    %v319 = vsel %vm86, %v312, 0
    %v321 = vsel %vm86, %v314, 0
    %323 = vmatprep.subr.mxu0 0.0
    %324 = vmatpush1.msra.mxu0 0.0
    %325 = vmatprep.subr.mxu0 0.0
    %326 = vmatpush1.msra.mxu0 0.0
    %327 = vmatprep.subr.mxu0 0.0
    %328 = vmatpush1.msra.mxu0 0.0
    %329 = vmatprep.subr.mxu0 0.0
    %330 = vmatpush1.msra.mxu0 0.0
    %331 = vmatprep.subr.mxu0 0.0
    %332 = vmatpush1.msra.mxu0 0.0
    %333 = vmatprep.subr.mxu0 0.0
    %334 = vmatpush1.msra.mxu0 0.0
    %335 = vmatprep.subr.mxu0 0.0
    %336 = vmatpush1.msra.mxu0 0.0
    %337 = vmatprep.subr.mxu0 0.0
    %338 = vmatpush1.msra.mxu0 0.0
    %339 = vmatprep.subr.mxu0 0.0
    %340 = vmatpush1.msra.mxu0 0.0
    %341 = vmatprep.subr.mxu0 0.0
    %342 = vmatpush1.msra.mxu0 0.0
    %343 = vmatprep.subr.mxu0 0.0
    %344 = vmatpush1.msra.mxu0 0.0
    %345 = vmatprep.subr.mxu0 0.0
    %346 = vmatpush1.msra.mxu0 0.0
    %347 = vmatprep.subr.mxu0 0.0
    %348 = vmatpush1.msra.mxu0 %v299
    %349 = vmatprep.subr.mxu0 0.0
    %350 = vmatpush1.msra.mxu0 %v298
    %351 = vmatprep.subr.mxu0 0.0
    %352 = vmatpush1.msra.mxu0 %v297
    %353 = vmatprep.subr.mxu0 0.0
    %354 = vmatpush1.msra.mxu0 %v296
    %355 = vmatprep.subr.mxu0 0.0
    %356 = vmatpush2.msra.mxu0 0.0
    %357 = vmatprep.subr.mxu0 0.0
    %358 = vmatpush2.msra.mxu0 0.0
    %359 = vmatprep.subr.mxu0 0.0
    %360 = vmatpush2.msra.mxu0 0.0
    %361 = vmatprep.subr.mxu0 0.0
    %362 = vmatpush2.msra.mxu0 0.0
    %363 = vmatprep.subr.mxu0 0.0
    %364 = vmatpush2.msra.mxu0 0.0
    %365 = vmatprep.subr.mxu0 0.0
    %366 = vmatpush2.msra.mxu0 0.0
    %367 = vmatprep.subr.mxu0 0.0
    %368 = vmatpush2.msra.mxu0 0.0
    %369 = vmatprep.subr.mxu0 0.0
    %370 = vmatpush2.msra.mxu0 0.0
    %371 = vmatprep.subr.mxu0 0.0
    %372 = vmatpush2.msra.mxu0 0.0
    %373 = vmatprep.subr.mxu0 0.0
    %374 = vmatpush2.msra.mxu0 0.0
    %375 = vmatprep.subr.mxu0 0.0
    %376 = vmatpush2.msra.mxu0 0.0
    %377 = vmatprep.subr.mxu0 0.0
    %378 = vmatpush2.msra.mxu0 0.0
    %379 = vmatprep.subr.mxu0 0.0
    %380 = vmatpush2.msra.mxu0 0.0
    %381 = vmatprep.subr.mxu0 0.0
    %382 = vmatpush2.msra.mxu0 0.0
    %383 = vmatprep.subr.mxu0 0.0
    %384 = vmatpush2.msra.mxu0 0.0
    %385 = vmatprep.subr.mxu0 0.0
    %386 = vmatpush2.msra.mxu0 0.0
    %387 = vmatprep.mubr.f32.mxu0 0.0
    %388 = vmatmul.mubr.f32.gmra.mxu0 %v315
    %v389 = vpop.f32.mrf.mxu0
    %v390 = vadd.f32 %v305, %v389
    %v391 = vpop.f32.mrf.mxu0
    %392 = vmatprep.mubr.f32.mxu0 0.0
    %393 = vmatmul.mubr.f32.gmra.mxu0 %v317
    %v394 = vpop.f32.mrf.mxu0
    %v395 = vadd.f32 %v305, %v394
    %v396 = vpop.f32.mrf.mxu0
    %397 = vmatprep.mubr.f32.mxu0 0.0
    %398 = vmatmul.mubr.f32.gmra.mxu0 %v319
    %v399 = vpop.f32.mrf.mxu0
    %v400 = vadd.f32 %v305, %v399
    %v401 = vpop.f32.mrf.mxu0
    %402 = vmatprep.mubr.f32.mxu0 0.0
    %403 = vmatmul.mubr.f32.gmra.mxu0 %v321
    %v404 = vpop.f32.mrf.mxu0
    %v405 = vadd.f32 %v305, %v404
    %v406 = vpop.f32.mrf.mxu0
    %407 = vdwg.mxu0
    %v408 = vld [vmem:[%s7] sm:$0xff]
    %v409 = vld [vmem:[%s7 + $0x8] sm:$0xff]
    %v410 = vld [vmem:[%s7 + $0x10] sm:$0xff]
    %v411 = vld [vmem:[%s7 + $0x18] sm:$0xff]
    %v412 = vld [vmem:[%s8] sm:$0x1]
    %v414 = vlaneseq
    %v415 = vshrl.u32 %v414, 7
    %v416 = vsub.s32 0, %v415
    %v417 = vrot.slane %v412, %v416
    %419 = vrot.lane.b32.xlu0 %v184, 64
    %v420 = vpop.permute.xlu0 %419
    %421 = vrot.lane.b32.xlu0 %v185, 64
    %v422 = vpop.permute.xlu0 %421
    %423 = vrot.lane.b32.xlu0 %v186, 64
    %v424 = vpop.permute.xlu0 %423
    %425 = vrot.lane.b32.xlu0 %v187, 64
    %v426 = vpop.permute.xlu0 %425
    %v427 = vsel %vm86, %v420, 0
    %v429 = vsel %vm86, %v422, 0
    %v431 = vsel %vm86, %v424, 0
    %v433 = vsel %vm86, %v426, 0
    %435 = vmatprep.subr.mxu0 0.0
    %436 = vmatpush1.msra.mxu0 0.0
    %437 = vmatprep.subr.mxu0 0.0
    %438 = vmatpush1.msra.mxu0 0.0
    %439 = vmatprep.subr.mxu0 0.0
    %440 = vmatpush1.msra.mxu0 0.0
    %441 = vmatprep.subr.mxu0 0.0
    %442 = vmatpush1.msra.mxu0 0.0
    %443 = vmatprep.subr.mxu0 0.0
    %444 = vmatpush1.msra.mxu0 0.0
    %445 = vmatprep.subr.mxu0 0.0
    %446 = vmatpush1.msra.mxu0 0.0
    %447 = vmatprep.subr.mxu0 0.0
    %448 = vmatpush1.msra.mxu0 0.0
    %449 = vmatprep.subr.mxu0 0.0
    %450 = vmatpush1.msra.mxu0 0.0
    %451 = vmatprep.subr.mxu0 0.0
    %452 = vmatpush1.msra.mxu0 0.0
    %453 = vmatprep.subr.mxu0 0.0
    %454 = vmatpush1.msra.mxu0 0.0
    %455 = vmatprep.subr.mxu0 0.0
    %456 = vmatpush1.msra.mxu0 0.0
    %457 = vmatprep.subr.mxu0 0.0
    %458 = vmatpush1.msra.mxu0 0.0
    %459 = vmatprep.subr.mxu0 0.0
    %460 = vmatpush1.msra.mxu0 %v411
    %461 = vmatprep.subr.mxu0 0.0
    %462 = vmatpush1.msra.mxu0 %v410
    %463 = vmatprep.subr.mxu0 0.0
    %464 = vmatpush1.msra.mxu0 %v409
    %465 = vmatprep.subr.mxu0 0.0
    %466 = vmatpush1.msra.mxu0 %v408
    %467 = vmatprep.subr.mxu0 0.0
    %468 = vmatpush2.msra.mxu0 0.0
    %469 = vmatprep.subr.mxu0 0.0
    %470 = vmatpush2.msra.mxu0 0.0
    %471 = vmatprep.subr.mxu0 0.0
    %472 = vmatpush2.msra.mxu0 0.0
    %473 = vmatprep.subr.mxu0 0.0
    %474 = vmatpush2.msra.mxu0 0.0
    %475 = vmatprep.subr.mxu0 0.0
    %476 = vmatpush2.msra.mxu0 0.0
    %477 = vmatprep.subr.mxu0 0.0
    %478 = vmatpush2.msra.mxu0 0.0
    %479 = vmatprep.subr.mxu0 0.0
    %480 = vmatpush2.msra.mxu0 0.0
    %481 = vmatprep.subr.mxu0 0.0
    %482 = vmatpush2.msra.mxu0 0.0
    %483 = vmatprep.subr.mxu0 0.0
    %484 = vmatpush2.msra.mxu0 0.0
    %485 = vmatprep.subr.mxu0 0.0
    %486 = vmatpush2.msra.mxu0 0.0
    %487 = vmatprep.subr.mxu0 0.0
    %488 = vmatpush2.msra.mxu0 0.0
    %489 = vmatprep.subr.mxu0 0.0
    %490 = vmatpush2.msra.mxu0 0.0
    %491 = vmatprep.subr.mxu0 0.0
    %492 = vmatpush2.msra.mxu0 0.0
    %493 = vmatprep.subr.mxu0 0.0
    %494 = vmatpush2.msra.mxu0 0.0
    %495 = vmatprep.subr.mxu0 0.0
    %496 = vmatpush2.msra.mxu0 0.0
    %497 = vmatprep.subr.mxu0 0.0
    %498 = vmatpush2.msra.mxu0 0.0
    %499 = vmatprep.mubr.f32.mxu0 0.0
    %500 = vmatmul.mubr.f32.gmra.mxu0 %v427
    %v501 = vpop.f32.mrf.mxu0
    %v502 = vadd.f32 %v417, %v501
    %v503 = vpop.f32.mrf.mxu0
    %504 = vmatprep.mubr.f32.mxu0 0.0
    %505 = vmatmul.mubr.f32.gmra.mxu0 %v429
    %v506 = vpop.f32.mrf.mxu0
    %v507 = vadd.f32 %v417, %v506
    %v508 = vpop.f32.mrf.mxu0
    %509 = vmatprep.mubr.f32.mxu0 0.0
    %510 = vmatmul.mubr.f32.gmra.mxu0 %v431
    %v511 = vpop.f32.mrf.mxu0
    %v512 = vadd.f32 %v417, %v511
    %v513 = vpop.f32.mrf.mxu0
    %514 = vmatprep.mubr.f32.mxu0 0.0
    %515 = vmatmul.mubr.f32.gmra.mxu0 %v433
    %v516 = vpop.f32.mrf.mxu0
    %v517 = vadd.f32 %v417, %v516
    %v518 = vpop.f32.mrf.mxu0
    %519 = vdwg.mxu0
    %vm520 = vcmask 64512
    %v522 = vsel %vm520, %v278, 0
    %v525 = vsel %vm520, %v390, 0
    %527 = vmatprep.subr.mxu0 0.0
    %528 = vmatpush1.xpose.msra.mxu0 0.0
    %529 = vmatprep.subr.mxu0 0.0
    %530 = vmatpush1.xpose.msra.mxu0 0.0
    %531 = vmatprep.subr.mxu0 0.0
    %532 = vmatpush1.xpose.msra.mxu0 0.0
    %533 = vmatprep.subr.mxu0 0.0
    %534 = vmatpush1.xpose.msra.mxu0 0.0
    %535 = vmatprep.subr.mxu0 0.0
    %536 = vmatpush1.xpose.msra.mxu0 0.0
    %537 = vmatprep.subr.mxu0 0.0
    %538 = vmatpush1.xpose.msra.mxu0 0.0
    %539 = vmatprep.subr.mxu0 0.0
    %540 = vmatpush1.xpose.msra.mxu0 0.0
    %541 = vmatprep.subr.mxu0 0.0
    %542 = vmatpush1.xpose.msra.mxu0 0.0
    %543 = vmatprep.subr.mxu0 0.0
    %544 = vmatpush1.xpose.msra.mxu0 0.0
    %545 = vmatprep.subr.mxu0 0.0
    %546 = vmatpush1.xpose.msra.mxu0 0.0
    %547 = vmatprep.subr.mxu0 0.0
    %548 = vmatpush1.xpose.msra.mxu0 0.0
    %549 = vmatprep.subr.mxu0 0.0
    %550 = vmatpush1.xpose.msra.mxu0 0.0
    %551 = vmatprep.subr.mxu0 0.0
    %552 = vmatpush1.xpose.msra.mxu0 0.0
    %553 = vmatprep.subr.mxu0 0.0
    %554 = vmatpush1.xpose.msra.mxu0 0.0
    %555 = vmatprep.subr.mxu0 0.0
    %556 = vmatpush1.xpose.msra.mxu0 0.0
    %557 = vmatprep.subr.mxu0 0.0
    %558 = vmatpush1.xpose.msra.mxu0 %v525
    %559 = vmatprep.subr.mxu0 0.0
    %560 = vmatpush2.xpose.msra.mxu0 0.0
    %561 = vmatprep.subr.mxu0 0.0
    %562 = vmatpush2.xpose.msra.mxu0 0.0
    %563 = vmatprep.subr.mxu0 0.0
    %564 = vmatpush2.xpose.msra.mxu0 0.0
    %565 = vmatprep.subr.mxu0 0.0
    %566 = vmatpush2.xpose.msra.mxu0 0.0
    %567 = vmatprep.subr.mxu0 0.0
    %568 = vmatpush2.xpose.msra.mxu0 0.0
    %569 = vmatprep.subr.mxu0 0.0
    %570 = vmatpush2.xpose.msra.mxu0 0.0
    %571 = vmatprep.subr.mxu0 0.0
    %572 = vmatpush2.xpose.msra.mxu0 0.0
    %573 = vmatprep.subr.mxu0 0.0
    %574 = vmatpush2.xpose.msra.mxu0 0.0
    %575 = vmatprep.subr.mxu0 0.0
    %576 = vmatpush2.xpose.msra.mxu0 0.0
    %577 = vmatprep.subr.mxu0 0.0
    %578 = vmatpush2.xpose.msra.mxu0 0.0
    %579 = vmatprep.subr.mxu0 0.0
    %580 = vmatpush2.xpose.msra.mxu0 0.0
    %581 = vmatprep.subr.mxu0 0.0
    %582 = vmatpush2.xpose.msra.mxu0 0.0
    %583 = vmatprep.subr.mxu0 0.0
    %584 = vmatpush2.xpose.msra.mxu0 0.0
    %585 = vmatprep.subr.mxu0 0.0
    %586 = vmatpush2.xpose.msra.mxu0 0.0
    %587 = vmatprep.subr.mxu0 0.0
    %588 = vmatpush2.xpose.msra.mxu0 0.0
    %589 = vmatprep.subr.mxu0 0.0
    %590 = vmatpush2.xpose.msra.mxu0 0.0
    %591 = vmatprep.mubr.f32.mxu0 0.0
    %592 = vmatmul.mubr.f32.gmra.mxu0 %v522
    %v593 = vpop.f32.mrf.mxu0
    %v594 = vadd.f32 0.0, %v593
    %v595 = vpop.f32.mrf.mxu0
    %596 = vdwg.mxu0
    %v598 = vsel %vm520, %v283, 0
    %v601 = vsel %vm520, %v395, 0
    %603 = vmatprep.subr.mxu0 0.0
    %604 = vmatpush1.xpose.msra.mxu0 0.0
    %605 = vmatprep.subr.mxu0 0.0
    %606 = vmatpush1.xpose.msra.mxu0 0.0
    %607 = vmatprep.subr.mxu0 0.0
    %608 = vmatpush1.xpose.msra.mxu0 0.0
    %609 = vmatprep.subr.mxu0 0.0
    %610 = vmatpush1.xpose.msra.mxu0 0.0
    %611 = vmatprep.subr.mxu0 0.0
    %612 = vmatpush1.xpose.msra.mxu0 0.0
    %613 = vmatprep.subr.mxu0 0.0
    %614 = vmatpush1.xpose.msra.mxu0 0.0
    %615 = vmatprep.subr.mxu0 0.0
    %616 = vmatpush1.xpose.msra.mxu0 0.0
    %617 = vmatprep.subr.mxu0 0.0
    %618 = vmatpush1.xpose.msra.mxu0 0.0
    %619 = vmatprep.subr.mxu0 0.0
    %620 = vmatpush1.xpose.msra.mxu0 0.0
    %621 = vmatprep.subr.mxu0 0.0
    %622 = vmatpush1.xpose.msra.mxu0 0.0
    %623 = vmatprep.subr.mxu0 0.0
    %624 = vmatpush1.xpose.msra.mxu0 0.0
    %625 = vmatprep.subr.mxu0 0.0
    %626 = vmatpush1.xpose.msra.mxu0 0.0
    %627 = vmatprep.subr.mxu0 0.0
    %628 = vmatpush1.xpose.msra.mxu0 0.0
    %629 = vmatprep.subr.mxu0 0.0
    %630 = vmatpush1.xpose.msra.mxu0 0.0
    %631 = vmatprep.subr.mxu0 0.0
    %632 = vmatpush1.xpose.msra.mxu0 0.0
    %633 = vmatprep.subr.mxu0 0.0
    %634 = vmatpush1.xpose.msra.mxu0 %v601
    %635 = vmatprep.subr.mxu0 0.0
    %636 = vmatpush2.xpose.msra.mxu0 0.0
    %637 = vmatprep.subr.mxu0 0.0
    %638 = vmatpush2.xpose.msra.mxu0 0.0
    %639 = vmatprep.subr.mxu0 0.0
    %640 = vmatpush2.xpose.msra.mxu0 0.0
    %641 = vmatprep.subr.mxu0 0.0
    %642 = vmatpush2.xpose.msra.mxu0 0.0
    %643 = vmatprep.subr.mxu0 0.0
    %644 = vmatpush2.xpose.msra.mxu0 0.0
    %645 = vmatprep.subr.mxu0 0.0
    %646 = vmatpush2.xpose.msra.mxu0 0.0
    %647 = vmatprep.subr.mxu0 0.0
    %648 = vmatpush2.xpose.msra.mxu0 0.0
    %649 = vmatprep.subr.mxu0 0.0
    %650 = vmatpush2.xpose.msra.mxu0 0.0
    %651 = vmatprep.subr.mxu0 0.0
    %652 = vmatpush2.xpose.msra.mxu0 0.0
    %653 = vmatprep.subr.mxu0 0.0
    %654 = vmatpush2.xpose.msra.mxu0 0.0
    %655 = vmatprep.subr.mxu0 0.0
    %656 = vmatpush2.xpose.msra.mxu0 0.0
    %657 = vmatprep.subr.mxu0 0.0
    %658 = vmatpush2.xpose.msra.mxu0 0.0
    %659 = vmatprep.subr.mxu0 0.0
    %660 = vmatpush2.xpose.msra.mxu0 0.0
    %661 = vmatprep.subr.mxu0 0.0
    %662 = vmatpush2.xpose.msra.mxu0 0.0
    %663 = vmatprep.subr.mxu0 0.0
    %664 = vmatpush2.xpose.msra.mxu0 0.0
    %665 = vmatprep.subr.mxu0 0.0
    %666 = vmatpush2.xpose.msra.mxu0 0.0
    %667 = vmatprep.mubr.f32.mxu0 0.0
    %668 = vmatmul.mubr.f32.gmra.mxu0 %v598
    %v669 = vpop.f32.mrf.mxu0
    %v670 = vadd.f32 0.0, %v669
    %v671 = vpop.f32.mrf.mxu0
    %672 = vdwg.mxu0
    %v674 = vsel %vm520, %v288, 0
    %v677 = vsel %vm520, %v400, 0
    %679 = vmatprep.subr.mxu0 0.0
    %680 = vmatpush1.xpose.msra.mxu0 0.0
    %681 = vmatprep.subr.mxu0 0.0
    %682 = vmatpush1.xpose.msra.mxu0 0.0
    %683 = vmatprep.subr.mxu0 0.0
    %684 = vmatpush1.xpose.msra.mxu0 0.0
    %685 = vmatprep.subr.mxu0 0.0
    %686 = vmatpush1.xpose.msra.mxu0 0.0
    %687 = vmatprep.subr.mxu0 0.0
    %688 = vmatpush1.xpose.msra.mxu0 0.0
    %689 = vmatprep.subr.mxu0 0.0
    %690 = vmatpush1.xpose.msra.mxu0 0.0
    %691 = vmatprep.subr.mxu0 0.0
    %692 = vmatpush1.xpose.msra.mxu0 0.0
    %693 = vmatprep.subr.mxu0 0.0
    %694 = vmatpush1.xpose.msra.mxu0 0.0
    %695 = vmatprep.subr.mxu0 0.0
    %696 = vmatpush1.xpose.msra.mxu0 0.0
    %697 = vmatprep.subr.mxu0 0.0
    %698 = vmatpush1.xpose.msra.mxu0 0.0
    %699 = vmatprep.subr.mxu0 0.0
    %700 = vmatpush1.xpose.msra.mxu0 0.0
    %701 = vmatprep.subr.mxu0 0.0
    %702 = vmatpush1.xpose.msra.mxu0 0.0
    %703 = vmatprep.subr.mxu0 0.0
    %704 = vmatpush1.xpose.msra.mxu0 0.0
    %705 = vmatprep.subr.mxu0 0.0
    %706 = vmatpush1.xpose.msra.mxu0 0.0
    %707 = vmatprep.subr.mxu0 0.0
    %708 = vmatpush1.xpose.msra.mxu0 0.0
    %709 = vmatprep.subr.mxu0 0.0
    %710 = vmatpush1.xpose.msra.mxu0 %v677
    %711 = vmatprep.subr.mxu0 0.0
    %712 = vmatpush2.xpose.msra.mxu0 0.0
    %713 = vmatprep.subr.mxu0 0.0
    %714 = vmatpush2.xpose.msra.mxu0 0.0
    %715 = vmatprep.subr.mxu0 0.0
    %716 = vmatpush2.xpose.msra.mxu0 0.0
    %717 = vmatprep.subr.mxu0 0.0
    %718 = vmatpush2.xpose.msra.mxu0 0.0
    %719 = vmatprep.subr.mxu0 0.0
    %720 = vmatpush2.xpose.msra.mxu0 0.0
    %721 = vmatprep.subr.mxu0 0.0
    %722 = vmatpush2.xpose.msra.mxu0 0.0
    %723 = vmatprep.subr.mxu0 0.0
    %724 = vmatpush2.xpose.msra.mxu0 0.0
    %725 = vmatprep.subr.mxu0 0.0
    %726 = vmatpush2.xpose.msra.mxu0 0.0
    %727 = vmatprep.subr.mxu0 0.0
    %728 = vmatpush2.xpose.msra.mxu0 0.0
    %729 = vmatprep.subr.mxu0 0.0
    %730 = vmatpush2.xpose.msra.mxu0 0.0
    %731 = vmatprep.subr.mxu0 0.0
    %732 = vmatpush2.xpose.msra.mxu0 0.0
    %733 = vmatprep.subr.mxu0 0.0
    %734 = vmatpush2.xpose.msra.mxu0 0.0
    %735 = vmatprep.subr.mxu0 0.0
    %736 = vmatpush2.xpose.msra.mxu0 0.0
    %737 = vmatprep.subr.mxu0 0.0
    %738 = vmatpush2.xpose.msra.mxu0 0.0
    %739 = vmatprep.subr.mxu0 0.0
    %740 = vmatpush2.xpose.msra.mxu0 0.0
    %741 = vmatprep.subr.mxu0 0.0
    %742 = vmatpush2.xpose.msra.mxu0 0.0
    %743 = vmatprep.mubr.f32.mxu0 0.0
    %744 = vmatmul.mubr.f32.gmra.mxu0 %v674
    %v745 = vpop.f32.mrf.mxu0
    %v746 = vadd.f32 0.0, %v745
    %v747 = vpop.f32.mrf.mxu0
    %748 = vdwg.mxu0
    %v750 = vsel %vm520, %v293, 0
    %v753 = vsel %vm520, %v405, 0
    %755 = vmatprep.subr.mxu0 0.0
    %756 = vmatpush1.xpose.msra.mxu0 0.0
    %757 = vmatprep.subr.mxu0 0.0
    %758 = vmatpush1.xpose.msra.mxu0 0.0
    %759 = vmatprep.subr.mxu0 0.0
    %760 = vmatpush1.xpose.msra.mxu0 0.0
    %761 = vmatprep.subr.mxu0 0.0
    %762 = vmatpush1.xpose.msra.mxu0 0.0
    %763 = vmatprep.subr.mxu0 0.0
    %764 = vmatpush1.xpose.msra.mxu0 0.0
    %765 = vmatprep.subr.mxu0 0.0
    %766 = vmatpush1.xpose.msra.mxu0 0.0
    %767 = vmatprep.subr.mxu0 0.0
    %768 = vmatpush1.xpose.msra.mxu0 0.0
    %769 = vmatprep.subr.mxu0 0.0
    %770 = vmatpush1.xpose.msra.mxu0 0.0
    %771 = vmatprep.subr.mxu0 0.0
    %772 = vmatpush1.xpose.msra.mxu0 0.0
    %773 = vmatprep.subr.mxu0 0.0
    %774 = vmatpush1.xpose.msra.mxu0 0.0
    %775 = vmatprep.subr.mxu0 0.0
    %776 = vmatpush1.xpose.msra.mxu0 0.0
    %777 = vmatprep.subr.mxu0 0.0
    %778 = vmatpush1.xpose.msra.mxu0 0.0
    %779 = vmatprep.subr.mxu0 0.0
    %780 = vmatpush1.xpose.msra.mxu0 0.0
    %781 = vmatprep.subr.mxu0 0.0
    %782 = vmatpush1.xpose.msra.mxu0 0.0
    %783 = vmatprep.subr.mxu0 0.0
    %784 = vmatpush1.xpose.msra.mxu0 0.0
    %785 = vmatprep.subr.mxu0 0.0
    %786 = vmatpush1.xpose.msra.mxu0 %v753
    %787 = vmatprep.subr.mxu0 0.0
    %788 = vmatpush2.xpose.msra.mxu0 0.0
    %789 = vmatprep.subr.mxu0 0.0
    %790 = vmatpush2.xpose.msra.mxu0 0.0
    %791 = vmatprep.subr.mxu0 0.0
    %792 = vmatpush2.xpose.msra.mxu0 0.0
    %793 = vmatprep.subr.mxu0 0.0
    %794 = vmatpush2.xpose.msra.mxu0 0.0
    %795 = vmatprep.subr.mxu0 0.0
    %796 = vmatpush2.xpose.msra.mxu0 0.0
    %797 = vmatprep.subr.mxu0 0.0
    %798 = vmatpush2.xpose.msra.mxu0 0.0
    %799 = vmatprep.subr.mxu0 0.0
    %800 = vmatpush2.xpose.msra.mxu0 0.0
    %801 = vmatprep.subr.mxu0 0.0
    %802 = vmatpush2.xpose.msra.mxu0 0.0
    %803 = vmatprep.subr.mxu0 0.0
    %804 = vmatpush2.xpose.msra.mxu0 0.0
    %805 = vmatprep.subr.mxu0 0.0
    %806 = vmatpush2.xpose.msra.mxu0 0.0
    %807 = vmatprep.subr.mxu0 0.0
    %808 = vmatpush2.xpose.msra.mxu0 0.0
    %809 = vmatprep.subr.mxu0 0.0
    %810 = vmatpush2.xpose.msra.mxu0 0.0
    %811 = vmatprep.subr.mxu0 0.0
    %812 = vmatpush2.xpose.msra.mxu0 0.0
    %813 = vmatprep.subr.mxu0 0.0
    %814 = vmatpush2.xpose.msra.mxu0 0.0
    %815 = vmatprep.subr.mxu0 0.0
    %816 = vmatpush2.xpose.msra.mxu0 0.0
    %817 = vmatprep.subr.mxu0 0.0
    %818 = vmatpush2.xpose.msra.mxu0 0.0
    %819 = vmatprep.mubr.f32.mxu0 0.0
    %820 = vmatmul.mubr.f32.gmra.mxu0 %v750
    %v821 = vpop.f32.mrf.mxu0
    %v822 = vadd.f32 0.0, %v821
    %v823 = vpop.f32.mrf.mxu0
    %824 = vdwg.mxu0
    %v825 = vmul.f32 %v594, 0.35355338
    %v826 = vmul.f32 %v670, 0.35355338
    %v827 = vmul.f32 %v746, 0.35355338
    %v828 = vmul.f32 %v822, 0.35355338
    %v829 = vsel %vm520, %v825, -inf
    %830 = vmax.xlane.f32.xlu0 %v829
    %v831 = vpop.xlane.xlu0 %830
    %v832 = vsel %vm520, %v826, -inf
    %833 = vmax.xlane.f32.xlu0 %v832
    %v834 = vpop.xlane.xlu0 %833
    %v835 = vsel %vm520, %v827, -inf
    %836 = vmax.xlane.f32.xlu0 %v835
    %v837 = vpop.xlane.xlu0 %836
    %v838 = vsel %vm520, %v828, -inf
    %839 = vmax.xlane.f32.xlu0 %v838
    %v840 = vpop.xlane.xlu0 %839
    %v841 = vsub.f32 %v825, %v831
    %v842 = vsub.f32 %v826, %v834
    %v843 = vsub.f32 %v827, %v837
    %v844 = vsub.f32 %v828, %v840
    %v845 = vmul.f32 %v841, 1.442695
    %v846 = vpow.pop %v845
    %v847 = vmul.f32 %v842, 1.442695
    %v848 = vpow.pop %v847
    %v849 = vmul.f32 %v843, 1.442695
    %v850 = vpow.pop %v849
    %v851 = vmul.f32 %v844, 1.442695
    %v852 = vpow.pop %v851
    %v853 = vsel %vm520, %v846, 0.0
    %854 = vadd.xlane.f32.xlu0 %v853
    %v855 = vpop.xlane.xlu0 %854
    %v856 = vsel %vm520, %v848, 0.0
    %857 = vadd.xlane.f32.xlu0 %v856
    %v858 = vpop.xlane.xlu0 %857
    %v859 = vsel %vm520, %v850, 0.0
    %860 = vadd.xlane.f32.xlu0 %v859
    %v861 = vpop.xlane.xlu0 %860
    %v862 = vsel %vm520, %v852, 0.0
    %863 = vadd.xlane.f32.xlu0 %v862
    %v864 = vpop.xlane.xlu0 %863
    %v865 = vrcp.pop %v855
    %v866 = vmul.f32 %v846, %v865
    %v867 = vrcp.pop %v858
    %v868 = vmul.f32 %v848, %v867
    %v869 = vrcp.pop %v861
    %v870 = vmul.f32 %v850, %v869
    %v871 = vrcp.pop %v864
    %v872 = vmul.f32 %v852, %v871
    %v874 = vsel %vm520, %v866, 0
    %876 = vmatprep.subr.mxu0 0.0
    %877 = vmatpush1.msra.mxu0 0.0
    %878 = vmatprep.subr.mxu0 0.0
    %879 = vmatpush1.msra.mxu0 0.0
    %880 = vmatprep.subr.mxu0 0.0
    %881 = vmatpush1.msra.mxu0 0.0
    %882 = vmatprep.subr.mxu0 0.0
    %883 = vmatpush1.msra.mxu0 0.0
    %884 = vmatprep.subr.mxu0 0.0
    %885 = vmatpush1.msra.mxu0 0.0
    %886 = vmatprep.subr.mxu0 0.0
    %887 = vmatpush1.msra.mxu0 0.0
    %888 = vmatprep.subr.mxu0 0.0
    %889 = vmatpush1.msra.mxu0 0.0
    %890 = vmatprep.subr.mxu0 0.0
    %891 = vmatpush1.msra.mxu0 0.0
    %892 = vmatprep.subr.mxu0 0.0
    %893 = vmatpush1.msra.mxu0 0.0
    %894 = vmatprep.subr.mxu0 0.0
    %895 = vmatpush1.msra.mxu0 0.0
    %896 = vmatprep.subr.mxu0 0.0
    %897 = vmatpush1.msra.mxu0 0.0
    %898 = vmatprep.subr.mxu0 0.0
    %899 = vmatpush1.msra.mxu0 0.0
    %900 = vmatprep.subr.mxu0 0.0
    %901 = vmatpush1.msra.mxu0 0.0
    %902 = vmatprep.subr.mxu0 0.0
    %903 = vmatpush1.msra.mxu0 0.0
    %904 = vmatprep.subr.mxu0 0.0
    %905 = vmatpush1.msra.mxu0 0.0
    %906 = vmatprep.subr.mxu0 0.0
    %907 = vmatpush1.msra.mxu0 %v502
    %908 = vmatprep.subr.mxu0 0.0
    %909 = vmatpush2.msra.mxu0 0.0
    %910 = vmatprep.subr.mxu0 0.0
    %911 = vmatpush2.msra.mxu0 0.0
    %912 = vmatprep.subr.mxu0 0.0
    %913 = vmatpush2.msra.mxu0 0.0
    %914 = vmatprep.subr.mxu0 0.0
    %915 = vmatpush2.msra.mxu0 0.0
    %916 = vmatprep.subr.mxu0 0.0
    %917 = vmatpush2.msra.mxu0 0.0
    %918 = vmatprep.subr.mxu0 0.0
    %919 = vmatpush2.msra.mxu0 0.0
    %920 = vmatprep.subr.mxu0 0.0
    %921 = vmatpush2.msra.mxu0 0.0
    %922 = vmatprep.subr.mxu0 0.0
    %923 = vmatpush2.msra.mxu0 0.0
    %924 = vmatprep.subr.mxu0 0.0
    %925 = vmatpush2.msra.mxu0 0.0
    %926 = vmatprep.subr.mxu0 0.0
    %927 = vmatpush2.msra.mxu0 0.0
    %928 = vmatprep.subr.mxu0 0.0
    %929 = vmatpush2.msra.mxu0 0.0
    %930 = vmatprep.subr.mxu0 0.0
    %931 = vmatpush2.msra.mxu0 0.0
    %932 = vmatprep.subr.mxu0 0.0
    %933 = vmatpush2.msra.mxu0 0.0
    %934 = vmatprep.subr.mxu0 0.0
    %935 = vmatpush2.msra.mxu0 0.0
    %936 = vmatprep.subr.mxu0 0.0
    %937 = vmatpush2.msra.mxu0 0.0
    %938 = vmatprep.subr.mxu0 0.0
    %939 = vmatpush2.msra.mxu0 0.0
    %940 = vmatprep.mubr.f32.mxu0 0.0
    %941 = vmatmul.mubr.f32.gmra.mxu0 %v874
    %v942 = vpop.f32.mrf.mxu0
    %v943 = vadd.f32 0.0, %v942
    %v944 = vpop.f32.mrf.mxu0
    %945 = vdwg.mxu0
    %v947 = vsel %vm520, %v868, 0
    %949 = vmatprep.subr.mxu0 0.0
    %950 = vmatpush1.msra.mxu0 0.0
    %951 = vmatprep.subr.mxu0 0.0
    %952 = vmatpush1.msra.mxu0 0.0
    %953 = vmatprep.subr.mxu0 0.0
    %954 = vmatpush1.msra.mxu0 0.0
    %955 = vmatprep.subr.mxu0 0.0
    %956 = vmatpush1.msra.mxu0 0.0
    %957 = vmatprep.subr.mxu0 0.0
    %958 = vmatpush1.msra.mxu0 0.0
    %959 = vmatprep.subr.mxu0 0.0
    %960 = vmatpush1.msra.mxu0 0.0
    %961 = vmatprep.subr.mxu0 0.0
    %962 = vmatpush1.msra.mxu0 0.0
    %963 = vmatprep.subr.mxu0 0.0
    %964 = vmatpush1.msra.mxu0 0.0
    %965 = vmatprep.subr.mxu0 0.0
    %966 = vmatpush1.msra.mxu0 0.0
    %967 = vmatprep.subr.mxu0 0.0
    %968 = vmatpush1.msra.mxu0 0.0
    %969 = vmatprep.subr.mxu0 0.0
    %970 = vmatpush1.msra.mxu0 0.0
    %971 = vmatprep.subr.mxu0 0.0
    %972 = vmatpush1.msra.mxu0 0.0
    %973 = vmatprep.subr.mxu0 0.0
    %974 = vmatpush1.msra.mxu0 0.0
    %975 = vmatprep.subr.mxu0 0.0
    %976 = vmatpush1.msra.mxu0 0.0
    %977 = vmatprep.subr.mxu0 0.0
    %978 = vmatpush1.msra.mxu0 0.0
    %979 = vmatprep.subr.mxu0 0.0
    %980 = vmatpush1.msra.mxu0 %v507
    %981 = vmatprep.subr.mxu0 0.0
    %982 = vmatpush2.msra.mxu0 0.0
    %983 = vmatprep.subr.mxu0 0.0
    %984 = vmatpush2.msra.mxu0 0.0
    %985 = vmatprep.subr.mxu0 0.0
    %986 = vmatpush2.msra.mxu0 0.0
    %987 = vmatprep.subr.mxu0 0.0
    %988 = vmatpush2.msra.mxu0 0.0
    %989 = vmatprep.subr.mxu0 0.0
    %990 = vmatpush2.msra.mxu0 0.0
    %991 = vmatprep.subr.mxu0 0.0
    %992 = vmatpush2.msra.mxu0 0.0
    %993 = vmatprep.subr.mxu0 0.0
    %994 = vmatpush2.msra.mxu0 0.0
    %995 = vmatprep.subr.mxu0 0.0
    %996 = vmatpush2.msra.mxu0 0.0
    %997 = vmatprep.subr.mxu0 0.0
    %998 = vmatpush2.msra.mxu0 0.0
    %999 = vmatprep.subr.mxu0 0.0
    %1000 = vmatpush2.msra.mxu0 0.0
    %1001 = vmatprep.subr.mxu0 0.0
    %1002 = vmatpush2.msra.mxu0 0.0
    %1003 = vmatprep.subr.mxu0 0.0
    %1004 = vmatpush2.msra.mxu0 0.0
    %1005 = vmatprep.subr.mxu0 0.0
    %1006 = vmatpush2.msra.mxu0 0.0
    %1007 = vmatprep.subr.mxu0 0.0
    %1008 = vmatpush2.msra.mxu0 0.0
    %1009 = vmatprep.subr.mxu0 0.0
    %1010 = vmatpush2.msra.mxu0 0.0
    %1011 = vmatprep.subr.mxu0 0.0
    %1012 = vmatpush2.msra.mxu0 0.0
    %1013 = vmatprep.mubr.f32.mxu0 0.0
    %1014 = vmatmul.mubr.f32.gmra.mxu0 %v947
    %v1015 = vpop.f32.mrf.mxu0
    %v1016 = vadd.f32 0.0, %v1015
    %v1017 = vpop.f32.mrf.mxu0
    %1018 = vdwg.mxu0
    %v1020 = vsel %vm520, %v870, 0
    %1022 = vmatprep.subr.mxu0 0.0
    %1023 = vmatpush1.msra.mxu0 0.0
    %1024 = vmatprep.subr.mxu0 0.0
    %1025 = vmatpush1.msra.mxu0 0.0
    %1026 = vmatprep.subr.mxu0 0.0
    %1027 = vmatpush1.msra.mxu0 0.0
    %1028 = vmatprep.subr.mxu0 0.0
    %1029 = vmatpush1.msra.mxu0 0.0
    %1030 = vmatprep.subr.mxu0 0.0
    %1031 = vmatpush1.msra.mxu0 0.0
    %1032 = vmatprep.subr.mxu0 0.0
    %1033 = vmatpush1.msra.mxu0 0.0
    %1034 = vmatprep.subr.mxu0 0.0
    %1035 = vmatpush1.msra.mxu0 0.0
    %1036 = vmatprep.subr.mxu0 0.0
    %1037 = vmatpush1.msra.mxu0 0.0
    %1038 = vmatprep.subr.mxu0 0.0
    %1039 = vmatpush1.msra.mxu0 0.0
    %1040 = vmatprep.subr.mxu0 0.0
    %1041 = vmatpush1.msra.mxu0 0.0
    %1042 = vmatprep.subr.mxu0 0.0
    %1043 = vmatpush1.msra.mxu0 0.0
    %1044 = vmatprep.subr.mxu0 0.0
    %1045 = vmatpush1.msra.mxu0 0.0
    %1046 = vmatprep.subr.mxu0 0.0
    %1047 = vmatpush1.msra.mxu0 0.0
    %1048 = vmatprep.subr.mxu0 0.0
    %1049 = vmatpush1.msra.mxu0 0.0
    %1050 = vmatprep.subr.mxu0 0.0
    %1051 = vmatpush1.msra.mxu0 0.0
    %1052 = vmatprep.subr.mxu0 0.0
    %1053 = vmatpush1.msra.mxu0 %v512
    %1054 = vmatprep.subr.mxu0 0.0
    %1055 = vmatpush2.msra.mxu0 0.0
    %1056 = vmatprep.subr.mxu0 0.0
    %1057 = vmatpush2.msra.mxu0 0.0
    %1058 = vmatprep.subr.mxu0 0.0
    %1059 = vmatpush2.msra.mxu0 0.0
    %1060 = vmatprep.subr.mxu0 0.0
    %1061 = vmatpush2.msra.mxu0 0.0
    %1062 = vmatprep.subr.mxu0 0.0
    %1063 = vmatpush2.msra.mxu0 0.0
    %1064 = vmatprep.subr.mxu0 0.0
    %1065 = vmatpush2.msra.mxu0 0.0
    %1066 = vmatprep.subr.mxu0 0.0
    %1067 = vmatpush2.msra.mxu0 0.0
    %1068 = vmatprep.subr.mxu0 0.0
    %1069 = vmatpush2.msra.mxu0 0.0
    %1070 = vmatprep.subr.mxu0 0.0
    %1071 = vmatpush2.msra.mxu0 0.0
    %1072 = vmatprep.subr.mxu0 0.0
    %1073 = vmatpush2.msra.mxu0 0.0
    %1074 = vmatprep.subr.mxu0 0.0
    %1075 = vmatpush2.msra.mxu0 0.0
    %1076 = vmatprep.subr.mxu0 0.0
    %1077 = vmatpush2.msra.mxu0 0.0
    %1078 = vmatprep.subr.mxu0 0.0
    %1079 = vmatpush2.msra.mxu0 0.0
    %1080 = vmatprep.subr.mxu0 0.0
    %1081 = vmatpush2.msra.mxu0 0.0
    %1082 = vmatprep.subr.mxu0 0.0
    %1083 = vmatpush2.msra.mxu0 0.0
    %1084 = vmatprep.subr.mxu0 0.0
    %1085 = vmatpush2.msra.mxu0 0.0
    %1086 = vmatprep.mubr.f32.mxu0 0.0
    %1087 = vmatmul.mubr.f32.gmra.mxu0 %v1020
    %v1088 = vpop.f32.mrf.mxu0
    %v1089 = vadd.f32 0.0, %v1088
    %v1090 = vpop.f32.mrf.mxu0
    %1091 = vdwg.mxu0
    %v1093 = vsel %vm520, %v872, 0
    %1095 = vmatprep.subr.mxu0 0.0
    %1096 = vmatpush1.msra.mxu0 0.0
    %1097 = vmatprep.subr.mxu0 0.0
    %1098 = vmatpush1.msra.mxu0 0.0
    %1099 = vmatprep.subr.mxu0 0.0
    %1100 = vmatpush1.msra.mxu0 0.0
    %1101 = vmatprep.subr.mxu0 0.0
    %1102 = vmatpush1.msra.mxu0 0.0
    %1103 = vmatprep.subr.mxu0 0.0
    %1104 = vmatpush1.msra.mxu0 0.0
    %1105 = vmatprep.subr.mxu0 0.0
    %1106 = vmatpush1.msra.mxu0 0.0
    %1107 = vmatprep.subr.mxu0 0.0
    %1108 = vmatpush1.msra.mxu0 0.0
    %1109 = vmatprep.subr.mxu0 0.0
    %1110 = vmatpush1.msra.mxu0 0.0
    %1111 = vmatprep.subr.mxu0 0.0
    %1112 = vmatpush1.msra.mxu0 0.0
    %1113 = vmatprep.subr.mxu0 0.0
    %1114 = vmatpush1.msra.mxu0 0.0
    %1115 = vmatprep.subr.mxu0 0.0
    %1116 = vmatpush1.msra.mxu0 0.0
    %1117 = vmatprep.subr.mxu0 0.0
    %1118 = vmatpush1.msra.mxu0 0.0
    %1119 = vmatprep.subr.mxu0 0.0
    %1120 = vmatpush1.msra.mxu0 0.0
    %1121 = vmatprep.subr.mxu0 0.0
    %1122 = vmatpush1.msra.mxu0 0.0
    %1123 = vmatprep.subr.mxu0 0.0
    %1124 = vmatpush1.msra.mxu0 0.0
    %1125 = vmatprep.subr.mxu0 0.0
    %1126 = vmatpush1.msra.mxu0 %v517
    %1127 = vmatprep.subr.mxu0 0.0
    %1128 = vmatpush2.msra.mxu0 0.0
    %1129 = vmatprep.subr.mxu0 0.0
    %1130 = vmatpush2.msra.mxu0 0.0
    %1131 = vmatprep.subr.mxu0 0.0
    %1132 = vmatpush2.msra.mxu0 0.0
    %1133 = vmatprep.subr.mxu0 0.0
    %1134 = vmatpush2.msra.mxu0 0.0
    %1135 = vmatprep.subr.mxu0 0.0
    %1136 = vmatpush2.msra.mxu0 0.0
    %1137 = vmatprep.subr.mxu0 0.0
    %1138 = vmatpush2.msra.mxu0 0.0
    %1139 = vmatprep.subr.mxu0 0.0
    %1140 = vmatpush2.msra.mxu0 0.0
    %1141 = vmatprep.subr.mxu0 0.0
    %1142 = vmatpush2.msra.mxu0 0.0
    %1143 = vmatprep.subr.mxu0 0.0
    %1144 = vmatpush2.msra.mxu0 0.0
    %1145 = vmatprep.subr.mxu0 0.0
    %1146 = vmatpush2.msra.mxu0 0.0
    %1147 = vmatprep.subr.mxu0 0.0
    %1148 = vmatpush2.msra.mxu0 0.0
    %1149 = vmatprep.subr.mxu0 0.0
    %1150 = vmatpush2.msra.mxu0 0.0
    %1151 = vmatprep.subr.mxu0 0.0
    %1152 = vmatpush2.msra.mxu0 0.0
    %1153 = vmatprep.subr.mxu0 0.0
    %1154 = vmatpush2.msra.mxu0 0.0
    %1155 = vmatprep.subr.mxu0 0.0
    %1156 = vmatpush2.msra.mxu0 0.0
    %1157 = vmatprep.subr.mxu0 0.0
    %1158 = vmatpush2.msra.mxu0 0.0
    %1159 = vmatprep.mubr.f32.mxu0 0.0
    %1160 = vmatmul.mubr.f32.gmra.mxu0 %v1093
    %v1161 = vpop.f32.mrf.mxu0
    %v1162 = vadd.f32 0.0, %v1161
    %v1163 = vpop.f32.mrf.mxu0
    %1164 = vdwg.mxu0
    %1165 = vrot.lane.b32.xlu0 %v278, 120
    %v1166 = vpop.permute.xlu0 %1165
    %1167 = vrot.lane.b32.xlu0 %v390, 120
    %v1168 = vpop.permute.xlu0 %1167
    %v1169 = vsel %vm520, %v1166, 0
    %v1171 = vsel %vm520, %v1168, 0
    %1173 = vmatprep.subr.mxu0 0.0
    %1174 = vmatpush1.xpose.msra.mxu0 0.0
    %1175 = vmatprep.subr.mxu0 0.0
    %1176 = vmatpush1.xpose.msra.mxu0 0.0
    %1177 = vmatprep.subr.mxu0 0.0
    %1178 = vmatpush1.xpose.msra.mxu0 0.0
    %1179 = vmatprep.subr.mxu0 0.0
    %1180 = vmatpush1.xpose.msra.mxu0 0.0
    %1181 = vmatprep.subr.mxu0 0.0
    %1182 = vmatpush1.xpose.msra.mxu0 0.0
    %1183 = vmatprep.subr.mxu0 0.0
    %1184 = vmatpush1.xpose.msra.mxu0 0.0
    %1185 = vmatprep.subr.mxu0 0.0
    %1186 = vmatpush1.xpose.msra.mxu0 0.0
    %1187 = vmatprep.subr.mxu0 0.0
    %1188 = vmatpush1.xpose.msra.mxu0 0.0
    %1189 = vmatprep.subr.mxu0 0.0
    %1190 = vmatpush1.xpose.msra.mxu0 0.0
    %1191 = vmatprep.subr.mxu0 0.0
    %1192 = vmatpush1.xpose.msra.mxu0 0.0
    %1193 = vmatprep.subr.mxu0 0.0
    %1194 = vmatpush1.xpose.msra.mxu0 0.0
    %1195 = vmatprep.subr.mxu0 0.0
    %1196 = vmatpush1.xpose.msra.mxu0 0.0
    %1197 = vmatprep.subr.mxu0 0.0
    %1198 = vmatpush1.xpose.msra.mxu0 0.0
    %1199 = vmatprep.subr.mxu0 0.0
    %1200 = vmatpush1.xpose.msra.mxu0 0.0
    %1201 = vmatprep.subr.mxu0 0.0
    %1202 = vmatpush1.xpose.msra.mxu0 0.0
    %1203 = vmatprep.subr.mxu0 0.0
    %1204 = vmatpush1.xpose.msra.mxu0 %v1171
    %1205 = vmatprep.subr.mxu0 0.0
    %1206 = vmatpush2.xpose.msra.mxu0 0.0
    %1207 = vmatprep.subr.mxu0 0.0
    %1208 = vmatpush2.xpose.msra.mxu0 0.0
    %1209 = vmatprep.subr.mxu0 0.0
    %1210 = vmatpush2.xpose.msra.mxu0 0.0
    %1211 = vmatprep.subr.mxu0 0.0
    %1212 = vmatpush2.xpose.msra.mxu0 0.0
    %1213 = vmatprep.subr.mxu0 0.0
    %1214 = vmatpush2.xpose.msra.mxu0 0.0
    %1215 = vmatprep.subr.mxu0 0.0
    %1216 = vmatpush2.xpose.msra.mxu0 0.0
    %1217 = vmatprep.subr.mxu0 0.0
    %1218 = vmatpush2.xpose.msra.mxu0 0.0
    %1219 = vmatprep.subr.mxu0 0.0
    %1220 = vmatpush2.xpose.msra.mxu0 0.0
    %1221 = vmatprep.subr.mxu0 0.0
    %1222 = vmatpush2.xpose.msra.mxu0 0.0
    %1223 = vmatprep.subr.mxu0 0.0
    %1224 = vmatpush2.xpose.msra.mxu0 0.0
    %1225 = vmatprep.subr.mxu0 0.0
    %1226 = vmatpush2.xpose.msra.mxu0 0.0
    %1227 = vmatprep.subr.mxu0 0.0
    %1228 = vmatpush2.xpose.msra.mxu0 0.0
    %1229 = vmatprep.subr.mxu0 0.0
    %1230 = vmatpush2.xpose.msra.mxu0 0.0
    %1231 = vmatprep.subr.mxu0 0.0
    %1232 = vmatpush2.xpose.msra.mxu0 0.0
    %1233 = vmatprep.subr.mxu0 0.0
    %1234 = vmatpush2.xpose.msra.mxu0 0.0
    %1235 = vmatprep.subr.mxu0 0.0
    %1236 = vmatpush2.xpose.msra.mxu0 0.0
    %1237 = vmatprep.mubr.f32.mxu0 0.0
    %1238 = vmatmul.mubr.f32.gmra.mxu0 %v1169
    %v1239 = vpop.f32.mrf.mxu0
    %v1240 = vadd.f32 0.0, %v1239
    %v1241 = vpop.f32.mrf.mxu0
    %1242 = vdwg.mxu0
    %1243 = vrot.lane.b32.xlu0 %v283, 120
    %v1244 = vpop.permute.xlu0 %1243
    %1245 = vrot.lane.b32.xlu0 %v395, 120
    %v1246 = vpop.permute.xlu0 %1245
    %v1247 = vsel %vm520, %v1244, 0
    %v1249 = vsel %vm520, %v1246, 0
    %1251 = vmatprep.subr.mxu0 0.0
    %1252 = vmatpush1.xpose.msra.mxu0 0.0
    %1253 = vmatprep.subr.mxu0 0.0
    %1254 = vmatpush1.xpose.msra.mxu0 0.0
    %1255 = vmatprep.subr.mxu0 0.0
    %1256 = vmatpush1.xpose.msra.mxu0 0.0
    %1257 = vmatprep.subr.mxu0 0.0
    %1258 = vmatpush1.xpose.msra.mxu0 0.0
    %1259 = vmatprep.subr.mxu0 0.0
    %1260 = vmatpush1.xpose.msra.mxu0 0.0
    %1261 = vmatprep.subr.mxu0 0.0
    %1262 = vmatpush1.xpose.msra.mxu0 0.0
    %1263 = vmatprep.subr.mxu0 0.0
    %1264 = vmatpush1.xpose.msra.mxu0 0.0
    %1265 = vmatprep.subr.mxu0 0.0
    %1266 = vmatpush1.xpose.msra.mxu0 0.0
    %1267 = vmatprep.subr.mxu0 0.0
    %1268 = vmatpush1.xpose.msra.mxu0 0.0
    %1269 = vmatprep.subr.mxu0 0.0
    %1270 = vmatpush1.xpose.msra.mxu0 0.0
    %1271 = vmatprep.subr.mxu0 0.0
    %1272 = vmatpush1.xpose.msra.mxu0 0.0
    %1273 = vmatprep.subr.mxu0 0.0
    %1274 = vmatpush1.xpose.msra.mxu0 0.0
    %1275 = vmatprep.subr.mxu0 0.0
    %1276 = vmatpush1.xpose.msra.mxu0 0.0
    %1277 = vmatprep.subr.mxu0 0.0
    %1278 = vmatpush1.xpose.msra.mxu0 0.0
    %1279 = vmatprep.subr.mxu0 0.0
    %1280 = vmatpush1.xpose.msra.mxu0 0.0
    %1281 = vmatprep.subr.mxu0 0.0
    %1282 = vmatpush1.xpose.msra.mxu0 %v1249
    %1283 = vmatprep.subr.mxu0 0.0
    %1284 = vmatpush2.xpose.msra.mxu0 0.0
    %1285 = vmatprep.subr.mxu0 0.0
    %1286 = vmatpush2.xpose.msra.mxu0 0.0
    %1287 = vmatprep.subr.mxu0 0.0
    %1288 = vmatpush2.xpose.msra.mxu0 0.0
    %1289 = vmatprep.subr.mxu0 0.0
    %1290 = vmatpush2.xpose.msra.mxu0 0.0
    %1291 = vmatprep.subr.mxu0 0.0
    %1292 = vmatpush2.xpose.msra.mxu0 0.0
    %1293 = vmatprep.subr.mxu0 0.0
    %1294 = vmatpush2.xpose.msra.mxu0 0.0
    %1295 = vmatprep.subr.mxu0 0.0
    %1296 = vmatpush2.xpose.msra.mxu0 0.0
    %1297 = vmatprep.subr.mxu0 0.0
    %1298 = vmatpush2.xpose.msra.mxu0 0.0
    %1299 = vmatprep.subr.mxu0 0.0
    %1300 = vmatpush2.xpose.msra.mxu0 0.0
    %1301 = vmatprep.subr.mxu0 0.0
    %1302 = vmatpush2.xpose.msra.mxu0 0.0
    %1303 = vmatprep.subr.mxu0 0.0
    %1304 = vmatpush2.xpose.msra.mxu0 0.0
    %1305 = vmatprep.subr.mxu0 0.0
    %1306 = vmatpush2.xpose.msra.mxu0 0.0
    %1307 = vmatprep.subr.mxu0 0.0
    %1308 = vmatpush2.xpose.msra.mxu0 0.0
    %1309 = vmatprep.subr.mxu0 0.0
    %1310 = vmatpush2.xpose.msra.mxu0 0.0
    %1311 = vmatprep.subr.mxu0 0.0
    %1312 = vmatpush2.xpose.msra.mxu0 0.0
    %1313 = vmatprep.subr.mxu0 0.0
    %1314 = vmatpush2.xpose.msra.mxu0 0.0
    %1315 = vmatprep.mubr.f32.mxu0 0.0
    %1316 = vmatmul.mubr.f32.gmra.mxu0 %v1247
    %v1317 = vpop.f32.mrf.mxu0
    %v1318 = vadd.f32 0.0, %v1317
    %v1319 = vpop.f32.mrf.mxu0
    %1320 = vdwg.mxu0
    %1321 = vrot.lane.b32.xlu0 %v288, 120
    %v1322 = vpop.permute.xlu0 %1321
    %1323 = vrot.lane.b32.xlu0 %v400, 120
    %v1324 = vpop.permute.xlu0 %1323
    %v1325 = vsel %vm520, %v1322, 0
    %v1327 = vsel %vm520, %v1324, 0
    %1329 = vmatprep.subr.mxu0 0.0
    %1330 = vmatpush1.xpose.msra.mxu0 0.0
    %1331 = vmatprep.subr.mxu0 0.0
    %1332 = vmatpush1.xpose.msra.mxu0 0.0
    %1333 = vmatprep.subr.mxu0 0.0
    %1334 = vmatpush1.xpose.msra.mxu0 0.0
    %1335 = vmatprep.subr.mxu0 0.0
    %1336 = vmatpush1.xpose.msra.mxu0 0.0
    %1337 = vmatprep.subr.mxu0 0.0
    %1338 = vmatpush1.xpose.msra.mxu0 0.0
    %1339 = vmatprep.subr.mxu0 0.0
    %1340 = vmatpush1.xpose.msra.mxu0 0.0
    %1341 = vmatprep.subr.mxu0 0.0
    %1342 = vmatpush1.xpose.msra.mxu0 0.0
    %1343 = vmatprep.subr.mxu0 0.0
    %1344 = vmatpush1.xpose.msra.mxu0 0.0
    %1345 = vmatprep.subr.mxu0 0.0
    %1346 = vmatpush1.xpose.msra.mxu0 0.0
    %1347 = vmatprep.subr.mxu0 0.0
    %1348 = vmatpush1.xpose.msra.mxu0 0.0
    %1349 = vmatprep.subr.mxu0 0.0
    %1350 = vmatpush1.xpose.msra.mxu0 0.0
    %1351 = vmatprep.subr.mxu0 0.0
    %1352 = vmatpush1.xpose.msra.mxu0 0.0
    %1353 = vmatprep.subr.mxu0 0.0
    %1354 = vmatpush1.xpose.msra.mxu0 0.0
    %1355 = vmatprep.subr.mxu0 0.0
    %1356 = vmatpush1.xpose.msra.mxu0 0.0
    %1357 = vmatprep.subr.mxu0 0.0
    %1358 = vmatpush1.xpose.msra.mxu0 0.0
    %1359 = vmatprep.subr.mxu0 0.0
    %1360 = vmatpush1.xpose.msra.mxu0 %v1327
    %1361 = vmatprep.subr.mxu0 0.0
    %1362 = vmatpush2.xpose.msra.mxu0 0.0
    %1363 = vmatprep.subr.mxu0 0.0
    %1364 = vmatpush2.xpose.msra.mxu0 0.0
    %1365 = vmatprep.subr.mxu0 0.0
    %1366 = vmatpush2.xpose.msra.mxu0 0.0
    %1367 = vmatprep.subr.mxu0 0.0
    %1368 = vmatpush2.xpose.msra.mxu0 0.0
    %1369 = vmatprep.subr.mxu0 0.0
    %1370 = vmatpush2.xpose.msra.mxu0 0.0
    %1371 = vmatprep.subr.mxu0 0.0
    %1372 = vmatpush2.xpose.msra.mxu0 0.0
    %1373 = vmatprep.subr.mxu0 0.0
    %1374 = vmatpush2.xpose.msra.mxu0 0.0
    %1375 = vmatprep.subr.mxu0 0.0
    %1376 = vmatpush2.xpose.msra.mxu0 0.0
    %1377 = vmatprep.subr.mxu0 0.0
    %1378 = vmatpush2.xpose.msra.mxu0 0.0
    %1379 = vmatprep.subr.mxu0 0.0
    %1380 = vmatpush2.xpose.msra.mxu0 0.0
    %1381 = vmatprep.subr.mxu0 0.0
    %1382 = vmatpush2.xpose.msra.mxu0 0.0
    %1383 = vmatprep.subr.mxu0 0.0
    %1384 = vmatpush2.xpose.msra.mxu0 0.0
    %1385 = vmatprep.subr.mxu0 0.0
    %1386 = vmatpush2.xpose.msra.mxu0 0.0
    %1387 = vmatprep.subr.mxu0 0.0
    %1388 = vmatpush2.xpose.msra.mxu0 0.0
    %1389 = vmatprep.subr.mxu0 0.0
    %1390 = vmatpush2.xpose.msra.mxu0 0.0
    %1391 = vmatprep.subr.mxu0 0.0
    %1392 = vmatpush2.xpose.msra.mxu0 0.0
    %1393 = vmatprep.mubr.f32.mxu0 0.0
    %1394 = vmatmul.mubr.f32.gmra.mxu0 %v1325
    %v1395 = vpop.f32.mrf.mxu0
    %v1396 = vadd.f32 0.0, %v1395
    %v1397 = vpop.f32.mrf.mxu0
    %1398 = vdwg.mxu0
    %1399 = vrot.lane.b32.xlu0 %v293, 120
    %v1400 = vpop.permute.xlu0 %1399
    %1401 = vrot.lane.b32.xlu0 %v405, 120
    %v1402 = vpop.permute.xlu0 %1401
    %v1403 = vsel %vm520, %v1400, 0
    %v1405 = vsel %vm520, %v1402, 0
    %1407 = vmatprep.subr.mxu0 0.0
    %1408 = vmatpush1.xpose.msra.mxu0 0.0
    %1409 = vmatprep.subr.mxu0 0.0
    %1410 = vmatpush1.xpose.msra.mxu0 0.0
    %1411 = vmatprep.subr.mxu0 0.0
    %1412 = vmatpush1.xpose.msra.mxu0 0.0
    %1413 = vmatprep.subr.mxu0 0.0
    %1414 = vmatpush1.xpose.msra.mxu0 0.0
    %1415 = vmatprep.subr.mxu0 0.0
    %1416 = vmatpush1.xpose.msra.mxu0 0.0
    %1417 = vmatprep.subr.mxu0 0.0
    %1418 = vmatpush1.xpose.msra.mxu0 0.0
    %1419 = vmatprep.subr.mxu0 0.0
    %1420 = vmatpush1.xpose.msra.mxu0 0.0
    %1421 = vmatprep.subr.mxu0 0.0
    %1422 = vmatpush1.xpose.msra.mxu0 0.0
    %1423 = vmatprep.subr.mxu0 0.0
    %1424 = vmatpush1.xpose.msra.mxu0 0.0
    %1425 = vmatprep.subr.mxu0 0.0
    %1426 = vmatpush1.xpose.msra.mxu0 0.0
    %1427 = vmatprep.subr.mxu0 0.0
    %1428 = vmatpush1.xpose.msra.mxu0 0.0
    %1429 = vmatprep.subr.mxu0 0.0
    %1430 = vmatpush1.xpose.msra.mxu0 0.0
    %1431 = vmatprep.subr.mxu0 0.0
    %1432 = vmatpush1.xpose.msra.mxu0 0.0
    %1433 = vmatprep.subr.mxu0 0.0
    %1434 = vmatpush1.xpose.msra.mxu0 0.0
    %1435 = vmatprep.subr.mxu0 0.0
    %1436 = vmatpush1.xpose.msra.mxu0 0.0
    %1437 = vmatprep.subr.mxu0 0.0
    %1438 = vmatpush1.xpose.msra.mxu0 %v1405
    %1439 = vmatprep.subr.mxu0 0.0
    %1440 = vmatpush2.xpose.msra.mxu0 0.0
    %1441 = vmatprep.subr.mxu0 0.0
    %1442 = vmatpush2.xpose.msra.mxu0 0.0
    %1443 = vmatprep.subr.mxu0 0.0
    %1444 = vmatpush2.xpose.msra.mxu0 0.0
    %1445 = vmatprep.subr.mxu0 0.0
    %1446 = vmatpush2.xpose.msra.mxu0 0.0
    %1447 = vmatprep.subr.mxu0 0.0
    %1448 = vmatpush2.xpose.msra.mxu0 0.0
    %1449 = vmatprep.subr.mxu0 0.0
    %1450 = vmatpush2.xpose.msra.mxu0 0.0
    %1451 = vmatprep.subr.mxu0 0.0
    %1452 = vmatpush2.xpose.msra.mxu0 0.0
    %1453 = vmatprep.subr.mxu0 0.0
    %1454 = vmatpush2.xpose.msra.mxu0 0.0
    %1455 = vmatprep.subr.mxu0 0.0
    %1456 = vmatpush2.xpose.msra.mxu0 0.0
    %1457 = vmatprep.subr.mxu0 0.0
    %1458 = vmatpush2.xpose.msra.mxu0 0.0
    %1459 = vmatprep.subr.mxu0 0.0
    %1460 = vmatpush2.xpose.msra.mxu0 0.0
    %1461 = vmatprep.subr.mxu0 0.0
    %1462 = vmatpush2.xpose.msra.mxu0 0.0
    %1463 = vmatprep.subr.mxu0 0.0
    %1464 = vmatpush2.xpose.msra.mxu0 0.0
    %1465 = vmatprep.subr.mxu0 0.0
    %1466 = vmatpush2.xpose.msra.mxu0 0.0
    %1467 = vmatprep.subr.mxu0 0.0
    %1468 = vmatpush2.xpose.msra.mxu0 0.0
    %1469 = vmatprep.subr.mxu0 0.0
    %1470 = vmatpush2.xpose.msra.mxu0 0.0
    %1471 = vmatprep.mubr.f32.mxu0 0.0
    %1472 = vmatmul.mubr.f32.gmra.mxu0 %v1403
    %v1473 = vpop.f32.mrf.mxu0
    %v1474 = vadd.f32 0.0, %v1473
    %v1475 = vpop.f32.mrf.mxu0
    %1476 = vdwg.mxu0
    %v1477 = vmul.f32 %v1240, 0.35355338
    %v1478 = vmul.f32 %v1318, 0.35355338
    %v1479 = vmul.f32 %v1396, 0.35355338
    %v1480 = vmul.f32 %v1474, 0.35355338
    %v1481 = vsel %vm520, %v1477, -inf
    %1482 = vmax.xlane.f32.xlu0 %v1481
    %v1483 = vpop.xlane.xlu0 %1482
    %v1484 = vsel %vm520, %v1478, -inf
    %1485 = vmax.xlane.f32.xlu0 %v1484
    %v1486 = vpop.xlane.xlu0 %1485
    %v1487 = vsel %vm520, %v1479, -inf
    %1488 = vmax.xlane.f32.xlu0 %v1487
    %v1489 = vpop.xlane.xlu0 %1488
    %v1490 = vsel %vm520, %v1480, -inf
    %1491 = vmax.xlane.f32.xlu0 %v1490
    %v1492 = vpop.xlane.xlu0 %1491
    %v1493 = vsub.f32 %v1477, %v1483
    %v1494 = vsub.f32 %v1478, %v1486
    %v1495 = vsub.f32 %v1479, %v1489
    %v1496 = vsub.f32 %v1480, %v1492
    %v1497 = vmul.f32 %v1493, 1.442695
    %v1498 = vpow.pop %v1497
    %v1499 = vmul.f32 %v1494, 1.442695
    %v1500 = vpow.pop %v1499
    %v1501 = vmul.f32 %v1495, 1.442695
    %v1502 = vpow.pop %v1501
    %v1503 = vmul.f32 %v1496, 1.442695
    %v1504 = vpow.pop %v1503
    %v1505 = vsel %vm520, %v1498, 0.0
    %1506 = vadd.xlane.f32.xlu0 %v1505
    %v1507 = vpop.xlane.xlu0 %1506
    %v1508 = vsel %vm520, %v1500, 0.0
    %1509 = vadd.xlane.f32.xlu0 %v1508
    %v1510 = vpop.xlane.xlu0 %1509
    %v1511 = vsel %vm520, %v1502, 0.0
    %1512 = vadd.xlane.f32.xlu0 %v1511
    %v1513 = vpop.xlane.xlu0 %1512
    %v1514 = vsel %vm520, %v1504, 0.0
    %1515 = vadd.xlane.f32.xlu0 %v1514
    %v1516 = vpop.xlane.xlu0 %1515
    %v1517 = vrcp.pop %v1507
    %v1518 = vmul.f32 %v1498, %v1517
    %v1519 = vrcp.pop %v1510
    %v1520 = vmul.f32 %v1500, %v1519
    %v1521 = vrcp.pop %v1513
    %v1522 = vmul.f32 %v1502, %v1521
    %v1523 = vrcp.pop %v1516
    %v1524 = vmul.f32 %v1504, %v1523
    %1526 = vrot.lane.b32.xlu0 %v502, 120
    %v1527 = vpop.permute.xlu0 %1526
    %v1530 = vsel %vm520, %v1518, 0
    %1532 = vmatprep.subr.mxu0 0.0
    %1533 = vmatpush1.msra.mxu0 0.0
    %1534 = vmatprep.subr.mxu0 0.0
    %1535 = vmatpush1.msra.mxu0 0.0
    %1536 = vmatprep.subr.mxu0 0.0
    %1537 = vmatpush1.msra.mxu0 0.0
    %1538 = vmatprep.subr.mxu0 0.0
    %1539 = vmatpush1.msra.mxu0 0.0
    %1540 = vmatprep.subr.mxu0 0.0
    %1541 = vmatpush1.msra.mxu0 0.0
    %1542 = vmatprep.subr.mxu0 0.0
    %1543 = vmatpush1.msra.mxu0 0.0
    %1544 = vmatprep.subr.mxu0 0.0
    %1545 = vmatpush1.msra.mxu0 0.0
    %1546 = vmatprep.subr.mxu0 0.0
    %1547 = vmatpush1.msra.mxu0 0.0
    %1548 = vmatprep.subr.mxu0 0.0
    %1549 = vmatpush1.msra.mxu0 0.0
    %1550 = vmatprep.subr.mxu0 0.0
    %1551 = vmatpush1.msra.mxu0 0.0
    %1552 = vmatprep.subr.mxu0 0.0
    %1553 = vmatpush1.msra.mxu0 0.0
    %1554 = vmatprep.subr.mxu0 0.0
    %1555 = vmatpush1.msra.mxu0 0.0
    %1556 = vmatprep.subr.mxu0 0.0
    %1557 = vmatpush1.msra.mxu0 0.0
    %1558 = vmatprep.subr.mxu0 0.0
    %1559 = vmatpush1.msra.mxu0 0.0
    %1560 = vmatprep.subr.mxu0 0.0
    %1561 = vmatpush1.msra.mxu0 0.0
    %1562 = vmatprep.subr.mxu0 0.0
    %1563 = vmatpush1.msra.mxu0 %v1527
    %1564 = vmatprep.subr.mxu0 0.0
    %1565 = vmatpush2.msra.mxu0 0.0
    %1566 = vmatprep.subr.mxu0 0.0
    %1567 = vmatpush2.msra.mxu0 0.0
    %1568 = vmatprep.subr.mxu0 0.0
    %1569 = vmatpush2.msra.mxu0 0.0
    %1570 = vmatprep.subr.mxu0 0.0
    %1571 = vmatpush2.msra.mxu0 0.0
    %1572 = vmatprep.subr.mxu0 0.0
    %1573 = vmatpush2.msra.mxu0 0.0
    %1574 = vmatprep.subr.mxu0 0.0
    %1575 = vmatpush2.msra.mxu0 0.0
    %1576 = vmatprep.subr.mxu0 0.0
    %1577 = vmatpush2.msra.mxu0 0.0
    %1578 = vmatprep.subr.mxu0 0.0
    %1579 = vmatpush2.msra.mxu0 0.0
    %1580 = vmatprep.subr.mxu0 0.0
    %1581 = vmatpush2.msra.mxu0 0.0
    %1582 = vmatprep.subr.mxu0 0.0
    %1583 = vmatpush2.msra.mxu0 0.0
    %1584 = vmatprep.subr.mxu0 0.0
    %1585 = vmatpush2.msra.mxu0 0.0
    %1586 = vmatprep.subr.mxu0 0.0
    %1587 = vmatpush2.msra.mxu0 0.0
    %1588 = vmatprep.subr.mxu0 0.0
    %1589 = vmatpush2.msra.mxu0 0.0
    %1590 = vmatprep.subr.mxu0 0.0
    %1591 = vmatpush2.msra.mxu0 0.0
    %1592 = vmatprep.subr.mxu0 0.0
    %1593 = vmatpush2.msra.mxu0 0.0
    %1594 = vmatprep.subr.mxu0 0.0
    %1595 = vmatpush2.msra.mxu0 0.0
    %1596 = vmatprep.mubr.f32.mxu0 0.0
    %1597 = vmatmul.mubr.f32.gmra.mxu0 %v1530
    %v1598 = vpop.f32.mrf.mxu0
    %v1599 = vadd.f32 0.0, %v1598
    %v1600 = vpop.f32.mrf.mxu0
    %1601 = vdwg.mxu0
    %1603 = vrot.lane.b32.xlu0 %v507, 120
    %v1604 = vpop.permute.xlu0 %1603
    %v1607 = vsel %vm520, %v1520, 0
    %1609 = vmatprep.subr.mxu0 0.0
    %1610 = vmatpush1.msra.mxu0 0.0
    %1611 = vmatprep.subr.mxu0 0.0
    %1612 = vmatpush1.msra.mxu0 0.0
    %1613 = vmatprep.subr.mxu0 0.0
    %1614 = vmatpush1.msra.mxu0 0.0
    %1615 = vmatprep.subr.mxu0 0.0
    %1616 = vmatpush1.msra.mxu0 0.0
    %1617 = vmatprep.subr.mxu0 0.0
    %1618 = vmatpush1.msra.mxu0 0.0
    %1619 = vmatprep.subr.mxu0 0.0
    %1620 = vmatpush1.msra.mxu0 0.0
    %1621 = vmatprep.subr.mxu0 0.0
    %1622 = vmatpush1.msra.mxu0 0.0
    %1623 = vmatprep.subr.mxu0 0.0
    %1624 = vmatpush1.msra.mxu0 0.0
    %1625 = vmatprep.subr.mxu0 0.0
    %1626 = vmatpush1.msra.mxu0 0.0
    %1627 = vmatprep.subr.mxu0 0.0
    %1628 = vmatpush1.msra.mxu0 0.0
    %1629 = vmatprep.subr.mxu0 0.0
    %1630 = vmatpush1.msra.mxu0 0.0
    %1631 = vmatprep.subr.mxu0 0.0
    %1632 = vmatpush1.msra.mxu0 0.0
    %1633 = vmatprep.subr.mxu0 0.0
    %1634 = vmatpush1.msra.mxu0 0.0
    %1635 = vmatprep.subr.mxu0 0.0
    %1636 = vmatpush1.msra.mxu0 0.0
    %1637 = vmatprep.subr.mxu0 0.0
    %1638 = vmatpush1.msra.mxu0 0.0
    %1639 = vmatprep.subr.mxu0 0.0
    %1640 = vmatpush1.msra.mxu0 %v1604
    %1641 = vmatprep.subr.mxu0 0.0
    %1642 = vmatpush2.msra.mxu0 0.0
    %1643 = vmatprep.subr.mxu0 0.0
    %1644 = vmatpush2.msra.mxu0 0.0
    %1645 = vmatprep.subr.mxu0 0.0
    %1646 = vmatpush2.msra.mxu0 0.0
    %1647 = vmatprep.subr.mxu0 0.0
    %1648 = vmatpush2.msra.mxu0 0.0
    %1649 = vmatprep.subr.mxu0 0.0
    %1650 = vmatpush2.msra.mxu0 0.0
    %1651 = vmatprep.subr.mxu0 0.0
    %1652 = vmatpush2.msra.mxu0 0.0
    %1653 = vmatprep.subr.mxu0 0.0
    %1654 = vmatpush2.msra.mxu0 0.0
    %1655 = vmatprep.subr.mxu0 0.0
    %1656 = vmatpush2.msra.mxu0 0.0
    %1657 = vmatprep.subr.mxu0 0.0
    %1658 = vmatpush2.msra.mxu0 0.0
    %1659 = vmatprep.subr.mxu0 0.0
    %1660 = vmatpush2.msra.mxu0 0.0
    %1661 = vmatprep.subr.mxu0 0.0
    %1662 = vmatpush2.msra.mxu0 0.0
    %1663 = vmatprep.subr.mxu0 0.0
    %1664 = vmatpush2.msra.mxu0 0.0
    %1665 = vmatprep.subr.mxu0 0.0
    %1666 = vmatpush2.msra.mxu0 0.0
    %1667 = vmatprep.subr.mxu0 0.0
    %1668 = vmatpush2.msra.mxu0 0.0
    %1669 = vmatprep.subr.mxu0 0.0
    %1670 = vmatpush2.msra.mxu0 0.0
    %1671 = vmatprep.subr.mxu0 0.0
    %1672 = vmatpush2.msra.mxu0 0.0
    %1673 = vmatprep.mubr.f32.mxu0 0.0
    %1674 = vmatmul.mubr.f32.gmra.mxu0 %v1607
    %v1675 = vpop.f32.mrf.mxu0
    %v1676 = vadd.f32 0.0, %v1675
    %v1677 = vpop.f32.mrf.mxu0
    %1678 = vdwg.mxu0
    %1680 = vrot.lane.b32.xlu0 %v512, 120
    %v1681 = vpop.permute.xlu0 %1680
    %v1684 = vsel %vm520, %v1522, 0
    %1686 = vmatprep.subr.mxu0 0.0
    %1687 = vmatpush1.msra.mxu0 0.0
    %1688 = vmatprep.subr.mxu0 0.0
    %1689 = vmatpush1.msra.mxu0 0.0
    %1690 = vmatprep.subr.mxu0 0.0
    %1691 = vmatpush1.msra.mxu0 0.0
    %1692 = vmatprep.subr.mxu0 0.0
    %1693 = vmatpush1.msra.mxu0 0.0
    %1694 = vmatprep.subr.mxu0 0.0
    %1695 = vmatpush1.msra.mxu0 0.0
    %1696 = vmatprep.subr.mxu0 0.0
    %1697 = vmatpush1.msra.mxu0 0.0
    %1698 = vmatprep.subr.mxu0 0.0
    %1699 = vmatpush1.msra.mxu0 0.0
    %1700 = vmatprep.subr.mxu0 0.0
    %1701 = vmatpush1.msra.mxu0 0.0
    %1702 = vmatprep.subr.mxu0 0.0
    %1703 = vmatpush1.msra.mxu0 0.0
    %1704 = vmatprep.subr.mxu0 0.0
    %1705 = vmatpush1.msra.mxu0 0.0
    %1706 = vmatprep.subr.mxu0 0.0
    %1707 = vmatpush1.msra.mxu0 0.0
    %1708 = vmatprep.subr.mxu0 0.0
    %1709 = vmatpush1.msra.mxu0 0.0
    %1710 = vmatprep.subr.mxu0 0.0
    %1711 = vmatpush1.msra.mxu0 0.0
    %1712 = vmatprep.subr.mxu0 0.0
    %1713 = vmatpush1.msra.mxu0 0.0
    %1714 = vmatprep.subr.mxu0 0.0
    %1715 = vmatpush1.msra.mxu0 0.0
    %1716 = vmatprep.subr.mxu0 0.0
    %1717 = vmatpush1.msra.mxu0 %v1681
    %1718 = vmatprep.subr.mxu0 0.0
    %1719 = vmatpush2.msra.mxu0 0.0
    %1720 = vmatprep.subr.mxu0 0.0
    %1721 = vmatpush2.msra.mxu0 0.0
    %1722 = vmatprep.subr.mxu0 0.0
    %1723 = vmatpush2.msra.mxu0 0.0
    %1724 = vmatprep.subr.mxu0 0.0
    %1725 = vmatpush2.msra.mxu0 0.0
    %1726 = vmatprep.subr.mxu0 0.0
    %1727 = vmatpush2.msra.mxu0 0.0
    %1728 = vmatprep.subr.mxu0 0.0
    %1729 = vmatpush2.msra.mxu0 0.0
    %1730 = vmatprep.subr.mxu0 0.0
    %1731 = vmatpush2.msra.mxu0 0.0
    %1732 = vmatprep.subr.mxu0 0.0
    %1733 = vmatpush2.msra.mxu0 0.0
    %1734 = vmatprep.subr.mxu0 0.0
    %1735 = vmatpush2.msra.mxu0 0.0
    %1736 = vmatprep.subr.mxu0 0.0
    %1737 = vmatpush2.msra.mxu0 0.0
    %1738 = vmatprep.subr.mxu0 0.0
    %1739 = vmatpush2.msra.mxu0 0.0
    %1740 = vmatprep.subr.mxu0 0.0
    %1741 = vmatpush2.msra.mxu0 0.0
    %1742 = vmatprep.subr.mxu0 0.0
    %1743 = vmatpush2.msra.mxu0 0.0
    %1744 = vmatprep.subr.mxu0 0.0
    %1745 = vmatpush2.msra.mxu0 0.0
    %1746 = vmatprep.subr.mxu0 0.0
    %1747 = vmatpush2.msra.mxu0 0.0
    %1748 = vmatprep.subr.mxu0 0.0
    %1749 = vmatpush2.msra.mxu0 0.0
    %1750 = vmatprep.mubr.f32.mxu0 0.0
    %1751 = vmatmul.mubr.f32.gmra.mxu0 %v1684
    %v1752 = vpop.f32.mrf.mxu0
    %v1753 = vadd.f32 0.0, %v1752
    %v1754 = vpop.f32.mrf.mxu0
    %1755 = vdwg.mxu0
    %1757 = vrot.lane.b32.xlu0 %v517, 120
    %v1758 = vpop.permute.xlu0 %1757
    %v1761 = vsel %vm520, %v1524, 0
    %1763 = vmatprep.subr.mxu0 0.0
    %1764 = vmatpush1.msra.mxu0 0.0
    %1765 = vmatprep.subr.mxu0 0.0
    %1766 = vmatpush1.msra.mxu0 0.0
    %1767 = vmatprep.subr.mxu0 0.0
    %1768 = vmatpush1.msra.mxu0 0.0
    %1769 = vmatprep.subr.mxu0 0.0
    %1770 = vmatpush1.msra.mxu0 0.0
    %1771 = vmatprep.subr.mxu0 0.0
    %1772 = vmatpush1.msra.mxu0 0.0
    %1773 = vmatprep.subr.mxu0 0.0
    %1774 = vmatpush1.msra.mxu0 0.0
    %1775 = vmatprep.subr.mxu0 0.0
    %1776 = vmatpush1.msra.mxu0 0.0
    %1777 = vmatprep.subr.mxu0 0.0
    %1778 = vmatpush1.msra.mxu0 0.0
    %1779 = vmatprep.subr.mxu0 0.0
    %1780 = vmatpush1.msra.mxu0 0.0
    %1781 = vmatprep.subr.mxu0 0.0
    %1782 = vmatpush1.msra.mxu0 0.0
    %1783 = vmatprep.subr.mxu0 0.0
    %1784 = vmatpush1.msra.mxu0 0.0
    %1785 = vmatprep.subr.mxu0 0.0
    %1786 = vmatpush1.msra.mxu0 0.0
    %1787 = vmatprep.subr.mxu0 0.0
    %1788 = vmatpush1.msra.mxu0 0.0
    %1789 = vmatprep.subr.mxu0 0.0
    %1790 = vmatpush1.msra.mxu0 0.0
    %1791 = vmatprep.subr.mxu0 0.0
    %1792 = vmatpush1.msra.mxu0 0.0
    %1793 = vmatprep.subr.mxu0 0.0
    %1794 = vmatpush1.msra.mxu0 %v1758
    %1795 = vmatprep.subr.mxu0 0.0
    %1796 = vmatpush2.msra.mxu0 0.0
    %1797 = vmatprep.subr.mxu0 0.0
    %1798 = vmatpush2.msra.mxu0 0.0
    %1799 = vmatprep.subr.mxu0 0.0
    %1800 = vmatpush2.msra.mxu0 0.0
    %1801 = vmatprep.subr.mxu0 0.0
    %1802 = vmatpush2.msra.mxu0 0.0
    %1803 = vmatprep.subr.mxu0 0.0
    %1804 = vmatpush2.msra.mxu0 0.0
    %1805 = vmatprep.subr.mxu0 0.0
    %1806 = vmatpush2.msra.mxu0 0.0
    %1807 = vmatprep.subr.mxu0 0.0
    %1808 = vmatpush2.msra.mxu0 0.0
    %1809 = vmatprep.subr.mxu0 0.0
    %1810 = vmatpush2.msra.mxu0 0.0
    %1811 = vmatprep.subr.mxu0 0.0
    %1812 = vmatpush2.msra.mxu0 0.0
    %1813 = vmatprep.subr.mxu0 0.0
    %1814 = vmatpush2.msra.mxu0 0.0
    %1815 = vmatprep.subr.mxu0 0.0
    %1816 = vmatpush2.msra.mxu0 0.0
    %1817 = vmatprep.subr.mxu0 0.0
    %1818 = vmatpush2.msra.mxu0 0.0
    %1819 = vmatprep.subr.mxu0 0.0
    %1820 = vmatpush2.msra.mxu0 0.0
    %1821 = vmatprep.subr.mxu0 0.0
    %1822 = vmatpush2.msra.mxu0 0.0
    %1823 = vmatprep.subr.mxu0 0.0
    %1824 = vmatpush2.msra.mxu0 0.0
    %1825 = vmatprep.subr.mxu0 0.0
    %1826 = vmatpush2.msra.mxu0 0.0
    %1827 = vmatprep.mubr.f32.mxu0 0.0
    %1828 = vmatmul.mubr.f32.gmra.mxu0 %v1761
    %v1829 = vpop.f32.mrf.mxu0
    %v1830 = vadd.f32 0.0, %v1829
    %v1831 = vpop.f32.mrf.mxu0
    %1832 = vdwg.mxu0
    %1833 = vrot.lane.b32.xlu0 %v278, 112
    %v1834 = vpop.permute.xlu0 %1833
    %1835 = vrot.lane.b32.xlu0 %v390, 112
    %v1836 = vpop.permute.xlu0 %1835
    %v1837 = vsel %vm520, %v1834, 0
    %v1839 = vsel %vm520, %v1836, 0
    %1841 = vmatprep.subr.mxu0 0.0
    %1842 = vmatpush1.xpose.msra.mxu0 0.0
    %1843 = vmatprep.subr.mxu0 0.0
    %1844 = vmatpush1.xpose.msra.mxu0 0.0
    %1845 = vmatprep.subr.mxu0 0.0
    %1846 = vmatpush1.xpose.msra.mxu0 0.0
    %1847 = vmatprep.subr.mxu0 0.0
    %1848 = vmatpush1.xpose.msra.mxu0 0.0
    %1849 = vmatprep.subr.mxu0 0.0
    %1850 = vmatpush1.xpose.msra.mxu0 0.0
    %1851 = vmatprep.subr.mxu0 0.0
    %1852 = vmatpush1.xpose.msra.mxu0 0.0
    %1853 = vmatprep.subr.mxu0 0.0
    %1854 = vmatpush1.xpose.msra.mxu0 0.0
    %1855 = vmatprep.subr.mxu0 0.0
    %1856 = vmatpush1.xpose.msra.mxu0 0.0
    %1857 = vmatprep.subr.mxu0 0.0
    %1858 = vmatpush1.xpose.msra.mxu0 0.0
    %1859 = vmatprep.subr.mxu0 0.0
    %1860 = vmatpush1.xpose.msra.mxu0 0.0
    %1861 = vmatprep.subr.mxu0 0.0
    %1862 = vmatpush1.xpose.msra.mxu0 0.0
    %1863 = vmatprep.subr.mxu0 0.0
    %1864 = vmatpush1.xpose.msra.mxu0 0.0
    %1865 = vmatprep.subr.mxu0 0.0
    %1866 = vmatpush1.xpose.msra.mxu0 0.0
    %1867 = vmatprep.subr.mxu0 0.0
    %1868 = vmatpush1.xpose.msra.mxu0 0.0
    %1869 = vmatprep.subr.mxu0 0.0
    %1870 = vmatpush1.xpose.msra.mxu0 0.0
    %1871 = vmatprep.subr.mxu0 0.0
    %1872 = vmatpush1.xpose.msra.mxu0 %v1839
    %1873 = vmatprep.subr.mxu0 0.0
    %1874 = vmatpush2.xpose.msra.mxu0 0.0
    %1875 = vmatprep.subr.mxu0 0.0
    %1876 = vmatpush2.xpose.msra.mxu0 0.0
    %1877 = vmatprep.subr.mxu0 0.0
    %1878 = vmatpush2.xpose.msra.mxu0 0.0
    %1879 = vmatprep.subr.mxu0 0.0
    %1880 = vmatpush2.xpose.msra.mxu0 0.0
    %1881 = vmatprep.subr.mxu0 0.0
    %1882 = vmatpush2.xpose.msra.mxu0 0.0
    %1883 = vmatprep.subr.mxu0 0.0
    %1884 = vmatpush2.xpose.msra.mxu0 0.0
    %1885 = vmatprep.subr.mxu0 0.0
    %1886 = vmatpush2.xpose.msra.mxu0 0.0
    %1887 = vmatprep.subr.mxu0 0.0
    %1888 = vmatpush2.xpose.msra.mxu0 0.0
    %1889 = vmatprep.subr.mxu0 0.0
    %1890 = vmatpush2.xpose.msra.mxu0 0.0
    %1891 = vmatprep.subr.mxu0 0.0
    %1892 = vmatpush2.xpose.msra.mxu0 0.0
    %1893 = vmatprep.subr.mxu0 0.0
    %1894 = vmatpush2.xpose.msra.mxu0 0.0
    %1895 = vmatprep.subr.mxu0 0.0
    %1896 = vmatpush2.xpose.msra.mxu0 0.0
    %1897 = vmatprep.subr.mxu0 0.0
    %1898 = vmatpush2.xpose.msra.mxu0 0.0
    %1899 = vmatprep.subr.mxu0 0.0
    %1900 = vmatpush2.xpose.msra.mxu0 0.0
    %1901 = vmatprep.subr.mxu0 0.0
    %1902 = vmatpush2.xpose.msra.mxu0 0.0
    %1903 = vmatprep.subr.mxu0 0.0
    %1904 = vmatpush2.xpose.msra.mxu0 0.0
    %1905 = vmatprep.mubr.f32.mxu0 0.0
    %1906 = vmatmul.mubr.f32.gmra.mxu0 %v1837
    %v1907 = vpop.f32.mrf.mxu0
    %v1908 = vadd.f32 0.0, %v1907
    %v1909 = vpop.f32.mrf.mxu0
    %1910 = vdwg.mxu0
    %1911 = vrot.lane.b32.xlu0 %v283, 112
    %v1912 = vpop.permute.xlu0 %1911
    %1913 = vrot.lane.b32.xlu0 %v395, 112
    %v1914 = vpop.permute.xlu0 %1913
    %v1915 = vsel %vm520, %v1912, 0
    %v1917 = vsel %vm520, %v1914, 0
    %1919 = vmatprep.subr.mxu0 0.0
    %1920 = vmatpush1.xpose.msra.mxu0 0.0
    %1921 = vmatprep.subr.mxu0 0.0
    %1922 = vmatpush1.xpose.msra.mxu0 0.0
    %1923 = vmatprep.subr.mxu0 0.0
    %1924 = vmatpush1.xpose.msra.mxu0 0.0
    %1925 = vmatprep.subr.mxu0 0.0
    %1926 = vmatpush1.xpose.msra.mxu0 0.0
    %1927 = vmatprep.subr.mxu0 0.0
    %1928 = vmatpush1.xpose.msra.mxu0 0.0
    %1929 = vmatprep.subr.mxu0 0.0
    %1930 = vmatpush1.xpose.msra.mxu0 0.0
    %1931 = vmatprep.subr.mxu0 0.0
    %1932 = vmatpush1.xpose.msra.mxu0 0.0
    %1933 = vmatprep.subr.mxu0 0.0
    %1934 = vmatpush1.xpose.msra.mxu0 0.0
    %1935 = vmatprep.subr.mxu0 0.0
    %1936 = vmatpush1.xpose.msra.mxu0 0.0
    %1937 = vmatprep.subr.mxu0 0.0
    %1938 = vmatpush1.xpose.msra.mxu0 0.0
    %1939 = vmatprep.subr.mxu0 0.0
    %1940 = vmatpush1.xpose.msra.mxu0 0.0
    %1941 = vmatprep.subr.mxu0 0.0
    %1942 = vmatpush1.xpose.msra.mxu0 0.0
    %1943 = vmatprep.subr.mxu0 0.0
    %1944 = vmatpush1.xpose.msra.mxu0 0.0
    %1945 = vmatprep.subr.mxu0 0.0
    %1946 = vmatpush1.xpose.msra.mxu0 0.0
    %1947 = vmatprep.subr.mxu0 0.0
    %1948 = vmatpush1.xpose.msra.mxu0 0.0
    %1949 = vmatprep.subr.mxu0 0.0
    %1950 = vmatpush1.xpose.msra.mxu0 %v1917
    %1951 = vmatprep.subr.mxu0 0.0
    %1952 = vmatpush2.xpose.msra.mxu0 0.0
    %1953 = vmatprep.subr.mxu0 0.0
    %1954 = vmatpush2.xpose.msra.mxu0 0.0
    %1955 = vmatprep.subr.mxu0 0.0
    %1956 = vmatpush2.xpose.msra.mxu0 0.0
    %1957 = vmatprep.subr.mxu0 0.0
    %1958 = vmatpush2.xpose.msra.mxu0 0.0
    %1959 = vmatprep.subr.mxu0 0.0
    %1960 = vmatpush2.xpose.msra.mxu0 0.0
    %1961 = vmatprep.subr.mxu0 0.0
    %1962 = vmatpush2.xpose.msra.mxu0 0.0
    %1963 = vmatprep.subr.mxu0 0.0
    %1964 = vmatpush2.xpose.msra.mxu0 0.0
    %1965 = vmatprep.subr.mxu0 0.0
    %1966 = vmatpush2.xpose.msra.mxu0 0.0
    %1967 = vmatprep.subr.mxu0 0.0
    %1968 = vmatpush2.xpose.msra.mxu0 0.0
    %1969 = vmatprep.subr.mxu0 0.0
    %1970 = vmatpush2.xpose.msra.mxu0 0.0
    %1971 = vmatprep.subr.mxu0 0.0
    %1972 = vmatpush2.xpose.msra.mxu0 0.0
    %1973 = vmatprep.subr.mxu0 0.0
    %1974 = vmatpush2.xpose.msra.mxu0 0.0
    %1975 = vmatprep.subr.mxu0 0.0
    %1976 = vmatpush2.xpose.msra.mxu0 0.0
    %1977 = vmatprep.subr.mxu0 0.0
    %1978 = vmatpush2.xpose.msra.mxu0 0.0
    %1979 = vmatprep.subr.mxu0 0.0
    %1980 = vmatpush2.xpose.msra.mxu0 0.0
    %1981 = vmatprep.subr.mxu0 0.0
    %1982 = vmatpush2.xpose.msra.mxu0 0.0
    %1983 = vmatprep.mubr.f32.mxu0 0.0
    %1984 = vmatmul.mubr.f32.gmra.mxu0 %v1915
    %v1985 = vpop.f32.mrf.mxu0
    %v1986 = vadd.f32 0.0, %v1985
    %v1987 = vpop.f32.mrf.mxu0
    %1988 = vdwg.mxu0
    %1989 = vrot.lane.b32.xlu0 %v288, 112
    %v1990 = vpop.permute.xlu0 %1989
    %1991 = vrot.lane.b32.xlu0 %v400, 112
    %v1992 = vpop.permute.xlu0 %1991
    %v1993 = vsel %vm520, %v1990, 0
    %v1995 = vsel %vm520, %v1992, 0
    %1997 = vmatprep.subr.mxu0 0.0
    %1998 = vmatpush1.xpose.msra.mxu0 0.0
    %1999 = vmatprep.subr.mxu0 0.0
    %2000 = vmatpush1.xpose.msra.mxu0 0.0
    %2001 = vmatprep.subr.mxu0 0.0
    %2002 = vmatpush1.xpose.msra.mxu0 0.0
    %2003 = vmatprep.subr.mxu0 0.0
    %2004 = vmatpush1.xpose.msra.mxu0 0.0
    %2005 = vmatprep.subr.mxu0 0.0
    %2006 = vmatpush1.xpose.msra.mxu0 0.0
    %2007 = vmatprep.subr.mxu0 0.0
    %2008 = vmatpush1.xpose.msra.mxu0 0.0
    %2009 = vmatprep.subr.mxu0 0.0
    %2010 = vmatpush1.xpose.msra.mxu0 0.0
    %2011 = vmatprep.subr.mxu0 0.0
    %2012 = vmatpush1.xpose.msra.mxu0 0.0
    %2013 = vmatprep.subr.mxu0 0.0
    %2014 = vmatpush1.xpose.msra.mxu0 0.0
    %2015 = vmatprep.subr.mxu0 0.0
    %2016 = vmatpush1.xpose.msra.mxu0 0.0
    %2017 = vmatprep.subr.mxu0 0.0
    %2018 = vmatpush1.xpose.msra.mxu0 0.0
    %2019 = vmatprep.subr.mxu0 0.0
    %2020 = vmatpush1.xpose.msra.mxu0 0.0
    %2021 = vmatprep.subr.mxu0 0.0
    %2022 = vmatpush1.xpose.msra.mxu0 0.0
    %2023 = vmatprep.subr.mxu0 0.0
    %2024 = vmatpush1.xpose.msra.mxu0 0.0
    %2025 = vmatprep.subr.mxu0 0.0
    %2026 = vmatpush1.xpose.msra.mxu0 0.0
    %2027 = vmatprep.subr.mxu0 0.0
    %2028 = vmatpush1.xpose.msra.mxu0 %v1995
    %2029 = vmatprep.subr.mxu0 0.0
    %2030 = vmatpush2.xpose.msra.mxu0 0.0
    %2031 = vmatprep.subr.mxu0 0.0
    %2032 = vmatpush2.xpose.msra.mxu0 0.0
    %2033 = vmatprep.subr.mxu0 0.0
    %2034 = vmatpush2.xpose.msra.mxu0 0.0
    %2035 = vmatprep.subr.mxu0 0.0
    %2036 = vmatpush2.xpose.msra.mxu0 0.0
    %2037 = vmatprep.subr.mxu0 0.0
    %2038 = vmatpush2.xpose.msra.mxu0 0.0
    %2039 = vmatprep.subr.mxu0 0.0
    %2040 = vmatpush2.xpose.msra.mxu0 0.0
    %2041 = vmatprep.subr.mxu0 0.0
    %2042 = vmatpush2.xpose.msra.mxu0 0.0
    %2043 = vmatprep.subr.mxu0 0.0
    %2044 = vmatpush2.xpose.msra.mxu0 0.0
    %2045 = vmatprep.subr.mxu0 0.0
    %2046 = vmatpush2.xpose.msra.mxu0 0.0
    %2047 = vmatprep.subr.mxu0 0.0
    %2048 = vmatpush2.xpose.msra.mxu0 0.0
    %2049 = vmatprep.subr.mxu0 0.0
    %2050 = vmatpush2.xpose.msra.mxu0 0.0
    %2051 = vmatprep.subr.mxu0 0.0
    %2052 = vmatpush2.xpose.msra.mxu0 0.0
    %2053 = vmatprep.subr.mxu0 0.0
    %2054 = vmatpush2.xpose.msra.mxu0 0.0
    %2055 = vmatprep.subr.mxu0 0.0
    %2056 = vmatpush2.xpose.msra.mxu0 0.0
    %2057 = vmatprep.subr.mxu0 0.0
    %2058 = vmatpush2.xpose.msra.mxu0 0.0
    %2059 = vmatprep.subr.mxu0 0.0
    %2060 = vmatpush2.xpose.msra.mxu0 0.0
    %2061 = vmatprep.mubr.f32.mxu0 0.0
    %2062 = vmatmul.mubr.f32.gmra.mxu0 %v1993
    %v2063 = vpop.f32.mrf.mxu0
    %v2064 = vadd.f32 0.0, %v2063
    %v2065 = vpop.f32.mrf.mxu0
    %2066 = vdwg.mxu0
    %2067 = vrot.lane.b32.xlu0 %v293, 112
    %v2068 = vpop.permute.xlu0 %2067
    %2069 = vrot.lane.b32.xlu0 %v405, 112
    %v2070 = vpop.permute.xlu0 %2069
    %v2071 = vsel %vm520, %v2068, 0
    %v2073 = vsel %vm520, %v2070, 0
    %2075 = vmatprep.subr.mxu0 0.0
    %2076 = vmatpush1.xpose.msra.mxu0 0.0
    %2077 = vmatprep.subr.mxu0 0.0
    %2078 = vmatpush1.xpose.msra.mxu0 0.0
    %2079 = vmatprep.subr.mxu0 0.0
    %2080 = vmatpush1.xpose.msra.mxu0 0.0
    %2081 = vmatprep.subr.mxu0 0.0
    %2082 = vmatpush1.xpose.msra.mxu0 0.0
    %2083 = vmatprep.subr.mxu0 0.0
    %2084 = vmatpush1.xpose.msra.mxu0 0.0
    %2085 = vmatprep.subr.mxu0 0.0
    %2086 = vmatpush1.xpose.msra.mxu0 0.0
    %2087 = vmatprep.subr.mxu0 0.0
    %2088 = vmatpush1.xpose.msra.mxu0 0.0
    %2089 = vmatprep.subr.mxu0 0.0
    %2090 = vmatpush1.xpose.msra.mxu0 0.0
    %2091 = vmatprep.subr.mxu0 0.0
    %2092 = vmatpush1.xpose.msra.mxu0 0.0
    %2093 = vmatprep.subr.mxu0 0.0
    %2094 = vmatpush1.xpose.msra.mxu0 0.0
    %2095 = vmatprep.subr.mxu0 0.0
    %2096 = vmatpush1.xpose.msra.mxu0 0.0
    %2097 = vmatprep.subr.mxu0 0.0
    %2098 = vmatpush1.xpose.msra.mxu0 0.0
    %2099 = vmatprep.subr.mxu0 0.0
    %2100 = vmatpush1.xpose.msra.mxu0 0.0
    %2101 = vmatprep.subr.mxu0 0.0
    %2102 = vmatpush1.xpose.msra.mxu0 0.0
    %2103 = vmatprep.subr.mxu0 0.0
    %2104 = vmatpush1.xpose.msra.mxu0 0.0
    %2105 = vmatprep.subr.mxu0 0.0
    %2106 = vmatpush1.xpose.msra.mxu0 %v2073
    %2107 = vmatprep.subr.mxu0 0.0
    %2108 = vmatpush2.xpose.msra.mxu0 0.0
    %2109 = vmatprep.subr.mxu0 0.0
    %2110 = vmatpush2.xpose.msra.mxu0 0.0
    %2111 = vmatprep.subr.mxu0 0.0
    %2112 = vmatpush2.xpose.msra.mxu0 0.0
    %2113 = vmatprep.subr.mxu0 0.0
    %2114 = vmatpush2.xpose.msra.mxu0 0.0
    %2115 = vmatprep.subr.mxu0 0.0
    %2116 = vmatpush2.xpose.msra.mxu0 0.0
    %2117 = vmatprep.subr.mxu0 0.0
    %2118 = vmatpush2.xpose.msra.mxu0 0.0
    %2119 = vmatprep.subr.mxu0 0.0
    %2120 = vmatpush2.xpose.msra.mxu0 0.0
    %2121 = vmatprep.subr.mxu0 0.0
    %2122 = vmatpush2.xpose.msra.mxu0 0.0
    %2123 = vmatprep.subr.mxu0 0.0
    %2124 = vmatpush2.xpose.msra.mxu0 0.0
    %2125 = vmatprep.subr.mxu0 0.0
    %2126 = vmatpush2.xpose.msra.mxu0 0.0
    %2127 = vmatprep.subr.mxu0 0.0
    %2128 = vmatpush2.xpose.msra.mxu0 0.0
    %2129 = vmatprep.subr.mxu0 0.0
    %2130 = vmatpush2.xpose.msra.mxu0 0.0
    %2131 = vmatprep.subr.mxu0 0.0
    %2132 = vmatpush2.xpose.msra.mxu0 0.0
    %2133 = vmatprep.subr.mxu0 0.0
    %2134 = vmatpush2.xpose.msra.mxu0 0.0
    %2135 = vmatprep.subr.mxu0 0.0
    %2136 = vmatpush2.xpose.msra.mxu0 0.0
    %2137 = vmatprep.subr.mxu0 0.0
    %2138 = vmatpush2.xpose.msra.mxu0 0.0
    %2139 = vmatprep.mubr.f32.mxu0 0.0
    %2140 = vmatmul.mubr.f32.gmra.mxu0 %v2071
    %v2141 = vpop.f32.mrf.mxu0
    %v2142 = vadd.f32 0.0, %v2141
    %v2143 = vpop.f32.mrf.mxu0
    %2144 = vdwg.mxu0
    %v2145 = vmul.f32 %v1908, 0.35355338
    %v2146 = vmul.f32 %v1986, 0.35355338
    %v2147 = vmul.f32 %v2064, 0.35355338
    %v2148 = vmul.f32 %v2142, 0.35355338
    %v2149 = vsel %vm520, %v2145, -inf
    %2150 = vmax.xlane.f32.xlu0 %v2149
    %v2151 = vpop.xlane.xlu0 %2150
    %v2152 = vsel %vm520, %v2146, -inf
    %2153 = vmax.xlane.f32.xlu0 %v2152
    %v2154 = vpop.xlane.xlu0 %2153
    %v2155 = vsel %vm520, %v2147, -inf
    %2156 = vmax.xlane.f32.xlu0 %v2155
    %v2157 = vpop.xlane.xlu0 %2156
    %v2158 = vsel %vm520, %v2148, -inf
    %2159 = vmax.xlane.f32.xlu0 %v2158
    %v2160 = vpop.xlane.xlu0 %2159
    %v2161 = vsub.f32 %v2145, %v2151
    %v2162 = vsub.f32 %v2146, %v2154
    %v2163 = vsub.f32 %v2147, %v2157
    %v2164 = vsub.f32 %v2148, %v2160
    %v2165 = vmul.f32 %v2161, 1.442695
    %v2166 = vpow.pop %v2165
    %v2167 = vmul.f32 %v2162, 1.442695
    %v2168 = vpow.pop %v2167
    %v2169 = vmul.f32 %v2163, 1.442695
    %v2170 = vpow.pop %v2169
    %v2171 = vmul.f32 %v2164, 1.442695
    %v2172 = vpow.pop %v2171
    %v2173 = vsel %vm520, %v2166, 0.0
    %2174 = vadd.xlane.f32.xlu0 %v2173
    %v2175 = vpop.xlane.xlu0 %2174
    %v2176 = vsel %vm520, %v2168, 0.0
    %2177 = vadd.xlane.f32.xlu0 %v2176
    %v2178 = vpop.xlane.xlu0 %2177
    %v2179 = vsel %vm520, %v2170, 0.0
    %2180 = vadd.xlane.f32.xlu0 %v2179
    %v2181 = vpop.xlane.xlu0 %2180
    %v2182 = vsel %vm520, %v2172, 0.0
    %2183 = vadd.xlane.f32.xlu0 %v2182
    %v2184 = vpop.xlane.xlu0 %2183
    %v2185 = vrcp.pop %v2175
    %v2186 = vmul.f32 %v2166, %v2185
    %v2187 = vrcp.pop %v2178
    %v2188 = vmul.f32 %v2168, %v2187
    %v2189 = vrcp.pop %v2181
    %v2190 = vmul.f32 %v2170, %v2189
    %v2191 = vrcp.pop %v2184
    %v2192 = vmul.f32 %v2172, %v2191
    %2193 = vrot.lane.b32.xlu0 %v502, 112
    %v2194 = vpop.permute.xlu0 %2193
    %v2197 = vsel %vm520, %v2186, 0
    %2199 = vmatprep.subr.mxu0 0.0
    %2200 = vmatpush1.msra.mxu0 0.0
    %2201 = vmatprep.subr.mxu0 0.0
    %2202 = vmatpush1.msra.mxu0 0.0
    %2203 = vmatprep.subr.mxu0 0.0
    %2204 = vmatpush1.msra.mxu0 0.0
    %2205 = vmatprep.subr.mxu0 0.0
    %2206 = vmatpush1.msra.mxu0 0.0
    %2207 = vmatprep.subr.mxu0 0.0
    %2208 = vmatpush1.msra.mxu0 0.0
    %2209 = vmatprep.subr.mxu0 0.0
    %2210 = vmatpush1.msra.mxu0 0.0
    %2211 = vmatprep.subr.mxu0 0.0
    %2212 = vmatpush1.msra.mxu0 0.0
    %2213 = vmatprep.subr.mxu0 0.0
    %2214 = vmatpush1.msra.mxu0 0.0
    %2215 = vmatprep.subr.mxu0 0.0
    %2216 = vmatpush1.msra.mxu0 0.0
    %2217 = vmatprep.subr.mxu0 0.0
    %2218 = vmatpush1.msra.mxu0 0.0
    %2219 = vmatprep.subr.mxu0 0.0
    %2220 = vmatpush1.msra.mxu0 0.0
    %2221 = vmatprep.subr.mxu0 0.0
    %2222 = vmatpush1.msra.mxu0 0.0
    %2223 = vmatprep.subr.mxu0 0.0
    %2224 = vmatpush1.msra.mxu0 0.0
    %2225 = vmatprep.subr.mxu0 0.0
    %2226 = vmatpush1.msra.mxu0 0.0
    %2227 = vmatprep.subr.mxu0 0.0
    %2228 = vmatpush1.msra.mxu0 0.0
    %2229 = vmatprep.subr.mxu0 0.0
    %2230 = vmatpush1.msra.mxu0 %v2194
    %2231 = vmatprep.subr.mxu0 0.0
    %2232 = vmatpush2.msra.mxu0 0.0
    %2233 = vmatprep.subr.mxu0 0.0
    %2234 = vmatpush2.msra.mxu0 0.0
    %2235 = vmatprep.subr.mxu0 0.0
    %2236 = vmatpush2.msra.mxu0 0.0
    %2237 = vmatprep.subr.mxu0 0.0
    %2238 = vmatpush2.msra.mxu0 0.0
    %2239 = vmatprep.subr.mxu0 0.0
    %2240 = vmatpush2.msra.mxu0 0.0
    %2241 = vmatprep.subr.mxu0 0.0
    %2242 = vmatpush2.msra.mxu0 0.0
    %2243 = vmatprep.subr.mxu0 0.0
    %2244 = vmatpush2.msra.mxu0 0.0
    %2245 = vmatprep.subr.mxu0 0.0
    %2246 = vmatpush2.msra.mxu0 0.0
    %2247 = vmatprep.subr.mxu0 0.0
    %2248 = vmatpush2.msra.mxu0 0.0
    %2249 = vmatprep.subr.mxu0 0.0
    %2250 = vmatpush2.msra.mxu0 0.0
    %2251 = vmatprep.subr.mxu0 0.0
    %2252 = vmatpush2.msra.mxu0 0.0
    %2253 = vmatprep.subr.mxu0 0.0
    %2254 = vmatpush2.msra.mxu0 0.0
    %2255 = vmatprep.subr.mxu0 0.0
    %2256 = vmatpush2.msra.mxu0 0.0
    %2257 = vmatprep.subr.mxu0 0.0
    %2258 = vmatpush2.msra.mxu0 0.0
    %2259 = vmatprep.subr.mxu0 0.0
    %2260 = vmatpush2.msra.mxu0 0.0
    %2261 = vmatprep.subr.mxu0 0.0
    %2262 = vmatpush2.msra.mxu0 0.0
    %2263 = vmatprep.mubr.f32.mxu0 0.0
    %2264 = vmatmul.mubr.f32.gmra.mxu0 %v2197
    %v2265 = vpop.f32.mrf.mxu0
    %v2266 = vadd.f32 0.0, %v2265
    %v2267 = vpop.f32.mrf.mxu0
    %2268 = vdwg.mxu0
    %2269 = vrot.lane.b32.xlu0 %v507, 112
    %v2270 = vpop.permute.xlu0 %2269
    %v2273 = vsel %vm520, %v2188, 0
    %2275 = vmatprep.subr.mxu0 0.0
    %2276 = vmatpush1.msra.mxu0 0.0
    %2277 = vmatprep.subr.mxu0 0.0
    %2278 = vmatpush1.msra.mxu0 0.0
    %2279 = vmatprep.subr.mxu0 0.0
    %2280 = vmatpush1.msra.mxu0 0.0
    %2281 = vmatprep.subr.mxu0 0.0
    %2282 = vmatpush1.msra.mxu0 0.0
    %2283 = vmatprep.subr.mxu0 0.0
    %2284 = vmatpush1.msra.mxu0 0.0
    %2285 = vmatprep.subr.mxu0 0.0
    %2286 = vmatpush1.msra.mxu0 0.0
    %2287 = vmatprep.subr.mxu0 0.0
    %2288 = vmatpush1.msra.mxu0 0.0
    %2289 = vmatprep.subr.mxu0 0.0
    %2290 = vmatpush1.msra.mxu0 0.0
    %2291 = vmatprep.subr.mxu0 0.0
    %2292 = vmatpush1.msra.mxu0 0.0
    %2293 = vmatprep.subr.mxu0 0.0
    %2294 = vmatpush1.msra.mxu0 0.0
    %2295 = vmatprep.subr.mxu0 0.0
    %2296 = vmatpush1.msra.mxu0 0.0
    %2297 = vmatprep.subr.mxu0 0.0
    %2298 = vmatpush1.msra.mxu0 0.0
    %2299 = vmatprep.subr.mxu0 0.0
    %2300 = vmatpush1.msra.mxu0 0.0
    %2301 = vmatprep.subr.mxu0 0.0
    %2302 = vmatpush1.msra.mxu0 0.0
    %2303 = vmatprep.subr.mxu0 0.0
    %2304 = vmatpush1.msra.mxu0 0.0
    %2305 = vmatprep.subr.mxu0 0.0
    %2306 = vmatpush1.msra.mxu0 %v2270
    %2307 = vmatprep.subr.mxu0 0.0
    %2308 = vmatpush2.msra.mxu0 0.0
    %2309 = vmatprep.subr.mxu0 0.0
    %2310 = vmatpush2.msra.mxu0 0.0
    %2311 = vmatprep.subr.mxu0 0.0
    %2312 = vmatpush2.msra.mxu0 0.0
    %2313 = vmatprep.subr.mxu0 0.0
    %2314 = vmatpush2.msra.mxu0 0.0
    %2315 = vmatprep.subr.mxu0 0.0
    %2316 = vmatpush2.msra.mxu0 0.0
    %2317 = vmatprep.subr.mxu0 0.0
    %2318 = vmatpush2.msra.mxu0 0.0
    %2319 = vmatprep.subr.mxu0 0.0
    %2320 = vmatpush2.msra.mxu0 0.0
    %2321 = vmatprep.subr.mxu0 0.0
    %2322 = vmatpush2.msra.mxu0 0.0
    %2323 = vmatprep.subr.mxu0 0.0
    %2324 = vmatpush2.msra.mxu0 0.0
    %2325 = vmatprep.subr.mxu0 0.0
    %2326 = vmatpush2.msra.mxu0 0.0
    %2327 = vmatprep.subr.mxu0 0.0
    %2328 = vmatpush2.msra.mxu0 0.0
    %2329 = vmatprep.subr.mxu0 0.0
    %2330 = vmatpush2.msra.mxu0 0.0
    %2331 = vmatprep.subr.mxu0 0.0
    %2332 = vmatpush2.msra.mxu0 0.0
    %2333 = vmatprep.subr.mxu0 0.0
    %2334 = vmatpush2.msra.mxu0 0.0
    %2335 = vmatprep.subr.mxu0 0.0
    %2336 = vmatpush2.msra.mxu0 0.0
    %2337 = vmatprep.subr.mxu0 0.0
    %2338 = vmatpush2.msra.mxu0 0.0
    %2339 = vmatprep.mubr.f32.mxu0 0.0
    %2340 = vmatmul.mubr.f32.gmra.mxu0 %v2273
    %v2341 = vpop.f32.mrf.mxu0
    %v2342 = vadd.f32 0.0, %v2341
    %v2343 = vpop.f32.mrf.mxu0
    %2344 = vdwg.mxu0
    %2345 = vrot.lane.b32.xlu0 %v512, 112
    %v2346 = vpop.permute.xlu0 %2345
    %v2349 = vsel %vm520, %v2190, 0
    %2351 = vmatprep.subr.mxu0 0.0
    %2352 = vmatpush1.msra.mxu0 0.0
    %2353 = vmatprep.subr.mxu0 0.0
    %2354 = vmatpush1.msra.mxu0 0.0
    %2355 = vmatprep.subr.mxu0 0.0
    %2356 = vmatpush1.msra.mxu0 0.0
    %2357 = vmatprep.subr.mxu0 0.0
    %2358 = vmatpush1.msra.mxu0 0.0
    %2359 = vmatprep.subr.mxu0 0.0
    %2360 = vmatpush1.msra.mxu0 0.0
    %2361 = vmatprep.subr.mxu0 0.0
    %2362 = vmatpush1.msra.mxu0 0.0
    %2363 = vmatprep.subr.mxu0 0.0
    %2364 = vmatpush1.msra.mxu0 0.0
    %2365 = vmatprep.subr.mxu0 0.0
    %2366 = vmatpush1.msra.mxu0 0.0
    %2367 = vmatprep.subr.mxu0 0.0
    %2368 = vmatpush1.msra.mxu0 0.0
    %2369 = vmatprep.subr.mxu0 0.0
    %2370 = vmatpush1.msra.mxu0 0.0
    %2371 = vmatprep.subr.mxu0 0.0
    %2372 = vmatpush1.msra.mxu0 0.0
    %2373 = vmatprep.subr.mxu0 0.0
    %2374 = vmatpush1.msra.mxu0 0.0
    %2375 = vmatprep.subr.mxu0 0.0
    %2376 = vmatpush1.msra.mxu0 0.0
    %2377 = vmatprep.subr.mxu0 0.0
    %2378 = vmatpush1.msra.mxu0 0.0
    %2379 = vmatprep.subr.mxu0 0.0
    %2380 = vmatpush1.msra.mxu0 0.0
    %2381 = vmatprep.subr.mxu0 0.0
    %2382 = vmatpush1.msra.mxu0 %v2346
    %2383 = vmatprep.subr.mxu0 0.0
    %2384 = vmatpush2.msra.mxu0 0.0
    %2385 = vmatprep.subr.mxu0 0.0
    %2386 = vmatpush2.msra.mxu0 0.0
    %2387 = vmatprep.subr.mxu0 0.0
    %2388 = vmatpush2.msra.mxu0 0.0
    %2389 = vmatprep.subr.mxu0 0.0
    %2390 = vmatpush2.msra.mxu0 0.0
    %2391 = vmatprep.subr.mxu0 0.0
    %2392 = vmatpush2.msra.mxu0 0.0
    %2393 = vmatprep.subr.mxu0 0.0
    %2394 = vmatpush2.msra.mxu0 0.0
    %2395 = vmatprep.subr.mxu0 0.0
    %2396 = vmatpush2.msra.mxu0 0.0
    %2397 = vmatprep.subr.mxu0 0.0
    %2398 = vmatpush2.msra.mxu0 0.0
    %2399 = vmatprep.subr.mxu0 0.0
    %2400 = vmatpush2.msra.mxu0 0.0
    %2401 = vmatprep.subr.mxu0 0.0
    %2402 = vmatpush2.msra.mxu0 0.0
    %2403 = vmatprep.subr.mxu0 0.0
    %2404 = vmatpush2.msra.mxu0 0.0
    %2405 = vmatprep.subr.mxu0 0.0
    %2406 = vmatpush2.msra.mxu0 0.0
    %2407 = vmatprep.subr.mxu0 0.0
    %2408 = vmatpush2.msra.mxu0 0.0
    %2409 = vmatprep.subr.mxu0 0.0
    %2410 = vmatpush2.msra.mxu0 0.0
    %2411 = vmatprep.subr.mxu0 0.0
    %2412 = vmatpush2.msra.mxu0 0.0
    %2413 = vmatprep.subr.mxu0 0.0
    %2414 = vmatpush2.msra.mxu0 0.0
    %2415 = vmatprep.mubr.f32.mxu0 0.0
    %2416 = vmatmul.mubr.f32.gmra.mxu0 %v2349
    %v2417 = vpop.f32.mrf.mxu0
    %v2418 = vadd.f32 0.0, %v2417
    %v2419 = vpop.f32.mrf.mxu0
    %2420 = vdwg.mxu0
    %2421 = vrot.lane.b32.xlu0 %v517, 112
    %v2422 = vpop.permute.xlu0 %2421
    %v2425 = vsel %vm520, %v2192, 0
    %2427 = vmatprep.subr.mxu0 0.0
    %2428 = vmatpush1.msra.mxu0 0.0
    %2429 = vmatprep.subr.mxu0 0.0
    %2430 = vmatpush1.msra.mxu0 0.0
    %2431 = vmatprep.subr.mxu0 0.0
    %2432 = vmatpush1.msra.mxu0 0.0
    %2433 = vmatprep.subr.mxu0 0.0
    %2434 = vmatpush1.msra.mxu0 0.0
    %2435 = vmatprep.subr.mxu0 0.0
    %2436 = vmatpush1.msra.mxu0 0.0
    %2437 = vmatprep.subr.mxu0 0.0
    %2438 = vmatpush1.msra.mxu0 0.0
    %2439 = vmatprep.subr.mxu0 0.0
    %2440 = vmatpush1.msra.mxu0 0.0
    %2441 = vmatprep.subr.mxu0 0.0
    %2442 = vmatpush1.msra.mxu0 0.0
    %2443 = vmatprep.subr.mxu0 0.0
    %2444 = vmatpush1.msra.mxu0 0.0
    %2445 = vmatprep.subr.mxu0 0.0
    %2446 = vmatpush1.msra.mxu0 0.0
    %2447 = vmatprep.subr.mxu0 0.0
    %2448 = vmatpush1.msra.mxu0 0.0
    %2449 = vmatprep.subr.mxu0 0.0
    %2450 = vmatpush1.msra.mxu0 0.0
    %2451 = vmatprep.subr.mxu0 0.0
    %2452 = vmatpush1.msra.mxu0 0.0
    %2453 = vmatprep.subr.mxu0 0.0
    %2454 = vmatpush1.msra.mxu0 0.0
    %2455 = vmatprep.subr.mxu0 0.0
    %2456 = vmatpush1.msra.mxu0 0.0
    %2457 = vmatprep.subr.mxu0 0.0
    %2458 = vmatpush1.msra.mxu0 %v2422
    %2459 = vmatprep.subr.mxu0 0.0
    %2460 = vmatpush2.msra.mxu0 0.0
    %2461 = vmatprep.subr.mxu0 0.0
    %2462 = vmatpush2.msra.mxu0 0.0
    %2463 = vmatprep.subr.mxu0 0.0
    %2464 = vmatpush2.msra.mxu0 0.0
    %2465 = vmatprep.subr.mxu0 0.0
    %2466 = vmatpush2.msra.mxu0 0.0
    %2467 = vmatprep.subr.mxu0 0.0
    %2468 = vmatpush2.msra.mxu0 0.0
    %2469 = vmatprep.subr.mxu0 0.0
    %2470 = vmatpush2.msra.mxu0 0.0
    %2471 = vmatprep.subr.mxu0 0.0
    %2472 = vmatpush2.msra.mxu0 0.0
    %2473 = vmatprep.subr.mxu0 0.0
    %2474 = vmatpush2.msra.mxu0 0.0
    %2475 = vmatprep.subr.mxu0 0.0
    %2476 = vmatpush2.msra.mxu0 0.0
    %2477 = vmatprep.subr.mxu0 0.0
    %2478 = vmatpush2.msra.mxu0 0.0
    %2479 = vmatprep.subr.mxu0 0.0
    %2480 = vmatpush2.msra.mxu0 0.0
    %2481 = vmatprep.subr.mxu0 0.0
    %2482 = vmatpush2.msra.mxu0 0.0
    %2483 = vmatprep.subr.mxu0 0.0
    %2484 = vmatpush2.msra.mxu0 0.0
    %2485 = vmatprep.subr.mxu0 0.0
    %2486 = vmatpush2.msra.mxu0 0.0
    %2487 = vmatprep.subr.mxu0 0.0
    %2488 = vmatpush2.msra.mxu0 0.0
    %2489 = vmatprep.subr.mxu0 0.0
    %2490 = vmatpush2.msra.mxu0 0.0
    %2491 = vmatprep.mubr.f32.mxu0 0.0
    %2492 = vmatmul.mubr.f32.gmra.mxu0 %v2425
    %v2493 = vpop.f32.mrf.mxu0
    %v2494 = vadd.f32 0.0, %v2493
    %v2495 = vpop.f32.mrf.mxu0
    %2496 = vdwg.mxu0
    %2497 = vrot.lane.b32.xlu0 %v278, 104
    %v2498 = vpop.permute.xlu0 %2497
    %2499 = vrot.lane.b32.xlu0 %v390, 104
    %v2500 = vpop.permute.xlu0 %2499
    %v2501 = vsel %vm520, %v2498, 0
    %v2503 = vsel %vm520, %v2500, 0
    %2505 = vmatprep.subr.mxu0 0.0
    %2506 = vmatpush1.xpose.msra.mxu0 0.0
    %2507 = vmatprep.subr.mxu0 0.0
    %2508 = vmatpush1.xpose.msra.mxu0 0.0
    %2509 = vmatprep.subr.mxu0 0.0
    %2510 = vmatpush1.xpose.msra.mxu0 0.0
    %2511 = vmatprep.subr.mxu0 0.0
    %2512 = vmatpush1.xpose.msra.mxu0 0.0
    %2513 = vmatprep.subr.mxu0 0.0
    %2514 = vmatpush1.xpose.msra.mxu0 0.0
    %2515 = vmatprep.subr.mxu0 0.0
    %2516 = vmatpush1.xpose.msra.mxu0 0.0
    %2517 = vmatprep.subr.mxu0 0.0
    %2518 = vmatpush1.xpose.msra.mxu0 0.0
    %2519 = vmatprep.subr.mxu0 0.0
    %2520 = vmatpush1.xpose.msra.mxu0 0.0
    %2521 = vmatprep.subr.mxu0 0.0
    %2522 = vmatpush1.xpose.msra.mxu0 0.0
    %2523 = vmatprep.subr.mxu0 0.0
    %2524 = vmatpush1.xpose.msra.mxu0 0.0
    %2525 = vmatprep.subr.mxu0 0.0
    %2526 = vmatpush1.xpose.msra.mxu0 0.0
    %2527 = vmatprep.subr.mxu0 0.0
    %2528 = vmatpush1.xpose.msra.mxu0 0.0
    %2529 = vmatprep.subr.mxu0 0.0
    %2530 = vmatpush1.xpose.msra.mxu0 0.0
    %2531 = vmatprep.subr.mxu0 0.0
    %2532 = vmatpush1.xpose.msra.mxu0 0.0
    %2533 = vmatprep.subr.mxu0 0.0
    %2534 = vmatpush1.xpose.msra.mxu0 0.0
    %2535 = vmatprep.subr.mxu0 0.0
    %2536 = vmatpush1.xpose.msra.mxu0 %v2503
    %2537 = vmatprep.subr.mxu0 0.0
    %2538 = vmatpush2.xpose.msra.mxu0 0.0
    %2539 = vmatprep.subr.mxu0 0.0
    %2540 = vmatpush2.xpose.msra.mxu0 0.0
    %2541 = vmatprep.subr.mxu0 0.0
    %2542 = vmatpush2.xpose.msra.mxu0 0.0
    %2543 = vmatprep.subr.mxu0 0.0
    %2544 = vmatpush2.xpose.msra.mxu0 0.0
    %2545 = vmatprep.subr.mxu0 0.0
    %2546 = vmatpush2.xpose.msra.mxu0 0.0
    %2547 = vmatprep.subr.mxu0 0.0
    %2548 = vmatpush2.xpose.msra.mxu0 0.0
    %2549 = vmatprep.subr.mxu0 0.0
    %2550 = vmatpush2.xpose.msra.mxu0 0.0
    %2551 = vmatprep.subr.mxu0 0.0
    %2552 = vmatpush2.xpose.msra.mxu0 0.0
    %2553 = vmatprep.subr.mxu0 0.0
    %2554 = vmatpush2.xpose.msra.mxu0 0.0
    %2555 = vmatprep.subr.mxu0 0.0
    %2556 = vmatpush2.xpose.msra.mxu0 0.0
    %2557 = vmatprep.subr.mxu0 0.0
    %2558 = vmatpush2.xpose.msra.mxu0 0.0
    %2559 = vmatprep.subr.mxu0 0.0
    %2560 = vmatpush2.xpose.msra.mxu0 0.0
    %2561 = vmatprep.subr.mxu0 0.0
    %2562 = vmatpush2.xpose.msra.mxu0 0.0
    %2563 = vmatprep.subr.mxu0 0.0
    %2564 = vmatpush2.xpose.msra.mxu0 0.0
    %2565 = vmatprep.subr.mxu0 0.0
    %2566 = vmatpush2.xpose.msra.mxu0 0.0
    %2567 = vmatprep.subr.mxu0 0.0
    %2568 = vmatpush2.xpose.msra.mxu0 0.0
    %2569 = vmatprep.mubr.f32.mxu0 0.0
    %2570 = vmatmul.mubr.f32.gmra.mxu0 %v2501
    %v2571 = vpop.f32.mrf.mxu0
    %v2572 = vadd.f32 0.0, %v2571
    %v2573 = vpop.f32.mrf.mxu0
    %2574 = vdwg.mxu0
    %2575 = vrot.lane.b32.xlu0 %v283, 104
    %v2576 = vpop.permute.xlu0 %2575
    %2577 = vrot.lane.b32.xlu0 %v395, 104
    %v2578 = vpop.permute.xlu0 %2577
    %v2579 = vsel %vm520, %v2576, 0
    %v2581 = vsel %vm520, %v2578, 0
    %2583 = vmatprep.subr.mxu0 0.0
    %2584 = vmatpush1.xpose.msra.mxu0 0.0
    %2585 = vmatprep.subr.mxu0 0.0
    %2586 = vmatpush1.xpose.msra.mxu0 0.0
    %2587 = vmatprep.subr.mxu0 0.0
    %2588 = vmatpush1.xpose.msra.mxu0 0.0
    %2589 = vmatprep.subr.mxu0 0.0
    %2590 = vmatpush1.xpose.msra.mxu0 0.0
    %2591 = vmatprep.subr.mxu0 0.0
    %2592 = vmatpush1.xpose.msra.mxu0 0.0
    %2593 = vmatprep.subr.mxu0 0.0
    %2594 = vmatpush1.xpose.msra.mxu0 0.0
    %2595 = vmatprep.subr.mxu0 0.0
    %2596 = vmatpush1.xpose.msra.mxu0 0.0
    %2597 = vmatprep.subr.mxu0 0.0
    %2598 = vmatpush1.xpose.msra.mxu0 0.0
    %2599 = vmatprep.subr.mxu0 0.0
    %2600 = vmatpush1.xpose.msra.mxu0 0.0
    %2601 = vmatprep.subr.mxu0 0.0
    %2602 = vmatpush1.xpose.msra.mxu0 0.0
    %2603 = vmatprep.subr.mxu0 0.0
    %2604 = vmatpush1.xpose.msra.mxu0 0.0
    %2605 = vmatprep.subr.mxu0 0.0
    %2606 = vmatpush1.xpose.msra.mxu0 0.0
    %2607 = vmatprep.subr.mxu0 0.0
    %2608 = vmatpush1.xpose.msra.mxu0 0.0
    %2609 = vmatprep.subr.mxu0 0.0
    %2610 = vmatpush1.xpose.msra.mxu0 0.0
    %2611 = vmatprep.subr.mxu0 0.0
    %2612 = vmatpush1.xpose.msra.mxu0 0.0
    %2613 = vmatprep.subr.mxu0 0.0
    %2614 = vmatpush1.xpose.msra.mxu0 %v2581
    %2615 = vmatprep.subr.mxu0 0.0
    %2616 = vmatpush2.xpose.msra.mxu0 0.0
    %2617 = vmatprep.subr.mxu0 0.0
    %2618 = vmatpush2.xpose.msra.mxu0 0.0
    %2619 = vmatprep.subr.mxu0 0.0
    %2620 = vmatpush2.xpose.msra.mxu0 0.0
    %2621 = vmatprep.subr.mxu0 0.0
    %2622 = vmatpush2.xpose.msra.mxu0 0.0
    %2623 = vmatprep.subr.mxu0 0.0
    %2624 = vmatpush2.xpose.msra.mxu0 0.0
    %2625 = vmatprep.subr.mxu0 0.0
    %2626 = vmatpush2.xpose.msra.mxu0 0.0
    %2627 = vmatprep.subr.mxu0 0.0
    %2628 = vmatpush2.xpose.msra.mxu0 0.0
    %2629 = vmatprep.subr.mxu0 0.0
    %2630 = vmatpush2.xpose.msra.mxu0 0.0
    %2631 = vmatprep.subr.mxu0 0.0
    %2632 = vmatpush2.xpose.msra.mxu0 0.0
    %2633 = vmatprep.subr.mxu0 0.0
    %2634 = vmatpush2.xpose.msra.mxu0 0.0
    %2635 = vmatprep.subr.mxu0 0.0
    %2636 = vmatpush2.xpose.msra.mxu0 0.0
    %2637 = vmatprep.subr.mxu0 0.0
    %2638 = vmatpush2.xpose.msra.mxu0 0.0
    %2639 = vmatprep.subr.mxu0 0.0
    %2640 = vmatpush2.xpose.msra.mxu0 0.0
    %2641 = vmatprep.subr.mxu0 0.0
    %2642 = vmatpush2.xpose.msra.mxu0 0.0
    %2643 = vmatprep.subr.mxu0 0.0
    %2644 = vmatpush2.xpose.msra.mxu0 0.0
    %2645 = vmatprep.subr.mxu0 0.0
    %2646 = vmatpush2.xpose.msra.mxu0 0.0
    %2647 = vmatprep.mubr.f32.mxu0 0.0
    %2648 = vmatmul.mubr.f32.gmra.mxu0 %v2579
    %v2649 = vpop.f32.mrf.mxu0
    %v2650 = vadd.f32 0.0, %v2649
    %v2651 = vpop.f32.mrf.mxu0
    %2652 = vdwg.mxu0
    %2653 = vrot.lane.b32.xlu0 %v288, 104
    %v2654 = vpop.permute.xlu0 %2653
    %2655 = vrot.lane.b32.xlu0 %v400, 104
    %v2656 = vpop.permute.xlu0 %2655
    %v2657 = vsel %vm520, %v2654, 0
    %v2659 = vsel %vm520, %v2656, 0
    %2661 = vmatprep.subr.mxu0 0.0
    %2662 = vmatpush1.xpose.msra.mxu0 0.0
    %2663 = vmatprep.subr.mxu0 0.0
    %2664 = vmatpush1.xpose.msra.mxu0 0.0
    %2665 = vmatprep.subr.mxu0 0.0
    %2666 = vmatpush1.xpose.msra.mxu0 0.0
    %2667 = vmatprep.subr.mxu0 0.0
    %2668 = vmatpush1.xpose.msra.mxu0 0.0
    %2669 = vmatprep.subr.mxu0 0.0
    %2670 = vmatpush1.xpose.msra.mxu0 0.0
    %2671 = vmatprep.subr.mxu0 0.0
    %2672 = vmatpush1.xpose.msra.mxu0 0.0
    %2673 = vmatprep.subr.mxu0 0.0
    %2674 = vmatpush1.xpose.msra.mxu0 0.0
    %2675 = vmatprep.subr.mxu0 0.0
    %2676 = vmatpush1.xpose.msra.mxu0 0.0
    %2677 = vmatprep.subr.mxu0 0.0
    %2678 = vmatpush1.xpose.msra.mxu0 0.0
    %2679 = vmatprep.subr.mxu0 0.0
    %2680 = vmatpush1.xpose.msra.mxu0 0.0
    %2681 = vmatprep.subr.mxu0 0.0
    %2682 = vmatpush1.xpose.msra.mxu0 0.0
    %2683 = vmatprep.subr.mxu0 0.0
    %2684 = vmatpush1.xpose.msra.mxu0 0.0
    %2685 = vmatprep.subr.mxu0 0.0
    %2686 = vmatpush1.xpose.msra.mxu0 0.0
    %2687 = vmatprep.subr.mxu0 0.0
    %2688 = vmatpush1.xpose.msra.mxu0 0.0
    %2689 = vmatprep.subr.mxu0 0.0
    %2690 = vmatpush1.xpose.msra.mxu0 0.0
    %2691 = vmatprep.subr.mxu0 0.0
    %2692 = vmatpush1.xpose.msra.mxu0 %v2659
    %2693 = vmatprep.subr.mxu0 0.0
    %2694 = vmatpush2.xpose.msra.mxu0 0.0
    %2695 = vmatprep.subr.mxu0 0.0
    %2696 = vmatpush2.xpose.msra.mxu0 0.0
    %2697 = vmatprep.subr.mxu0 0.0
    %2698 = vmatpush2.xpose.msra.mxu0 0.0
    %2699 = vmatprep.subr.mxu0 0.0
    %2700 = vmatpush2.xpose.msra.mxu0 0.0
    %2701 = vmatprep.subr.mxu0 0.0
    %2702 = vmatpush2.xpose.msra.mxu0 0.0
    %2703 = vmatprep.subr.mxu0 0.0
    %2704 = vmatpush2.xpose.msra.mxu0 0.0
    %2705 = vmatprep.subr.mxu0 0.0
    %2706 = vmatpush2.xpose.msra.mxu0 0.0
    %2707 = vmatprep.subr.mxu0 0.0
    %2708 = vmatpush2.xpose.msra.mxu0 0.0
    %2709 = vmatprep.subr.mxu0 0.0
    %2710 = vmatpush2.xpose.msra.mxu0 0.0
    %2711 = vmatprep.subr.mxu0 0.0
    %2712 = vmatpush2.xpose.msra.mxu0 0.0
    %2713 = vmatprep.subr.mxu0 0.0
    %2714 = vmatpush2.xpose.msra.mxu0 0.0
    %2715 = vmatprep.subr.mxu0 0.0
    %2716 = vmatpush2.xpose.msra.mxu0 0.0
    %2717 = vmatprep.subr.mxu0 0.0
    %2718 = vmatpush2.xpose.msra.mxu0 0.0
    %2719 = vmatprep.subr.mxu0 0.0
    %2720 = vmatpush2.xpose.msra.mxu0 0.0
    %2721 = vmatprep.subr.mxu0 0.0
    %2722 = vmatpush2.xpose.msra.mxu0 0.0
    %2723 = vmatprep.subr.mxu0 0.0
    %2724 = vmatpush2.xpose.msra.mxu0 0.0
    %2725 = vmatprep.mubr.f32.mxu0 0.0
    %2726 = vmatmul.mubr.f32.gmra.mxu0 %v2657
    %v2727 = vpop.f32.mrf.mxu0
    %v2728 = vadd.f32 0.0, %v2727
    %v2729 = vpop.f32.mrf.mxu0
    %2730 = vdwg.mxu0
    %2731 = vrot.lane.b32.xlu0 %v293, 104
    %v2732 = vpop.permute.xlu0 %2731
    %2733 = vrot.lane.b32.xlu0 %v405, 104
    %v2734 = vpop.permute.xlu0 %2733
    %v2735 = vsel %vm520, %v2732, 0
    %v2737 = vsel %vm520, %v2734, 0
    %2739 = vmatprep.subr.mxu0 0.0
    %2740 = vmatpush1.xpose.msra.mxu0 0.0
    %2741 = vmatprep.subr.mxu0 0.0
    %2742 = vmatpush1.xpose.msra.mxu0 0.0
    %2743 = vmatprep.subr.mxu0 0.0
    %2744 = vmatpush1.xpose.msra.mxu0 0.0
    %2745 = vmatprep.subr.mxu0 0.0
    %2746 = vmatpush1.xpose.msra.mxu0 0.0
    %2747 = vmatprep.subr.mxu0 0.0
    %2748 = vmatpush1.xpose.msra.mxu0 0.0
    %2749 = vmatprep.subr.mxu0 0.0
    %2750 = vmatpush1.xpose.msra.mxu0 0.0
    %2751 = vmatprep.subr.mxu0 0.0
    %2752 = vmatpush1.xpose.msra.mxu0 0.0
    %2753 = vmatprep.subr.mxu0 0.0
    %2754 = vmatpush1.xpose.msra.mxu0 0.0
    %2755 = vmatprep.subr.mxu0 0.0
    %2756 = vmatpush1.xpose.msra.mxu0 0.0
    %2757 = vmatprep.subr.mxu0 0.0
    %2758 = vmatpush1.xpose.msra.mxu0 0.0
    %2759 = vmatprep.subr.mxu0 0.0
    %2760 = vmatpush1.xpose.msra.mxu0 0.0
    %2761 = vmatprep.subr.mxu0 0.0
    %2762 = vmatpush1.xpose.msra.mxu0 0.0
    %2763 = vmatprep.subr.mxu0 0.0
    %2764 = vmatpush1.xpose.msra.mxu0 0.0
    %2765 = vmatprep.subr.mxu0 0.0
    %2766 = vmatpush1.xpose.msra.mxu0 0.0
    %2767 = vmatprep.subr.mxu0 0.0
    %2768 = vmatpush1.xpose.msra.mxu0 0.0
    %2769 = vmatprep.subr.mxu0 0.0
    %2770 = vmatpush1.xpose.msra.mxu0 %v2737
    %2771 = vmatprep.subr.mxu0 0.0
    %2772 = vmatpush2.xpose.msra.mxu0 0.0
    %2773 = vmatprep.subr.mxu0 0.0
    %2774 = vmatpush2.xpose.msra.mxu0 0.0
    %2775 = vmatprep.subr.mxu0 0.0
    %2776 = vmatpush2.xpose.msra.mxu0 0.0
    %2777 = vmatprep.subr.mxu0 0.0
    %2778 = vmatpush2.xpose.msra.mxu0 0.0
    %2779 = vmatprep.subr.mxu0 0.0
    %2780 = vmatpush2.xpose.msra.mxu0 0.0
    %2781 = vmatprep.subr.mxu0 0.0
    %2782 = vmatpush2.xpose.msra.mxu0 0.0
    %2783 = vmatprep.subr.mxu0 0.0
    %2784 = vmatpush2.xpose.msra.mxu0 0.0
    %2785 = vmatprep.subr.mxu0 0.0
    %2786 = vmatpush2.xpose.msra.mxu0 0.0
    %2787 = vmatprep.subr.mxu0 0.0
    %2788 = vmatpush2.xpose.msra.mxu0 0.0
    %2789 = vmatprep.subr.mxu0 0.0
    %2790 = vmatpush2.xpose.msra.mxu0 0.0
    %2791 = vmatprep.subr.mxu0 0.0
    %2792 = vmatpush2.xpose.msra.mxu0 0.0
    %2793 = vmatprep.subr.mxu0 0.0
    %2794 = vmatpush2.xpose.msra.mxu0 0.0
    %2795 = vmatprep.subr.mxu0 0.0
    %2796 = vmatpush2.xpose.msra.mxu0 0.0
    %2797 = vmatprep.subr.mxu0 0.0
    %2798 = vmatpush2.xpose.msra.mxu0 0.0
    %2799 = vmatprep.subr.mxu0 0.0
    %2800 = vmatpush2.xpose.msra.mxu0 0.0
    %2801 = vmatprep.subr.mxu0 0.0
    %2802 = vmatpush2.xpose.msra.mxu0 0.0
    %2803 = vmatprep.mubr.f32.mxu0 0.0
    %2804 = vmatmul.mubr.f32.gmra.mxu0 %v2735
    %v2805 = vpop.f32.mrf.mxu0
    %v2806 = vadd.f32 0.0, %v2805
    %v2807 = vpop.f32.mrf.mxu0
    %2808 = vdwg.mxu0
    %v2809 = vmul.f32 %v2572, 0.35355338
    %v2810 = vmul.f32 %v2650, 0.35355338
    %v2811 = vmul.f32 %v2728, 0.35355338
    %v2812 = vmul.f32 %v2806, 0.35355338
    %v2813 = vsel %vm520, %v2809, -inf
    %2814 = vmax.xlane.f32.xlu0 %v2813
    %v2815 = vpop.xlane.xlu0 %2814
    %v2816 = vsel %vm520, %v2810, -inf
    %2817 = vmax.xlane.f32.xlu0 %v2816
    %v2818 = vpop.xlane.xlu0 %2817
    %v2819 = vsel %vm520, %v2811, -inf
    %2820 = vmax.xlane.f32.xlu0 %v2819
    %v2821 = vpop.xlane.xlu0 %2820
    %v2822 = vsel %vm520, %v2812, -inf
    %2823 = vmax.xlane.f32.xlu0 %v2822
    %v2824 = vpop.xlane.xlu0 %2823
    %v2825 = vsub.f32 %v2809, %v2815
    %v2826 = vsub.f32 %v2810, %v2818
    %v2827 = vsub.f32 %v2811, %v2821
    %v2828 = vsub.f32 %v2812, %v2824
    %v2829 = vmul.f32 %v2825, 1.442695
    %v2830 = vpow.pop %v2829
    %v2831 = vmul.f32 %v2826, 1.442695
    %v2832 = vpow.pop %v2831
    %v2833 = vmul.f32 %v2827, 1.442695
    %v2834 = vpow.pop %v2833
    %v2835 = vmul.f32 %v2828, 1.442695
    %v2836 = vpow.pop %v2835
    %v2837 = vsel %vm520, %v2830, 0.0
    %2838 = vadd.xlane.f32.xlu0 %v2837
    %v2839 = vpop.xlane.xlu0 %2838
    %v2840 = vsel %vm520, %v2832, 0.0
    %2841 = vadd.xlane.f32.xlu0 %v2840
    %v2842 = vpop.xlane.xlu0 %2841
    %v2843 = vsel %vm520, %v2834, 0.0
    %2844 = vadd.xlane.f32.xlu0 %v2843
    %v2845 = vpop.xlane.xlu0 %2844
    %v2846 = vsel %vm520, %v2836, 0.0
    %2847 = vadd.xlane.f32.xlu0 %v2846
    %v2848 = vpop.xlane.xlu0 %2847
    %v2849 = vrcp.pop %v2839
    %v2850 = vmul.f32 %v2830, %v2849
    %v2851 = vrcp.pop %v2842
    %v2852 = vmul.f32 %v2832, %v2851
    %v2853 = vrcp.pop %v2845
    %v2854 = vmul.f32 %v2834, %v2853
    %v2855 = vrcp.pop %v2848
    %v2856 = vmul.f32 %v2836, %v2855
    %2857 = vrot.lane.b32.xlu0 %v502, 104
    %v2858 = vpop.permute.xlu0 %2857
    %v2861 = vsel %vm520, %v2850, 0
    %2863 = vmatprep.subr.mxu0 0.0
    %2864 = vmatpush1.msra.mxu0 0.0
    %2865 = vmatprep.subr.mxu0 0.0
    %2866 = vmatpush1.msra.mxu0 0.0
    %2867 = vmatprep.subr.mxu0 0.0
    %2868 = vmatpush1.msra.mxu0 0.0
    %2869 = vmatprep.subr.mxu0 0.0
    %2870 = vmatpush1.msra.mxu0 0.0
    %2871 = vmatprep.subr.mxu0 0.0
    %2872 = vmatpush1.msra.mxu0 0.0
    %2873 = vmatprep.subr.mxu0 0.0
    %2874 = vmatpush1.msra.mxu0 0.0
    %2875 = vmatprep.subr.mxu0 0.0
    %2876 = vmatpush1.msra.mxu0 0.0
    %2877 = vmatprep.subr.mxu0 0.0
    %2878 = vmatpush1.msra.mxu0 0.0
    %2879 = vmatprep.subr.mxu0 0.0
    %2880 = vmatpush1.msra.mxu0 0.0
    %2881 = vmatprep.subr.mxu0 0.0
    %2882 = vmatpush1.msra.mxu0 0.0
    %2883 = vmatprep.subr.mxu0 0.0
    %2884 = vmatpush1.msra.mxu0 0.0
    %2885 = vmatprep.subr.mxu0 0.0
    %2886 = vmatpush1.msra.mxu0 0.0
    %2887 = vmatprep.subr.mxu0 0.0
    %2888 = vmatpush1.msra.mxu0 0.0
    %2889 = vmatprep.subr.mxu0 0.0
    %2890 = vmatpush1.msra.mxu0 0.0
    %2891 = vmatprep.subr.mxu0 0.0
    %2892 = vmatpush1.msra.mxu0 0.0
    %2893 = vmatprep.subr.mxu0 0.0
    %2894 = vmatpush1.msra.mxu0 %v2858
    %2895 = vmatprep.subr.mxu0 0.0
    %2896 = vmatpush2.msra.mxu0 0.0
    %2897 = vmatprep.subr.mxu0 0.0
    %2898 = vmatpush2.msra.mxu0 0.0
    %2899 = vmatprep.subr.mxu0 0.0
    %2900 = vmatpush2.msra.mxu0 0.0
    %2901 = vmatprep.subr.mxu0 0.0
    %2902 = vmatpush2.msra.mxu0 0.0
    %2903 = vmatprep.subr.mxu0 0.0
    %2904 = vmatpush2.msra.mxu0 0.0
    %2905 = vmatprep.subr.mxu0 0.0
    %2906 = vmatpush2.msra.mxu0 0.0
    %2907 = vmatprep.subr.mxu0 0.0
    %2908 = vmatpush2.msra.mxu0 0.0
    %2909 = vmatprep.subr.mxu0 0.0
    %2910 = vmatpush2.msra.mxu0 0.0
    %2911 = vmatprep.subr.mxu0 0.0
    %2912 = vmatpush2.msra.mxu0 0.0
    %2913 = vmatprep.subr.mxu0 0.0
    %2914 = vmatpush2.msra.mxu0 0.0
    %2915 = vmatprep.subr.mxu0 0.0
    %2916 = vmatpush2.msra.mxu0 0.0
    %2917 = vmatprep.subr.mxu0 0.0
    %2918 = vmatpush2.msra.mxu0 0.0
    %2919 = vmatprep.subr.mxu0 0.0
    %2920 = vmatpush2.msra.mxu0 0.0
    %2921 = vmatprep.subr.mxu0 0.0
    %2922 = vmatpush2.msra.mxu0 0.0
    %2923 = vmatprep.subr.mxu0 0.0
    %2924 = vmatpush2.msra.mxu0 0.0
    %2925 = vmatprep.subr.mxu0 0.0
    %2926 = vmatpush2.msra.mxu0 0.0
    %2927 = vmatprep.mubr.f32.mxu0 0.0
    %2928 = vmatmul.mubr.f32.gmra.mxu0 %v2861
    %v2929 = vpop.f32.mrf.mxu0
    %v2930 = vadd.f32 0.0, %v2929
    %v2931 = vpop.f32.mrf.mxu0
    %2932 = vdwg.mxu0
    %2933 = vrot.lane.b32.xlu0 %v507, 104
    %v2934 = vpop.permute.xlu0 %2933
    %v2937 = vsel %vm520, %v2852, 0
    %2939 = vmatprep.subr.mxu0 0.0
    %2940 = vmatpush1.msra.mxu0 0.0
    %2941 = vmatprep.subr.mxu0 0.0
    %2942 = vmatpush1.msra.mxu0 0.0
    %2943 = vmatprep.subr.mxu0 0.0
    %2944 = vmatpush1.msra.mxu0 0.0
    %2945 = vmatprep.subr.mxu0 0.0
    %2946 = vmatpush1.msra.mxu0 0.0
    %2947 = vmatprep.subr.mxu0 0.0
    %2948 = vmatpush1.msra.mxu0 0.0
    %2949 = vmatprep.subr.mxu0 0.0
    %2950 = vmatpush1.msra.mxu0 0.0
    %2951 = vmatprep.subr.mxu0 0.0
    %2952 = vmatpush1.msra.mxu0 0.0
    %2953 = vmatprep.subr.mxu0 0.0
    %2954 = vmatpush1.msra.mxu0 0.0
    %2955 = vmatprep.subr.mxu0 0.0
    %2956 = vmatpush1.msra.mxu0 0.0
    %2957 = vmatprep.subr.mxu0 0.0
    %2958 = vmatpush1.msra.mxu0 0.0
    %2959 = vmatprep.subr.mxu0 0.0
    %2960 = vmatpush1.msra.mxu0 0.0
    %2961 = vmatprep.subr.mxu0 0.0
    %2962 = vmatpush1.msra.mxu0 0.0
    %2963 = vmatprep.subr.mxu0 0.0
    %2964 = vmatpush1.msra.mxu0 0.0
    %2965 = vmatprep.subr.mxu0 0.0
    %2966 = vmatpush1.msra.mxu0 0.0
    %2967 = vmatprep.subr.mxu0 0.0
    %2968 = vmatpush1.msra.mxu0 0.0
    %2969 = vmatprep.subr.mxu0 0.0
    %2970 = vmatpush1.msra.mxu0 %v2934
    %2971 = vmatprep.subr.mxu0 0.0
    %2972 = vmatpush2.msra.mxu0 0.0
    %2973 = vmatprep.subr.mxu0 0.0
    %2974 = vmatpush2.msra.mxu0 0.0
    %2975 = vmatprep.subr.mxu0 0.0
    %2976 = vmatpush2.msra.mxu0 0.0
    %2977 = vmatprep.subr.mxu0 0.0
    %2978 = vmatpush2.msra.mxu0 0.0
    %2979 = vmatprep.subr.mxu0 0.0
    %2980 = vmatpush2.msra.mxu0 0.0
    %2981 = vmatprep.subr.mxu0 0.0
    %2982 = vmatpush2.msra.mxu0 0.0
    %2983 = vmatprep.subr.mxu0 0.0
    %2984 = vmatpush2.msra.mxu0 0.0
    %2985 = vmatprep.subr.mxu0 0.0
    %2986 = vmatpush2.msra.mxu0 0.0
    %2987 = vmatprep.subr.mxu0 0.0
    %2988 = vmatpush2.msra.mxu0 0.0
    %2989 = vmatprep.subr.mxu0 0.0
    %2990 = vmatpush2.msra.mxu0 0.0
    %2991 = vmatprep.subr.mxu0 0.0
    %2992 = vmatpush2.msra.mxu0 0.0
    %2993 = vmatprep.subr.mxu0 0.0
    %2994 = vmatpush2.msra.mxu0 0.0
    %2995 = vmatprep.subr.mxu0 0.0
    %2996 = vmatpush2.msra.mxu0 0.0
    %2997 = vmatprep.subr.mxu0 0.0
    %2998 = vmatpush2.msra.mxu0 0.0
    %2999 = vmatprep.subr.mxu0 0.0
    %3000 = vmatpush2.msra.mxu0 0.0
    %3001 = vmatprep.subr.mxu0 0.0
    %3002 = vmatpush2.msra.mxu0 0.0
    %3003 = vmatprep.mubr.f32.mxu0 0.0
    %3004 = vmatmul.mubr.f32.gmra.mxu0 %v2937
    %v3005 = vpop.f32.mrf.mxu0
    %v3006 = vadd.f32 0.0, %v3005
    %v3007 = vpop.f32.mrf.mxu0
    %3008 = vdwg.mxu0
    %3009 = vrot.lane.b32.xlu0 %v512, 104
    %v3010 = vpop.permute.xlu0 %3009
    %v3013 = vsel %vm520, %v2854, 0
    %3015 = vmatprep.subr.mxu0 0.0
    %3016 = vmatpush1.msra.mxu0 0.0
    %3017 = vmatprep.subr.mxu0 0.0
    %3018 = vmatpush1.msra.mxu0 0.0
    %3019 = vmatprep.subr.mxu0 0.0
    %3020 = vmatpush1.msra.mxu0 0.0
    %3021 = vmatprep.subr.mxu0 0.0
    %3022 = vmatpush1.msra.mxu0 0.0
    %3023 = vmatprep.subr.mxu0 0.0
    %3024 = vmatpush1.msra.mxu0 0.0
    %3025 = vmatprep.subr.mxu0 0.0
    %3026 = vmatpush1.msra.mxu0 0.0
    %3027 = vmatprep.subr.mxu0 0.0
    %3028 = vmatpush1.msra.mxu0 0.0
    %3029 = vmatprep.subr.mxu0 0.0
    %3030 = vmatpush1.msra.mxu0 0.0
    %3031 = vmatprep.subr.mxu0 0.0
    %3032 = vmatpush1.msra.mxu0 0.0
    %3033 = vmatprep.subr.mxu0 0.0
    %3034 = vmatpush1.msra.mxu0 0.0
    %3035 = vmatprep.subr.mxu0 0.0
    %3036 = vmatpush1.msra.mxu0 0.0
    %3037 = vmatprep.subr.mxu0 0.0
    %3038 = vmatpush1.msra.mxu0 0.0
    %3039 = vmatprep.subr.mxu0 0.0
    %3040 = vmatpush1.msra.mxu0 0.0
    %3041 = vmatprep.subr.mxu0 0.0
    %3042 = vmatpush1.msra.mxu0 0.0
    %3043 = vmatprep.subr.mxu0 0.0
    %3044 = vmatpush1.msra.mxu0 0.0
    %3045 = vmatprep.subr.mxu0 0.0
    %3046 = vmatpush1.msra.mxu0 %v3010
    %3047 = vmatprep.subr.mxu0 0.0
    %3048 = vmatpush2.msra.mxu0 0.0
    %3049 = vmatprep.subr.mxu0 0.0
    %3050 = vmatpush2.msra.mxu0 0.0
    %3051 = vmatprep.subr.mxu0 0.0
    %3052 = vmatpush2.msra.mxu0 0.0
    %3053 = vmatprep.subr.mxu0 0.0
    %3054 = vmatpush2.msra.mxu0 0.0
    %3055 = vmatprep.subr.mxu0 0.0
    %3056 = vmatpush2.msra.mxu0 0.0
    %3057 = vmatprep.subr.mxu0 0.0
    %3058 = vmatpush2.msra.mxu0 0.0
    %3059 = vmatprep.subr.mxu0 0.0
    %3060 = vmatpush2.msra.mxu0 0.0
    %3061 = vmatprep.subr.mxu0 0.0
    %3062 = vmatpush2.msra.mxu0 0.0
    %3063 = vmatprep.subr.mxu0 0.0
    %3064 = vmatpush2.msra.mxu0 0.0
    %3065 = vmatprep.subr.mxu0 0.0
    %3066 = vmatpush2.msra.mxu0 0.0
    %3067 = vmatprep.subr.mxu0 0.0
    %3068 = vmatpush2.msra.mxu0 0.0
    %3069 = vmatprep.subr.mxu0 0.0
    %3070 = vmatpush2.msra.mxu0 0.0
    %3071 = vmatprep.subr.mxu0 0.0
    %3072 = vmatpush2.msra.mxu0 0.0
    %3073 = vmatprep.subr.mxu0 0.0
    %3074 = vmatpush2.msra.mxu0 0.0
    %3075 = vmatprep.subr.mxu0 0.0
    %3076 = vmatpush2.msra.mxu0 0.0
    %3077 = vmatprep.subr.mxu0 0.0
    %3078 = vmatpush2.msra.mxu0 0.0
    %3079 = vmatprep.mubr.f32.mxu0 0.0
    %3080 = vmatmul.mubr.f32.gmra.mxu0 %v3013
    %v3081 = vpop.f32.mrf.mxu0
    %v3082 = vadd.f32 0.0, %v3081
    %v3083 = vpop.f32.mrf.mxu0
    %3084 = vdwg.mxu0
    %3085 = vrot.lane.b32.xlu0 %v517, 104
    %v3086 = vpop.permute.xlu0 %3085
    %v3089 = vsel %vm520, %v2856, 0
    %3091 = vmatprep.subr.mxu0 0.0
    %3092 = vmatpush1.msra.mxu0 0.0
    %3093 = vmatprep.subr.mxu0 0.0
    %3094 = vmatpush1.msra.mxu0 0.0
    %3095 = vmatprep.subr.mxu0 0.0
    %3096 = vmatpush1.msra.mxu0 0.0
    %3097 = vmatprep.subr.mxu0 0.0
    %3098 = vmatpush1.msra.mxu0 0.0
    %3099 = vmatprep.subr.mxu0 0.0
    %3100 = vmatpush1.msra.mxu0 0.0
    %3101 = vmatprep.subr.mxu0 0.0
    %3102 = vmatpush1.msra.mxu0 0.0
    %3103 = vmatprep.subr.mxu0 0.0
    %3104 = vmatpush1.msra.mxu0 0.0
    %3105 = vmatprep.subr.mxu0 0.0
    %3106 = vmatpush1.msra.mxu0 0.0
    %3107 = vmatprep.subr.mxu0 0.0
    %3108 = vmatpush1.msra.mxu0 0.0
    %3109 = vmatprep.subr.mxu0 0.0
    %3110 = vmatpush1.msra.mxu0 0.0
    %3111 = vmatprep.subr.mxu0 0.0
    %3112 = vmatpush1.msra.mxu0 0.0
    %3113 = vmatprep.subr.mxu0 0.0
    %3114 = vmatpush1.msra.mxu0 0.0
    %3115 = vmatprep.subr.mxu0 0.0
    %3116 = vmatpush1.msra.mxu0 0.0
    %3117 = vmatprep.subr.mxu0 0.0
    %3118 = vmatpush1.msra.mxu0 0.0
    %3119 = vmatprep.subr.mxu0 0.0
    %3120 = vmatpush1.msra.mxu0 0.0
    %3121 = vmatprep.subr.mxu0 0.0
    %3122 = vmatpush1.msra.mxu0 %v3086
    %3123 = vmatprep.subr.mxu0 0.0
    %3124 = vmatpush2.msra.mxu0 0.0
    %3125 = vmatprep.subr.mxu0 0.0
    %3126 = vmatpush2.msra.mxu0 0.0
    %3127 = vmatprep.subr.mxu0 0.0
    %3128 = vmatpush2.msra.mxu0 0.0
    %3129 = vmatprep.subr.mxu0 0.0
    %3130 = vmatpush2.msra.mxu0 0.0
    %3131 = vmatprep.subr.mxu0 0.0
    %3132 = vmatpush2.msra.mxu0 0.0
    %3133 = vmatprep.subr.mxu0 0.0
    %3134 = vmatpush2.msra.mxu0 0.0
    %3135 = vmatprep.subr.mxu0 0.0
    %3136 = vmatpush2.msra.mxu0 0.0
    %3137 = vmatprep.subr.mxu0 0.0
    %3138 = vmatpush2.msra.mxu0 0.0
    %3139 = vmatprep.subr.mxu0 0.0
    %3140 = vmatpush2.msra.mxu0 0.0
    %3141 = vmatprep.subr.mxu0 0.0
    %3142 = vmatpush2.msra.mxu0 0.0
    %3143 = vmatprep.subr.mxu0 0.0
    %3144 = vmatpush2.msra.mxu0 0.0
    %3145 = vmatprep.subr.mxu0 0.0
    %3146 = vmatpush2.msra.mxu0 0.0
    %3147 = vmatprep.subr.mxu0 0.0
    %3148 = vmatpush2.msra.mxu0 0.0
    %3149 = vmatprep.subr.mxu0 0.0
    %3150 = vmatpush2.msra.mxu0 0.0
    %3151 = vmatprep.subr.mxu0 0.0
    %3152 = vmatpush2.msra.mxu0 0.0
    %3153 = vmatprep.subr.mxu0 0.0
    %3154 = vmatpush2.msra.mxu0 0.0
    %3155 = vmatprep.mubr.f32.mxu0 0.0
    %3156 = vmatmul.mubr.f32.gmra.mxu0 %v3089
    %v3157 = vpop.f32.mrf.mxu0
    %v3158 = vadd.f32 0.0, %v3157
    %v3159 = vpop.f32.mrf.mxu0
    %3160 = vdwg.mxu0
    %3165 = vrot.lane.b32.xlu0 %v1599, 8
    %v3166 = vpop.permute.xlu0 %3165
    %3167 = vrot.lane.b32.xlu0 %v1676, 8
    %v3168 = vpop.permute.xlu0 %3167
    %3169 = vrot.lane.b32.xlu0 %v1753, 8
    %v3170 = vpop.permute.xlu0 %3169
    %3171 = vrot.lane.b32.xlu0 %v1830, 8
    %v3172 = vpop.permute.xlu0 %3171
    %3181 = vrot.lane.b32.xlu0 %v2266, 16
    %v3182 = vpop.permute.xlu0 %3181
    %3183 = vrot.lane.b32.xlu0 %v2342, 16
    %v3184 = vpop.permute.xlu0 %3183
    %3185 = vrot.lane.b32.xlu0 %v2418, 16
    %v3186 = vpop.permute.xlu0 %3185
    %3187 = vrot.lane.b32.xlu0 %v2494, 16
    %v3188 = vpop.permute.xlu0 %3187
    %3197 = vrot.lane.b32.xlu0 %v2930, 24
    %v3198 = vpop.permute.xlu0 %3197
    %3199 = vrot.lane.b32.xlu0 %v3006, 24
    %v3200 = vpop.permute.xlu0 %3199
    %3201 = vrot.lane.b32.xlu0 %v3082, 24
    %v3202 = vpop.permute.xlu0 %3201
    %3203 = vrot.lane.b32.xlu0 %v3158, 24
    %v3204 = vpop.permute.xlu0 %3203
    %v3209 = vsel %vm520, %v943, %v3166
    %v3210 = vsel %vm520, %v1016, %v3168
    %v3211 = vsel %vm520, %v1089, %v3170
    %v3212 = vsel %vm520, %v1162, %v3172
    %vm3213 = vcmask 130048
    %v3214 = vsel %vm3213, %v3209, %v3182
    %v3215 = vsel %vm3213, %v3210, %v3184
    %v3216 = vsel %vm3213, %v3211, %v3186
    %v3217 = vsel %vm3213, %v3212, %v3188
    %vm3218 = vcmask 195584
    %v3219 = vsel %vm3218, %v3214, %v3198
    %v3220 = vsel %vm3218, %v3215, %v3200
    %v3221 = vsel %vm3218, %v3216, %v3202
    %v3222 = vsel %vm3218, %v3217, %v3204
    %v3223 = vld [vmem:[%s9] sm:$0xff]
    %v3224 = vld [vmem:[%s9 + $0x8] sm:$0xff]
    %v3225 = vld [vmem:[%s9 + $0x10] sm:$0xff]
    %v3226 = vld [vmem:[%s9 + $0x18] sm:$0xff]
    %v3227 = vld [vmem:[%s10] sm:$0x1]
    %v3229 = vlaneseq
    %v3230 = vshrl.u32 %v3229, 7
    %v3231 = vsub.s32 0, %v3230
    %v3232 = vrot.slane %v3227, %v3231
    %v3235 = vsel %vm86, %v3219, 0
    %v3238 = vsel %vm86, %v3220, 0
    %v3241 = vsel %vm86, %v3221, 0
    %v3244 = vsel %vm86, %v3222, 0
    %3246 = vmatprep.subr.mxu0 0.0
    %3247 = vmatpush1.msra.mxu0 0.0
    %3248 = vmatprep.subr.mxu0 0.0
    %3249 = vmatpush1.msra.mxu0 0.0
    %3250 = vmatprep.subr.mxu0 0.0
    %3251 = vmatpush1.msra.mxu0 0.0
    %3252 = vmatprep.subr.mxu0 0.0
    %3253 = vmatpush1.msra.mxu0 0.0
    %3254 = vmatprep.subr.mxu0 0.0
    %3255 = vmatpush1.msra.mxu0 0.0
    %3256 = vmatprep.subr.mxu0 0.0
    %3257 = vmatpush1.msra.mxu0 0.0
    %3258 = vmatprep.subr.mxu0 0.0
    %3259 = vmatpush1.msra.mxu0 0.0
    %3260 = vmatprep.subr.mxu0 0.0
    %3261 = vmatpush1.msra.mxu0 0.0
    %3262 = vmatprep.subr.mxu0 0.0
    %3263 = vmatpush1.msra.mxu0 0.0
    %3264 = vmatprep.subr.mxu0 0.0
    %3265 = vmatpush1.msra.mxu0 0.0
    %3266 = vmatprep.subr.mxu0 0.0
    %3267 = vmatpush1.msra.mxu0 0.0
    %3268 = vmatprep.subr.mxu0 0.0
    %3269 = vmatpush1.msra.mxu0 0.0
    %3270 = vmatprep.subr.mxu0 0.0
    %3271 = vmatpush1.msra.mxu0 %v3226
    %3272 = vmatprep.subr.mxu0 0.0
    %3273 = vmatpush1.msra.mxu0 %v3225
    %3274 = vmatprep.subr.mxu0 0.0
    %3275 = vmatpush1.msra.mxu0 %v3224
    %3276 = vmatprep.subr.mxu0 0.0
    %3277 = vmatpush1.msra.mxu0 %v3223
    %3278 = vmatprep.subr.mxu0 0.0
    %3279 = vmatpush2.msra.mxu0 0.0
    %3280 = vmatprep.subr.mxu0 0.0
    %3281 = vmatpush2.msra.mxu0 0.0
    %3282 = vmatprep.subr.mxu0 0.0
    %3283 = vmatpush2.msra.mxu0 0.0
    %3284 = vmatprep.subr.mxu0 0.0
    %3285 = vmatpush2.msra.mxu0 0.0
    %3286 = vmatprep.subr.mxu0 0.0
    %3287 = vmatpush2.msra.mxu0 0.0
    %3288 = vmatprep.subr.mxu0 0.0
    %3289 = vmatpush2.msra.mxu0 0.0
    %3290 = vmatprep.subr.mxu0 0.0
    %3291 = vmatpush2.msra.mxu0 0.0
    %3292 = vmatprep.subr.mxu0 0.0
    %3293 = vmatpush2.msra.mxu0 0.0
    %3294 = vmatprep.subr.mxu0 0.0
    %3295 = vmatpush2.msra.mxu0 0.0
    %3296 = vmatprep.subr.mxu0 0.0
    %3297 = vmatpush2.msra.mxu0 0.0
    %3298 = vmatprep.subr.mxu0 0.0
    %3299 = vmatpush2.msra.mxu0 0.0
    %3300 = vmatprep.subr.mxu0 0.0
    %3301 = vmatpush2.msra.mxu0 0.0
    %3302 = vmatprep.subr.mxu0 0.0
    %3303 = vmatpush2.msra.mxu0 0.0
    %3304 = vmatprep.subr.mxu0 0.0
    %3305 = vmatpush2.msra.mxu0 0.0
    %3306 = vmatprep.subr.mxu0 0.0
    %3307 = vmatpush2.msra.mxu0 0.0
    %3308 = vmatprep.subr.mxu0 0.0
    %3309 = vmatpush2.msra.mxu0 0.0
    %3310 = vmatprep.mubr.f32.mxu0 0.0
    %3311 = vmatmul.mubr.f32.gmra.mxu0 %v3235
    %v3312 = vpop.f32.mrf.mxu0
    %v3313 = vadd.f32 %v3232, %v3312
    %v3314 = vpop.f32.mrf.mxu0
    %3315 = vmatprep.mubr.f32.mxu0 0.0
    %3316 = vmatmul.mubr.f32.gmra.mxu0 %v3238
    %v3317 = vpop.f32.mrf.mxu0
    %v3318 = vadd.f32 %v3232, %v3317
    %v3319 = vpop.f32.mrf.mxu0
    %3320 = vmatprep.mubr.f32.mxu0 0.0
    %3321 = vmatmul.mubr.f32.gmra.mxu0 %v3241
    %v3322 = vpop.f32.mrf.mxu0
    %v3323 = vadd.f32 %v3232, %v3322
    %v3324 = vpop.f32.mrf.mxu0
    %3325 = vmatprep.mubr.f32.mxu0 0.0
    %3326 = vmatmul.mubr.f32.gmra.mxu0 %v3244
    %v3327 = vpop.f32.mrf.mxu0
    %v3328 = vadd.f32 %v3232, %v3327
    %v3329 = vpop.f32.mrf.mxu0
    %3330 = vdwg.mxu0
    %v3331 = vadd.f32 %v71, %v3313
    %v3332 = vadd.f32 %v72, %v3318
    %v3333 = vadd.f32 %v73, %v3323
    %v3334 = vadd.f32 %v74, %v3328
    %v3335 = vld [vmem:[%s11] sm:$0xff]
    %v3336 = vld [vmem:[%s11 + $0x8] sm:$0xff]
    %v3337 = vld [vmem:[%s11 + $0x10] sm:$0xff]
    %v3338 = vld [vmem:[%s11 + $0x18] sm:$0xff]
    %v3339 = vld [vmem:[%s12] sm:$0x1]
    %v3341 = vlaneseq
    %v3342 = vshrl.u32 %v3341, 7
    %v3343 = vsub.s32 0, %v3342
    %v3344 = vrot.slane %v3339, %v3343
    %v3347 = vsel %vm86, %v3331, 0
    %v3350 = vsel %vm86, %v3332, 0
    %v3353 = vsel %vm86, %v3333, 0
    %v3356 = vsel %vm86, %v3334, 0
    %3358 = vmatprep.subr.mxu0 0.0
    %3359 = vmatpush1.msra.mxu0 0.0
    %3360 = vmatprep.subr.mxu0 0.0
    %3361 = vmatpush1.msra.mxu0 0.0
    %3362 = vmatprep.subr.mxu0 0.0
    %3363 = vmatpush1.msra.mxu0 0.0
    %3364 = vmatprep.subr.mxu0 0.0
    %3365 = vmatpush1.msra.mxu0 0.0
    %3366 = vmatprep.subr.mxu0 0.0
    %3367 = vmatpush1.msra.mxu0 0.0
    %3368 = vmatprep.subr.mxu0 0.0
    %3369 = vmatpush1.msra.mxu0 0.0
    %3370 = vmatprep.subr.mxu0 0.0
    %3371 = vmatpush1.msra.mxu0 0.0
    %3372 = vmatprep.subr.mxu0 0.0
    %3373 = vmatpush1.msra.mxu0 0.0
    %3374 = vmatprep.subr.mxu0 0.0
    %3375 = vmatpush1.msra.mxu0 0.0
    %3376 = vmatprep.subr.mxu0 0.0
    %3377 = vmatpush1.msra.mxu0 0.0
    %3378 = vmatprep.subr.mxu0 0.0
    %3379 = vmatpush1.msra.mxu0 0.0
    %3380 = vmatprep.subr.mxu0 0.0
    %3381 = vmatpush1.msra.mxu0 0.0
    %3382 = vmatprep.subr.mxu0 0.0
    %3383 = vmatpush1.msra.mxu0 %v3338
    %3384 = vmatprep.subr.mxu0 0.0
    %3385 = vmatpush1.msra.mxu0 %v3337
    %3386 = vmatprep.subr.mxu0 0.0
    %3387 = vmatpush1.msra.mxu0 %v3336
    %3388 = vmatprep.subr.mxu0 0.0
    %3389 = vmatpush1.msra.mxu0 %v3335
    %3390 = vmatprep.subr.mxu0 0.0
    %3391 = vmatpush2.msra.mxu0 0.0
    %3392 = vmatprep.subr.mxu0 0.0
    %3393 = vmatpush2.msra.mxu0 0.0
    %3394 = vmatprep.subr.mxu0 0.0
    %3395 = vmatpush2.msra.mxu0 0.0
    %3396 = vmatprep.subr.mxu0 0.0
    %3397 = vmatpush2.msra.mxu0 0.0
    %3398 = vmatprep.subr.mxu0 0.0
    %3399 = vmatpush2.msra.mxu0 0.0
    %3400 = vmatprep.subr.mxu0 0.0
    %3401 = vmatpush2.msra.mxu0 0.0
    %3402 = vmatprep.subr.mxu0 0.0
    %3403 = vmatpush2.msra.mxu0 0.0
    %3404 = vmatprep.subr.mxu0 0.0
    %3405 = vmatpush2.msra.mxu0 0.0
    %3406 = vmatprep.subr.mxu0 0.0
    %3407 = vmatpush2.msra.mxu0 0.0
    %3408 = vmatprep.subr.mxu0 0.0
    %3409 = vmatpush2.msra.mxu0 0.0
    %3410 = vmatprep.subr.mxu0 0.0
    %3411 = vmatpush2.msra.mxu0 0.0
    %3412 = vmatprep.subr.mxu0 0.0
    %3413 = vmatpush2.msra.mxu0 0.0
    %3414 = vmatprep.subr.mxu0 0.0
    %3415 = vmatpush2.msra.mxu0 0.0
    %3416 = vmatprep.subr.mxu0 0.0
    %3417 = vmatpush2.msra.mxu0 0.0
    %3418 = vmatprep.subr.mxu0 0.0
    %3419 = vmatpush2.msra.mxu0 0.0
    %3420 = vmatprep.subr.mxu0 0.0
    %3421 = vmatpush2.msra.mxu0 0.0
    %3422 = vmatprep.mubr.f32.mxu0 0.0
    %3423 = vmatmul.mubr.f32.gmra.mxu0 %v3347
    %v3424 = vpop.f32.mrf.mxu0
    %v3425 = vadd.f32 %v3344, %v3424
    %v3426 = vpop.f32.mrf.mxu0
    %3427 = vmatprep.mubr.f32.mxu0 0.0
    %3428 = vmatmul.mubr.f32.gmra.mxu0 %v3350
    %v3429 = vpop.f32.mrf.mxu0
    %v3430 = vadd.f32 %v3344, %v3429
    %v3431 = vpop.f32.mrf.mxu0
    %3432 = vmatprep.mubr.f32.mxu0 0.0
    %3433 = vmatmul.mubr.f32.gmra.mxu0 %v3353
    %v3434 = vpop.f32.mrf.mxu0
    %v3435 = vadd.f32 %v3344, %v3434
    %v3436 = vpop.f32.mrf.mxu0
    %3437 = vmatprep.mubr.f32.mxu0 0.0
    %3438 = vmatmul.mubr.f32.gmra.mxu0 %v3356
    %v3439 = vpop.f32.mrf.mxu0
    %v3440 = vadd.f32 %v3344, %v3439
    %v3441 = vpop.f32.mrf.mxu0
    %3442 = vdwg.mxu0
    %v3443 = vmax.f32 %v3425, 0.0
    %v3444 = vmax.f32 %v3430, 0.0
    %v3445 = vmax.f32 %v3435, 0.0
    %v3446 = vmax.f32 %v3440, 0.0
    %v3447 = vld [vmem:[%s13] sm:$0xff]
    %v3448 = vld [vmem:[%s13 + $0x8] sm:$0xff]
    %v3449 = vld [vmem:[%s13 + $0x10] sm:$0xff]
    %v3450 = vld [vmem:[%s13 + $0x18] sm:$0xff]
    %v3451 = vld [vmem:[%s13 + $0x20] sm:$0xff]
    %v3452 = vld [vmem:[%s13 + $0x28] sm:$0xff]
    %v3453 = vld [vmem:[%s13 + $0x30] sm:$0xff]
    %v3454 = vld [vmem:[%s13 + $0x38] sm:$0xff]
    %v3455 = vld [vmem:[%s14] sm:$0x1]
    %v3457 = vlaneseq
    %v3458 = vshrl.u32 %v3457, 7
    %v3459 = vsub.s32 0, %v3458
    %v3460 = vrot.slane %v3455, %v3459
    %vm3462 = vcmask 523264
    %v3464 = vsel %vm3462, %v3443, 0
    %v3467 = vsel %vm3462, %v3444, 0
    %v3470 = vsel %vm3462, %v3445, 0
    %v3473 = vsel %vm3462, %v3446, 0
    %3475 = vmatprep.subr.mxu0 0.0
    %3476 = vmatpush1.msra.mxu0 0.0
    %3477 = vmatprep.subr.mxu0 0.0
    %3478 = vmatpush1.msra.mxu0 0.0
    %3479 = vmatprep.subr.mxu0 0.0
    %3480 = vmatpush1.msra.mxu0 0.0
    %3481 = vmatprep.subr.mxu0 0.0
    %3482 = vmatpush1.msra.mxu0 0.0
    %3483 = vmatprep.subr.mxu0 0.0
    %3484 = vmatpush1.msra.mxu0 0.0
    %3485 = vmatprep.subr.mxu0 0.0
    %3486 = vmatpush1.msra.mxu0 0.0
    %3487 = vmatprep.subr.mxu0 0.0
    %3488 = vmatpush1.msra.mxu0 0.0
    %3489 = vmatprep.subr.mxu0 0.0
    %3490 = vmatpush1.msra.mxu0 0.0
    %3491 = vmatprep.subr.mxu0 0.0
    %3492 = vmatpush1.msra.mxu0 %v3454
    %3493 = vmatprep.subr.mxu0 0.0
    %3494 = vmatpush1.msra.mxu0 %v3453
    %3495 = vmatprep.subr.mxu0 0.0
    %3496 = vmatpush1.msra.mxu0 %v3452
    %3497 = vmatprep.subr.mxu0 0.0
    %3498 = vmatpush1.msra.mxu0 %v3451
    %3499 = vmatprep.subr.mxu0 0.0
    %3500 = vmatpush1.msra.mxu0 %v3450
    %3501 = vmatprep.subr.mxu0 0.0
    %3502 = vmatpush1.msra.mxu0 %v3449
    %3503 = vmatprep.subr.mxu0 0.0
    %3504 = vmatpush1.msra.mxu0 %v3448
    %3505 = vmatprep.subr.mxu0 0.0
    %3506 = vmatpush1.msra.mxu0 %v3447
    %3507 = vmatprep.subr.mxu0 0.0
    %3508 = vmatpush2.msra.mxu0 0.0
    %3509 = vmatprep.subr.mxu0 0.0
    %3510 = vmatpush2.msra.mxu0 0.0
    %3511 = vmatprep.subr.mxu0 0.0
    %3512 = vmatpush2.msra.mxu0 0.0
    %3513 = vmatprep.subr.mxu0 0.0
    %3514 = vmatpush2.msra.mxu0 0.0
    %3515 = vmatprep.subr.mxu0 0.0
    %3516 = vmatpush2.msra.mxu0 0.0
    %3517 = vmatprep.subr.mxu0 0.0
    %3518 = vmatpush2.msra.mxu0 0.0
    %3519 = vmatprep.subr.mxu0 0.0
    %3520 = vmatpush2.msra.mxu0 0.0
    %3521 = vmatprep.subr.mxu0 0.0
    %3522 = vmatpush2.msra.mxu0 0.0
    %3523 = vmatprep.subr.mxu0 0.0
    %3524 = vmatpush2.msra.mxu0 0.0
    %3525 = vmatprep.subr.mxu0 0.0
    %3526 = vmatpush2.msra.mxu0 0.0
    %3527 = vmatprep.subr.mxu0 0.0
    %3528 = vmatpush2.msra.mxu0 0.0
    %3529 = vmatprep.subr.mxu0 0.0
    %3530 = vmatpush2.msra.mxu0 0.0
    %3531 = vmatprep.subr.mxu0 0.0
    %3532 = vmatpush2.msra.mxu0 0.0
    %3533 = vmatprep.subr.mxu0 0.0
    %3534 = vmatpush2.msra.mxu0 0.0
    %3535 = vmatprep.subr.mxu0 0.0
    %3536 = vmatpush2.msra.mxu0 0.0
    %3537 = vmatprep.subr.mxu0 0.0
    %3538 = vmatpush2.msra.mxu0 0.0
    %3539 = vmatprep.mubr.f32.mxu0 0.0
    %3540 = vmatmul.mubr.f32.gmra.mxu0 %v3464
    %v3541 = vpop.f32.mrf.mxu0
    %v3542 = vadd.f32 %v3460, %v3541
    %v3543 = vpop.f32.mrf.mxu0
    %3544 = vmatprep.mubr.f32.mxu0 0.0
    %3545 = vmatmul.mubr.f32.gmra.mxu0 %v3467
    %v3546 = vpop.f32.mrf.mxu0
    %v3547 = vadd.f32 %v3460, %v3546
    %v3548 = vpop.f32.mrf.mxu0
    %3549 = vmatprep.mubr.f32.mxu0 0.0
    %3550 = vmatmul.mubr.f32.gmra.mxu0 %v3470
    %v3551 = vpop.f32.mrf.mxu0
    %v3552 = vadd.f32 %v3460, %v3551
    %v3553 = vpop.f32.mrf.mxu0
    %3554 = vmatprep.mubr.f32.mxu0 0.0
    %3555 = vmatmul.mubr.f32.gmra.mxu0 %v3473
    %v3556 = vpop.f32.mrf.mxu0
    %v3557 = vadd.f32 %v3460, %v3556
    %v3558 = vpop.f32.mrf.mxu0
    %3559 = vdwg.mxu0
    %v3560 = vadd.f32 %v3331, %v3542
    %v3561 = vadd.f32 %v3332, %v3547
    %v3562 = vadd.f32 %v3333, %v3552
    %v3563 = vadd.f32 %v3334, %v3557
    %v3564 = vsel %vm86, %v3560, 0.0
    %v3565 = vrot.slane %v3564, 4
    %v3566 = vadd.f32 %v3564, %v3565
    %v3567 = vrot.slane %v3566, 2
    %v3568 = vadd.f32 %v3566, %v3567
    %v3569 = vrot.slane %v3568, 1
    %v3570 = vadd.f32 %v3568, %v3569
    %v3571 = vsel %vm86, %v3561, 0.0
    %v3572 = vrot.slane %v3571, 4
    %v3573 = vadd.f32 %v3571, %v3572
    %v3574 = vrot.slane %v3573, 2
    %v3575 = vadd.f32 %v3573, %v3574
    %v3576 = vrot.slane %v3575, 1
    %v3577 = vadd.f32 %v3575, %v3576
    %v3578 = vsel %vm86, %v3562, 0.0
    %v3579 = vrot.slane %v3578, 4
    %v3580 = vadd.f32 %v3578, %v3579
    %v3581 = vrot.slane %v3580, 2
    %v3582 = vadd.f32 %v3580, %v3581
    %v3583 = vrot.slane %v3582, 1
    %v3584 = vadd.f32 %v3582, %v3583
    %v3585 = vsel %vm86, %v3563, 0.0
    %v3586 = vrot.slane %v3585, 4
    %v3587 = vadd.f32 %v3585, %v3586
    %v3588 = vrot.slane %v3587, 2
    %v3589 = vadd.f32 %v3587, %v3588
    %v3590 = vrot.slane %v3589, 1
    %v3591 = vadd.f32 %v3589, %v3590
    %v3592 = vrcp.pop 8.0
    %v3593 = vmul.f32 %v3570, %v3592
    %v3594 = vmul.f32 %v3577, %v3592
    %v3595 = vmul.f32 %v3584, %v3592
    %v3596 = vmul.f32 %v3591, %v3592
    %v3597 = vld [vmem:[%s15] sm:$0xff]
    %v3598 = vld [vmem:[%s15 + $0x8] sm:$0xff]
    %v3599 = vld [vmem:[%s15 + $0x10] sm:$0xff]
    %v3600 = vld [vmem:[%s15 + $0x18] sm:$0xff]
    %v3601 = vld [vmem:[%s16] sm:$0x1]
    %v3603 = vlaneseq
    %v3604 = vshrl.u32 %v3603, 7
    %v3605 = vsub.s32 0, %v3604
    %v3606 = vrot.slane %v3601, %v3605
    %vm3612 = vcmask 1041409
    %v3613 = vsel %vm3612, %v3594, %v3593
    %vm3614 = vcmask 1042434
    %v3615 = vsel %vm3614, %v3595, %v3613
    %vm3616 = vcmask 1043459
    %v3617 = vsel %vm3616, %v3596, %v3615
    %v3618 = vsel %vm86, %v3617, 0
    %3620 = vmatprep.subr.mxu0 0.0
    %3621 = vmatpush1.msra.mxu0 0.0
    %3622 = vmatprep.subr.mxu0 0.0
    %3623 = vmatpush1.msra.mxu0 0.0
    %3624 = vmatprep.subr.mxu0 0.0
    %3625 = vmatpush1.msra.mxu0 0.0
    %3626 = vmatprep.subr.mxu0 0.0
    %3627 = vmatpush1.msra.mxu0 0.0
    %3628 = vmatprep.subr.mxu0 0.0
    %3629 = vmatpush1.msra.mxu0 0.0
    %3630 = vmatprep.subr.mxu0 0.0
    %3631 = vmatpush1.msra.mxu0 0.0
    %3632 = vmatprep.subr.mxu0 0.0
    %3633 = vmatpush1.msra.mxu0 0.0
    %3634 = vmatprep.subr.mxu0 0.0
    %3635 = vmatpush1.msra.mxu0 0.0
    %3636 = vmatprep.subr.mxu0 0.0
    %3637 = vmatpush1.msra.mxu0 0.0
    %3638 = vmatprep.subr.mxu0 0.0
    %3639 = vmatpush1.msra.mxu0 0.0
    %3640 = vmatprep.subr.mxu0 0.0
    %3641 = vmatpush1.msra.mxu0 0.0
    %3642 = vmatprep.subr.mxu0 0.0
    %3643 = vmatpush1.msra.mxu0 0.0
    %3644 = vmatprep.subr.mxu0 0.0
    %3645 = vmatpush1.msra.mxu0 %v3600
    %3646 = vmatprep.subr.mxu0 0.0
    %3647 = vmatpush1.msra.mxu0 %v3599
    %3648 = vmatprep.subr.mxu0 0.0
    %3649 = vmatpush1.msra.mxu0 %v3598
    %3650 = vmatprep.subr.mxu0 0.0
    %3651 = vmatpush1.msra.mxu0 %v3597
    %3652 = vmatprep.subr.mxu0 0.0
    %3653 = vmatpush2.msra.mxu0 0.0
    %3654 = vmatprep.subr.mxu0 0.0
    %3655 = vmatpush2.msra.mxu0 0.0
    %3656 = vmatprep.subr.mxu0 0.0
    %3657 = vmatpush2.msra.mxu0 0.0
    %3658 = vmatprep.subr.mxu0 0.0
    %3659 = vmatpush2.msra.mxu0 0.0
    %3660 = vmatprep.subr.mxu0 0.0
    %3661 = vmatpush2.msra.mxu0 0.0
    %3662 = vmatprep.subr.mxu0 0.0
    %3663 = vmatpush2.msra.mxu0 0.0
    %3664 = vmatprep.subr.mxu0 0.0
    %3665 = vmatpush2.msra.mxu0 0.0
    %3666 = vmatprep.subr.mxu0 0.0
    %3667 = vmatpush2.msra.mxu0 0.0
    %3668 = vmatprep.subr.mxu0 0.0
    %3669 = vmatpush2.msra.mxu0 0.0
    %3670 = vmatprep.subr.mxu0 0.0
    %3671 = vmatpush2.msra.mxu0 0.0
    %3672 = vmatprep.subr.mxu0 0.0
    %3673 = vmatpush2.msra.mxu0 0.0
    %3674 = vmatprep.subr.mxu0 0.0
    %3675 = vmatpush2.msra.mxu0 0.0
    %3676 = vmatprep.subr.mxu0 0.0
    %3677 = vmatpush2.msra.mxu0 0.0
    %3678 = vmatprep.subr.mxu0 0.0
    %3679 = vmatpush2.msra.mxu0 0.0
    %3680 = vmatprep.subr.mxu0 0.0
    %3681 = vmatpush2.msra.mxu0 0.0
    %3682 = vmatprep.subr.mxu0 0.0
    %3683 = vmatpush2.msra.mxu0 0.0
    %3684 = vmatprep.mubr.f32.mxu0 0.0
    %3685 = vmatmul.mubr.f32.gmra.mxu0 %v3618
    %v3686 = vpop.f32.mrf.mxu0
    %v3687 = vadd.f32 %v3606, %v3686
    %v3688 = vpop.f32.mrf.mxu0
    %3689 = vdwg.mxu0
    %v3690 = vld [vmem:[%s17] sm:$0xff]
    %v3691 = vld [vmem:[%s17 + $0x8] sm:$0xff]
    %v3692 = vld [vmem:[%s17 + $0x10] sm:$0xff]
    %v3693 = vld [vmem:[%s17 + $0x18] sm:$0xff]
    %v3694 = vld [vmem:[%s18] sm:$0x1]
    %v3696 = vlaneseq
    %v3697 = vshrl.u32 %v3696, 7
    %v3698 = vsub.s32 0, %v3697
    %v3699 = vrot.slane %v3694, %v3698
    %v3702 = vsel %vm86, %v3560, 0
    %v3705 = vsel %vm86, %v3561, 0
    %v3708 = vsel %vm86, %v3562, 0
    %v3711 = vsel %vm86, %v3563, 0
    %3713 = vmatprep.subr.mxu0 0.0
    %3714 = vmatpush1.msra.mxu0 0.0
    %3715 = vmatprep.subr.mxu0 0.0
    %3716 = vmatpush1.msra.mxu0 0.0
    %3717 = vmatprep.subr.mxu0 0.0
    %3718 = vmatpush1.msra.mxu0 0.0
    %3719 = vmatprep.subr.mxu0 0.0
    %3720 = vmatpush1.msra.mxu0 0.0
    %3721 = vmatprep.subr.mxu0 0.0
    %3722 = vmatpush1.msra.mxu0 0.0
    %3723 = vmatprep.subr.mxu0 0.0
    %3724 = vmatpush1.msra.mxu0 0.0
    %3725 = vmatprep.subr.mxu0 0.0
    %3726 = vmatpush1.msra.mxu0 0.0
    %3727 = vmatprep.subr.mxu0 0.0
    %3728 = vmatpush1.msra.mxu0 0.0
    %3729 = vmatprep.subr.mxu0 0.0
    %3730 = vmatpush1.msra.mxu0 0.0
    %3731 = vmatprep.subr.mxu0 0.0
    %3732 = vmatpush1.msra.mxu0 0.0
    %3733 = vmatprep.subr.mxu0 0.0
    %3734 = vmatpush1.msra.mxu0 0.0
    %3735 = vmatprep.subr.mxu0 0.0
    %3736 = vmatpush1.msra.mxu0 0.0
    %3737 = vmatprep.subr.mxu0 0.0
    %3738 = vmatpush1.msra.mxu0 %v3693
    %3739 = vmatprep.subr.mxu0 0.0
    %3740 = vmatpush1.msra.mxu0 %v3692
    %3741 = vmatprep.subr.mxu0 0.0
    %3742 = vmatpush1.msra.mxu0 %v3691
    %3743 = vmatprep.subr.mxu0 0.0
    %3744 = vmatpush1.msra.mxu0 %v3690
    %3745 = vmatprep.subr.mxu0 0.0
    %3746 = vmatpush2.msra.mxu0 0.0
    %3747 = vmatprep.subr.mxu0 0.0
    %3748 = vmatpush2.msra.mxu0 0.0
    %3749 = vmatprep.subr.mxu0 0.0
    %3750 = vmatpush2.msra.mxu0 0.0
    %3751 = vmatprep.subr.mxu0 0.0
    %3752 = vmatpush2.msra.mxu0 0.0
    %3753 = vmatprep.subr.mxu0 0.0
    %3754 = vmatpush2.msra.mxu0 0.0
    %3755 = vmatprep.subr.mxu0 0.0
    %3756 = vmatpush2.msra.mxu0 0.0
    %3757 = vmatprep.subr.mxu0 0.0
    %3758 = vmatpush2.msra.mxu0 0.0
    %3759 = vmatprep.subr.mxu0 0.0
    %3760 = vmatpush2.msra.mxu0 0.0
    %3761 = vmatprep.subr.mxu0 0.0
    %3762 = vmatpush2.msra.mxu0 0.0
    %3763 = vmatprep.subr.mxu0 0.0
    %3764 = vmatpush2.msra.mxu0 0.0
    %3765 = vmatprep.subr.mxu0 0.0
    %3766 = vmatpush2.msra.mxu0 0.0
    %3767 = vmatprep.subr.mxu0 0.0
    %3768 = vmatpush2.msra.mxu0 0.0
    %3769 = vmatprep.subr.mxu0 0.0
    %3770 = vmatpush2.msra.mxu0 0.0
    %3771 = vmatprep.subr.mxu0 0.0
    %3772 = vmatpush2.msra.mxu0 0.0
    %3773 = vmatprep.subr.mxu0 0.0
    %3774 = vmatpush2.msra.mxu0 0.0
    %3775 = vmatprep.subr.mxu0 0.0
    %3776 = vmatpush2.msra.mxu0 0.0
    %3777 = vmatprep.mubr.f32.mxu0 0.0
    %3778 = vmatmul.mubr.f32.gmra.mxu0 %v3702
    %v3779 = vpop.f32.mrf.mxu0
    %v3780 = vadd.f32 %v3699, %v3779
    %v3781 = vpop.f32.mrf.mxu0
    %3782 = vmatprep.mubr.f32.mxu0 0.0
    %3783 = vmatmul.mubr.f32.gmra.mxu0 %v3705
    %v3784 = vpop.f32.mrf.mxu0
    %v3785 = vadd.f32 %v3699, %v3784
    %v3786 = vpop.f32.mrf.mxu0
    %3787 = vmatprep.mubr.f32.mxu0 0.0
    %3788 = vmatmul.mubr.f32.gmra.mxu0 %v3708
    %v3789 = vpop.f32.mrf.mxu0
    %v3790 = vadd.f32 %v3699, %v3789
    %v3791 = vpop.f32.mrf.mxu0
    %3792 = vmatprep.mubr.f32.mxu0 0.0
    %3793 = vmatmul.mubr.f32.gmra.mxu0 %v3711
    %v3794 = vpop.f32.mrf.mxu0
    %v3795 = vadd.f32 %v3699, %v3794
    %v3796 = vpop.f32.mrf.mxu0
    %3797 = vdwg.mxu0
    %v3800 = vunpack.c.l.s4 1966171168
    %v3801 = vunpack.c.0.s8 %v3800
    %v3802 = vlaneseq
    %v3803 = vshrl.u32 %v3802, 7
    %v3804 = vsub.s32 %v3801, %v3803
    %v3805 = vrot.slane %v3687, %v3804
    %v3806 = vcombine.high %v3805, %v3805
    %v3808 = vunpack.c.l.s4 1966171168
    %v3809 = vunpack.c.0.s8 %v3808
    %v3810 = vlaneseq
    %v3811 = vshrl.u32 %v3810, 7
    %v3812 = vsub.s32 %v3809, %v3811
    %v3813 = vrot.slane %v3805, %v3812
    %v3815 = vunpack.c.l.s4 1966171168
    %v3816 = vunpack.c.0.s8 %v3815
    %v3817 = vlaneseq
    %v3818 = vshrl.u32 %v3817, 7
    %v3819 = vsub.s32 %v3816, %v3818
    %v3820 = vrot.slane %v3806, %v3819
    %v3821 = vcombine.high %v3813, %v3813
    %v3822 = vcombine.high %v3820, %v3820
    %v3823 = vlaneseq
    %v3824 = vshrl.u32 %v3823, 7
    %v3825 = vsub.s32 0, %v3824
    %v3826 = vrot.slane %v3813, %v3825
    %v3827 = vlaneseq
    %v3828 = vshrl.u32 %v3827, 7
    %v3829 = vsub.s32 0, %v3828
    %v3830 = vrot.slane %v3820, %v3829
    %v3831 = vlaneseq
    %v3832 = vshrl.u32 %v3831, 7
    %v3833 = vsub.s32 0, %v3832
    %v3834 = vrot.slane %v3821, %v3833
    %v3835 = vlaneseq
    %v3836 = vshrl.u32 %v3835, 7
    %v3837 = vsub.s32 0, %v3836
    %v3838 = vrot.slane %v3822, %v3837
    %v3843 = vmul.f32 %v3780, %v3826
    %v3844 = vmul.f32 %v3785, %v3830
    %v3845 = vmul.f32 %v3790, %v3834
    %v3846 = vmul.f32 %v3795, %v3838
    %v3847 = vsel %vm86, %v3843, 0.0
    %3848 = vadd.xlane.f32.xlu0 %v3847
    %v3849 = vpop.xlane.xlu0 %3848
    %v3850 = vsel %vm86, %v3844, 0.0
    %3851 = vadd.xlane.f32.xlu0 %v3850
    %v3852 = vpop.xlane.xlu0 %3851
    %v3853 = vsel %vm86, %v3845, 0.0
    %3854 = vadd.xlane.f32.xlu0 %v3853
    %v3855 = vpop.xlane.xlu0 %3854
    %v3856 = vsel %vm86, %v3846, 0.0
    %3857 = vadd.xlane.f32.xlu0 %v3856
    %v3858 = vpop.xlane.xlu0 %3857
    %v3859 = vrot.slane %v3849, 4
    %v3860 = vmax.f32 %v3849, %v3859
    %v3861 = vrot.slane %v3860, 2
    %v3862 = vmax.f32 %v3860, %v3861
    %v3863 = vrot.slane %v3862, 1
    %v3864 = vmax.f32 %v3862, %v3863
    %v3865 = vrot.slane %v3852, 4
    %v3866 = vmax.f32 %v3852, %v3865
    %v3867 = vrot.slane %v3866, 2
    %v3868 = vmax.f32 %v3866, %v3867
    %v3869 = vrot.slane %v3868, 1
    %v3870 = vmax.f32 %v3868, %v3869
    %v3871 = vrot.slane %v3855, 4
    %v3872 = vmax.f32 %v3855, %v3871
    %v3873 = vrot.slane %v3872, 2
    %v3874 = vmax.f32 %v3872, %v3873
    %v3875 = vrot.slane %v3874, 1
    %v3876 = vmax.f32 %v3874, %v3875
    %v3877 = vrot.slane %v3858, 4
    %v3878 = vmax.f32 %v3858, %v3877
    %v3879 = vrot.slane %v3878, 2
    %v3880 = vmax.f32 %v3878, %v3879
    %v3881 = vrot.slane %v3880, 1
    %v3882 = vmax.f32 %v3880, %v3881
    %v3883 = vsub.f32 %v3849, %v3864
    %v3884 = vsub.f32 %v3852, %v3870
    %v3885 = vsub.f32 %v3855, %v3876
    %v3886 = vsub.f32 %v3858, %v3882
    %v3887 = vmul.f32 %v3883, 1.442695
    %v3888 = vpow.pop %v3887
    %v3889 = vmul.f32 %v3884, 1.442695
    %v3890 = vpow.pop %v3889
    %v3891 = vmul.f32 %v3885, 1.442695
    %v3892 = vpow.pop %v3891
    %v3893 = vmul.f32 %v3886, 1.442695
    %v3894 = vpow.pop %v3893
    %v3895 = vrot.slane %v3888, 4
    %v3896 = vadd.f32 %v3888, %v3895
    %v3897 = vrot.slane %v3896, 2
    %v3898 = vadd.f32 %v3896, %v3897
    %v3899 = vrot.slane %v3898, 1
    %v3900 = vadd.f32 %v3898, %v3899
    %v3901 = vrot.slane %v3890, 4
    %v3902 = vadd.f32 %v3890, %v3901
    %v3903 = vrot.slane %v3902, 2
    %v3904 = vadd.f32 %v3902, %v3903
    %v3905 = vrot.slane %v3904, 1
    %v3906 = vadd.f32 %v3904, %v3905
    %v3907 = vrot.slane %v3892, 4
    %v3908 = vadd.f32 %v3892, %v3907
    %v3909 = vrot.slane %v3908, 2
    %v3910 = vadd.f32 %v3908, %v3909
    %v3911 = vrot.slane %v3910, 1
    %v3912 = vadd.f32 %v3910, %v3911
    %v3913 = vrot.slane %v3894, 4
    %v3914 = vadd.f32 %v3894, %v3913
    %v3915 = vrot.slane %v3914, 2
    %v3916 = vadd.f32 %v3914, %v3915
    %v3917 = vrot.slane %v3916, 1
    %v3918 = vadd.f32 %v3916, %v3917
    %v3919 = vrcp.pop %v3900
    %v3920 = vmul.f32 %v3888, %v3919
    %v3921 = vrcp.pop %v3906
    %v3922 = vmul.f32 %v3890, %v3921
    %v3923 = vrcp.pop %v3912
    %v3924 = vmul.f32 %v3892, %v3923
    %v3925 = vrcp.pop %v3918
    %v3926 = vmul.f32 %v3894, %v3925
    %v3927 = vmul.f32 %v3920, %v3780
    %v3928 = vmul.f32 %v3922, %v3785
    %v3929 = vmul.f32 %v3924, %v3790
    %v3930 = vmul.f32 %v3926, %v3795
    %vm3931 = vcmask 523520
    %v3932 = vsel %vm3931, %v3927, 0.0
    %v3933 = vrot.slane %v3932, 4
    %v3934 = vadd.f32 %v3932, %v3933
    %v3935 = vrot.slane %v3934, 2
    %v3936 = vadd.f32 %v3934, %v3935
    %v3937 = vrot.slane %v3936, 1
    %v3938 = vadd.f32 %v3936, %v3937
    %v3939 = vsel %vm3931, %v3928, 0.0
    %v3940 = vrot.slane %v3939, 4
    %v3941 = vadd.f32 %v3939, %v3940
    %v3942 = vrot.slane %v3941, 2
    %v3943 = vadd.f32 %v3941, %v3942
    %v3944 = vrot.slane %v3943, 1
    %v3945 = vadd.f32 %v3943, %v3944
    %v3946 = vsel %vm3931, %v3929, 0.0
    %v3947 = vrot.slane %v3946, 4
    %v3948 = vadd.f32 %v3946, %v3947
    %v3949 = vrot.slane %v3948, 2
    %v3950 = vadd.f32 %v3948, %v3949
    %v3951 = vrot.slane %v3950, 1
    %v3952 = vadd.f32 %v3950, %v3951
    %v3953 = vsel %vm3931, %v3930, 0.0
    %v3954 = vrot.slane %v3953, 4
    %v3955 = vadd.f32 %v3953, %v3954
    %v3956 = vrot.slane %v3955, 2
    %v3957 = vadd.f32 %v3955, %v3956
    %v3958 = vrot.slane %v3957, 1
    %v3959 = vadd.f32 %v3957, %v3958
    %v3964 = vsel %vm3612, %v3945, %v3938
    %v3965 = vsel %vm3614, %v3952, %v3964
    %v3966 = vsel %vm3616, %v3959, %v3965
    %3967 = vrot.lane.b32.xlu0 %v3966, 96
    %v3968 = vpop.permute.xlu0 %3967
    %vm3970 = vcmask 257024
    %3971 = vst.msk [vmem:[#allocation2] sm:$0xf] %vm3970, %v3968
    %v3972 = vld [vmem:[%s19] sm:$0xff]
    %v3973 = vld [vmem:[%s19 + $0x8] sm:$0xff]
    %v3974 = vld [vmem:[%s19 + $0x10] sm:$0xff]
    %v3975 = vld [vmem:[%s19 + $0x18] sm:$0xff]
    %v3976 = vld [vmem:[%s20] sm:$0x1]
    %v3978 = vlaneseq
    %v3979 = vshrl.u32 %v3978, 7
    %v3980 = vsub.s32 0, %v3979
    %v3981 = vrot.slane %v3976, %v3980
    %v3983 = vsel %vm86, %v3968, 0
    %3985 = vmatprep.subr.mxu0 0.0
    %3986 = vmatpush1.msra.mxu0 0.0
    %3987 = vmatprep.subr.mxu0 0.0
    %3988 = vmatpush1.msra.mxu0 0.0
    %3989 = vmatprep.subr.mxu0 0.0
    %3990 = vmatpush1.msra.mxu0 0.0
    %3991 = vmatprep.subr.mxu0 0.0
    %3992 = vmatpush1.msra.mxu0 0.0
    %3993 = vmatprep.subr.mxu0 0.0
    %3994 = vmatpush1.msra.mxu0 0.0
    %3995 = vmatprep.subr.mxu0 0.0
    %3996 = vmatpush1.msra.mxu0 0.0
    %3997 = vmatprep.subr.mxu0 0.0
    %3998 = vmatpush1.msra.mxu0 0.0
    %3999 = vmatprep.subr.mxu0 0.0
    %4000 = vmatpush1.msra.mxu0 0.0
    %4001 = vmatprep.subr.mxu0 0.0
    %4002 = vmatpush1.msra.mxu0 0.0
    %4003 = vmatprep.subr.mxu0 0.0
    %4004 = vmatpush1.msra.mxu0 0.0
    %4005 = vmatprep.subr.mxu0 0.0
    %4006 = vmatpush1.msra.mxu0 0.0
    %4007 = vmatprep.subr.mxu0 0.0
    %4008 = vmatpush1.msra.mxu0 0.0
    %4009 = vmatprep.subr.mxu0 0.0
    %4010 = vmatpush1.msra.mxu0 %v3975
    %4011 = vmatprep.subr.mxu0 0.0
    %4012 = vmatpush1.msra.mxu0 %v3974
    %4013 = vmatprep.subr.mxu0 0.0
    %4014 = vmatpush1.msra.mxu0 %v3973
    %4015 = vmatprep.subr.mxu0 0.0
    %4016 = vmatpush1.msra.mxu0 %v3972
    %4017 = vmatprep.subr.mxu0 0.0
    %4018 = vmatpush2.msra.mxu0 0.0
    %4019 = vmatprep.subr.mxu0 0.0
    %4020 = vmatpush2.msra.mxu0 0.0
    %4021 = vmatprep.subr.mxu0 0.0
    %4022 = vmatpush2.msra.mxu0 0.0
    %4023 = vmatprep.subr.mxu0 0.0
    %4024 = vmatpush2.msra.mxu0 0.0
    %4025 = vmatprep.subr.mxu0 0.0
    %4026 = vmatpush2.msra.mxu0 0.0
    %4027 = vmatprep.subr.mxu0 0.0
    %4028 = vmatpush2.msra.mxu0 0.0
    %4029 = vmatprep.subr.mxu0 0.0
    %4030 = vmatpush2.msra.mxu0 0.0
    %4031 = vmatprep.subr.mxu0 0.0
    %4032 = vmatpush2.msra.mxu0 0.0
    %4033 = vmatprep.subr.mxu0 0.0
    %4034 = vmatpush2.msra.mxu0 0.0
    %4035 = vmatprep.subr.mxu0 0.0
    %4036 = vmatpush2.msra.mxu0 0.0
    %4037 = vmatprep.subr.mxu0 0.0
    %4038 = vmatpush2.msra.mxu0 0.0
    %4039 = vmatprep.subr.mxu0 0.0
    %4040 = vmatpush2.msra.mxu0 0.0
    %4041 = vmatprep.subr.mxu0 0.0
    %4042 = vmatpush2.msra.mxu0 0.0
    %4043 = vmatprep.subr.mxu0 0.0
    %4044 = vmatpush2.msra.mxu0 0.0
    %4045 = vmatprep.subr.mxu0 0.0
    %4046 = vmatpush2.msra.mxu0 0.0
    %4047 = vmatprep.subr.mxu0 0.0
    %4048 = vmatpush2.msra.mxu0 0.0
    %4049 = vmatprep.mubr.f32.mxu0 0.0
    %4050 = vmatmul.mubr.f32.gmra.mxu0 %v3983
    %v4051 = vpop.f32.mrf.mxu0
    %v4052 = vadd.f32 %v3981, %v4051
    %v4053 = vpop.f32.mrf.mxu0
    %4054 = vdwg.mxu0
    %v4055 = vxor.u32 %v4052, 2147483648
    %v4056 = vmul.f32 %v4055, 1.442695
    %v4057 = vpow.pop %v4056
    %v4058 = vadd.f32 %v4057, 1.0
    %v4059 = vrcp.pop %v4058
    %v4060 = vmul.f32 1.0, %v4059
    %vm4061 = vcmask 11264
    %4062 = vst.msk [vmem:[%s21] sm:$0xf] %vm4061, %v4060
    // Predicated region
    $region86: #{vanilla_transformer_forward.3} parent=1 // pred_check
      _
    $region87: #{vanilla_transformer_forward.3} parent=1 // pred_check_branch
      %4064 = sbr.rel (0) target = $region89
    $region88: #{vanilla_transformer_forward.3} parent=1 // pred_region
      _
    $region89: #{vanilla_transformer_forward.3} parent=1 // pred_fallthru
      _
    // Predicated region
    $region90: #{vanilla_transformer_forward.3} parent=1 // pred_check
      _
    $region91: #{vanilla_transformer_forward.3} parent=1 // pred_check_branch
      %4066 = sbr.rel (0) target = $region93
    $region92: #{vanilla_transformer_forward.3} parent=1 // pred_region
      %s4068 = ssub.s32 64, 64
      %4069 = vsyncadd [#allocation3], %s4068
      %s4071 = sshll.u32 [#allocation2], 4
      %s4072 = int_to_ptr.vmem [resolvable:$true] %s4071
      %4074 = dma.vmem_to_hbm [thread:$0]  %s4072, 64, %s22, [#allocation3]
    $region93: #{vanilla_transformer_forward.3} parent=1 // pred_fallthru
      _
    // Predicated region
    $region94: #{vanilla_transformer_forward.3} parent=1 // pred_check
      _
    $region95: #{vanilla_transformer_forward.3} parent=1 // pred_check_branch
      %4076 = sbr.rel (0) target = $region97
    $region96: #{vanilla_transformer_forward.3} parent=1 // pred_region
      _
    $region97: #{vanilla_transformer_forward.3} parent=1 // pred_fallthru
      _
    // Predicated region
    $region98: #{vanilla_transformer_forward.3} parent=1 // pred_check
      _
    $region99: #{vanilla_transformer_forward.3} parent=1 // pred_check_branch
      %4078 = sbr.rel (0) target = $region101
    $region100: #{vanilla_transformer_forward.3} parent=1 // pred_region
      %4079 = dma.done [#allocation3], 64
    $region101: #{vanilla_transformer_forward.3} parent=1 // pred_fallthru
      _
    %4080 = vsyncpa [#allocation3], 1

</llo_original>
